<compile_context>
chip_gen: v7x
topology: tpu7x:2x2x1
jax: 0.10.0
libtpu: 0.0.40
codegen_flags: <defaults>
</compile_context>

<pallas_src>
import jax
import jax.numpy as jnp
from jax import lax
from jax.experimental import pallas as pl
from jax.experimental.pallas import tpu as pltpu

_NORM_EPS = 1e-12


def _round_up(x, m):
    return ((x + m - 1) // m) * m


# ----------------------------------------------------------------------------
# Kernel 1: bidirectional GRU (PyTorch gate order r, z, n), both directions in
# a single kernel.  Outputs the padded final hidden states [h_fwd | h_bwd] with
# shape (B, 2*Hp); padded hidden columns are exactly zero.
# ----------------------------------------------------------------------------
def bigru_final_hidden(x_flat, L, B, wih_all, bih_all, whh_f, bhh_f, whh_b, bhh_b):
    Hp = whh_f.shape[0]
    G = whh_f.shape[1]            # 3 * Hp (fused r|z|n gate width, lane aligned)

    def kernel(x_ref, wih_ref, bih_ref, whhf_ref, bhhf_ref, whhb_ref, bhhb_ref,
               o_ref, xp_ref):
        # ---- phase 1: hoisted input projections for all steps / both
        # directions as ONE big matmul, streamed into VMEM scratch.
        xp_ref[...] = (jnp.dot(x_ref[...], wih_ref[...],
                               preferred_element_type=jnp.float32)
                       + bih_ref[...])

        # ---- phase 2: sequential recurrence; one fused (Hp,3Hp) matmul per
        # direction per step, fwd/bwd chains interleaved to hide MXU latency.
        whhf = whhf_ref[...]
        whhb = whhb_ref[...]
        bhhf = bhhf_ref[...]
        bhhb = bhhb_ref[...]

        def step(h_f, h_b, ixf, ixb):
            hhf = jnp.dot(h_f, whhf, preferred_element_type=jnp.float32) + bhhf
            hhb = jnp.dot(h_b, whhb, preferred_element_type=jnp.float32) + bhhb
            r_f = jax.nn.sigmoid(ixf[:, 0:Hp] + hhf[:, 0:Hp])
            z_f = jax.nn.sigmoid(ixf[:, Hp:2 * Hp] + hhf[:, Hp:2 * Hp])
            n_f = jnp.tanh(ixf[:, 2 * Hp:3 * Hp] + r_f * hhf[:, 2 * Hp:3 * Hp])
            h_f = (1.0 - z_f) * n_f + z_f * h_f
            r_b = jax.nn.sigmoid(ixb[:, 0:Hp] + hhb[:, 0:Hp])
            z_b = jax.nn.sigmoid(ixb[:, Hp:2 * Hp] + hhb[:, Hp:2 * Hp])
            n_b = jnp.tanh(ixb[:, 2 * Hp:3 * Hp] + r_b * hhb[:, 2 * Hp:3 * Hp])
            h_b = (1.0 - z_b) * n_b + z_b * h_b
            return h_f, h_b

        h_f = jnp.zeros((B, Hp), jnp.float32)
        h_b = jnp.zeros((B, Hp), jnp.float32)
        if L <= 16:
            for t in range(L):                       # static -> fully unrolled
                ixf = xp_ref[t * B:(t + 1) * B, 0:G]
                ixb = xp_ref[(L - 1 - t) * B:(L - t) * B, G:2 * G]
                h_f, h_b = step(h_f, h_b, ixf, ixb)
        else:
            # bounded code size / vreg live ranges for long sequences
            def body(t, carry):
                hf, hb = carry
                ixf = xp_ref[pl.ds(t * B, B), 0:G]
                ixb = xp_ref[pl.ds((L - 1 - t) * B, B), G:2 * G]
                return step(hf, hb, ixf, ixb)
            h_f, h_b = lax.fori_loop(0, L, body, (h_f, h_b), unroll=2)

        o_ref[:, 0:Hp] = h_f
        o_ref[:, Hp:2 * Hp] = h_b

    return pl.pallas_call(
        kernel,
        out_shape=jax.ShapeDtypeStruct((B, 2 * Hp), jnp.float32),
        scratch_shapes=[pltpu.VMEM((L * B, 2 * G), jnp.float32)],
        compiler_params=pltpu.CompilerParams(vmem_limit_bytes=32 * 1024 * 1024),
    )(x_flat, wih_all, bih_all, whh_f, bhh_f, whh_b, bhh_b)


# ----------------------------------------------------------------------------
# Kernel 2a: projections + L2 norms + row-independent fusion terms.
#   A[j] = clip_n[j] @ (W1_add + W1_vv)
#   C[i] = sent_n[i] @ (W1_add + W1_ss) + b1
# ----------------------------------------------------------------------------
def _proj_kernel(vis_ref, sent_ref, v2sw_ref, v2sb_ref, s2sw_ref, s2sb_ref,
                 w1av_ref, w1as_ref, b1_ref,
                 clipn_ref, sentn_ref, a_ref, c_ref):
    clip = jnp.dot(vis_ref[...], v2sw_ref[...],
                   preferred_element_type=jnp.float32) + v2sb_ref[...]
    sent = jnp.dot(sent_ref[...], s2sw_ref[...],
                   preferred_element_type=jnp.float32) + s2sb_ref[...]
    clip_n = clip * lax.rsqrt(jnp.sum(clip * clip, axis=1, keepdims=True) + _NORM_EPS)
    sent_n = sent * lax.rsqrt(jnp.sum(sent * sent, axis=1, keepdims=True) + _NORM_EPS)
    clipn_ref[...] = clip_n
    sentn_ref[...] = sent_n
    a_ref[...] = jnp.dot(clip_n, w1av_ref[...], preferred_element_type=jnp.float32)
    c_ref[...] = jnp.dot(sent_n, w1as_ref[...],
                         preferred_element_type=jnp.float32) + b1_ref[...]


# ----------------------------------------------------------------------------
# Kernel 2b: cross-modal fusion + fc1 + ReLU + fc2, gridded over the sentence
# (i) axis.  Output row k = i*B + j  corresponds to (sent[i], clip[j]).
# ----------------------------------------------------------------------------
def _fusion_kernel(clipn_ref, sentn_ref, a_ref, c_ref, w1m_ref, w2_ref, b2_ref,
                   o_ref, mul_sc, ac_sc):
    TI = sentn_ref.shape[0]
    B = clipn_ref.shape[0]
    clip_n = clipn_ref[...]
    a_full = a_ref[...]
    sent_t = sentn_ref[...]
    c_t = c_ref[...]
    # Build the (TI*B, Dp) multiplicative features and (TI*B, Mp) additive bias
    # with VPU broadcasts only; the matmuls below see all TI*B rows at once.
    for li in range(TI):                              # static -> unrolled
        mul_sc[li * B:(li + 1) * B, :] = clip_n * sent_t[li:li + 1, :]
        ac_sc[li * B:(li + 1) * B, :] = a_full + c_t[li:li + 1, :]
    h = jnp.dot(mul_sc[...], w1m_ref[...],
                preferred_element_type=jnp.float32) + ac_sc[...]
    h = jnp.maximum(h, 0.0)
    o_ref[...] = jnp.dot(h, w2_ref[...],
                         preferred_element_type=jnp.float32) + b2_ref[...]


def fused_head(visual_pad, sent_pad, pp):
    B = visual_pad.shape[0]
    Dp = pp['v2s_w'].shape[1]
    Mp = pp['w1m'].shape[1]

    clip_n, sent_n, a_rows, c_rows = pl.pallas_call(
        _proj_kernel,
        out_shape=(jax.ShapeDtypeStruct((B, Dp), jnp.float32),
                   jax.ShapeDtypeStruct((B, Dp), jnp.float32),
                   jax.ShapeDtypeStruct((B, Mp), jnp.float32),
                   jax.ShapeDtypeStruct((B, Mp), jnp.float32)),
    )(visual_pad, sent_pad, pp['v2s_w'], pp['v2s_b'], pp['s2s_w'], pp['s2s_b'],
      pp['w1av'], pp['w1as'], pp['b1'])

    # Tile the i (sentence) axis so the lane-dense writeback pipelines with
    # compute; grid axis is "parallel" (megacore split on v7x).
    # TODO(synk): ragged B (not a multiple of 8) falls back to a single tile;
    #             use pl.BoundedSlice for a true ragged split if needed.
    TI = B if (B <= 8 or B % 8 != 0) else 8
    grid = (B // TI,)
    out_flat = pl.pallas_call(
        _fusion_kernel,
        grid=grid,
        in_specs=[
            pl.BlockSpec((B, Dp), lambda i: (0, 0)),    # clip_n (all rows)
            pl.BlockSpec((TI, Dp), lambda i: (i, 0)),   # sent_n tile
            pl.BlockSpec((B, Mp), lambda i: (0, 0)),    # A (all rows)
            pl.BlockSpec((TI, Mp), lambda i: (i, 0)),   # C tile
            pl.BlockSpec((Dp, Mp), lambda i: (0, 0)),   # w1m
            pl.BlockSpec((Mp, 128), lambda i: (0, 0)),  # w2 (lane padded)
            pl.BlockSpec((1, 128), lambda i: (0, 0)),   # b2 (lane padded)
        ],
        out_specs=pl.BlockSpec((TI * B, 128), lambda i: (i, 0)),
        out_shape=jax.ShapeDtypeStruct((B * B, 128), jnp.float32),
        scratch_shapes=[pltpu.VMEM((TI * B, Dp), jnp.float32),
                        pltpu.VMEM((TI * B, Mp), jnp.float32)],
        compiler_params=pltpu.CompilerParams(dimension_semantics=("parallel",)),
    )(clip_n, sent_n, a_rows, c_rows, pp['w1m'], pp['w2p'], pp['b2p'])
    return out_flat.reshape(B, B, 128)


# ----------------------------------------------------------------------------
# Host-side parameter preparation: padding (H->Hp=256, E->Ep=384, D->Dp=128,
# M->Mp=128, Vd->Vp=128), gate fusion, direction concatenation, fusion-weight
# algebraic pre-sums, fc2 lane padding.  All pads are zeros -> bit-equivalent.
# ----------------------------------------------------------------------------
def prepare_params(p):
    E = p['wih_f'].shape[1]
    H = p['whh_f'].shape[1]
    Vd = p['v2s_w'].shape[0]
    D = p['s2s_w'].shape[1]
    M = p['w1'].shape[1]
    Ep = _round_up(E, 128)
    Hp = _round_up(H, 128)
    Dp = _round_up(D, 128)
    Mp = _round_up(M, 128)
    Vp = _round_up(Vd, 128)
    G = 3 * Hp

    def pack_wih(w):   # (3, E, H) -> (Ep, G); gate g in cols [g*Hp, g*Hp+H)
        out = jnp.zeros((Ep, G), jnp.float32)
        for g in range(3):
            out = out.at[:E, g * Hp:g * Hp + H].set(w[g])
        return out

    def pack_whh(w):   # (3, H, H) -> (Hp, G)
        out = jnp.zeros((Hp, G), jnp.float32)
        for g in range(3):
            out = out.at[:H, g * Hp:g * Hp + H].set(w[g])
        return out

    def pack_b(b):     # (3, 1, H) -> (1, G)
        out = jnp.zeros((1, G), jnp.float32)
        for g in range(3):
            out = out.at[:, g * Hp:g * Hp + H].set(b[g])
        return out

    wih_all = jnp.concatenate([pack_wih(p['wih_f']), pack_wih(p['wih_b'])], axis=1)
    bih_all = jnp.concatenate([pack_b(p['bih_f']), pack_b(p['bih_b'])], axis=1)

    v2s_w_pad = jnp.zeros((Vp, Dp), jnp.float32).at[:Vd, :D].set(p['v2s_w'])
    v2s_b_pad = jnp.zeros((1, Dp), jnp.float32).at[:, :D].set(p['v2s_b'])

    s2s_w_pad = jnp.zeros((2 * Hp, Dp), jnp.float32)
    s2s_w_pad = s2s_w_pad.at[0:H, :D].set(p['s2s_w'][0:H])
    s2s_w_pad = s2s_w_pad.at[Hp:Hp + H, :D].set(p['s2s_w'][H:2 * H])
    s2s_b_pad = jnp.zeros((1, Dp), jnp.float32).at[:, :D].set(p['s2s_b'])

    w1 = p['w1']

    def pad_dm(w):     # (D, M) -> (Dp, Mp)
        return jnp.zeros((Dp, Mp), jnp.float32).at[:D, :M].set(w)

    w1m = pad_dm(w1[0:D])
    w1av = pad_dm(w1[D:2 * D] + w1[2 * D:3 * D])
    w1as = pad_dm(w1[D:2 * D] + w1[3 * D:4 * D])
    b1p = jnp.zeros((1, Mp), jnp.float32).at[:, :M].set(p['b1'])
    w2p = jnp.zeros((Mp, 128), jnp.float32).at[:M, 0:3].set(p['w2'])
    b2p = jnp.zeros((1, 128), jnp.float32).at[:, 0:3].set(p['b2'])

    return dict(
        emb_w_pad=jnp.pad(p['emb_w'], ((0, 0), (0, Ep - E))),
        wih_all=wih_all, bih_all=bih_all,
        whh_f=pack_whh(p['whh_f']), bhh_f=pack_b(p['bhh_f']),
        whh_b=pack_whh(p['whh_b']), bhh_b=pack_b(p['bhh_b']),
        v2s_w=v2s_w_pad, v2s_b=v2s_b_pad,
        s2s_w=s2s_w_pad, s2s_b=s2s_b_pad,
        w1m=w1m, w1av=w1av, w1as=w1as, b1=b1p, w2p=w2p, b2p=b2p,
    )


# ----------------------------------------------------------------------------
# Full CTRL forward (glue: embedding gather, transpose/flatten, final slice).
# ----------------------------------------------------------------------------
def ctrl_forward(pp, visual, word_seqs):
    B, L = word_seqs.shape
    Ep = pp['emb_w_pad'].shape[1]
    # TODO(synk): embedding gather over the 9091-row table stays in plain JAX.
    emb = jnp.take(pp['emb_w_pad'], word_seqs, axis=0)               # (B, L, Ep)
    # time-major + flattened so the GRU kernel never relayouts sublanes
    x_flat = jnp.transpose(emb, (1, 0, 2)).reshape(L * B, Ep).astype(jnp.float32)

    sent_pad = bigru_final_hidden(x_flat, L, B, pp['wih_all'], pp['bih_all'],
                                  pp['whh_f'], pp['bhh_f'],
                                  pp['whh_b'], pp['bhh_b'])          # (B, 2*Hp)

    Vp = pp['v2s_w'].shape[0]
    vis = visual.astype(jnp.float32)
    vis_pad = jnp.pad(vis, ((0, 0), (0, Vp - vis.shape[1])))

    out_pad = fused_head(vis_pad, sent_pad, pp)                      # (B, B, 128)
    return out_pad[:, :, 0:3]


# ----------------------------------------------------------------------------
# Pure-JAX reference (mirrors PyTorch semantics) for correctness checking.
# ----------------------------------------------------------------------------
def reference_forward(p, visual, word_seqs):
    HP = lax.Precision.HIGHEST
    emb = jnp.take(p['emb_w'], word_seqs, axis=0)

    def run_gru(x_tm, wih, whh, bih, bhh):
        Bb = x_tm.shape[1]
        H = whh.shape[1]

        def step(h, x_t):
            i_r = jnp.dot(x_t, wih[0], precision=HP) + bih[0]
            i_z = jnp.dot(x_t, wih[1], precision=HP) + bih[1]
            i_n = jnp.dot(x_t, wih[2], precision=HP) + bih[2]
            h_r = jnp.dot(h, whh[0], precision=HP) + bhh[0]
            h_z = jnp.dot(h, whh[1], precision=HP) + bhh[1]
            h_n = jnp.dot(h, whh[2], precision=HP) + bhh[2]
            r = jax.nn.sigmoid(i_r + h_r)
            z = jax.nn.sigmoid(i_z + h_z)
            n = jnp.tanh(i_n + r * h_n)
            return (1.0 - z) * n + z * h, None

        h0 = jnp.zeros((Bb, H), jnp.float32)
        h_fin, _ = lax.scan(step, h0, x_tm)
        return h_fin

    x_tm = jnp.transpose(emb, (1, 0, 2))
    h_f = run_gru(x_tm, p['wih_f'], p['whh_f'], p['bih_f'], p['bhh_f'])
    h_b = run_gru(x_tm[::-1], p['wih_b'], p['whh_b'], p['bih_b'], p['bhh_b'])
    sent = jnp.concatenate([h_f, h_b], axis=1)

    tc = jnp.dot(visual, p['v2s_w'], precision=HP) + p['v2s_b']
    ts = jnp.dot(sent, p['s2s_w'], precision=HP) + p['s2s_b']
    tcn = tc / jnp.linalg.norm(tc, axis=1, keepdims=True)
    tsn = ts / jnp.linalg.norm(ts, axis=1, keepdims=True)

    B, D = tcn.shape
    vv = jnp.broadcast_to(tcn[None, :, :], (B, B, D))
    ss = jnp.broadcast_to(tsn[:, None, :], (B, B, D))
    cm = jnp.concatenate([vv * ss, vv + ss, vv, ss], axis=2)         # (B, B, 4D)
    h = jnp.maximum(jnp.einsum('ijc,cm->ijm', cm, p['w1'], precision=HP) + p['b1'], 0.0)
    out = jnp.einsum('ijm,mk->ijk', h, p['w2'], precision=HP) + p['b2']
    return out


# ----------------------------------------------------------------------------
# Deterministic parameter construction (synthetic; no checkpoint loading).
# ----------------------------------------------------------------------------
def make_params(key, ntoken, emb_dim, gru_hid, visual_dim, semantic_dim, middle_dim):
    ks = list(jax.random.split(key, 24))

    def nrm(k, shape, scale=0.05):
        return scale * jax.random.normal(k, shape, dtype=jnp.float32)

    emb_w = nrm(ks[0], (ntoken, emb_dim))
    emb_w = emb_w.at[0].set(0.0)  # padding_idx=0 row is zero

    def gru_params(k):
        a, b, c, d = jax.random.split(k, 4)
        return (nrm(a, (3, emb_dim, gru_hid)),
                nrm(b, (3, gru_hid, gru_hid)),
                nrm(c, (3, 1, gru_hid)),
                nrm(d, (3, 1, gru_hid)))

    wih_f, whh_f, bih_f, bhh_f = gru_params(ks[1])
    wih_b, whh_b, bih_b, bhh_b = gru_params(ks[2])

    sent_dim = 2 * gru_hid
    params = dict(
        emb_w=emb_w,
        wih_f=wih_f, whh_f=whh_f, bih_f=bih_f, bhh_f=bhh_f,
        wih_b=wih_b, whh_b=whh_b, bih_b=bih_b, bhh_b=bhh_b,
        # linear layers stored already transposed (in_dim, out_dim)
        v2s_w=nrm(ks[3], (visual_dim, semantic_dim)), v2s_b=nrm(ks[4], (semantic_dim,)),
        s2s_w=nrm(ks[5], (sent_dim, semantic_dim)), s2s_b=nrm(ks[6], (semantic_dim,)),
        # 1x1 conv weights stored transposed: (in_channels, out_channels)
        w1=nrm(ks[7], (4 * semantic_dim, middle_dim)), b1=nrm(ks[8], (middle_dim,)),
        w2=nrm(ks[9], (middle_dim, 3)), b2=nrm(ks[10], (3,)),
    )
    return params


if __name__ == "__main__":
    # small shapes consistent with the module (GRU dims 300/250, ntoken=9091 kept)
    NTOKEN, EMB_DIM, GRU_HID = 9091, 300, 250
    VISUAL_DIM, SEMANTIC_DIM, MIDDLE_DIM = 64, 32, 64
    B, L = 4, 8

    key = jax.random.PRNGKey(0)
    kp, kv, kw = jax.random.split(key, 3)
    params = make_params(kp, NTOKEN, EMB_DIM, GRU_HID, VISUAL_DIM, SEMANTIC_DIM, MIDDLE_DIM)
    pp = prepare_params(params)

    visual = jax.random.normal(kv, (B, VISUAL_DIM), dtype=jnp.float32)
    word_seqs = jax.random.randint(kw, (B, L), 1, NTOKEN, dtype=jnp.int32)

    fwd = jax.jit(ctrl_forward)
    out = jax.block_until_ready(fwd(pp, visual, word_seqs))
    assert out.shape == (B, B, 3), out.shape

    ref = reference_forward(params, visual, word_seqs)
    if not bool(jnp.allclose(out, ref, rtol=2e-2, atol=1e-3)):
        max_err = float(jnp.max(jnp.abs(out - ref)))
        raise AssertionError(f"Pallas output mismatch, max abs err = {max_err}")

    print("KERNEL_OK")
</pallas_src>

<mosaic_0001>
module attributes {stable_mosaic.version = 11 : i64} {
  func.func @_proj_kernel(%arg0: memref<4x128xf32, #tpu.memory_space<vmem>>, %arg1: memref<4x512xf32, #tpu.memory_space<vmem>>, %arg2: memref<128x128xf32, #tpu.memory_space<vmem>>, %arg3: memref<1x128xf32, #tpu.memory_space<vmem>>, %arg4: memref<512x128xf32, #tpu.memory_space<vmem>>, %arg5: memref<1x128xf32, #tpu.memory_space<vmem>>, %arg6: memref<128x128xf32, #tpu.memory_space<vmem>>, %arg7: memref<128x128xf32, #tpu.memory_space<vmem>>, %arg8: memref<1x128xf32, #tpu.memory_space<vmem>>, %arg9: memref<4x128xf32, #tpu.memory_space<vmem>>, %arg10: memref<4x128xf32, #tpu.memory_space<vmem>>, %arg11: memref<4x128xf32, #tpu.memory_space<vmem>>, %arg12: memref<4x128xf32, #tpu.memory_space<vmem>>) attributes {dimension_semantics = [], scalar_prefetch = 0 : i64, scratch_operands = 0 : i64, tpu.core_type = #tpu.core_type<tc>} {
    %c0 = arith.constant 0 : index
    %c0_0 = arith.constant 0 : index
    %0 = vector.load %arg0[%c0, %c0_0] : memref<4x128xf32, #tpu.memory_space<vmem>>, vector<4x128xf32>
    %c0_1 = arith.constant 0 : index
    %c0_2 = arith.constant 0 : index
    %1 = vector.load %arg2[%c0_1, %c0_2] : memref<128x128xf32, #tpu.memory_space<vmem>>, vector<128x128xf32>
    %cst = arith.constant dense<0.000000e+00> : vector<4x128xf32>
    %2 = tpu.matmul %0, %1, %cst {dimension_numbers = #tpu.dot_dimension_numbers<[1], [0], [0], [1], [0, 0, 1, 1], [], []>} : vector<4x128xf32>, vector<128x128xf32>, vector<4x128xf32> -> vector<4x128xf32>
    %c0_3 = arith.constant 0 : index
    %c0_4 = arith.constant 0 : index
    %3 = vector.load %arg3[%c0_3, %c0_4] : memref<1x128xf32, #tpu.memory_space<vmem>>, vector<1x128xf32>
    %4 = vector.broadcast %3 : vector<1x128xf32> to vector<4x128xf32>
    %5 = arith.addf %2, %4 : vector<4x128xf32>
    %c0_5 = arith.constant 0 : index
    %c0_6 = arith.constant 0 : index
    %6 = vector.load %arg1[%c0_5, %c0_6] : memref<4x512xf32, #tpu.memory_space<vmem>>, vector<4x512xf32>
    %c0_7 = arith.constant 0 : index
    %c0_8 = arith.constant 0 : index
    %7 = vector.load %arg4[%c0_7, %c0_8] : memref<512x128xf32, #tpu.memory_space<vmem>>, vector<512x128xf32>
    %cst_9 = arith.constant dense<0.000000e+00> : vector<4x128xf32>
    %8 = tpu.matmul %6, %7, %cst_9 {dimension_numbers = #tpu.dot_dimension_numbers<[1], [0], [0], [1], [0, 0, 1, 1], [], []>} : vector<4x512xf32>, vector<512x128xf32>, vector<4x128xf32> -> vector<4x128xf32>
    %c0_10 = arith.constant 0 : index
    %c0_11 = arith.constant 0 : index
    %9 = vector.load %arg5[%c0_10, %c0_11] : memref<1x128xf32, #tpu.memory_space<vmem>>, vector<1x128xf32>
    %10 = vector.broadcast %9 : vector<1x128xf32> to vector<4x128xf32>
    %11 = arith.addf %8, %10 : vector<4x128xf32>
    %12 = arith.mulf %5, %5 : vector<4x128xf32>
    %cst_12 = arith.constant dense<0.000000e+00> : vector<4xf32>
    %13 = vector.multi_reduction <add>, %12, %cst_12 [1] : vector<4x128xf32> to vector<4xf32>
    %14 = vector.shape_cast %13 : vector<4xf32> to vector<4x1xf32>
    %cst_13 = arith.constant 9.99999996E-13 : f32
    %15 = vector.broadcast %cst_13 : f32 to vector<4x1xf32>
    %16 = arith.addf %14, %15 : vector<4x1xf32>
    %17 = math.rsqrt %16 : vector<4x1xf32>
    %18 = vector.broadcast %17 : vector<4x1xf32> to vector<4x128xf32>
    %19 = arith.mulf %5, %18 : vector<4x128xf32>
    %20 = arith.mulf %11, %11 : vector<4x128xf32>
    %cst_14 = arith.constant dense<0.000000e+00> : vector<4xf32>
    %21 = vector.multi_reduction <add>, %20, %cst_14 [1] : vector<4x128xf32> to vector<4xf32>
    %22 = vector.shape_cast %21 : vector<4xf32> to vector<4x1xf32>
    %cst_15 = arith.constant 9.99999996E-13 : f32
    %23 = vector.broadcast %cst_15 : f32 to vector<4x1xf32>
    %24 = arith.addf %22, %23 : vector<4x1xf32>
    %25 = math.rsqrt %24 : vector<4x1xf32>
    %26 = vector.broadcast %25 : vector<4x1xf32> to vector<4x128xf32>
    %27 = arith.mulf %11, %26 : vector<4x128xf32>
    %c0_16 = arith.constant 0 : index
    %c0_17 = arith.constant 0 : index
    %28 = vector.load %arg9[%c0_16, %c0_17] : memref<4x128xf32, #tpu.memory_space<vmem>>, vector<4x128xf32>
    tpu.vector_store %arg9[%c0_16, %c0_17], %19 {strides = array<i32>} : memref<4x128xf32, #tpu.memory_space<vmem>>, vector<4x128xf32>,
    %c0_18 = arith.constant 0 : index
    %c0_19 = arith.constant 0 : index
    %29 = vector.load %arg10[%c0_18, %c0_19] : memref<4x128xf32, #tpu.memory_space<vmem>>, vector<4x128xf32>
    tpu.vector_store %arg10[%c0_18, %c0_19], %27 {strides = array<i32>} : memref<4x128xf32, #tpu.memory_space<vmem>>, vector<4x128xf32>,
    %c0_20 = arith.constant 0 : index
    %c0_21 = arith.constant 0 : index
    %30 = vector.load %arg6[%c0_20, %c0_21] : memref<128x128xf32, #tpu.memory_space<vmem>>, vector<128x128xf32>
    %cst_22 = arith.constant dense<0.000000e+00> : vector<4x128xf32>
    %31 = tpu.matmul %19, %30, %cst_22 {dimension_numbers = #tpu.dot_dimension_numbers<[1], [0], [0], [1], [0, 0, 1, 1], [], []>} : vector<4x128xf32>, vector<128x128xf32>, vector<4x128xf32> -> vector<4x128xf32>
    %c0_23 = arith.constant 0 : index
    %c0_24 = arith.constant 0 : index
    %32 = vector.load %arg11[%c0_23, %c0_24] : memref<4x128xf32, #tpu.memory_space<vmem>>, vector<4x128xf32>
    tpu.vector_store %arg11[%c0_23, %c0_24], %31 {strides = array<i32>} : memref<4x128xf32, #tpu.memory_space<vmem>>, vector<4x128xf32>,
    %c0_25 = arith.constant 0 : index
    %c0_26 = arith.constant 0 : index
    %33 = vector.load %arg7[%c0_25, %c0_26] : memref<128x128xf32, #tpu.memory_space<vmem>>, vector<128x128xf32>
    %cst_27 = arith.constant dense<0.000000e+00> : vector<4x128xf32>
    %34 = tpu.matmul %27, %33, %cst_27 {dimension_numbers = #tpu.dot_dimension_numbers<[1], [0], [0], [1], [0, 0, 1, 1], [], []>} : vector<4x128xf32>, vector<128x128xf32>, vector<4x128xf32> -> vector<4x128xf32>
    %c0_28 = arith.constant 0 : index
    %c0_29 = arith.constant 0 : index
    %35 = vector.load %arg8[%c0_28, %c0_29] : memref<1x128xf32, #tpu.memory_space<vmem>>, vector<1x128xf32>
    %36 = vector.broadcast %35 : vector<1x128xf32> to vector<4x128xf32>
    %37 = arith.addf %34, %36 : vector<4x128xf32>
    %c0_30 = arith.constant 0 : index
    %c0_31 = arith.constant 0 : index
    %38 = vector.load %arg12[%c0_30, %c0_31] : memref<4x128xf32, #tpu.memory_space<vmem>>, vector<4x128xf32>
    tpu.vector_store %arg12[%c0_30, %c0_31], %37 {strides = array<i32>} : memref<4x128xf32, #tpu.memory_space<vmem>>, vector<4x128xf32>,
    return
  }
}

module attributes {stable_mosaic.version = 11 : i64} {
  func.func @_fusion_kernel(%arg0: i32, %arg1: memref<4x128xf32, #tpu.memory_space<vmem>>, %arg2: memref<4x128xf32, #tpu.memory_space<vmem>>, %arg3: memref<4x128xf32, #tpu.memory_space<vmem>>, %arg4: memref<4x128xf32, #tpu.memory_space<vmem>>, %arg5: memref<128x128xf32, #tpu.memory_space<vmem>>, %arg6: memref<128x128xf32, #tpu.memory_space<vmem>>, %arg7: memref<1x128xf32, #tpu.memory_space<vmem>>, %arg8: memref<16x128xf32, #tpu.memory_space<vmem>>, %arg9: memref<16x128xf32, #tpu.memory_space<vmem>>, %arg10: memref<16x128xf32, #tpu.memory_space<vmem>>) attributes {dimension_semantics = [#tpu.dimension_semantics<parallel>], iteration_bounds = array<i64: 1>, scalar_prefetch = 0 : i64, scratch_operands = 2 : i64, tpu.core_type = #tpu.core_type<tc>, window_params = [{pipeline_mode = #tpu.pipeline_mode<synchronous>, transform_indices = @transform_0, window_bounds = array<i64: 4, 128>}, {transform_indices = @transform_1, window_bounds = array<i64: 4, 128>}, {pipeline_mode = #tpu.pipeline_mode<synchronous>, transform_indices = @transform_2, window_bounds = array<i64: 4, 128>}, {transform_indices = @transform_3, window_bounds = array<i64: 4, 128>}, {pipeline_mode = #tpu.pipeline_mode<synchronous>, transform_indices = @transform_4, window_bounds = array<i64: 128, 128>}, {pipeline_mode = #tpu.pipeline_mode<synchronous>, transform_indices = @transform_5, window_bounds = array<i64: 128, 128>}, {pipeline_mode = #tpu.pipeline_mode<synchronous>, transform_indices = @transform_6, window_bounds = array<i64: 1, 128>}, {transform_indices = @transform_7, window_bounds = array<i64: 16, 128>}]} {
    %c0 = arith.constant 0 : index
    %c0_0 = arith.constant 0 : index
    %0 = vector.load %arg1[%c0, %c0_0] : memref<4x128xf32, #tpu.memory_space<vmem>>, vector<4x128xf32>
    %c0_1 = arith.constant 0 : index
    %c0_2 = arith.constant 0 : index
    %1 = vector.load %arg3[%c0_1, %c0_2] : memref<4x128xf32, #tpu.memory_space<vmem>>, vector<4x128xf32>
    %c0_3 = arith.constant 0 : index
    %c0_4 = arith.constant 0 : index
    %2 = vector.load %arg2[%c0_3, %c0_4] : memref<4x128xf32, #tpu.memory_space<vmem>>, vector<4x128xf32>
    %c0_5 = arith.constant 0 : index
    %c0_6 = arith.constant 0 : index
    %3 = vector.load %arg4[%c0_5, %c0_6] : memref<4x128xf32, #tpu.memory_space<vmem>>, vector<4x128xf32>
    %4 = vector.extract_strided_slice %2 {offsets = [0, 0], sizes = [1, 128], strides = [1, 1]} : vector<4x128xf32> to vector<1x128xf32>
    %5 = vector.broadcast %4 : vector<1x128xf32> to vector<4x128xf32>
    %6 = arith.mulf %0, %5 : vector<4x128xf32>
    %c0_7 = arith.constant 0 : index
    %c0_8 = arith.constant 0 : index
    %7 = vector.load %arg9[%c0_7, %c0_8] : memref<16x128xf32, #tpu.memory_space<vmem>>, vector<4x128xf32>
    tpu.vector_store %arg9[%c0_7, %c0_8], %6 {strides = array<i32>} : memref<16x128xf32, #tpu.memory_space<vmem>>, vector<4x128xf32>,
    %8 = vector.extract_strided_slice %3 {offsets = [0, 0], sizes = [1, 128], strides = [1, 1]} : vector<4x128xf32> to vector<1x128xf32>
    %9 = vector.broadcast %8 : vector<1x128xf32> to vector<4x128xf32>
    %10 = arith.addf %1, %9 : vector<4x128xf32>
    %c0_9 = arith.constant 0 : index
    %c0_10 = arith.constant 0 : index
    %11 = vector.load %arg10[%c0_9, %c0_10] : memref<16x128xf32, #tpu.memory_space<vmem>>, vector<4x128xf32>
    tpu.vector_store %arg10[%c0_9, %c0_10], %10 {strides = array<i32>} : memref<16x128xf32, #tpu.memory_space<vmem>>, vector<4x128xf32>,
    %12 = vector.extract_strided_slice %2 {offsets = [1, 0], sizes = [1, 128], strides = [1, 1]} : vector<4x128xf32> to vector<1x128xf32>
    %13 = vector.broadcast %12 : vector<1x128xf32> to vector<4x128xf32>
    %14 = arith.mulf %0, %13 : vector<4x128xf32>
    %c4 = arith.constant 4 : index
    %c0_11 = arith.constant 0 : index
    %15 = vector.load %arg9[%c4, %c0_11] : memref<16x128xf32, #tpu.memory_space<vmem>>, vector<4x128xf32>
    tpu.vector_store %arg9[%c4, %c0_11], %14 {strides = array<i32>} : memref<16x128xf32, #tpu.memory_space<vmem>>, vector<4x128xf32>,
    %16 = vector.extract_strided_slice %3 {offsets = [1, 0], sizes = [1, 128], strides = [1, 1]} : vector<4x128xf32> to vector<1x128xf32>
    %17 = vector.broadcast %16 : vector<1x128xf32> to vector<4x128xf32>
    %18 = arith.addf %1, %17 : vector<4x128xf32>
    %c4_12 = arith.constant 4 : index
    %c0_13 = arith.constant 0 : index
    %19 = vector.load %arg10[%c4_12, %c0_13] : memref<16x128xf32, #tpu.memory_space<vmem>>, vector<4x128xf32>
    tpu.vector_store %arg10[%c4_12, %c0_13], %18 {strides = array<i32>} : memref<16x128xf32, #tpu.memory_space<vmem>>, vector<4x128xf32>,
    %20 = vector.extract_strided_slice %2 {offsets = [2, 0], sizes = [1, 128], strides = [1, 1]} : vector<4x128xf32> to vector<1x128xf32>
    %21 = vector.broadcast %20 : vector<1x128xf32> to vector<4x128xf32>
    %22 = arith.mulf %0, %21 : vector<4x128xf32>
    %c8 = arith.constant 8 : index
    %c0_14 = arith.constant 0 : index
    %23 = vector.load %arg9[%c8, %c0_14] : memref<16x128xf32, #tpu.memory_space<vmem>>, vector<4x128xf32>
    tpu.vector_store %arg9[%c8, %c0_14], %22 {strides = array<i32>} : memref<16x128xf32, #tpu.memory_space<vmem>>, vector<4x128xf32>,
    %24 = vector.extract_strided_slice %3 {offsets = [2, 0], sizes = [1, 128], strides = [1, 1]} : vector<4x128xf32> to vector<1x128xf32>
    %25 = vector.broadcast %24 : vector<1x128xf32> to vector<4x128xf32>
    %26 = arith.addf %1, %25 : vector<4x128xf32>
    %c8_15 = arith.constant 8 : index
    %c0_16 = arith.constant 0 : index
    %27 = vector.load %arg10[%c8_15, %c0_16] : memref<16x128xf32, #tpu.memory_space<vmem>>, vector<4x128xf32>
    tpu.vector_store %arg10[%c8_15, %c0_16], %26 {strides = array<i32>} : memref<16x128xf32, #tpu.memory_space<vmem>>, vector<4x128xf32>,
    %28 = vector.extract_strided_slice %2 {offsets = [3, 0], sizes = [1, 128], strides = [1, 1]} : vector<4x128xf32> to vector<1x128xf32>
    %29 = vector.broadcast %28 : vector<1x128xf32> to vector<4x128xf32>
    %30 = arith.mulf %0, %29 : vector<4x128xf32>
    %c12 = arith.constant 12 : index
    %c0_17 = arith.constant 0 : index
    %31 = vector.load %arg9[%c12, %c0_17] : memref<16x128xf32, #tpu.memory_space<vmem>>, vector<4x128xf32>
    tpu.vector_store %arg9[%c12, %c0_17], %30 {strides = array<i32>} : memref<16x128xf32, #tpu.memory_space<vmem>>, vector<4x128xf32>,
    %32 = vector.extract_strided_slice %3 {offsets = [3, 0], sizes = [1, 128], strides = [1, 1]} : vector<4x128xf32> to vector<1x128xf32>
    %33 = vector.broadcast %32 : vector<1x128xf32> to vector<4x128xf32>
    %34 = arith.addf %1, %33 : vector<4x128xf32>
    %c12_18 = arith.constant 12 : index
    %c0_19 = arith.constant 0 : index
    %35 = vector.load %arg10[%c12_18, %c0_19] : memref<16x128xf32, #tpu.memory_space<vmem>>, vector<4x128xf32>
    tpu.vector_store %arg10[%c12_18, %c0_19], %34 {strides = array<i32>} : memref<16x128xf32, #tpu.memory_space<vmem>>, vector<4x128xf32>,
    %c0_20 = arith.constant 0 : index
    %c0_21 = arith.constant 0 : index
    %36 = vector.load %arg9[%c0_20, %c0_21] : memref<16x128xf32, #tpu.memory_space<vmem>>, vector<16x128xf32>
    %c0_22 = arith.constant 0 : index
    %c0_23 = arith.constant 0 : index
    %37 = vector.load %arg5[%c0_22, %c0_23] : memref<128x128xf32, #tpu.memory_space<vmem>>, vector<128x128xf32>
    %cst = arith.constant dense<0.000000e+00> : vector<16x128xf32>
    %38 = tpu.matmul %36, %37, %cst {dimension_numbers = #tpu.dot_dimension_numbers<[1], [0], [0], [1], [0, 0, 1, 1], [], []>} : vector<16x128xf32>, vector<128x128xf32>, vector<16x128xf32> -> vector<16x128xf32>
    %c0_24 = arith.constant 0 : index
    %c0_25 = arith.constant 0 : index
    %39 = vector.load %arg10[%c0_24, %c0_25] : memref<16x128xf32, #tpu.memory_space<vmem>>, vector<16x128xf32>
    %40 = arith.addf %38, %39 : vector<16x128xf32>
    %cst_26 = arith.constant 0.000000e+00 : f32
    %41 = vector.broadcast %cst_26 : f32 to vector<16x128xf32>
    %42 = arith.maximumf %40, %41 : vector<16x128xf32>
    %c0_27 = arith.constant 0 : index
    %c0_28 = arith.constant 0 : index
    %43 = vector.load %arg6[%c0_27, %c0_28] : memref<128x128xf32, #tpu.memory_space<vmem>>, vector<128x128xf32>
    %cst_29 = arith.constant dense<0.000000e+00> : vector<16x128xf32>
    %44 = tpu.matmul %42, %43, %cst_29 {dimension_numbers = #tpu.dot_dimension_numbers<[1], [0], [0], [1], [0, 0, 1, 1], [], []>} : vector<16x128xf32>, vector<128x128xf32>, vector<16x128xf32> -> vector<16x128xf32>
    %c0_30 = arith.constant 0 : index
    %c0_31 = arith.constant 0 : index
    %45 = vector.load %arg7[%c0_30, %c0_31] : memref<1x128xf32, #tpu.memory_space<vmem>>, vector<1x128xf32>
    %46 = vector.broadcast %45 : vector<1x128xf32> to vector<16x128xf32>
    %47 = arith.addf %44, %46 : vector<16x128xf32>
    %c0_32 = arith.constant 0 : index
    %c0_33 = arith.constant 0 : index
    %48 = vector.load %arg8[%c0_32, %c0_33] : memref<16x128xf32, #tpu.memory_space<vmem>>, vector<16x128xf32>
    tpu.vector_store %arg8[%c0_32, %c0_33], %47 {strides = array<i32>} : memref<16x128xf32, #tpu.memory_space<vmem>>, vector<16x128xf32>,
    return
  }
  func.func @transform_0(%arg0: i32) -> (i32, i32) {
    %c0_i32 = arith.constant 0 : i32
    %c0_i32_0 = arith.constant 0 : i32
    %c0_i32_1 = arith.constant 0 : i32
    return %c0_i32, %c0_i32_0 : i32, i32
  }
  func.func @transform_1(%arg0: i32) -> (i32, i32) {
    %c0_i32 = arith.constant 0 : i32
    %c0_i32_0 = arith.constant 0 : i32
    return %arg0, %c0_i32 : i32, i32
  }
  func.func @transform_2(%arg0: i32) -> (i32, i32) {
    %c0_i32 = arith.constant 0 : i32
    %c0_i32_0 = arith.constant 0 : i32
    %c0_i32_1 = arith.constant 0 : i32
    return %c0_i32, %c0_i32_0 : i32, i32
  }
  func.func @transform_3(%arg0: i32) -> (i32, i32) {
    %c0_i32 = arith.constant 0 : i32
    %c0_i32_0 = arith.constant 0 : i32
    return %arg0, %c0_i32 : i32, i32
  }
  func.func @transform_4(%arg0: i32) -> (i32, i32) {
    %c0_i32 = arith.constant 0 : i32
    %c0_i32_0 = arith.constant 0 : i32
    %c0_i32_1 = arith.constant 0 : i32
    return %c0_i32, %c0_i32_0 : i32, i32
  }
  func.func @transform_5(%arg0: i32) -> (i32, i32) {
    %c0_i32 = arith.constant 0 : i32
    %c0_i32_0 = arith.constant 0 : i32
    %c0_i32_1 = arith.constant 0 : i32
    return %c0_i32, %c0_i32_0 : i32, i32
  }
  func.func @transform_6(%arg0: i32) -> (i32, i32) {
    %c0_i32 = arith.constant 0 : i32
    %c0_i32_0 = arith.constant 0 : i32
    %c0_i32_1 = arith.constant 0 : i32
    return %c0_i32, %c0_i32_0 : i32, i32
  }
  func.func @transform_7(%arg0: i32) -> (i32, i32) {
    %c0_i32 = arith.constant 0 : i32
    %c0_i32_0 = arith.constant 0 : i32
    return %arg0, %c0_i32 : i32, i32
  }
}

module attributes {stable_mosaic.version = 11 : i64} {
  func.func @kernel(%arg0: memref<32x384xf32, #tpu.memory_space<vmem>>, %arg1: memref<384x1536xf32, #tpu.memory_space<vmem>>, %arg2: memref<1x1536xf32, #tpu.memory_space<vmem>>, %arg3: memref<256x768xf32, #tpu.memory_space<vmem>>, %arg4: memref<1x768xf32, #tpu.memory_space<vmem>>, %arg5: memref<256x768xf32, #tpu.memory_space<vmem>>, %arg6: memref<1x768xf32, #tpu.memory_space<vmem>>, %arg7: memref<4x512xf32, #tpu.memory_space<vmem>>, %arg8: memref<32x1536xf32, #tpu.memory_space<vmem>>) attributes {dimension_semantics = [], scalar_prefetch = 0 : i64, scratch_operands = 1 : i64, tpu.core_type = #tpu.core_type<tc>} {
    %c0 = arith.constant 0 : index
    %c0_0 = arith.constant 0 : index
    %0 = vector.load %arg0[%c0, %c0_0] : memref<32x384xf32, #tpu.memory_space<vmem>>, vector<32x384xf32>
    %c0_1 = arith.constant 0 : index
    %c0_2 = arith.constant 0 : index
    %1 = vector.load %arg1[%c0_1, %c0_2] : memref<384x1536xf32, #tpu.memory_space<vmem>>, vector<384x1536xf32>
    %cst = arith.constant dense<0.000000e+00> : vector<32x1536xf32>
    %2 = tpu.matmul %0, %1, %cst {dimension_numbers = #tpu.dot_dimension_numbers<[1], [0], [0], [1], [0, 0, 1, 1], [], []>} : vector<32x384xf32>, vector<384x1536xf32>, vector<32x1536xf32> -> vector<32x1536xf32>
    %c0_3 = arith.constant 0 : index
    %c0_4 = arith.constant 0 : index
    %3 = vector.load %arg2[%c0_3, %c0_4] : memref<1x1536xf32, #tpu.memory_space<vmem>>, vector<1x1536xf32>
    %4 = vector.broadcast %3 : vector<1x1536xf32> to vector<32x1536xf32>
    %5 = arith.addf %2, %4 : vector<32x1536xf32>
    %c0_5 = arith.constant 0 : index
    %c0_6 = arith.constant 0 : index
    %6 = vector.load %arg8[%c0_5, %c0_6] : memref<32x1536xf32, #tpu.memory_space<vmem>>, vector<32x1536xf32>
    tpu.vector_store %arg8[%c0_5, %c0_6], %5 {strides = array<i32>} : memref<32x1536xf32, #tpu.memory_space<vmem>>, vector<32x1536xf32>,
    %c0_7 = arith.constant 0 : index
    %c0_8 = arith.constant 0 : index
    %7 = vector.load %arg3[%c0_7, %c0_8] : memref<256x768xf32, #tpu.memory_space<vmem>>, vector<256x768xf32>
    %c0_9 = arith.constant 0 : index
    %c0_10 = arith.constant 0 : index
    %8 = vector.load %arg5[%c0_9, %c0_10] : memref<256x768xf32, #tpu.memory_space<vmem>>, vector<256x768xf32>
    %c0_11 = arith.constant 0 : index
    %c0_12 = arith.constant 0 : index
    %9 = vector.load %arg4[%c0_11, %c0_12] : memref<1x768xf32, #tpu.memory_space<vmem>>, vector<1x768xf32>
    %c0_13 = arith.constant 0 : index
    %c0_14 = arith.constant 0 : index
    %10 = vector.load %arg6[%c0_13, %c0_14] : memref<1x768xf32, #tpu.memory_space<vmem>>, vector<1x768xf32>
    %cst_15 = arith.constant 0.000000e+00 : f32
    %11 = vector.broadcast %cst_15 : f32 to vector<4x256xf32>
    %cst_16 = arith.constant 0.000000e+00 : f32
    %12 = vector.broadcast %cst_16 : f32 to vector<4x256xf32>
    %c0_17 = arith.constant 0 : index
    %c0_18 = arith.constant 0 : index
    %13 = vector.load %arg8[%c0_17, %c0_18] : memref<32x1536xf32, #tpu.memory_space<vmem>>, vector<4x768xf32>
    %c28 = arith.constant 28 : index
    %c768 = arith.constant 768 : index
    %14 = vector.load %arg8[%c28, %c768] : memref<32x1536xf32, #tpu.memory_space<vmem>>, vector<4x768xf32>
    %cst_19 = arith.constant dense<0.000000e+00> : vector<4x768xf32>
    %15 = tpu.matmul %11, %7, %cst_19 {dimension_numbers = #tpu.dot_dimension_numbers<[1], [0], [0], [1], [0, 0, 1, 1], [], []>} : vector<4x256xf32>, vector<256x768xf32>, vector<4x768xf32> -> vector<4x768xf32>
    %16 = vector.broadcast %9 : vector<1x768xf32> to vector<4x768xf32>
    %17 = arith.addf %15, %16 : vector<4x768xf32>
    %cst_20 = arith.constant dense<0.000000e+00> : vector<4x768xf32>
    %18 = tpu.matmul %12, %8, %cst_20 {dimension_numbers = #tpu.dot_dimension_numbers<[1], [0], [0], [1], [0, 0, 1, 1], [], []>} : vector<4x256xf32>, vector<256x768xf32>, vector<4x768xf32> -> vector<4x768xf32>
    %19 = vector.broadcast %10 : vector<1x768xf32> to vector<4x768xf32>
    %20 = arith.addf %18, %19 : vector<4x768xf32>
    %21 = vector.extract_strided_slice %13 {offsets = [0, 0], sizes = [4, 256], strides = [1, 1]} : vector<4x768xf32> to vector<4x256xf32>
    %22 = vector.extract_strided_slice %17 {offsets = [0, 0], sizes = [4, 256], strides = [1, 1]} : vector<4x768xf32> to vector<4x256xf32>
    %23 = arith.addf %21, %22 : vector<4x256xf32>
    %24 = arith.negf %23 : vector<4x256xf32>
    %25 = math.exp %24 : vector<4x256xf32>
    %cst_21 = arith.constant 1.000000e+00 : f32
    %26 = vector.broadcast %cst_21 : f32 to vector<4x256xf32>
    %27 = arith.addf %26, %25 : vector<4x256xf32>
    %28 = arith.divf %26, %27 : vector<4x256xf32>
    %29 = vector.extract_strided_slice %13 {offsets = [0, 256], sizes = [4, 256], strides = [1, 1]} : vector<4x768xf32> to vector<4x256xf32>
    %30 = vector.extract_strided_slice %17 {offsets = [0, 256], sizes = [4, 256], strides = [1, 1]} : vector<4x768xf32> to vector<4x256xf32>
    %31 = arith.addf %29, %30 : vector<4x256xf32>
    %32 = arith.negf %31 : vector<4x256xf32>
    %33 = math.exp %32 : vector<4x256xf32>
    %cst_22 = arith.constant 1.000000e+00 : f32
    %34 = vector.broadcast %cst_22 : f32 to vector<4x256xf32>
    %35 = arith.addf %34, %33 : vector<4x256xf32>
    %36 = arith.divf %34, %35 : vector<4x256xf32>
    %37 = vector.extract_strided_slice %13 {offsets = [0, 512], sizes = [4, 256], strides = [1, 1]} : vector<4x768xf32> to vector<4x256xf32>
    %38 = vector.extract_strided_slice %17 {offsets = [0, 512], sizes = [4, 256], strides = [1, 1]} : vector<4x768xf32> to vector<4x256xf32>
    %39 = arith.mulf %28, %38 : vector<4x256xf32>
    %40 = arith.addf %37, %39 : vector<4x256xf32>
    %41 = math.tanh %40 : vector<4x256xf32>
    %cst_23 = arith.constant 1.000000e+00 : f32
    %42 = vector.broadcast %cst_23 : f32 to vector<4x256xf32>
    %43 = arith.subf %42, %36 : vector<4x256xf32>
    %44 = arith.mulf %43, %41 : vector<4x256xf32>
    %45 = arith.mulf %36, %11 : vector<4x256xf32>
    %46 = arith.addf %44, %45 : vector<4x256xf32>
    %47 = vector.extract_strided_slice %14 {offsets = [0, 0], sizes = [4, 256], strides = [1, 1]} : vector<4x768xf32> to vector<4x256xf32>
    %48 = vector.extract_strided_slice %20 {offsets = [0, 0], sizes = [4, 256], strides = [1, 1]} : vector<4x768xf32> to vector<4x256xf32>
    %49 = arith.addf %47, %48 : vector<4x256xf32>
    %50 = arith.negf %49 : vector<4x256xf32>
    %51 = math.exp %50 : vector<4x256xf32>
    %cst_24 = arith.constant 1.000000e+00 : f32
    %52 = vector.broadcast %cst_24 : f32 to vector<4x256xf32>
    %53 = arith.addf %52, %51 : vector<4x256xf32>
    %54 = arith.divf %52, %53 : vector<4x256xf32>
    %55 = vector.extract_strided_slice %14 {offsets = [0, 256], sizes = [4, 256], strides = [1, 1]} : vector<4x768xf32> to vector<4x256xf32>
    %56 = vector.extract_strided_slice %20 {offsets = [0, 256], sizes = [4, 256], strides = [1, 1]} : vector<4x768xf32> to vector<4x256xf32>
    %57 = arith.addf %55, %56 : vector<4x256xf32>
    %58 = arith.negf %57 : vector<4x256xf32>
    %59 = math.exp %58 : vector<4x256xf32>
    %cst_25 = arith.constant 1.000000e+00 : f32
    %60 = vector.broadcast %cst_25 : f32 to vector<4x256xf32>
    %61 = arith.addf %60, %59 : vector<4x256xf32>
    %62 = arith.divf %60, %61 : vector<4x256xf32>
    %63 = vector.extract_strided_slice %14 {offsets = [0, 512], sizes = [4, 256], strides = [1, 1]} : vector<4x768xf32> to vector<4x256xf32>
    %64 = vector.extract_strided_slice %20 {offsets = [0, 512], sizes = [4, 256], strides = [1, 1]} : vector<4x768xf32> to vector<4x256xf32>
    %65 = arith.mulf %54, %64 : vector<4x256xf32>
    %66 = arith.addf %63, %65 : vector<4x256xf32>
    %67 = math.tanh %66 : vector<4x256xf32>
    %cst_26 = arith.constant 1.000000e+00 : f32
    %68 = vector.broadcast %cst_26 : f32 to vector<4x256xf32>
    %69 = arith.subf %68, %62 : vector<4x256xf32>
    %70 = arith.mulf %69, %67 : vector<4x256xf32>
    %71 = arith.mulf %62, %12 : vector<4x256xf32>
    %72 = arith.addf %70, %71 : vector<4x256xf32>
    %c4 = arith.constant 4 : index
    %c0_27 = arith.constant 0 : index
    %73 = vector.load %arg8[%c4, %c0_27] : memref<32x1536xf32, #tpu.memory_space<vmem>>, vector<4x768xf32>
    %c24 = arith.constant 24 : index
    %c768_28 = arith.constant 768 : index
    %74 = vector.load %arg8[%c24, %c768_28] : memref<32x1536xf32, #tpu.memory_space<vmem>>, vector<4x768xf32>
    %cst_29 = arith.constant dense<0.000000e+00> : vector<4x768xf32>
    %75 = tpu.matmul %46, %7, %cst_29 {dimension_numbers = #tpu.dot_dimension_numbers<[1], [0], [0], [1], [0, 0, 1, 1], [], []>} : vector<4x256xf32>, vector<256x768xf32>, vector<4x768xf32> -> vector<4x768xf32>
    %76 = vector.broadcast %9 : vector<1x768xf32> to vector<4x768xf32>
    %77 = arith.addf %75, %76 : vector<4x768xf32>
    %cst_30 = arith.constant dense<0.000000e+00> : vector<4x768xf32>
    %78 = tpu.matmul %72, %8, %cst_30 {dimension_numbers = #tpu.dot_dimension_numbers<[1], [0], [0], [1], [0, 0, 1, 1], [], []>} : vector<4x256xf32>, vector<256x768xf32>, vector<4x768xf32> -> vector<4x768xf32>
    %79 = vector.broadcast %10 : vector<1x768xf32> to vector<4x768xf32>
    %80 = arith.addf %78, %79 : vector<4x768xf32>
    %81 = vector.extract_strided_slice %73 {offsets = [0, 0], sizes = [4, 256], strides = [1, 1]} : vector<4x768xf32> to vector<4x256xf32>
    %82 = vector.extract_strided_slice %77 {offsets = [0, 0], sizes = [4, 256], strides = [1, 1]} : vector<4x768xf32> to vector<4x256xf32>
    %83 = arith.addf %81, %82 : vector<4x256xf32>
    %84 = arith.negf %83 : vector<4x256xf32>
    %85 = math.exp %84 : vector<4x256xf32>
    %cst_31 = arith.constant 1.000000e+00 : f32
    %86 = vector.broadcast %cst_31 : f32 to vector<4x256xf32>
    %87 = arith.addf %86, %85 : vector<4x256xf32>
    %88 = arith.divf %86, %87 : vector<4x256xf32>
    %89 = vector.extract_strided_slice %73 {offsets = [0, 256], sizes = [4, 256], strides = [1, 1]} : vector<4x768xf32> to vector<4x256xf32>
    %90 = vector.extract_strided_slice %77 {offsets = [0, 256], sizes = [4, 256], strides = [1, 1]} : vector<4x768xf32> to vector<4x256xf32>
    %91 = arith.addf %89, %90 : vector<4x256xf32>
    %92 = arith.negf %91 : vector<4x256xf32>
    %93 = math.exp %92 : vector<4x256xf32>
    %cst_32 = arith.constant 1.000000e+00 : f32
    %94 = vector.broadcast %cst_32 : f32 to vector<4x256xf32>
    %95 = arith.addf %94, %93 : vector<4x256xf32>
    %96 = arith.divf %94, %95 : vector<4x256xf32>
    %97 = vector.extract_strided_slice %73 {offsets = [0, 512], sizes = [4, 256], strides = [1, 1]} : vector<4x768xf32> to vector<4x256xf32>
    %98 = vector.extract_strided_slice %77 {offsets = [0, 512], sizes = [4, 256], strides = [1, 1]} : vector<4x768xf32> to vector<4x256xf32>
    %99 = arith.mulf %88, %98 : vector<4x256xf32>
    %100 = arith.addf %97, %99 : vector<4x256xf32>
    %101 = math.tanh %100 : vector<4x256xf32>
    %cst_33 = arith.constant 1.000000e+00 : f32
    %102 = vector.broadcast %cst_33 : f32 to vector<4x256xf32>
    %103 = arith.subf %102, %96 : vector<4x256xf32>
    %104 = arith.mulf %103, %101 : vector<4x256xf32>
    %105 = arith.mulf %96, %46 : vector<4x256xf32>
    %106 = arith.addf %104, %105 : vector<4x256xf32>
    %107 = vector.extract_strided_slice %74 {offsets = [0, 0], sizes = [4, 256], strides = [1, 1]} : vector<4x768xf32> to vector<4x256xf32>
    %108 = vector.extract_strided_slice %80 {offsets = [0, 0], sizes = [4, 256], strides = [1, 1]} : vector<4x768xf32> to vector<4x256xf32>
    %109 = arith.addf %107, %108 : vector<4x256xf32>
    %110 = arith.negf %109 : vector<4x256xf32>
    %111 = math.exp %110 : vector<4x256xf32>
    %cst_34 = arith.constant 1.000000e+00 : f32
    %112 = vector.broadcast %cst_34 : f32 to vector<4x256xf32>
    %113 = arith.addf %112, %111 : vector<4x256xf32>
    %114 = arith.divf %112, %113 : vector<4x256xf32>
    %115 = vector.extract_strided_slice %74 {offsets = [0, 256], sizes = [4, 256], strides = [1, 1]} : vector<4x768xf32> to vector<4x256xf32>
    %116 = vector.extract_strided_slice %80 {offsets = [0, 256], sizes = [4, 256], strides = [1, 1]} : vector<4x768xf32> to vector<4x256xf32>
    %117 = arith.addf %115, %116 : vector<4x256xf32>
    %118 = arith.negf %117 : vector<4x256xf32>
    %119 = math.exp %118 : vector<4x256xf32>
    %cst_35 = arith.constant 1.000000e+00 : f32
    %120 = vector.broadcast %cst_35 : f32 to vector<4x256xf32>
    %121 = arith.addf %120, %119 : vector<4x256xf32>
    %122 = arith.divf %120, %121 : vector<4x256xf32>
    %123 = vector.extract_strided_slice %74 {offsets = [0, 512], sizes = [4, 256], strides = [1, 1]} : vector<4x768xf32> to vector<4x256xf32>
    %124 = vector.extract_strided_slice %80 {offsets = [0, 512], sizes = [4, 256], strides = [1, 1]} : vector<4x768xf32> to vector<4x256xf32>
    %125 = arith.mulf %114, %124 : vector<4x256xf32>
    %126 = arith.addf %123, %125 : vector<4x256xf32>
    %127 = math.tanh %126 : vector<4x256xf32>
    %cst_36 = arith.constant 1.000000e+00 : f32
    %128 = vector.broadcast %cst_36 : f32 to vector<4x256xf32>
    %129 = arith.subf %128, %122 : vector<4x256xf32>
    %130 = arith.mulf %129, %127 : vector<4x256xf32>
    %131 = arith.mulf %122, %72 : vector<4x256xf32>
    %132 = arith.addf %130, %131 : vector<4x256xf32>
    %c8 = arith.constant 8 : index
    %c0_37 = arith.constant 0 : index
    %133 = vector.load %arg8[%c8, %c0_37] : memref<32x1536xf32, #tpu.memory_space<vmem>>, vector<4x768xf32>
    %c20 = arith.constant 20 : index
    %c768_38 = arith.constant 768 : index
    %134 = vector.load %arg8[%c20, %c768_38] : memref<32x1536xf32, #tpu.memory_space<vmem>>, vector<4x768xf32>
    %cst_39 = arith.constant dense<0.000000e+00> : vector<4x768xf32>
    %135 = tpu.matmul %106, %7, %cst_39 {dimension_numbers = #tpu.dot_dimension_numbers<[1], [0], [0], [1], [0, 0, 1, 1], [], []>} : vector<4x256xf32>, vector<256x768xf32>, vector<4x768xf32> -> vector<4x768xf32>
    %136 = vector.broadcast %9 : vector<1x768xf32> to vector<4x768xf32>
    %137 = arith.addf %135, %136 : vector<4x768xf32>
    %cst_40 = arith.constant dense<0.000000e+00> : vector<4x768xf32>
    %138 = tpu.matmul %132, %8, %cst_40 {dimension_numbers = #tpu.dot_dimension_numbers<[1], [0], [0], [1], [0, 0, 1, 1], [], []>} : vector<4x256xf32>, vector<256x768xf32>, vector<4x768xf32> -> vector<4x768xf32>
    %139 = vector.broadcast %10 : vector<1x768xf32> to vector<4x768xf32>
    %140 = arith.addf %138, %139 : vector<4x768xf32>
    %141 = vector.extract_strided_slice %133 {offsets = [0, 0], sizes = [4, 256], strides = [1, 1]} : vector<4x768xf32> to vector<4x256xf32>
    %142 = vector.extract_strided_slice %137 {offsets = [0, 0], sizes = [4, 256], strides = [1, 1]} : vector<4x768xf32> to vector<4x256xf32>
    %143 = arith.addf %141, %142 : vector<4x256xf32>
    %144 = arith.negf %143 : vector<4x256xf32>
    %145 = math.exp %144 : vector<4x256xf32>
    %cst_41 = arith.constant 1.000000e+00 : f32
    %146 = vector.broadcast %cst_41 : f32 to vector<4x256xf32>
    %147 = arith.addf %146, %145 : vector<4x256xf32>
    %148 = arith.divf %146, %147 : vector<4x256xf32>
    %149 = vector.extract_strided_slice %133 {offsets = [0, 256], sizes = [4, 256], strides = [1, 1]} : vector<4x768xf32> to vector<4x256xf32>
    %150 = vector.extract_strided_slice %137 {offsets = [0, 256], sizes = [4, 256], strides = [1, 1]} : vector<4x768xf32> to vector<4x256xf32>
    %151 = arith.addf %149, %150 : vector<4x256xf32>
    %152 = arith.negf %151 : vector<4x256xf32>
    %153 = math.exp %152 : vector<4x256xf32>
    %cst_42 = arith.constant 1.000000e+00 : f32
    %154 = vector.broadcast %cst_42 : f32 to vector<4x256xf32>
    %155 = arith.addf %154, %153 : vector<4x256xf32>
    %156 = arith.divf %154, %155 : vector<4x256xf32>
    %157 = vector.extract_strided_slice %133 {offsets = [0, 512], sizes = [4, 256], strides = [1, 1]} : vector<4x768xf32> to vector<4x256xf32>
    %158 = vector.extract_strided_slice %137 {offsets = [0, 512], sizes = [4, 256], strides = [1, 1]} : vector<4x768xf32> to vector<4x256xf32>
    %159 = arith.mulf %148, %158 : vector<4x256xf32>
    %160 = arith.addf %157, %159 : vector<4x256xf32>
    %161 = math.tanh %160 : vector<4x256xf32>
    %cst_43 = arith.constant 1.000000e+00 : f32
    %162 = vector.broadcast %cst_43 : f32 to vector<4x256xf32>
    %163 = arith.subf %162, %156 : vector<4x256xf32>
    %164 = arith.mulf %163, %161 : vector<4x256xf32>
    %165 = arith.mulf %156, %106 : vector<4x256xf32>
    %166 = arith.addf %164, %165 : vector<4x256xf32>
    %167 = vector.extract_strided_slice %134 {offsets = [0, 0], sizes = [4, 256], strides = [1, 1]} : vector<4x768xf32> to vector<4x256xf32>
    %168 = vector.extract_strided_slice %140 {offsets = [0, 0], sizes = [4, 256], strides = [1, 1]} : vector<4x768xf32> to vector<4x256xf32>
    %169 = arith.addf %167, %168 : vector<4x256xf32>
    %170 = arith.negf %169 : vector<4x256xf32>
    %171 = math.exp %170 : vector<4x256xf32>
    %cst_44 = arith.constant 1.000000e+00 : f32
    %172 = vector.broadcast %cst_44 : f32 to vector<4x256xf32>
    %173 = arith.addf %172, %171 : vector<4x256xf32>
    %174 = arith.divf %172, %173 : vector<4x256xf32>
    %175 = vector.extract_strided_slice %134 {offsets = [0, 256], sizes = [4, 256], strides = [1, 1]} : vector<4x768xf32> to vector<4x256xf32>
    %176 = vector.extract_strided_slice %140 {offsets = [0, 256], sizes = [4, 256], strides = [1, 1]} : vector<4x768xf32> to vector<4x256xf32>
    %177 = arith.addf %175, %176 : vector<4x256xf32>
    %178 = arith.negf %177 : vector<4x256xf32>
    %179 = math.exp %178 : vector<4x256xf32>
    %cst_45 = arith.constant 1.000000e+00 : f32
    %180 = vector.broadcast %cst_45 : f32 to vector<4x256xf32>
    %181 = arith.addf %180, %179 : vector<4x256xf32>
    %182 = arith.divf %180, %181 : vector<4x256xf32>
    %183 = vector.extract_strided_slice %134 {offsets = [0, 512], sizes = [4, 256], strides = [1, 1]} : vector<4x768xf32> to vector<4x256xf32>
    %184 = vector.extract_strided_slice %140 {offsets = [0, 512], sizes = [4, 256], strides = [1, 1]} : vector<4x768xf32> to vector<4x256xf32>
    %185 = arith.mulf %174, %184 : vector<4x256xf32>
    %186 = arith.addf %183, %185 : vector<4x256xf32>
    %187 = math.tanh %186 : vector<4x256xf32>
    %cst_46 = arith.constant 1.000000e+00 : f32
    %188 = vector.broadcast %cst_46 : f32 to vector<4x256xf32>
    %189 = arith.subf %188, %182 : vector<4x256xf32>
    %190 = arith.mulf %189, %187 : vector<4x256xf32>
    %191 = arith.mulf %182, %132 : vector<4x256xf32>
    %192 = arith.addf %190, %191 : vector<4x256xf32>
    %c12 = arith.constant 12 : index
    %c0_47 = arith.constant 0 : index
    %193 = vector.load %arg8[%c12, %c0_47] : memref<32x1536xf32, #tpu.memory_space<vmem>>, vector<4x768xf32>
    %c16 = arith.constant 16 : index
    %c768_48 = arith.constant 768 : index
    %194 = vector.load %arg8[%c16, %c768_48] : memref<32x1536xf32, #tpu.memory_space<vmem>>, vector<4x768xf32>
    %cst_49 = arith.constant dense<0.000000e+00> : vector<4x768xf32>
    %195 = tpu.matmul %166, %7, %cst_49 {dimension_numbers = #tpu.dot_dimension_numbers<[1], [0], [0], [1], [0, 0, 1, 1], [], []>} : vector<4x256xf32>, vector<256x768xf32>, vector<4x768xf32> -> vector<4x768xf32>
    %196 = vector.broadcast %9 : vector<1x768xf32> to vector<4x768xf32>
    %197 = arith.addf %195, %196 : vector<4x768xf32>
    %cst_50 = arith.constant dense<0.000000e+00> : vector<4x768xf32>
    %198 = tpu.matmul %192, %8, %cst_50 {dimension_numbers = #tpu.dot_dimension_numbers<[1], [0], [0], [1], [0, 0, 1, 1], [], []>} : vector<4x256xf32>, vector<256x768xf32>, vector<4x768xf32> -> vector<4x768xf32>
    %199 = vector.broadcast %10 : vector<1x768xf32> to vector<4x768xf32>
    %200 = arith.addf %198, %199 : vector<4x768xf32>
    %201 = vector.extract_strided_slice %193 {offsets = [0, 0], sizes = [4, 256], strides = [1, 1]} : vector<4x768xf32> to vector<4x256xf32>
    %202 = vector.extract_strided_slice %197 {offsets = [0, 0], sizes = [4, 256], strides = [1, 1]} : vector<4x768xf32> to vector<4x256xf32>
    %203 = arith.addf %201, %202 : vector<4x256xf32>
    %204 = arith.negf %203 : vector<4x256xf32>
    %205 = math.exp %204 : vector<4x256xf32>
    %cst_51 = arith.constant 1.000000e+00 : f32
    %206 = vector.broadcast %cst_51 : f32 to vector<4x256xf32>
    %207 = arith.addf %206, %205 : vector<4x256xf32>
    %208 = arith.divf %206, %207 : vector<4x256xf32>
    %209 = vector.extract_strided_slice %193 {offsets = [0, 256], sizes = [4, 256], strides = [1, 1]} : vector<4x768xf32> to vector<4x256xf32>
    %210 = vector.extract_strided_slice %197 {offsets = [0, 256], sizes = [4, 256], strides = [1, 1]} : vector<4x768xf32> to vector<4x256xf32>
    %211 = arith.addf %209, %210 : vector<4x256xf32>
    %212 = arith.negf %211 : vector<4x256xf32>
    %213 = math.exp %212 : vector<4x256xf32>
    %cst_52 = arith.constant 1.000000e+00 : f32
    %214 = vector.broadcast %cst_52 : f32 to vector<4x256xf32>
    %215 = arith.addf %214, %213 : vector<4x256xf32>
    %216 = arith.divf %214, %215 : vector<4x256xf32>
    %217 = vector.extract_strided_slice %193 {offsets = [0, 512], sizes = [4, 256], strides = [1, 1]} : vector<4x768xf32> to vector<4x256xf32>
    %218 = vector.extract_strided_slice %197 {offsets = [0, 512], sizes = [4, 256], strides = [1, 1]} : vector<4x768xf32> to vector<4x256xf32>
    %219 = arith.mulf %208, %218 : vector<4x256xf32>
    %220 = arith.addf %217, %219 : vector<4x256xf32>
    %221 = math.tanh %220 : vector<4x256xf32>
    %cst_53 = arith.constant 1.000000e+00 : f32
    %222 = vector.broadcast %cst_53 : f32 to vector<4x256xf32>
    %223 = arith.subf %222, %216 : vector<4x256xf32>
    %224 = arith.mulf %223, %221 : vector<4x256xf32>
    %225 = arith.mulf %216, %166 : vector<4x256xf32>
    %226 = arith.addf %224, %225 : vector<4x256xf32>
    %227 = vector.extract_strided_slice %194 {offsets = [0, 0], sizes = [4, 256], strides = [1, 1]} : vector<4x768xf32> to vector<4x256xf32>
    %228 = vector.extract_strided_slice %200 {offsets = [0, 0], sizes = [4, 256], strides = [1, 1]} : vector<4x768xf32> to vector<4x256xf32>
    %229 = arith.addf %227, %228 : vector<4x256xf32>
    %230 = arith.negf %229 : vector<4x256xf32>
    %231 = math.exp %230 : vector<4x256xf32>
    %cst_54 = arith.constant 1.000000e+00 : f32
    %232 = vector.broadcast %cst_54 : f32 to vector<4x256xf32>
    %233 = arith.addf %232, %231 : vector<4x256xf32>
    %234 = arith.divf %232, %233 : vector<4x256xf32>
    %235 = vector.extract_strided_slice %194 {offsets = [0, 256], sizes = [4, 256], strides = [1, 1]} : vector<4x768xf32> to vector<4x256xf32>
    %236 = vector.extract_strided_slice %200 {offsets = [0, 256], sizes = [4, 256], strides = [1, 1]} : vector<4x768xf32> to vector<4x256xf32>
    %237 = arith.addf %235, %236 : vector<4x256xf32>
    %238 = arith.negf %237 : vector<4x256xf32>
    %239 = math.exp %238 : vector<4x256xf32>
    %cst_55 = arith.constant 1.000000e+00 : f32
    %240 = vector.broadcast %cst_55 : f32 to vector<4x256xf32>
    %241 = arith.addf %240, %239 : vector<4x256xf32>
    %242 = arith.divf %240, %241 : vector<4x256xf32>
    %243 = vector.extract_strided_slice %194 {offsets = [0, 512], sizes = [4, 256], strides = [1, 1]} : vector<4x768xf32> to vector<4x256xf32>
    %244 = vector.extract_strided_slice %200 {offsets = [0, 512], sizes = [4, 256], strides = [1, 1]} : vector<4x768xf32> to vector<4x256xf32>
    %245 = arith.mulf %234, %244 : vector<4x256xf32>
    %246 = arith.addf %243, %245 : vector<4x256xf32>
    %247 = math.tanh %246 : vector<4x256xf32>
    %cst_56 = arith.constant 1.000000e+00 : f32
    %248 = vector.broadcast %cst_56 : f32 to vector<4x256xf32>
    %249 = arith.subf %248, %242 : vector<4x256xf32>
    %250 = arith.mulf %249, %247 : vector<4x256xf32>
    %251 = arith.mulf %242, %192 : vector<4x256xf32>
    %252 = arith.addf %250, %251 : vector<4x256xf32>
    %c16_57 = arith.constant 16 : index
    %c0_58 = arith.constant 0 : index
    %253 = vector.load %arg8[%c16_57, %c0_58] : memref<32x1536xf32, #tpu.memory_space<vmem>>, vector<4x768xf32>
    %c12_59 = arith.constant 12 : index
    %c768_60 = arith.constant 768 : index
    %254 = vector.load %arg8[%c12_59, %c768_60] : memref<32x1536xf32, #tpu.memory_space<vmem>>, vector<4x768xf32>
    %cst_61 = arith.constant dense<0.000000e+00> : vector<4x768xf32>
    %255 = tpu.matmul %226, %7, %cst_61 {dimension_numbers = #tpu.dot_dimension_numbers<[1], [0], [0], [1], [0, 0, 1, 1], [], []>} : vector<4x256xf32>, vector<256x768xf32>, vector<4x768xf32> -> vector<4x768xf32>
    %256 = vector.broadcast %9 : vector<1x768xf32> to vector<4x768xf32>
    %257 = arith.addf %255, %256 : vector<4x768xf32>
    %cst_62 = arith.constant dense<0.000000e+00> : vector<4x768xf32>
    %258 = tpu.matmul %252, %8, %cst_62 {dimension_numbers = #tpu.dot_dimension_numbers<[1], [0], [0], [1], [0, 0, 1, 1], [], []>} : vector<4x256xf32>, vector<256x768xf32>, vector<4x768xf32> -> vector<4x768xf32>
    %259 = vector.broadcast %10 : vector<1x768xf32> to vector<4x768xf32>
    %260 = arith.addf %258, %259 : vector<4x768xf32>
    %261 = vector.extract_strided_slice %253 {offsets = [0, 0], sizes = [4, 256], strides = [1, 1]} : vector<4x768xf32> to vector<4x256xf32>
    %262 = vector.extract_strided_slice %257 {offsets = [0, 0], sizes = [4, 256], strides = [1, 1]} : vector<4x768xf32> to vector<4x256xf32>
    %263 = arith.addf %261, %262 : vector<4x256xf32>
    %264 = arith.negf %263 : vector<4x256xf32>
    %265 = math.exp %264 : vector<4x256xf32>
    %cst_63 = arith.constant 1.000000e+00 : f32
    %266 = vector.broadcast %cst_63 : f32 to vector<4x256xf32>
    %267 = arith.addf %266, %265 : vector<4x256xf32>
    %268 = arith.divf %266, %267 : vector<4x256xf32>
    %269 = vector.extract_strided_slice %253 {offsets = [0, 256], sizes = [4, 256], strides = [1, 1]} : vector<4x768xf32> to vector<4x256xf32>
    %270 = vector.extract_strided_slice %257 {offsets = [0, 256], sizes = [4, 256], strides = [1, 1]} : vector<4x768xf32> to vector<4x256xf32>
    %271 = arith.addf %269, %270 : vector<4x256xf32>
    %272 = arith.negf %271 : vector<4x256xf32>
    %273 = math.exp %272 : vector<4x256xf32>
    %cst_64 = arith.constant 1.000000e+00 : f32
    %274 = vector.broadcast %cst_64 : f32 to vector<4x256xf32>
    %275 = arith.addf %274, %273 : vector<4x256xf32>
    %276 = arith.divf %274, %275 : vector<4x256xf32>
    %277 = vector.extract_strided_slice %253 {offsets = [0, 512], sizes = [4, 256], strides = [1, 1]} : vector<4x768xf32> to vector<4x256xf32>
    %278 = vector.extract_strided_slice %257 {offsets = [0, 512], sizes = [4, 256], strides = [1, 1]} : vector<4x768xf32> to vector<4x256xf32>
    %279 = arith.mulf %268, %278 : vector<4x256xf32>
    %280 = arith.addf %277, %279 : vector<4x256xf32>
    %281 = math.tanh %280 : vector<4x256xf32>
    %cst_65 = arith.constant 1.000000e+00 : f32
    %282 = vector.broadcast %cst_65 : f32 to vector<4x256xf32>
    %283 = arith.subf %282, %276 : vector<4x256xf32>
    %284 = arith.mulf %283, %281 : vector<4x256xf32>
    %285 = arith.mulf %276, %226 : vector<4x256xf32>
    %286 = arith.addf %284, %285 : vector<4x256xf32>
    %287 = vector.extract_strided_slice %254 {offsets = [0, 0], sizes = [4, 256], strides = [1, 1]} : vector<4x768xf32> to vector<4x256xf32>
    %288 = vector.extract_strided_slice %260 {offsets = [0, 0], sizes = [4, 256], strides = [1, 1]} : vector<4x768xf32> to vector<4x256xf32>
    %289 = arith.addf %287, %288 : vector<4x256xf32>
    %290 = arith.negf %289 : vector<4x256xf32>
    %291 = math.exp %290 : vector<4x256xf32>
    %cst_66 = arith.constant 1.000000e+00 : f32
    %292 = vector.broadcast %cst_66 : f32 to vector<4x256xf32>
    %293 = arith.addf %292, %291 : vector<4x256xf32>
    %294 = arith.divf %292, %293 : vector<4x256xf32>
    %295 = vector.extract_strided_slice %254 {offsets = [0, 256], sizes = [4, 256], strides = [1, 1]} : vector<4x768xf32> to vector<4x256xf32>
    %296 = vector.extract_strided_slice %260 {offsets = [0, 256], sizes = [4, 256], strides = [1, 1]} : vector<4x768xf32> to vector<4x256xf32>
    %297 = arith.addf %295, %296 : vector<4x256xf32>
    %298 = arith.negf %297 : vector<4x256xf32>
    %299 = math.exp %298 : vector<4x256xf32>
    %cst_67 = arith.constant 1.000000e+00 : f32
    %300 = vector.broadcast %cst_67 : f32 to vector<4x256xf32>
    %301 = arith.addf %300, %299 : vector<4x256xf32>
    %302 = arith.divf %300, %301 : vector<4x256xf32>
    %303 = vector.extract_strided_slice %254 {offsets = [0, 512], sizes = [4, 256], strides = [1, 1]} : vector<4x768xf32> to vector<4x256xf32>
    %304 = vector.extract_strided_slice %260 {offsets = [0, 512], sizes = [4, 256], strides = [1, 1]} : vector<4x768xf32> to vector<4x256xf32>
    %305 = arith.mulf %294, %304 : vector<4x256xf32>
    %306 = arith.addf %303, %305 : vector<4x256xf32>
    %307 = math.tanh %306 : vector<4x256xf32>
    %cst_68 = arith.constant 1.000000e+00 : f32
    %308 = vector.broadcast %cst_68 : f32 to vector<4x256xf32>
    %309 = arith.subf %308, %302 : vector<4x256xf32>
    %310 = arith.mulf %309, %307 : vector<4x256xf32>
    %311 = arith.mulf %302, %252 : vector<4x256xf32>
    %312 = arith.addf %310, %311 : vector<4x256xf32>
    %c20_69 = arith.constant 20 : index
    %c0_70 = arith.constant 0 : index
    %313 = vector.load %arg8[%c20_69, %c0_70] : memref<32x1536xf32, #tpu.memory_space<vmem>>, vector<4x768xf32>
    %c8_71 = arith.constant 8 : index
    %c768_72 = arith.constant 768 : index
    %314 = vector.load %arg8[%c8_71, %c768_72] : memref<32x1536xf32, #tpu.memory_space<vmem>>, vector<4x768xf32>
    %cst_73 = arith.constant dense<0.000000e+00> : vector<4x768xf32>
    %315 = tpu.matmul %286, %7, %cst_73 {dimension_numbers = #tpu.dot_dimension_numbers<[1], [0], [0], [1], [0, 0, 1, 1], [], []>} : vector<4x256xf32>, vector<256x768xf32>, vector<4x768xf32> -> vector<4x768xf32>
    %316 = vector.broadcast %9 : vector<1x768xf32> to vector<4x768xf32>
    %317 = arith.addf %315, %316 : vector<4x768xf32>
    %cst_74 = arith.constant dense<0.000000e+00> : vector<4x768xf32>
    %318 = tpu.matmul %312, %8, %cst_74 {dimension_numbers = #tpu.dot_dimension_numbers<[1], [0], [0], [1], [0, 0, 1, 1], [], []>} : vector<4x256xf32>, vector<256x768xf32>, vector<4x768xf32> -> vector<4x768xf32>
    %319 = vector.broadcast %10 : vector<1x768xf32> to vector<4x768xf32>
    %320 = arith.addf %318, %319 : vector<4x768xf32>
    %321 = vector.extract_strided_slice %313 {offsets = [0, 0], sizes = [4, 256], strides = [1, 1]} : vector<4x768xf32> to vector<4x256xf32>
    %322 = vector.extract_strided_slice %317 {offsets = [0, 0], sizes = [4, 256], strides = [1, 1]} : vector<4x768xf32> to vector<4x256xf32>
    %323 = arith.addf %321, %322 : vector<4x256xf32>
    %324 = arith.negf %323 : vector<4x256xf32>
    %325 = math.exp %324 : vector<4x256xf32>
    %cst_75 = arith.constant 1.000000e+00 : f32
    %326 = vector.broadcast %cst_75 : f32 to vector<4x256xf32>
    %327 = arith.addf %326, %325 : vector<4x256xf32>
    %328 = arith.divf %326, %327 : vector<4x256xf32>
    %329 = vector.extract_strided_slice %313 {offsets = [0, 256], sizes = [4, 256], strides = [1, 1]} : vector<4x768xf32> to vector<4x256xf32>
    %330 = vector.extract_strided_slice %317 {offsets = [0, 256], sizes = [4, 256], strides = [1, 1]} : vector<4x768xf32> to vector<4x256xf32>
    %331 = arith.addf %329, %330 : vector<4x256xf32>
    %332 = arith.negf %331 : vector<4x256xf32>
    %333 = math.exp %332 : vector<4x256xf32>
    %cst_76 = arith.constant 1.000000e+00 : f32
    %334 = vector.broadcast %cst_76 : f32 to vector<4x256xf32>
    %335 = arith.addf %334, %333 : vector<4x256xf32>
    %336 = arith.divf %334, %335 : vector<4x256xf32>
    %337 = vector.extract_strided_slice %313 {offsets = [0, 512], sizes = [4, 256], strides = [1, 1]} : vector<4x768xf32> to vector<4x256xf32>
    %338 = vector.extract_strided_slice %317 {offsets = [0, 512], sizes = [4, 256], strides = [1, 1]} : vector<4x768xf32> to vector<4x256xf32>
    %339 = arith.mulf %328, %338 : vector<4x256xf32>
    %340 = arith.addf %337, %339 : vector<4x256xf32>
    %341 = math.tanh %340 : vector<4x256xf32>
    %cst_77 = arith.constant 1.000000e+00 : f32
    %342 = vector.broadcast %cst_77 : f32 to vector<4x256xf32>
    %343 = arith.subf %342, %336 : vector<4x256xf32>
    %344 = arith.mulf %343, %341 : vector<4x256xf32>
    %345 = arith.mulf %336, %286 : vector<4x256xf32>
    %346 = arith.addf %344, %345 : vector<4x256xf32>
    %347 = vector.extract_strided_slice %314 {offsets = [0, 0], sizes = [4, 256], strides = [1, 1]} : vector<4x768xf32> to vector<4x256xf32>
    %348 = vector.extract_strided_slice %320 {offsets = [0, 0], sizes = [4, 256], strides = [1, 1]} : vector<4x768xf32> to vector<4x256xf32>
    %349 = arith.addf %347, %348 : vector<4x256xf32>
    %350 = arith.negf %349 : vector<4x256xf32>
    %351 = math.exp %350 : vector<4x256xf32>
    %cst_78 = arith.constant 1.000000e+00 : f32
    %352 = vector.broadcast %cst_78 : f32 to vector<4x256xf32>
    %353 = arith.addf %352, %351 : vector<4x256xf32>
    %354 = arith.divf %352, %353 : vector<4x256xf32>
    %355 = vector.extract_strided_slice %314 {offsets = [0, 256], sizes = [4, 256], strides = [1, 1]} : vector<4x768xf32> to vector<4x256xf32>
    %356 = vector.extract_strided_slice %320 {offsets = [0, 256], sizes = [4, 256], strides = [1, 1]} : vector<4x768xf32> to vector<4x256xf32>
    %357 = arith.addf %355, %356 : vector<4x256xf32>
    %358 = arith.negf %357 : vector<4x256xf32>
    %359 = math.exp %358 : vector<4x256xf32>
    %cst_79 = arith.constant 1.000000e+00 : f32
    %360 = vector.broadcast %cst_79 : f32 to vector<4x256xf32>
    %361 = arith.addf %360, %359 : vector<4x256xf32>
    %362 = arith.divf %360, %361 : vector<4x256xf32>
    %363 = vector.extract_strided_slice %314 {offsets = [0, 512], sizes = [4, 256], strides = [1, 1]} : vector<4x768xf32> to vector<4x256xf32>
    %364 = vector.extract_strided_slice %320 {offsets = [0, 512], sizes = [4, 256], strides = [1, 1]} : vector<4x768xf32> to vector<4x256xf32>
    %365 = arith.mulf %354, %364 : vector<4x256xf32>
    %366 = arith.addf %363, %365 : vector<4x256xf32>
    %367 = math.tanh %366 : vector<4x256xf32>
    %cst_80 = arith.constant 1.000000e+00 : f32
    %368 = vector.broadcast %cst_80 : f32 to vector<4x256xf32>
    %369 = arith.subf %368, %362 : vector<4x256xf32>
    %370 = arith.mulf %369, %367 : vector<4x256xf32>
    %371 = arith.mulf %362, %312 : vector<4x256xf32>
    %372 = arith.addf %370, %371 : vector<4x256xf32>
    %c24_81 = arith.constant 24 : index
    %c0_82 = arith.constant 0 : index
    %373 = vector.load %arg8[%c24_81, %c0_82] : memref<32x1536xf32, #tpu.memory_space<vmem>>, vector<4x768xf32>
    %c4_83 = arith.constant 4 : index
    %c768_84 = arith.constant 768 : index
    %374 = vector.load %arg8[%c4_83, %c768_84] : memref<32x1536xf32, #tpu.memory_space<vmem>>, vector<4x768xf32>
    %cst_85 = arith.constant dense<0.000000e+00> : vector<4x768xf32>
    %375 = tpu.matmul %346, %7, %cst_85 {dimension_numbers = #tpu.dot_dimension_numbers<[1], [0], [0], [1], [0, 0, 1, 1], [], []>} : vector<4x256xf32>, vector<256x768xf32>, vector<4x768xf32> -> vector<4x768xf32>
    %376 = vector.broadcast %9 : vector<1x768xf32> to vector<4x768xf32>
    %377 = arith.addf %375, %376 : vector<4x768xf32>
    %cst_86 = arith.constant dense<0.000000e+00> : vector<4x768xf32>
    %378 = tpu.matmul %372, %8, %cst_86 {dimension_numbers = #tpu.dot_dimension_numbers<[1], [0], [0], [1], [0, 0, 1, 1], [], []>} : vector<4x256xf32>, vector<256x768xf32>, vector<4x768xf32> -> vector<4x768xf32>
    %379 = vector.broadcast %10 : vector<1x768xf32> to vector<4x768xf32>
    %380 = arith.addf %378, %379 : vector<4x768xf32>
    %381 = vector.extract_strided_slice %373 {offsets = [0, 0], sizes = [4, 256], strides = [1, 1]} : vector<4x768xf32> to vector<4x256xf32>
    %382 = vector.extract_strided_slice %377 {offsets = [0, 0], sizes = [4, 256], strides = [1, 1]} : vector<4x768xf32> to vector<4x256xf32>
    %383 = arith.addf %381, %382 : vector<4x256xf32>
    %384 = arith.negf %383 : vector<4x256xf32>
    %385 = math.exp %384 : vector<4x256xf32>
    %cst_87 = arith.constant 1.000000e+00 : f32
    %386 = vector.broadcast %cst_87 : f32 to vector<4x256xf32>
    %387 = arith.addf %386, %385 : vector<4x256xf32>
    %388 = arith.divf %386, %387 : vector<4x256xf32>
    %389 = vector.extract_strided_slice %373 {offsets = [0, 256], sizes = [4, 256], strides = [1, 1]} : vector<4x768xf32> to vector<4x256xf32>
    %390 = vector.extract_strided_slice %377 {offsets = [0, 256], sizes = [4, 256], strides = [1, 1]} : vector<4x768xf32> to vector<4x256xf32>
    %391 = arith.addf %389, %390 : vector<4x256xf32>
    %392 = arith.negf %391 : vector<4x256xf32>
    %393 = math.exp %392 : vector<4x256xf32>
    %cst_88 = arith.constant 1.000000e+00 : f32
    %394 = vector.broadcast %cst_88 : f32 to vector<4x256xf32>
    %395 = arith.addf %394, %393 : vector<4x256xf32>
    %396 = arith.divf %394, %395 : vector<4x256xf32>
    %397 = vector.extract_strided_slice %373 {offsets = [0, 512], sizes = [4, 256], strides = [1, 1]} : vector<4x768xf32> to vector<4x256xf32>
    %398 = vector.extract_strided_slice %377 {offsets = [0, 512], sizes = [4, 256], strides = [1, 1]} : vector<4x768xf32> to vector<4x256xf32>
    %399 = arith.mulf %388, %398 : vector<4x256xf32>
    %400 = arith.addf %397, %399 : vector<4x256xf32>
    %401 = math.tanh %400 : vector<4x256xf32>
    %cst_89 = arith.constant 1.000000e+00 : f32
    %402 = vector.broadcast %cst_89 : f32 to vector<4x256xf32>
    %403 = arith.subf %402, %396 : vector<4x256xf32>
    %404 = arith.mulf %403, %401 : vector<4x256xf32>
    %405 = arith.mulf %396, %346 : vector<4x256xf32>
    %406 = arith.addf %404, %405 : vector<4x256xf32>
    %407 = vector.extract_strided_slice %374 {offsets = [0, 0], sizes = [4, 256], strides = [1, 1]} : vector<4x768xf32> to vector<4x256xf32>
    %408 = vector.extract_strided_slice %380 {offsets = [0, 0], sizes = [4, 256], strides = [1, 1]} : vector<4x768xf32> to vector<4x256xf32>
    %409 = arith.addf %407, %408 : vector<4x256xf32>
    %410 = arith.negf %409 : vector<4x256xf32>
    %411 = math.exp %410 : vector<4x256xf32>
    %cst_90 = arith.constant 1.000000e+00 : f32
    %412 = vector.broadcast %cst_90 : f32 to vector<4x256xf32>
    %413 = arith.addf %412, %411 : vector<4x256xf32>
    %414 = arith.divf %412, %413 : vector<4x256xf32>
    %415 = vector.extract_strided_slice %374 {offsets = [0, 256], sizes = [4, 256], strides = [1, 1]} : vector<4x768xf32> to vector<4x256xf32>
    %416 = vector.extract_strided_slice %380 {offsets = [0, 256], sizes = [4, 256], strides = [1, 1]} : vector<4x768xf32> to vector<4x256xf32>
    %417 = arith.addf %415, %416 : vector<4x256xf32>
    %418 = arith.negf %417 : vector<4x256xf32>
    %419 = math.exp %418 : vector<4x256xf32>
    %cst_91 = arith.constant 1.000000e+00 : f32
    %420 = vector.broadcast %cst_91 : f32 to vector<4x256xf32>
    %421 = arith.addf %420, %419 : vector<4x256xf32>
    %422 = arith.divf %420, %421 : vector<4x256xf32>
    %423 = vector.extract_strided_slice %374 {offsets = [0, 512], sizes = [4, 256], strides = [1, 1]} : vector<4x768xf32> to vector<4x256xf32>
    %424 = vector.extract_strided_slice %380 {offsets = [0, 512], sizes = [4, 256], strides = [1, 1]} : vector<4x768xf32> to vector<4x256xf32>
    %425 = arith.mulf %414, %424 : vector<4x256xf32>
    %426 = arith.addf %423, %425 : vector<4x256xf32>
    %427 = math.tanh %426 : vector<4x256xf32>
    %cst_92 = arith.constant 1.000000e+00 : f32
    %428 = vector.broadcast %cst_92 : f32 to vector<4x256xf32>
    %429 = arith.subf %428, %422 : vector<4x256xf32>
    %430 = arith.mulf %429, %427 : vector<4x256xf32>
    %431 = arith.mulf %422, %372 : vector<4x256xf32>
    %432 = arith.addf %430, %431 : vector<4x256xf32>
    %c28_93 = arith.constant 28 : index
    %c0_94 = arith.constant 0 : index
    %433 = vector.load %arg8[%c28_93, %c0_94] : memref<32x1536xf32, #tpu.memory_space<vmem>>, vector<4x768xf32>
    %c0_95 = arith.constant 0 : index
    %c768_96 = arith.constant 768 : index
    %434 = vector.load %arg8[%c0_95, %c768_96] : memref<32x1536xf32, #tpu.memory_space<vmem>>, vector<4x768xf32>
    %cst_97 = arith.constant dense<0.000000e+00> : vector<4x768xf32>
    %435 = tpu.matmul %406, %7, %cst_97 {dimension_numbers = #tpu.dot_dimension_numbers<[1], [0], [0], [1], [0, 0, 1, 1], [], []>} : vector<4x256xf32>, vector<256x768xf32>, vector<4x768xf32> -> vector<4x768xf32>
    %436 = vector.broadcast %9 : vector<1x768xf32> to vector<4x768xf32>
    %437 = arith.addf %435, %436 : vector<4x768xf32>
    %cst_98 = arith.constant dense<0.000000e+00> : vector<4x768xf32>
    %438 = tpu.matmul %432, %8, %cst_98 {dimension_numbers = #tpu.dot_dimension_numbers<[1], [0], [0], [1], [0, 0, 1, 1], [], []>} : vector<4x256xf32>, vector<256x768xf32>, vector<4x768xf32> -> vector<4x768xf32>
    %439 = vector.broadcast %10 : vector<1x768xf32> to vector<4x768xf32>
    %440 = arith.addf %438, %439 : vector<4x768xf32>
    %441 = vector.extract_strided_slice %433 {offsets = [0, 0], sizes = [4, 256], strides = [1, 1]} : vector<4x768xf32> to vector<4x256xf32>
    %442 = vector.extract_strided_slice %437 {offsets = [0, 0], sizes = [4, 256], strides = [1, 1]} : vector<4x768xf32> to vector<4x256xf32>
    %443 = arith.addf %441, %442 : vector<4x256xf32>
    %444 = arith.negf %443 : vector<4x256xf32>
    %445 = math.exp %444 : vector<4x256xf32>
    %cst_99 = arith.constant 1.000000e+00 : f32
    %446 = vector.broadcast %cst_99 : f32 to vector<4x256xf32>
    %447 = arith.addf %446, %445 : vector<4x256xf32>
    %448 = arith.divf %446, %447 : vector<4x256xf32>
    %449 = vector.extract_strided_slice %433 {offsets = [0, 256], sizes = [4, 256], strides = [1, 1]} : vector<4x768xf32> to vector<4x256xf32>
    %450 = vector.extract_strided_slice %437 {offsets = [0, 256], sizes = [4, 256], strides = [1, 1]} : vector<4x768xf32> to vector<4x256xf32>
    %451 = arith.addf %449, %450 : vector<4x256xf32>
    %452 = arith.negf %451 : vector<4x256xf32>
    %453 = math.exp %452 : vector<4x256xf32>
    %cst_100 = arith.constant 1.000000e+00 : f32
    %454 = vector.broadcast %cst_100 : f32 to vector<4x256xf32>
    %455 = arith.addf %454, %453 : vector<4x256xf32>
    %456 = arith.divf %454, %455 : vector<4x256xf32>
    %457 = vector.extract_strided_slice %433 {offsets = [0, 512], sizes = [4, 256], strides = [1, 1]} : vector<4x768xf32> to vector<4x256xf32>
    %458 = vector.extract_strided_slice %437 {offsets = [0, 512], sizes = [4, 256], strides = [1, 1]} : vector<4x768xf32> to vector<4x256xf32>
    %459 = arith.mulf %448, %458 : vector<4x256xf32>
    %460 = arith.addf %457, %459 : vector<4x256xf32>
    %461 = math.tanh %460 : vector<4x256xf32>
    %cst_101 = arith.constant 1.000000e+00 : f32
    %462 = vector.broadcast %cst_101 : f32 to vector<4x256xf32>
    %463 = arith.subf %462, %456 : vector<4x256xf32>
    %464 = arith.mulf %463, %461 : vector<4x256xf32>
    %465 = arith.mulf %456, %406 : vector<4x256xf32>
    %466 = arith.addf %464, %465 : vector<4x256xf32>
    %467 = vector.extract_strided_slice %434 {offsets = [0, 0], sizes = [4, 256], strides = [1, 1]} : vector<4x768xf32> to vector<4x256xf32>
    %468 = vector.extract_strided_slice %440 {offsets = [0, 0], sizes = [4, 256], strides = [1, 1]} : vector<4x768xf32> to vector<4x256xf32>
    %469 = arith.addf %467, %468 : vector<4x256xf32>
    %470 = arith.negf %469 : vector<4x256xf32>
    %471 = math.exp %470 : vector<4x256xf32>
    %cst_102 = arith.constant 1.000000e+00 : f32
    %472 = vector.broadcast %cst_102 : f32 to vector<4x256xf32>
    %473 = arith.addf %472, %471 : vector<4x256xf32>
    %474 = arith.divf %472, %473 : vector<4x256xf32>
    %475 = vector.extract_strided_slice %434 {offsets = [0, 256], sizes = [4, 256], strides = [1, 1]} : vector<4x768xf32> to vector<4x256xf32>
    %476 = vector.extract_strided_slice %440 {offsets = [0, 256], sizes = [4, 256], strides = [1, 1]} : vector<4x768xf32> to vector<4x256xf32>
    %477 = arith.addf %475, %476 : vector<4x256xf32>
    %478 = arith.negf %477 : vector<4x256xf32>
    %479 = math.exp %478 : vector<4x256xf32>
    %cst_103 = arith.constant 1.000000e+00 : f32
    %480 = vector.broadcast %cst_103 : f32 to vector<4x256xf32>
    %481 = arith.addf %480, %479 : vector<4x256xf32>
    %482 = arith.divf %480, %481 : vector<4x256xf32>
    %483 = vector.extract_strided_slice %434 {offsets = [0, 512], sizes = [4, 256], strides = [1, 1]} : vector<4x768xf32> to vector<4x256xf32>
    %484 = vector.extract_strided_slice %440 {offsets = [0, 512], sizes = [4, 256], strides = [1, 1]} : vector<4x768xf32> to vector<4x256xf32>
    %485 = arith.mulf %474, %484 : vector<4x256xf32>
    %486 = arith.addf %483, %485 : vector<4x256xf32>
    %487 = math.tanh %486 : vector<4x256xf32>
    %cst_104 = arith.constant 1.000000e+00 : f32
    %488 = vector.broadcast %cst_104 : f32 to vector<4x256xf32>
    %489 = arith.subf %488, %482 : vector<4x256xf32>
    %490 = arith.mulf %489, %487 : vector<4x256xf32>
    %491 = arith.mulf %482, %432 : vector<4x256xf32>
    %492 = arith.addf %490, %491 : vector<4x256xf32>
    %c0_105 = arith.constant 0 : index
    %c0_106 = arith.constant 0 : index
    %493 = vector.load %arg7[%c0_105, %c0_106] : memref<4x512xf32, #tpu.memory_space<vmem>>, vector<4x256xf32>
    tpu.vector_store %arg7[%c0_105, %c0_106], %466 {strides = array<i32>} : memref<4x512xf32, #tpu.memory_space<vmem>>, vector<4x256xf32>,
    %c0_107 = arith.constant 0 : index
    %c256 = arith.constant 256 : index
    %494 = vector.load %arg7[%c0_107, %c256] : memref<4x512xf32, #tpu.memory_space<vmem>>, vector<4x256xf32>
    tpu.vector_store %arg7[%c0_107, %c256], %492 {strides = array<i32>} : memref<4x512xf32, #tpu.memory_space<vmem>>, vector<4x256xf32>,
    return
  }
}

</mosaic_0001>

<llo_original>
// kernel: ctrl_forward.5
$region0: #{ctrl_forward.5}
  #allocation0 [shape = 'u32[]', space=smem, size = 0x4, offset = 0x4, fixed_abs, tag = 'smem constant byte address 0x4 - core index']
  #allocation1 [shape = 'u32[144,128]{1,0:T(1,128)}', space=vmem, size = 0x12000, scoped, tag = 'internal scratch']
  #allocation2 [shape = 'f32[16,128]{1,0:T(8,128)}', space=vmem, size = 0x2000, scoped, tag = 'scratch operand']
  #allocation3 [shape = 'f32[16,128]{1,0:T(8,128)}', space=vmem, size = 0x2000, scoped, tag = 'scratch operand']
  %s0 = inlined_call_operand.vmem [shape: f32[4,128], index: 0, kind: input, shape index: {}]
  %s1 = inlined_call_operand.vmem [shape: f32[4,128], index: 1, kind: input, shape index: {}]
  %s2 = inlined_call_operand.vmem [shape: f32[4,128], index: 2, kind: input, shape index: {}]
  %s3 = inlined_call_operand.vmem [shape: f32[4,128], index: 3, kind: input, shape index: {}]
  %s4 = inlined_call_operand.hbm [shape: f32[128,128], index: 4, kind: input, shape index: {}]
  %s5 = inlined_call_operand.hbm [shape: f32[128,128], index: 5, kind: input, shape index: {}]
  %s6 = inlined_call_operand.hbm [shape: f32[1,128], index: 6, kind: input, shape index: {}]
  %s7 = inlined_call_operand.vmem [shape: f32[16,128], index: 7, kind: output, shape index: {}]
  %s8 = sld [smem:[#allocation0]]
  $region50: #{ctrl_forward.5} parent=0
    _
  %s10 = ssub.s32 1, %s8
  %s11 = scalar_select 0, %s10, %s8
  $region1: #{ctrl_forward.5} parent=0
    #allocation4 [shape = 'u8[65536]{0}', space=vmem, size = 0x10000, scoped, tag = 'input window, operand 4, single buffered']
    #allocation5 [shape = 's32[1]{0}', space=sflag, size = 0x4, scoped, tag = 'scoped memory for ctrl_forward.5']
    #allocation6 [shape = 'u8[65536]{0}', space=vmem, size = 0x10000, scoped, tag = 'input window, operand 5, single buffered']
    #allocation7 [shape = 's32[1]{0}', space=sflag, size = 0x4, scoped, tag = 'scoped memory for ctrl_forward.5']
    #allocation8 [shape = 'u8[512]{0}', space=vmem, size = 0x400, scoped, tag = 'input window, operand 6, single buffered']
    %12 = vsyncpa [#allocation5], 0
    %13 = vsyncpa [#allocation7], 0
    // Predicated region
    $region2: #{ctrl_forward.5} parent=1 // pred_check
      _
    $region3: #{ctrl_forward.5} parent=1 // pred_check_branch
      %15 = sbr.rel (0) target = $region5
    $region4: #{ctrl_forward.5} parent=1 // pred_region
      _
    $region5: #{ctrl_forward.5} parent=1 // pred_fallthru
      _
    // Predicated region
    $region6: #{ctrl_forward.5} parent=1 // pred_check
      _
    $region7: #{ctrl_forward.5} parent=1 // pred_check_branch
      %17 = sbr.rel (0) target = $region9
    $region8: #{ctrl_forward.5} parent=1 // pred_region
      _
    $region9: #{ctrl_forward.5} parent=1 // pred_fallthru
      _
    // Predicated region
    $region10: #{ctrl_forward.5} parent=1 // pred_check
      _
    $region11: #{ctrl_forward.5} parent=1 // pred_check_branch
      %19 = sbr.rel (0) target = $region13
    $region12: #{ctrl_forward.5} parent=1 // pred_region
      _
    $region13: #{ctrl_forward.5} parent=1 // pred_fallthru
      _
    // Predicated region
    $region14: #{ctrl_forward.5} parent=1 // pred_check
      _
    $region15: #{ctrl_forward.5} parent=1 // pred_check_branch
      %21 = sbr.rel (0) target = $region17
    $region16: #{ctrl_forward.5} parent=1 // pred_region
      _
    $region17: #{ctrl_forward.5} parent=1 // pred_fallthru
      _
    // Predicated region
    $region18: #{ctrl_forward.5} parent=1 // pred_check
      _
    $region19: #{ctrl_forward.5} parent=1 // pred_check_branch
      %23 = sbr.rel (0) target = $region21
    $region20: #{ctrl_forward.5} parent=1 // pred_region
      %s25 = ssub.s32 2048, 2048
      %26 = vsyncadd [#allocation5], %s25
      %s27 = sshll.u32 [#allocation4], 4
      %s28 = int_to_ptr.vmem [resolvable:$true] %s27
      %33 = dma.hbm_to_vmem [thread:$0]  %s4, 2048, %s28, [#allocation5], 128, 128, 8
    $region21: #{ctrl_forward.5} parent=1 // pred_fallthru
      _
    // Predicated region
    $region22: #{ctrl_forward.5} parent=1 // pred_check
      _
    $region23: #{ctrl_forward.5} parent=1 // pred_check_branch
      %35 = sbr.rel (0) target = $region25
    $region24: #{ctrl_forward.5} parent=1 // pred_region
      %s37 = ssub.s32 2048, 2048
      %38 = vsyncadd [#allocation7], %s37
      %s39 = sshll.u32 [#allocation6], 4
      %s40 = int_to_ptr.vmem [resolvable:$true] %s39
      %45 = dma.hbm_to_vmem [thread:$0]  %s5, 2048, %s40, [#allocation7], 128, 128, 8
    $region25: #{ctrl_forward.5} parent=1 // pred_fallthru
      _
    // Predicated region
    $region26: #{ctrl_forward.5} parent=1 // pred_check
      _
    $region27: #{ctrl_forward.5} parent=1 // pred_check_branch
      %47 = sbr.rel (0) target = $region29
    $region28: #{ctrl_forward.5} parent=1 // pred_region
      %s49 = ssub.s32 16, 16
      %50 = vsyncadd [#allocation7], %s49
      %s52 = sshll.u32 [#allocation8], 4
      %s53 = int_to_ptr.vmem [resolvable:$true] %s52
      %55 = dma.hbm_to_vmem [thread:$0]  %s6, 16, %s53, [#allocation7]
    $region29: #{ctrl_forward.5} parent=1 // pred_fallthru
      _
    // Predicated region
    $region30: #{ctrl_forward.5} parent=1 // pred_check
      _
    $region31: #{ctrl_forward.5} parent=1 // pred_check_branch
      %57 = sbr.rel (0) target = $region33
    $region32: #{ctrl_forward.5} parent=1 // pred_region
      %58 = dma.done [#allocation5], 2048
    $region33: #{ctrl_forward.5} parent=1 // pred_fallthru
      _
    // Predicated region
    $region34: #{ctrl_forward.5} parent=1 // pred_check
      _
    $region35: #{ctrl_forward.5} parent=1 // pred_check_branch
      %60 = sbr.rel (0) target = $region37
    $region36: #{ctrl_forward.5} parent=1 // pred_region
      %61 = dma.done [#allocation7], 2048
    $region37: #{ctrl_forward.5} parent=1 // pred_fallthru
      _
    // Predicated region
    $region38: #{ctrl_forward.5} parent=1 // pred_check
      _
    $region39: #{ctrl_forward.5} parent=1 // pred_check_branch
      %63 = sbr.rel (0) target = $region41
    $region40: #{ctrl_forward.5} parent=1 // pred_region
      %64 = dma.done [#allocation7], 16
    $region41: #{ctrl_forward.5} parent=1 // pred_fallthru
      _
    %v65 = vld [vmem:[%s0] sm:$0xf]
    %v66 = vld [vmem:[%s2] sm:$0xf]
    %v67 = vld [vmem:[%s1] sm:$0xf]
    %v68 = vld [vmem:[%s3] sm:$0xf]
    %v69 = vlaneseq
    %v70 = vshrl.u32 %v69, 7
    %v71 = vsub.s32 0, %v70
    %v72 = vrot.slane %v67, %v71
    %v73 = vmul.f32 %v65, %v72
    %74 = vst [vmem:[#allocation2] sm:$0xf] %v73
    %v75 = vlaneseq
    %v76 = vshrl.u32 %v75, 7
    %v77 = vsub.s32 0, %v76
    %v78 = vrot.slane %v68, %v77
    %v79 = vadd.f32 %v66, %v78
    %80 = vst [vmem:[#allocation3] sm:$0xf] %v79
    %v81 = vlaneseq
    %v82 = vshrl.u32 %v81, 7
    %v83 = vsub.s32 1, %v82
    %v84 = vrot.slane %v67, %v83
    %v85 = vmul.f32 %v65, %v84
    %86 = vst [vmem:[#allocation2 + $0x4] sm:$0xf] %v85
    %v87 = vlaneseq
    %v88 = vshrl.u32 %v87, 7
    %v89 = vsub.s32 1, %v88
    %v90 = vrot.slane %v68, %v89
    %v91 = vadd.f32 %v66, %v90
    %92 = vst [vmem:[#allocation3 + $0x4] sm:$0xf] %v91
    %v93 = vlaneseq
    %v94 = vshrl.u32 %v93, 7
    %v95 = vsub.s32 2, %v94
    %v96 = vrot.slane %v67, %v95
    %v97 = vmul.f32 %v65, %v96
    %98 = vst [vmem:[#allocation2 + $0x8] sm:$0xf] %v97
    %v99 = vlaneseq
    %v100 = vshrl.u32 %v99, 7
    %v101 = vsub.s32 2, %v100
    %v102 = vrot.slane %v68, %v101
    %v103 = vadd.f32 %v66, %v102
    %104 = vst [vmem:[#allocation3 + $0x8] sm:$0xf] %v103
    %v105 = vlaneseq
    %v106 = vshrl.u32 %v105, 7
    %v107 = vsub.s32 3, %v106
    %v108 = vrot.slane %v67, %v107
    %v109 = vmul.f32 %v65, %v108
    %110 = vst [vmem:[#allocation2 + $0xc] sm:$0xf] %v109
    %v111 = vlaneseq
    %v112 = vshrl.u32 %v111, 7
    %v113 = vsub.s32 3, %v112
    %v114 = vrot.slane %v68, %v113
    %v115 = vadd.f32 %v66, %v114
    %116 = vst [vmem:[#allocation3 + $0xc] sm:$0xf] %v115
    %v117 = vld [vmem:[#allocation2] sm:$0xff]
    %v118 = vld [vmem:[#allocation2 + $0x8] sm:$0xff]
    %v119 = vld [vmem:[#allocation4] sm:$0xff]
    %v120 = vld [vmem:[#allocation4 + $0x8] sm:$0xff]
    %v121 = vld [vmem:[#allocation4 + $0x10] sm:$0xff]
    %v122 = vld [vmem:[#allocation4 + $0x18] sm:$0xff]
    %v123 = vld [vmem:[#allocation4 + $0x20] sm:$0xff]
    %v124 = vld [vmem:[#allocation4 + $0x28] sm:$0xff]
    %v125 = vld [vmem:[#allocation4 + $0x30] sm:$0xff]
    %v126 = vld [vmem:[#allocation4 + $0x38] sm:$0xff]
    %v127 = vld [vmem:[#allocation4 + $0x40] sm:$0xff]
    %v128 = vld [vmem:[#allocation4 + $0x48] sm:$0xff]
    %v129 = vld [vmem:[#allocation4 + $0x50] sm:$0xff]
    %v130 = vld [vmem:[#allocation4 + $0x58] sm:$0xff]
    %v131 = vld [vmem:[#allocation4 + $0x60] sm:$0xff]
    %v132 = vld [vmem:[#allocation4 + $0x68] sm:$0xff]
    %v133 = vld [vmem:[#allocation4 + $0x70] sm:$0xff]
    %v134 = vld [vmem:[#allocation4 + $0x78] sm:$0xff]
    %v135 = vld [vmem:[#allocation3] sm:$0xff]
    %v136 = vld [vmem:[#allocation3 + $0x8] sm:$0xff]
    %137 = vmatprep.subr.mxu0 0.0
    %138 = vmatpush1.msra.mxu0 %v119
    %139 = vmatprep.subr.mxu0 0.0
    %140 = vmatpush1.msra.mxu0 %v120
    %141 = vmatprep.subr.mxu0 0.0
    %142 = vmatpush1.msra.mxu0 %v121
    %143 = vmatprep.subr.mxu0 0.0
    %144 = vmatpush1.msra.mxu0 %v122
    %145 = vmatprep.subr.mxu0 0.0
    %146 = vmatpush1.msra.mxu0 %v123
    %147 = vmatprep.subr.mxu0 0.0
    %148 = vmatpush1.msra.mxu0 %v124
    %149 = vmatprep.subr.mxu0 0.0
    %150 = vmatpush1.msra.mxu0 %v125
    %151 = vmatprep.subr.mxu0 0.0
    %152 = vmatpush1.msra.mxu0 %v126
    %153 = vmatprep.subr.mxu0 0.0
    %154 = vmatpush1.msra.mxu0 %v127
    %155 = vmatprep.subr.mxu0 0.0
    %156 = vmatpush1.msra.mxu0 %v128
    %157 = vmatprep.subr.mxu0 0.0
    %158 = vmatpush1.msra.mxu0 %v129
    %159 = vmatprep.subr.mxu0 0.0
    %160 = vmatpush1.msra.mxu0 %v130
    %161 = vmatprep.subr.mxu0 0.0
    %162 = vmatpush1.msra.mxu0 %v131
    %163 = vmatprep.subr.mxu0 0.0
    %164 = vmatpush1.msra.mxu0 %v132
    %165 = vmatprep.subr.mxu0 0.0
    %166 = vmatpush1.msra.mxu0 %v133
    %167 = vmatprep.subr.mxu0 0.0
    %168 = vmatpush1.msra.mxu0 %v134
    %169 = vmatprep.subr.mxu0 0.0
    %170 = vmatpush1.msra.mxu0 0.0
    %171 = vmatprep.subr.mxu0 0.0
    %172 = vmatpush1.msra.mxu0 0.0
    %173 = vmatprep.subr.mxu0 0.0
    %174 = vmatpush1.msra.mxu0 0.0
    %175 = vmatprep.subr.mxu0 0.0
    %176 = vmatpush1.msra.mxu0 0.0
    %177 = vmatprep.subr.mxu0 0.0
    %178 = vmatpush1.msra.mxu0 0.0
    %179 = vmatprep.subr.mxu0 0.0
    %180 = vmatpush1.msra.mxu0 0.0
    %181 = vmatprep.subr.mxu0 0.0
    %182 = vmatpush1.msra.mxu0 0.0
    %183 = vmatprep.subr.mxu0 0.0
    %184 = vmatpush1.msra.mxu0 0.0
    %185 = vmatprep.subr.mxu0 0.0
    %186 = vmatpush1.msra.mxu0 0.0
    %187 = vmatprep.subr.mxu0 0.0
    %188 = vmatpush1.msra.mxu0 0.0
    %189 = vmatprep.subr.mxu0 0.0
    %190 = vmatpush1.msra.mxu0 0.0
    %191 = vmatprep.subr.mxu0 0.0
    %192 = vmatpush1.msra.mxu0 0.0
    %193 = vmatprep.subr.mxu0 0.0
    %194 = vmatpush1.msra.mxu0 0.0
    %195 = vmatprep.subr.mxu0 0.0
    %196 = vmatpush1.msra.mxu0 0.0
    %197 = vmatprep.subr.mxu0 0.0
    %198 = vmatpush1.msra.mxu0 0.0
    %199 = vmatprep.subr.mxu0 0.0
    %200 = vmatpush1.msra.mxu0 0.0
    %201 = vmatprep.mubr.f32.mxu0 0.0
    %202 = vmatmul.mubr.f32.gmra.mrb[0].mxu0 %v117
    %v203 = vpop.f32.mrb[0].mxu0
    %v204 = vadd.f32 %v135, %v203
    %v205 = vpop.f32.mrb[0].mxu0
    %206 = vmatprep.mubr.f32.mxu0 0.0
    %207 = vmatmul.mubr.f32.gmra.mrb[0].mxu0 %v118
    %v208 = vpop.f32.mrb[0].mxu0
    %v209 = vadd.f32 %v136, %v208
    %v210 = vpop.f32.mrb[0].mxu0
    %211 = vdwg.mxu0
    %v212 = vmax.f32 %v204, 0.0
    %v213 = vmax.f32 %v209, 0.0
    %v214 = vld [vmem:[#allocation6] sm:$0xff]
    %v215 = vld [vmem:[#allocation6 + $0x8] sm:$0xff]
    %v216 = vld [vmem:[#allocation6 + $0x10] sm:$0xff]
    %v217 = vld [vmem:[#allocation6 + $0x18] sm:$0xff]
    %v218 = vld [vmem:[#allocation6 + $0x20] sm:$0xff]
    %v219 = vld [vmem:[#allocation6 + $0x28] sm:$0xff]
    %v220 = vld [vmem:[#allocation6 + $0x30] sm:$0xff]
    %v221 = vld [vmem:[#allocation6 + $0x38] sm:$0xff]
    %v222 = vld [vmem:[#allocation6 + $0x40] sm:$0xff]
    %v223 = vld [vmem:[#allocation6 + $0x48] sm:$0xff]
    %v224 = vld [vmem:[#allocation6 + $0x50] sm:$0xff]
    %v225 = vld [vmem:[#allocation6 + $0x58] sm:$0xff]
    %v226 = vld [vmem:[#allocation6 + $0x60] sm:$0xff]
    %v227 = vld [vmem:[#allocation6 + $0x68] sm:$0xff]
    %v228 = vld [vmem:[#allocation6 + $0x70] sm:$0xff]
    %v229 = vld [vmem:[#allocation6 + $0x78] sm:$0xff]
    %v230 = vld [vmem:[#allocation8] sm:$0x1]
    %v232 = vlaneseq
    %v233 = vshrl.u32 %v232, 7
    %v234 = vsub.s32 0, %v233
    %v235 = vrot.slane %v230, %v234
    %237 = vmatprep.subr.mxu0 0.0
    %238 = vmatpush1.msra.mxu0 %v214
    %239 = vmatprep.subr.mxu0 0.0
    %240 = vmatpush1.msra.mxu0 %v215
    %241 = vmatprep.subr.mxu0 0.0
    %242 = vmatpush1.msra.mxu0 %v216
    %243 = vmatprep.subr.mxu0 0.0
    %244 = vmatpush1.msra.mxu0 %v217
    %245 = vmatprep.subr.mxu0 0.0
    %246 = vmatpush1.msra.mxu0 %v218
    %247 = vmatprep.subr.mxu0 0.0
    %248 = vmatpush1.msra.mxu0 %v219
    %249 = vmatprep.subr.mxu0 0.0
    %250 = vmatpush1.msra.mxu0 %v220
    %251 = vmatprep.subr.mxu0 0.0
    %252 = vmatpush1.msra.mxu0 %v221
    %253 = vmatprep.subr.mxu0 0.0
    %254 = vmatpush1.msra.mxu0 %v222
    %255 = vmatprep.subr.mxu0 0.0
    %256 = vmatpush1.msra.mxu0 %v223
    %257 = vmatprep.subr.mxu0 0.0
    %258 = vmatpush1.msra.mxu0 %v224
    %259 = vmatprep.subr.mxu0 0.0
    %260 = vmatpush1.msra.mxu0 %v225
    %261 = vmatprep.subr.mxu0 0.0
    %262 = vmatpush1.msra.mxu0 %v226
    %263 = vmatprep.subr.mxu0 0.0
    %264 = vmatpush1.msra.mxu0 %v227
    %265 = vmatprep.subr.mxu0 0.0
    %266 = vmatpush1.msra.mxu0 %v228
    %267 = vmatprep.subr.mxu0 0.0
    %268 = vmatpush1.msra.mxu0 %v229
    %269 = vmatprep.subr.mxu0 0.0
    %270 = vmatpush1.msra.mxu0 0.0
    %271 = vmatprep.subr.mxu0 0.0
    %272 = vmatpush1.msra.mxu0 0.0
    %273 = vmatprep.subr.mxu0 0.0
    %274 = vmatpush1.msra.mxu0 0.0
    %275 = vmatprep.subr.mxu0 0.0
    %276 = vmatpush1.msra.mxu0 0.0
    %277 = vmatprep.subr.mxu0 0.0
    %278 = vmatpush1.msra.mxu0 0.0
    %279 = vmatprep.subr.mxu0 0.0
    %280 = vmatpush1.msra.mxu0 0.0
    %281 = vmatprep.subr.mxu0 0.0
    %282 = vmatpush1.msra.mxu0 0.0
    %283 = vmatprep.subr.mxu0 0.0
    %284 = vmatpush1.msra.mxu0 0.0
    %285 = vmatprep.subr.mxu0 0.0
    %286 = vmatpush1.msra.mxu0 0.0
    %287 = vmatprep.subr.mxu0 0.0
    %288 = vmatpush1.msra.mxu0 0.0
    %289 = vmatprep.subr.mxu0 0.0
    %290 = vmatpush1.msra.mxu0 0.0
    %291 = vmatprep.subr.mxu0 0.0
    %292 = vmatpush1.msra.mxu0 0.0
    %293 = vmatprep.subr.mxu0 0.0
    %294 = vmatpush1.msra.mxu0 0.0
    %295 = vmatprep.subr.mxu0 0.0
    %296 = vmatpush1.msra.mxu0 0.0
    %297 = vmatprep.subr.mxu0 0.0
    %298 = vmatpush1.msra.mxu0 0.0
    %299 = vmatprep.subr.mxu0 0.0
    %300 = vmatpush1.msra.mxu0 0.0
    %301 = vmatprep.mubr.f32.mxu0 0.0
    %302 = vmatmul.mubr.f32.gmra.mrb[0].mxu0 %v212
    %v303 = vpop.f32.mrb[0].mxu0
    %v304 = vadd.f32 %v235, %v303
    %v305 = vpop.f32.mrb[0].mxu0
    %306 = vmatprep.mubr.f32.mxu0 0.0
    %307 = vmatmul.mubr.f32.gmra.mrb[0].mxu0 %v213
    %v308 = vpop.f32.mrb[0].mxu0
    %v309 = vadd.f32 %v235, %v308
    %v310 = vpop.f32.mrb[0].mxu0
    %311 = vdwg.mxu0
    %312 = vst [vmem:[%s7] sm:$0xff] %v304
    %313 = vst [vmem:[%s7 + $0x8] sm:$0xff] %v309
    // Predicated region
    $region42: #{ctrl_forward.5} parent=1 // pred_check
      _
    $region43: #{ctrl_forward.5} parent=1 // pred_check_branch
      %315 = sbr.rel (0) target = $region45
    $region44: #{ctrl_forward.5} parent=1 // pred_region
      _
    $region45: #{ctrl_forward.5} parent=1 // pred_fallthru
      _
    // Predicated region
    $region46: #{ctrl_forward.5} parent=1 // pred_check
      _
    $region47: #{ctrl_forward.5} parent=1 // pred_check_branch
      %317 = sbr.rel (0) target = $region49
    $region48: #{ctrl_forward.5} parent=1 // pred_region
      _
    $region49: #{ctrl_forward.5} parent=1 // pred_fallthru
      _
    %318 = vsyncpa [#allocation5], 1
    %319 = vsyncpa [#allocation7], 1

// kernel: ctrl_forward.4
$region0: #{ctrl_forward.4}
  #allocation0 [shape = 'u32[]', space=smem, size = 0x4, offset = 0x4, fixed_abs, tag = 'smem constant byte address 0x4 - core index']
  #allocation1 [shape = 'u32[144,128]{1,0:T(1,128)}', space=vmem, size = 0x12000, scoped, tag = 'internal scratch']
  %s0 = inlined_call_operand.vmem [shape: f32[4,128], index: 0, kind: input, shape index: {}]
  %s1 = inlined_call_operand.vmem [shape: f32[4,512], index: 1, kind: input, shape index: {}]
  %s2 = inlined_call_operand.hbm [shape: f32[128,128], index: 2, kind: input, shape index: {}]
  %s3 = inlined_call_operand.hbm [shape: f32[1,128], index: 3, kind: input, shape index: {}]
  %s4 = inlined_call_operand.hbm [shape: f32[512,128], index: 4, kind: input, shape index: {}]
  %s5 = inlined_call_operand.hbm [shape: f32[1,128], index: 5, kind: input, shape index: {}]
  %s6 = inlined_call_operand.hbm [shape: f32[128,128], index: 6, kind: input, shape index: {}]
  %s7 = inlined_call_operand.hbm [shape: f32[128,128], index: 7, kind: input, shape index: {}]
  %s8 = inlined_call_operand.hbm [shape: f32[1,128], index: 8, kind: input, shape index: {}]
  %s9 = inlined_call_operand.vmem [shape: f32[4,128], index: 9, kind: output, shape index: {0}]
  %s10 = inlined_call_operand.vmem [shape: f32[4,128], index: 10, kind: output, shape index: {1}]
  %s11 = inlined_call_operand.vmem [shape: f32[4,128], index: 11, kind: output, shape index: {2}]
  %s12 = inlined_call_operand.vmem [shape: f32[4,128], index: 12, kind: output, shape index: {3}]
  %13 = xla_tuple %s9, %s10, %s11, %s12
  %s14 = sld [smem:[#allocation0]]
  $region98: #{ctrl_forward.4} parent=0
    _
  %s16 = ssub.s32 1, %s14
  %s17 = scalar_select 0, %s16, %s14
  $region1: #{ctrl_forward.4} parent=0
    #allocation2 [shape = 'u8[65536]{0}', space=vmem, size = 0x10000, scoped, tag = 'input window, operand 2, single buffered']
    #allocation3 [shape = 's32[1]{0}', space=sflag, size = 0x4, scoped, tag = 'scoped memory for ctrl_forward.4']
    #allocation4 [shape = 'u8[512]{0}', space=vmem, size = 0x400, scoped, tag = 'input window, operand 3, single buffered']
    #allocation5 [shape = 's32[1]{0}', space=sflag, size = 0x4, scoped, tag = 'scoped memory for ctrl_forward.4']
    #allocation6 [shape = 'u8[262144]{0}', space=vmem, size = 0x40000, scoped, tag = 'input window, operand 4, single buffered']
    #allocation7 [shape = 'u8[512]{0}', space=vmem, size = 0x400, scoped, tag = 'input window, operand 5, single buffered']
    #allocation8 [shape = 's32[1]{0}', space=sflag, size = 0x4, scoped, tag = 'scoped memory for ctrl_forward.4']
    #allocation9 [shape = 'u8[65536]{0}', space=vmem, size = 0x10000, scoped, tag = 'input window, operand 6, single buffered']
    #allocation10 [shape = 'u8[65536]{0}', space=vmem, size = 0x10000, scoped, tag = 'input window, operand 7, single buffered']
    #allocation11 [shape = 's32[1]{0}', space=sflag, size = 0x4, scoped, tag = 'scoped memory for ctrl_forward.4']
    #allocation12 [shape = 'u8[512]{0}', space=vmem, size = 0x400, scoped, tag = 'input window, operand 8, single buffered']
    %18 = vsyncpa [#allocation3], 0
    %19 = vsyncpa [#allocation5], 0
    %20 = vsyncpa [#allocation8], 0
    %21 = vsyncpa [#allocation11], 0
    // Predicated region
    $region2: #{ctrl_forward.4} parent=1 // pred_check
      _
    $region3: #{ctrl_forward.4} parent=1 // pred_check_branch
      %23 = sbr.rel (0) target = $region5
    $region4: #{ctrl_forward.4} parent=1 // pred_region
      _
    $region5: #{ctrl_forward.4} parent=1 // pred_fallthru
      _
    // Predicated region
    $region6: #{ctrl_forward.4} parent=1 // pred_check
      _
    $region7: #{ctrl_forward.4} parent=1 // pred_check_branch
      %25 = sbr.rel (0) target = $region9
    $region8: #{ctrl_forward.4} parent=1 // pred_region
      _
    $region9: #{ctrl_forward.4} parent=1 // pred_fallthru
      _
    // Predicated region
    $region10: #{ctrl_forward.4} parent=1 // pred_check
      _
    $region11: #{ctrl_forward.4} parent=1 // pred_check_branch
      %27 = sbr.rel (0) target = $region13
    $region12: #{ctrl_forward.4} parent=1 // pred_region
      %s29 = ssub.s32 2048, 2048
      %30 = vsyncadd [#allocation3], %s29
      %s31 = sshll.u32 [#allocation2], 4
      %s32 = int_to_ptr.vmem [resolvable:$true] %s31
      %37 = dma.hbm_to_vmem [thread:$0]  %s2, 2048, %s32, [#allocation3], 128, 128, 8
    $region13: #{ctrl_forward.4} parent=1 // pred_fallthru
      _
    // Predicated region
    $region14: #{ctrl_forward.4} parent=1 // pred_check
      _
    $region15: #{ctrl_forward.4} parent=1 // pred_check_branch
      %39 = sbr.rel (0) target = $region17
    $region16: #{ctrl_forward.4} parent=1 // pred_region
      %s41 = ssub.s32 16, 16
      %42 = vsyncadd [#allocation5], %s41
      %s44 = sshll.u32 [#allocation4], 4
      %s45 = int_to_ptr.vmem [resolvable:$true] %s44
      %47 = dma.hbm_to_vmem [thread:$0]  %s3, 16, %s45, [#allocation5]
    $region17: #{ctrl_forward.4} parent=1 // pred_fallthru
      _
    // Predicated region
    $region18: #{ctrl_forward.4} parent=1 // pred_check
      _
    $region19: #{ctrl_forward.4} parent=1 // pred_check_branch
      %49 = sbr.rel (0) target = $region21
    $region20: #{ctrl_forward.4} parent=1 // pred_region
      %s51 = ssub.s32 8192, 8192
      %52 = vsyncadd [#allocation5], %s51
      %s53 = sshll.u32 [#allocation6], 4
      %s54 = int_to_ptr.vmem [resolvable:$true] %s53
      %59 = dma.hbm_to_vmem [thread:$0]  %s4, 8192, %s54, [#allocation5], 128, 128, 8
    $region21: #{ctrl_forward.4} parent=1 // pred_fallthru
      _
    // Predicated region
    $region22: #{ctrl_forward.4} parent=1 // pred_check
      _
    $region23: #{ctrl_forward.4} parent=1 // pred_check_branch
      %61 = sbr.rel (0) target = $region25
    $region24: #{ctrl_forward.4} parent=1 // pred_region
      %s63 = ssub.s32 16, 16
      %64 = vsyncadd [#allocation8], %s63
      %s66 = sshll.u32 [#allocation7], 4
      %s67 = int_to_ptr.vmem [resolvable:$true] %s66
      %69 = dma.hbm_to_vmem [thread:$0]  %s5, 16, %s67, [#allocation8]
    $region25: #{ctrl_forward.4} parent=1 // pred_fallthru
      _
    // Predicated region
    $region26: #{ctrl_forward.4} parent=1 // pred_check
      _
    $region27: #{ctrl_forward.4} parent=1 // pred_check_branch
      %71 = sbr.rel (0) target = $region29
    $region28: #{ctrl_forward.4} parent=1 // pred_region
      %s73 = ssub.s32 2048, 2048
      %74 = vsyncadd [#allocation8], %s73
      %s75 = sshll.u32 [#allocation9], 4
      %s76 = int_to_ptr.vmem [resolvable:$true] %s75
      %81 = dma.hbm_to_vmem [thread:$0]  %s6, 2048, %s76, [#allocation8], 128, 128, 8
    $region29: #{ctrl_forward.4} parent=1 // pred_fallthru
      _
    // Predicated region
    $region30: #{ctrl_forward.4} parent=1 // pred_check
      _
    $region31: #{ctrl_forward.4} parent=1 // pred_check_branch
      %83 = sbr.rel (0) target = $region33
    $region32: #{ctrl_forward.4} parent=1 // pred_region
      %s85 = ssub.s32 2048, 2048
      %86 = vsyncadd [#allocation11], %s85
      %s87 = sshll.u32 [#allocation10], 4
      %s88 = int_to_ptr.vmem [resolvable:$true] %s87
      %93 = dma.hbm_to_vmem [thread:$0]  %s7, 2048, %s88, [#allocation11], 128, 128, 8
    $region33: #{ctrl_forward.4} parent=1 // pred_fallthru
      _
    // Predicated region
    $region34: #{ctrl_forward.4} parent=1 // pred_check
      _
    $region35: #{ctrl_forward.4} parent=1 // pred_check_branch
      %95 = sbr.rel (0) target = $region37
    $region36: #{ctrl_forward.4} parent=1 // pred_region
      %s97 = ssub.s32 16, 16
      %98 = vsyncadd [#allocation11], %s97
      %s100 = sshll.u32 [#allocation12], 4
      %s101 = int_to_ptr.vmem [resolvable:$true] %s100
      %103 = dma.hbm_to_vmem [thread:$0]  %s8, 16, %s101, [#allocation11]
    $region37: #{ctrl_forward.4} parent=1 // pred_fallthru
      _
    // Predicated region
    $region38: #{ctrl_forward.4} parent=1 // pred_check
      _
    $region39: #{ctrl_forward.4} parent=1 // pred_check_branch
      %105 = sbr.rel (0) target = $region41
    $region40: #{ctrl_forward.4} parent=1 // pred_region
      %106 = dma.done [#allocation3], 2048
    $region41: #{ctrl_forward.4} parent=1 // pred_fallthru
      _
    // Predicated region
    $region42: #{ctrl_forward.4} parent=1 // pred_check
      _
    $region43: #{ctrl_forward.4} parent=1 // pred_check_branch
      %108 = sbr.rel (0) target = $region45
    $region44: #{ctrl_forward.4} parent=1 // pred_region
      %109 = dma.done [#allocation5], 16
    $region45: #{ctrl_forward.4} parent=1 // pred_fallthru
      _
    // Predicated region
    $region46: #{ctrl_forward.4} parent=1 // pred_check
      _
    $region47: #{ctrl_forward.4} parent=1 // pred_check_branch
      %111 = sbr.rel (0) target = $region49
    $region48: #{ctrl_forward.4} parent=1 // pred_region
      %112 = dma.done [#allocation5], 8192
    $region49: #{ctrl_forward.4} parent=1 // pred_fallthru
      _
    // Predicated region
    $region50: #{ctrl_forward.4} parent=1 // pred_check
      _
    $region51: #{ctrl_forward.4} parent=1 // pred_check_branch
      %114 = sbr.rel (0) target = $region53
    $region52: #{ctrl_forward.4} parent=1 // pred_region
      %115 = dma.done [#allocation8], 16
    $region53: #{ctrl_forward.4} parent=1 // pred_fallthru
      _
    // Predicated region
    $region54: #{ctrl_forward.4} parent=1 // pred_check
      _
    $region55: #{ctrl_forward.4} parent=1 // pred_check_branch
      %117 = sbr.rel (0) target = $region57
    $region56: #{ctrl_forward.4} parent=1 // pred_region
      %118 = dma.done [#allocation8], 2048
    $region57: #{ctrl_forward.4} parent=1 // pred_fallthru
      _
    // Predicated region
    $region58: #{ctrl_forward.4} parent=1 // pred_check
      _
    $region59: #{ctrl_forward.4} parent=1 // pred_check_branch
      %120 = sbr.rel (0) target = $region61
    $region60: #{ctrl_forward.4} parent=1 // pred_region
      %121 = dma.done [#allocation11], 2048
    $region61: #{ctrl_forward.4} parent=1 // pred_fallthru
      _
    // Predicated region
    $region62: #{ctrl_forward.4} parent=1 // pred_check
      _
    $region63: #{ctrl_forward.4} parent=1 // pred_check_branch
      %123 = sbr.rel (0) target = $region65
    $region64: #{ctrl_forward.4} parent=1 // pred_region
      %124 = dma.done [#allocation11], 16
    $region65: #{ctrl_forward.4} parent=1 // pred_fallthru
      _
    %v125 = vld [vmem:[%s0] sm:$0xf]
    %v126 = vld [vmem:[#allocation2] sm:$0xff]
    %v127 = vld [vmem:[#allocation2 + $0x8] sm:$0xff]
    %v128 = vld [vmem:[#allocation2 + $0x10] sm:$0xff]
    %v129 = vld [vmem:[#allocation2 + $0x18] sm:$0xff]
    %v130 = vld [vmem:[#allocation2 + $0x20] sm:$0xff]
    %v131 = vld [vmem:[#allocation2 + $0x28] sm:$0xff]
    %v132 = vld [vmem:[#allocation2 + $0x30] sm:$0xff]
    %v133 = vld [vmem:[#allocation2 + $0x38] sm:$0xff]
    %v134 = vld [vmem:[#allocation2 + $0x40] sm:$0xff]
    %v135 = vld [vmem:[#allocation2 + $0x48] sm:$0xff]
    %v136 = vld [vmem:[#allocation2 + $0x50] sm:$0xff]
    %v137 = vld [vmem:[#allocation2 + $0x58] sm:$0xff]
    %v138 = vld [vmem:[#allocation2 + $0x60] sm:$0xff]
    %v139 = vld [vmem:[#allocation2 + $0x68] sm:$0xff]
    %v140 = vld [vmem:[#allocation2 + $0x70] sm:$0xff]
    %v141 = vld [vmem:[#allocation2 + $0x78] sm:$0xff]
    %v142 = vld [vmem:[#allocation4] sm:$0x1]
    %v144 = vlaneseq
    %v145 = vshrl.u32 %v144, 7
    %v146 = vsub.s32 0, %v145
    %v147 = vrot.slane %v142, %v146
    %149 = vmatprep.subr.mxu0 0.0
    %150 = vmatpush1.msra.mxu0 %v126
    %151 = vmatprep.subr.mxu0 0.0
    %152 = vmatpush1.msra.mxu0 %v127
    %153 = vmatprep.subr.mxu0 0.0
    %154 = vmatpush1.msra.mxu0 %v128
    %155 = vmatprep.subr.mxu0 0.0
    %156 = vmatpush1.msra.mxu0 %v129
    %157 = vmatprep.subr.mxu0 0.0
    %158 = vmatpush1.msra.mxu0 %v130
    %159 = vmatprep.subr.mxu0 0.0
    %160 = vmatpush1.msra.mxu0 %v131
    %161 = vmatprep.subr.mxu0 0.0
    %162 = vmatpush1.msra.mxu0 %v132
    %163 = vmatprep.subr.mxu0 0.0
    %164 = vmatpush1.msra.mxu0 %v133
    %165 = vmatprep.subr.mxu0 0.0
    %166 = vmatpush1.msra.mxu0 %v134
    %167 = vmatprep.subr.mxu0 0.0
    %168 = vmatpush1.msra.mxu0 %v135
    %169 = vmatprep.subr.mxu0 0.0
    %170 = vmatpush1.msra.mxu0 %v136
    %171 = vmatprep.subr.mxu0 0.0
    %172 = vmatpush1.msra.mxu0 %v137
    %173 = vmatprep.subr.mxu0 0.0
    %174 = vmatpush1.msra.mxu0 %v138
    %175 = vmatprep.subr.mxu0 0.0
    %176 = vmatpush1.msra.mxu0 %v139
    %177 = vmatprep.subr.mxu0 0.0
    %178 = vmatpush1.msra.mxu0 %v140
    %179 = vmatprep.subr.mxu0 0.0
    %180 = vmatpush1.msra.mxu0 %v141
    %181 = vmatprep.subr.mxu0 0.0
    %182 = vmatpush1.msra.mxu0 0.0
    %183 = vmatprep.subr.mxu0 0.0
    %184 = vmatpush1.msra.mxu0 0.0
    %185 = vmatprep.subr.mxu0 0.0
    %186 = vmatpush1.msra.mxu0 0.0
    %187 = vmatprep.subr.mxu0 0.0
    %188 = vmatpush1.msra.mxu0 0.0
    %189 = vmatprep.subr.mxu0 0.0
    %190 = vmatpush1.msra.mxu0 0.0
    %191 = vmatprep.subr.mxu0 0.0
    %192 = vmatpush1.msra.mxu0 0.0
    %193 = vmatprep.subr.mxu0 0.0
    %194 = vmatpush1.msra.mxu0 0.0
    %195 = vmatprep.subr.mxu0 0.0
    %196 = vmatpush1.msra.mxu0 0.0
    %197 = vmatprep.subr.mxu0 0.0
    %198 = vmatpush1.msra.mxu0 0.0
    %199 = vmatprep.subr.mxu0 0.0
    %200 = vmatpush1.msra.mxu0 0.0
    %201 = vmatprep.subr.mxu0 0.0
    %202 = vmatpush1.msra.mxu0 0.0
    %203 = vmatprep.subr.mxu0 0.0
    %204 = vmatpush1.msra.mxu0 0.0
    %205 = vmatprep.subr.mxu0 0.0
    %206 = vmatpush1.msra.mxu0 0.0
    %207 = vmatprep.subr.mxu0 0.0
    %208 = vmatpush1.msra.mxu0 0.0
    %209 = vmatprep.subr.mxu0 0.0
    %210 = vmatpush1.msra.mxu0 0.0
    %211 = vmatprep.subr.mxu0 0.0
    %212 = vmatpush1.msra.mxu0 0.0
    %213 = vmatprep.mubr.f32.mxu0 0.0
    %214 = vmatmul.mubr.f32.gmra.mrb[0].mxu0 %v125
    %v215 = vpop.f32.mrb[0].mxu0
    %v216 = vadd.f32 %v147, %v215
    %v217 = vpop.f32.mrb[0].mxu0
    %218 = vdwg.mxu0
    %v219 = vld [vmem:[%s1] sm:$0xff]
    %v220 = vld [vmem:[%s1 + $0x8] sm:$0xff]
    %v221 = vld [vmem:[#allocation6] sm:$0xff]
    %v222 = vld [vmem:[#allocation6 + $0x8] sm:$0xff]
    %v223 = vld [vmem:[#allocation6 + $0x10] sm:$0xff]
    %v224 = vld [vmem:[#allocation6 + $0x18] sm:$0xff]
    %v225 = vld [vmem:[#allocation6 + $0x20] sm:$0xff]
    %v226 = vld [vmem:[#allocation6 + $0x28] sm:$0xff]
    %v227 = vld [vmem:[#allocation6 + $0x30] sm:$0xff]
    %v228 = vld [vmem:[#allocation6 + $0x38] sm:$0xff]
    %v229 = vld [vmem:[#allocation6 + $0x40] sm:$0xff]
    %v230 = vld [vmem:[#allocation6 + $0x48] sm:$0xff]
    %v231 = vld [vmem:[#allocation6 + $0x50] sm:$0xff]
    %v232 = vld [vmem:[#allocation6 + $0x58] sm:$0xff]
    %v233 = vld [vmem:[#allocation6 + $0x60] sm:$0xff]
    %v234 = vld [vmem:[#allocation6 + $0x68] sm:$0xff]
    %v235 = vld [vmem:[#allocation6 + $0x70] sm:$0xff]
    %v236 = vld [vmem:[#allocation6 + $0x78] sm:$0xff]
    %v237 = vld [vmem:[#allocation6 + $0x80] sm:$0xff]
    %v238 = vld [vmem:[#allocation6 + $0x88] sm:$0xff]
    %v239 = vld [vmem:[#allocation6 + $0x90] sm:$0xff]
    %v240 = vld [vmem:[#allocation6 + $0x98] sm:$0xff]
    %v241 = vld [vmem:[#allocation6 + $0xa0] sm:$0xff]
    %v242 = vld [vmem:[#allocation6 + $0xa8] sm:$0xff]
    %v243 = vld [vmem:[#allocation6 + $0xb0] sm:$0xff]
    %v244 = vld [vmem:[#allocation6 + $0xb8] sm:$0xff]
    %v245 = vld [vmem:[#allocation6 + $0xc0] sm:$0xff]
    %v246 = vld [vmem:[#allocation6 + $0xc8] sm:$0xff]
    %v247 = vld [vmem:[#allocation6 + $0xd0] sm:$0xff]
    %v248 = vld [vmem:[#allocation6 + $0xd8] sm:$0xff]
    %v249 = vld [vmem:[#allocation6 + $0xe0] sm:$0xff]
    %v250 = vld [vmem:[#allocation6 + $0xe8] sm:$0xff]
    %v251 = vld [vmem:[#allocation6 + $0xf0] sm:$0xff]
    %v252 = vld [vmem:[#allocation6 + $0xf8] sm:$0xff]
    %v253 = vld [vmem:[#allocation6 + $0x100] sm:$0xff]
    %v254 = vld [vmem:[#allocation6 + $0x108] sm:$0xff]
    %v255 = vld [vmem:[#allocation6 + $0x110] sm:$0xff]
    %v256 = vld [vmem:[#allocation6 + $0x118] sm:$0xff]
    %v257 = vld [vmem:[#allocation6 + $0x120] sm:$0xff]
    %v258 = vld [vmem:[#allocation6 + $0x128] sm:$0xff]
    %v259 = vld [vmem:[#allocation6 + $0x130] sm:$0xff]
    %v260 = vld [vmem:[#allocation6 + $0x138] sm:$0xff]
    %v261 = vld [vmem:[#allocation6 + $0x140] sm:$0xff]
    %v262 = vld [vmem:[#allocation6 + $0x148] sm:$0xff]
    %v263 = vld [vmem:[#allocation6 + $0x150] sm:$0xff]
    %v264 = vld [vmem:[#allocation6 + $0x158] sm:$0xff]
    %v265 = vld [vmem:[#allocation6 + $0x160] sm:$0xff]
    %v266 = vld [vmem:[#allocation6 + $0x168] sm:$0xff]
    %v267 = vld [vmem:[#allocation6 + $0x170] sm:$0xff]
    %v268 = vld [vmem:[#allocation6 + $0x178] sm:$0xff]
    %v269 = vld [vmem:[#allocation6 + $0x180] sm:$0xff]
    %v270 = vld [vmem:[#allocation6 + $0x188] sm:$0xff]
    %v271 = vld [vmem:[#allocation6 + $0x190] sm:$0xff]
    %v272 = vld [vmem:[#allocation6 + $0x198] sm:$0xff]
    %v273 = vld [vmem:[#allocation6 + $0x1a0] sm:$0xff]
    %v274 = vld [vmem:[#allocation6 + $0x1a8] sm:$0xff]
    %v275 = vld [vmem:[#allocation6 + $0x1b0] sm:$0xff]
    %v276 = vld [vmem:[#allocation6 + $0x1b8] sm:$0xff]
    %v277 = vld [vmem:[#allocation6 + $0x1c0] sm:$0xff]
    %v278 = vld [vmem:[#allocation6 + $0x1c8] sm:$0xff]
    %v279 = vld [vmem:[#allocation6 + $0x1d0] sm:$0xff]
    %v280 = vld [vmem:[#allocation6 + $0x1d8] sm:$0xff]
    %v281 = vld [vmem:[#allocation6 + $0x1e0] sm:$0xff]
    %v282 = vld [vmem:[#allocation6 + $0x1e8] sm:$0xff]
    %v283 = vld [vmem:[#allocation6 + $0x1f0] sm:$0xff]
    %v284 = vld [vmem:[#allocation6 + $0x1f8] sm:$0xff]
    %v285 = vld [vmem:[#allocation7] sm:$0x1]
    %v287 = vlaneseq
    %v288 = vshrl.u32 %v287, 7
    %v289 = vsub.s32 0, %v288
    %v290 = vrot.slane %v285, %v289
    %v294 = vcombine.high %v219, %v219
    %v295 = vcombine.high %v220, %v220
    %298 = vmatprep.subr.mxu0 0.0
    %299 = vmatpush1.msra.mxu0 %v221
    %300 = vmatprep.subr.mxu0 0.0
    %301 = vmatpush1.msra.mxu0 %v222
    %302 = vmatprep.subr.mxu0 0.0
    %303 = vmatpush1.msra.mxu0 %v223
    %304 = vmatprep.subr.mxu0 0.0
    %305 = vmatpush1.msra.mxu0 %v224
    %306 = vmatprep.subr.mxu0 0.0
    %307 = vmatpush1.msra.mxu0 %v225
    %308 = vmatprep.subr.mxu0 0.0
    %309 = vmatpush1.msra.mxu0 %v226
    %310 = vmatprep.subr.mxu0 0.0
    %311 = vmatpush1.msra.mxu0 %v227
    %312 = vmatprep.subr.mxu0 0.0
    %313 = vmatpush1.msra.mxu0 %v228
    %314 = vmatprep.subr.mxu0 0.0
    %315 = vmatpush1.msra.mxu0 %v229
    %316 = vmatprep.subr.mxu0 0.0
    %317 = vmatpush1.msra.mxu0 %v230
    %318 = vmatprep.subr.mxu0 0.0
    %319 = vmatpush1.msra.mxu0 %v231
    %320 = vmatprep.subr.mxu0 0.0
    %321 = vmatpush1.msra.mxu0 %v232
    %322 = vmatprep.subr.mxu0 0.0
    %323 = vmatpush1.msra.mxu0 %v233
    %324 = vmatprep.subr.mxu0 0.0
    %325 = vmatpush1.msra.mxu0 %v234
    %326 = vmatprep.subr.mxu0 0.0
    %327 = vmatpush1.msra.mxu0 %v235
    %328 = vmatprep.subr.mxu0 0.0
    %329 = vmatpush1.msra.mxu0 %v236
    %330 = vmatprep.subr.mxu0 0.0
    %331 = vmatpush1.msra.mxu0 %v237
    %332 = vmatprep.subr.mxu0 0.0
    %333 = vmatpush1.msra.mxu0 %v238
    %334 = vmatprep.subr.mxu0 0.0
    %335 = vmatpush1.msra.mxu0 %v239
    %336 = vmatprep.subr.mxu0 0.0
    %337 = vmatpush1.msra.mxu0 %v240
    %338 = vmatprep.subr.mxu0 0.0
    %339 = vmatpush1.msra.mxu0 %v241
    %340 = vmatprep.subr.mxu0 0.0
    %341 = vmatpush1.msra.mxu0 %v242
    %342 = vmatprep.subr.mxu0 0.0
    %343 = vmatpush1.msra.mxu0 %v243
    %344 = vmatprep.subr.mxu0 0.0
    %345 = vmatpush1.msra.mxu0 %v244
    %346 = vmatprep.subr.mxu0 0.0
    %347 = vmatpush1.msra.mxu0 %v245
    %348 = vmatprep.subr.mxu0 0.0
    %349 = vmatpush1.msra.mxu0 %v246
    %350 = vmatprep.subr.mxu0 0.0
    %351 = vmatpush1.msra.mxu0 %v247
    %352 = vmatprep.subr.mxu0 0.0
    %353 = vmatpush1.msra.mxu0 %v248
    %354 = vmatprep.subr.mxu0 0.0
    %355 = vmatpush1.msra.mxu0 %v249
    %356 = vmatprep.subr.mxu0 0.0
    %357 = vmatpush1.msra.mxu0 %v250
    %358 = vmatprep.subr.mxu0 0.0
    %359 = vmatpush1.msra.mxu0 %v251
    %360 = vmatprep.subr.mxu0 0.0
    %361 = vmatpush1.msra.mxu0 %v252
    %362 = vmatprep.mubr.f32.mxu0 %v294
    %363 = vmatmul.mubr.f32.gmra.mrb[0].mxu0 %v219
    %v364 = vpop.f32.mrb[0].mxu0
    %v365 = vadd.f32 %v290, %v364
    %v366 = vpop.f32.mrb[0].mxu0
    %367 = vdwg.mxu0
    %368 = vmatprep.subr.mxu0 0.0
    %369 = vmatpush1.msra.mxu0 %v253
    %370 = vmatprep.subr.mxu0 0.0
    %371 = vmatpush1.msra.mxu0 %v254
    %372 = vmatprep.subr.mxu0 0.0
    %373 = vmatpush1.msra.mxu0 %v255
    %374 = vmatprep.subr.mxu0 0.0
    %375 = vmatpush1.msra.mxu0 %v256
    %376 = vmatprep.subr.mxu0 0.0
    %377 = vmatpush1.msra.mxu0 %v257
    %378 = vmatprep.subr.mxu0 0.0
    %379 = vmatpush1.msra.mxu0 %v258
    %380 = vmatprep.subr.mxu0 0.0
    %381 = vmatpush1.msra.mxu0 %v259
    %382 = vmatprep.subr.mxu0 0.0
    %383 = vmatpush1.msra.mxu0 %v260
    %384 = vmatprep.subr.mxu0 0.0
    %385 = vmatpush1.msra.mxu0 %v261
    %386 = vmatprep.subr.mxu0 0.0
    %387 = vmatpush1.msra.mxu0 %v262
    %388 = vmatprep.subr.mxu0 0.0
    %389 = vmatpush1.msra.mxu0 %v263
    %390 = vmatprep.subr.mxu0 0.0
    %391 = vmatpush1.msra.mxu0 %v264
    %392 = vmatprep.subr.mxu0 0.0
    %393 = vmatpush1.msra.mxu0 %v265
    %394 = vmatprep.subr.mxu0 0.0
    %395 = vmatpush1.msra.mxu0 %v266
    %396 = vmatprep.subr.mxu0 0.0
    %397 = vmatpush1.msra.mxu0 %v267
    %398 = vmatprep.subr.mxu0 0.0
    %399 = vmatpush1.msra.mxu0 %v268
    %400 = vmatprep.subr.mxu0 0.0
    %401 = vmatpush1.msra.mxu0 %v269
    %402 = vmatprep.subr.mxu0 0.0
    %403 = vmatpush1.msra.mxu0 %v270
    %404 = vmatprep.subr.mxu0 0.0
    %405 = vmatpush1.msra.mxu0 %v271
    %406 = vmatprep.subr.mxu0 0.0
    %407 = vmatpush1.msra.mxu0 %v272
    %408 = vmatprep.subr.mxu0 0.0
    %409 = vmatpush1.msra.mxu0 %v273
    %410 = vmatprep.subr.mxu0 0.0
    %411 = vmatpush1.msra.mxu0 %v274
    %412 = vmatprep.subr.mxu0 0.0
    %413 = vmatpush1.msra.mxu0 %v275
    %414 = vmatprep.subr.mxu0 0.0
    %415 = vmatpush1.msra.mxu0 %v276
    %416 = vmatprep.subr.mxu0 0.0
    %417 = vmatpush1.msra.mxu0 %v277
    %418 = vmatprep.subr.mxu0 0.0
    %419 = vmatpush1.msra.mxu0 %v278
    %420 = vmatprep.subr.mxu0 0.0
    %421 = vmatpush1.msra.mxu0 %v279
    %422 = vmatprep.subr.mxu0 0.0
    %423 = vmatpush1.msra.mxu0 %v280
    %424 = vmatprep.subr.mxu0 0.0
    %425 = vmatpush1.msra.mxu0 %v281
    %426 = vmatprep.subr.mxu0 0.0
    %427 = vmatpush1.msra.mxu0 %v282
    %428 = vmatprep.subr.mxu0 0.0
    %429 = vmatpush1.msra.mxu0 %v283
    %430 = vmatprep.subr.mxu0 0.0
    %431 = vmatpush1.msra.mxu0 %v284
    %432 = vmatprep.mubr.f32.mxu0 %v295
    %433 = vmatmul.mubr.f32.gmra.mrb[0].mxu0 %v220
    %v434 = vpop.f32.mrb[0].mxu0
    %v435 = vadd.f32 %v365, %v434
    %v436 = vpop.f32.mrb[0].mxu0
    %437 = vdwg.mxu0
    %v438 = vmul.f32 %v216, %v216
    %vm439 = vcmask 1043456
    %v440 = vsel %vm439, %v438, 0.0
    %441 = vadd.xlane.f32.xlu0 %v440
    %v442 = vpop.xlane.xlu0 %441
    %v443 = vadd.f32 %v442, 1e-12
    %v444 = vrsqrt.pop %v443
    %v445 = vmul.f32 %v216, %v444
    %v446 = vmul.f32 %v435, %v435
    %v447 = vsel %vm439, %v446, 0.0
    %448 = vadd.xlane.f32.xlu0 %v447
    %v449 = vpop.xlane.xlu0 %448
    %v450 = vadd.f32 %v449, 1e-12
    %v451 = vrsqrt.pop %v450
    %v452 = vmul.f32 %v435, %v451
    %453 = vst [vmem:[%s9] sm:$0xf] %v445
    %454 = vst [vmem:[%s10] sm:$0xf] %v452
    %v455 = vld [vmem:[#allocation9] sm:$0xff]
    %v456 = vld [vmem:[#allocation9 + $0x8] sm:$0xff]
    %v457 = vld [vmem:[#allocation9 + $0x10] sm:$0xff]
    %v458 = vld [vmem:[#allocation9 + $0x18] sm:$0xff]
    %v459 = vld [vmem:[#allocation9 + $0x20] sm:$0xff]
    %v460 = vld [vmem:[#allocation9 + $0x28] sm:$0xff]
    %v461 = vld [vmem:[#allocation9 + $0x30] sm:$0xff]
    %v462 = vld [vmem:[#allocation9 + $0x38] sm:$0xff]
    %v463 = vld [vmem:[#allocation9 + $0x40] sm:$0xff]
    %v464 = vld [vmem:[#allocation9 + $0x48] sm:$0xff]
    %v465 = vld [vmem:[#allocation9 + $0x50] sm:$0xff]
    %v466 = vld [vmem:[#allocation9 + $0x58] sm:$0xff]
    %v467 = vld [vmem:[#allocation9 + $0x60] sm:$0xff]
    %v468 = vld [vmem:[#allocation9 + $0x68] sm:$0xff]
    %v469 = vld [vmem:[#allocation9 + $0x70] sm:$0xff]
    %v470 = vld [vmem:[#allocation9 + $0x78] sm:$0xff]
    %471 = vmatprep.subr.mxu0 0.0
    %472 = vmatpush1.msra.mxu0 %v455
    %473 = vmatprep.subr.mxu0 0.0
    %474 = vmatpush1.msra.mxu0 %v456
    %475 = vmatprep.subr.mxu0 0.0
    %476 = vmatpush1.msra.mxu0 %v457
    %477 = vmatprep.subr.mxu0 0.0
    %478 = vmatpush1.msra.mxu0 %v458
    %479 = vmatprep.subr.mxu0 0.0
    %480 = vmatpush1.msra.mxu0 %v459
    %481 = vmatprep.subr.mxu0 0.0
    %482 = vmatpush1.msra.mxu0 %v460
    %483 = vmatprep.subr.mxu0 0.0
    %484 = vmatpush1.msra.mxu0 %v461
    %485 = vmatprep.subr.mxu0 0.0
    %486 = vmatpush1.msra.mxu0 %v462
    %487 = vmatprep.subr.mxu0 0.0
    %488 = vmatpush1.msra.mxu0 %v463
    %489 = vmatprep.subr.mxu0 0.0
    %490 = vmatpush1.msra.mxu0 %v464
    %491 = vmatprep.subr.mxu0 0.0
    %492 = vmatpush1.msra.mxu0 %v465
    %493 = vmatprep.subr.mxu0 0.0
    %494 = vmatpush1.msra.mxu0 %v466
    %495 = vmatprep.subr.mxu0 0.0
    %496 = vmatpush1.msra.mxu0 %v467
    %497 = vmatprep.subr.mxu0 0.0
    %498 = vmatpush1.msra.mxu0 %v468
    %499 = vmatprep.subr.mxu0 0.0
    %500 = vmatpush1.msra.mxu0 %v469
    %501 = vmatprep.subr.mxu0 0.0
    %502 = vmatpush1.msra.mxu0 %v470
    %503 = vmatprep.subr.mxu0 0.0
    %504 = vmatpush1.msra.mxu0 0.0
    %505 = vmatprep.subr.mxu0 0.0
    %506 = vmatpush1.msra.mxu0 0.0
    %507 = vmatprep.subr.mxu0 0.0
    %508 = vmatpush1.msra.mxu0 0.0
    %509 = vmatprep.subr.mxu0 0.0
    %510 = vmatpush1.msra.mxu0 0.0
    %511 = vmatprep.subr.mxu0 0.0
    %512 = vmatpush1.msra.mxu0 0.0
    %513 = vmatprep.subr.mxu0 0.0
    %514 = vmatpush1.msra.mxu0 0.0
    %515 = vmatprep.subr.mxu0 0.0
    %516 = vmatpush1.msra.mxu0 0.0
    %517 = vmatprep.subr.mxu0 0.0
    %518 = vmatpush1.msra.mxu0 0.0
    %519 = vmatprep.subr.mxu0 0.0
    %520 = vmatpush1.msra.mxu0 0.0
    %521 = vmatprep.subr.mxu0 0.0
    %522 = vmatpush1.msra.mxu0 0.0
    %523 = vmatprep.subr.mxu0 0.0
    %524 = vmatpush1.msra.mxu0 0.0
    %525 = vmatprep.subr.mxu0 0.0
    %526 = vmatpush1.msra.mxu0 0.0
    %527 = vmatprep.subr.mxu0 0.0
    %528 = vmatpush1.msra.mxu0 0.0
    %529 = vmatprep.subr.mxu0 0.0
    %530 = vmatpush1.msra.mxu0 0.0
    %531 = vmatprep.subr.mxu0 0.0
    %532 = vmatpush1.msra.mxu0 0.0
    %533 = vmatprep.subr.mxu0 0.0
    %534 = vmatpush1.msra.mxu0 0.0
    %535 = vmatprep.mubr.f32.mxu0 0.0
    %536 = vmatmul.mubr.f32.gmra.mrb[0].mxu0 %v445
    %v537 = vpop.f32.mrb[0].mxu0
    %v538 = vadd.f32 0.0, %v537
    %v539 = vpop.f32.mrb[0].mxu0
    %540 = vdwg.mxu0
    %541 = vst [vmem:[%s11] sm:$0xf] %v538
    %v542 = vld [vmem:[#allocation10] sm:$0xff]
    %v543 = vld [vmem:[#allocation10 + $0x8] sm:$0xff]
    %v544 = vld [vmem:[#allocation10 + $0x10] sm:$0xff]
    %v545 = vld [vmem:[#allocation10 + $0x18] sm:$0xff]
    %v546 = vld [vmem:[#allocation10 + $0x20] sm:$0xff]
    %v547 = vld [vmem:[#allocation10 + $0x28] sm:$0xff]
    %v548 = vld [vmem:[#allocation10 + $0x30] sm:$0xff]
    %v549 = vld [vmem:[#allocation10 + $0x38] sm:$0xff]
    %v550 = vld [vmem:[#allocation10 + $0x40] sm:$0xff]
    %v551 = vld [vmem:[#allocation10 + $0x48] sm:$0xff]
    %v552 = vld [vmem:[#allocation10 + $0x50] sm:$0xff]
    %v553 = vld [vmem:[#allocation10 + $0x58] sm:$0xff]
    %v554 = vld [vmem:[#allocation10 + $0x60] sm:$0xff]
    %v555 = vld [vmem:[#allocation10 + $0x68] sm:$0xff]
    %v556 = vld [vmem:[#allocation10 + $0x70] sm:$0xff]
    %v557 = vld [vmem:[#allocation10 + $0x78] sm:$0xff]
    %v558 = vld [vmem:[#allocation12] sm:$0x1]
    %v560 = vlaneseq
    %v561 = vshrl.u32 %v560, 7
    %v562 = vsub.s32 0, %v561
    %v563 = vrot.slane %v558, %v562
    %565 = vmatprep.subr.mxu0 0.0
    %566 = vmatpush1.msra.mxu0 %v542
    %567 = vmatprep.subr.mxu0 0.0
    %568 = vmatpush1.msra.mxu0 %v543
    %569 = vmatprep.subr.mxu0 0.0
    %570 = vmatpush1.msra.mxu0 %v544
    %571 = vmatprep.subr.mxu0 0.0
    %572 = vmatpush1.msra.mxu0 %v545
    %573 = vmatprep.subr.mxu0 0.0
    %574 = vmatpush1.msra.mxu0 %v546
    %575 = vmatprep.subr.mxu0 0.0
    %576 = vmatpush1.msra.mxu0 %v547
    %577 = vmatprep.subr.mxu0 0.0
    %578 = vmatpush1.msra.mxu0 %v548
    %579 = vmatprep.subr.mxu0 0.0
    %580 = vmatpush1.msra.mxu0 %v549
    %581 = vmatprep.subr.mxu0 0.0
    %582 = vmatpush1.msra.mxu0 %v550
    %583 = vmatprep.subr.mxu0 0.0
    %584 = vmatpush1.msra.mxu0 %v551
    %585 = vmatprep.subr.mxu0 0.0
    %586 = vmatpush1.msra.mxu0 %v552
    %587 = vmatprep.subr.mxu0 0.0
    %588 = vmatpush1.msra.mxu0 %v553
    %589 = vmatprep.subr.mxu0 0.0
    %590 = vmatpush1.msra.mxu0 %v554
    %591 = vmatprep.subr.mxu0 0.0
    %592 = vmatpush1.msra.mxu0 %v555
    %593 = vmatprep.subr.mxu0 0.0
    %594 = vmatpush1.msra.mxu0 %v556
    %595 = vmatprep.subr.mxu0 0.0
    %596 = vmatpush1.msra.mxu0 %v557
    %597 = vmatprep.subr.mxu0 0.0
    %598 = vmatpush1.msra.mxu0 0.0
    %599 = vmatprep.subr.mxu0 0.0
    %600 = vmatpush1.msra.mxu0 0.0
    %601 = vmatprep.subr.mxu0 0.0
    %602 = vmatpush1.msra.mxu0 0.0
    %603 = vmatprep.subr.mxu0 0.0
    %604 = vmatpush1.msra.mxu0 0.0
    %605 = vmatprep.subr.mxu0 0.0
    %606 = vmatpush1.msra.mxu0 0.0
    %607 = vmatprep.subr.mxu0 0.0
    %608 = vmatpush1.msra.mxu0 0.0
    %609 = vmatprep.subr.mxu0 0.0
    %610 = vmatpush1.msra.mxu0 0.0
    %611 = vmatprep.subr.mxu0 0.0
    %612 = vmatpush1.msra.mxu0 0.0
    %613 = vmatprep.subr.mxu0 0.0
    %614 = vmatpush1.msra.mxu0 0.0
    %615 = vmatprep.subr.mxu0 0.0
    %616 = vmatpush1.msra.mxu0 0.0
    %617 = vmatprep.subr.mxu0 0.0
    %618 = vmatpush1.msra.mxu0 0.0
    %619 = vmatprep.subr.mxu0 0.0
    %620 = vmatpush1.msra.mxu0 0.0
    %621 = vmatprep.subr.mxu0 0.0
    %622 = vmatpush1.msra.mxu0 0.0
    %623 = vmatprep.subr.mxu0 0.0
    %624 = vmatpush1.msra.mxu0 0.0
    %625 = vmatprep.subr.mxu0 0.0
    %626 = vmatpush1.msra.mxu0 0.0
    %627 = vmatprep.subr.mxu0 0.0
    %628 = vmatpush1.msra.mxu0 0.0
    %629 = vmatprep.mubr.f32.mxu0 0.0
    %630 = vmatmul.mubr.f32.gmra.mrb[0].mxu0 %v452
    %v631 = vpop.f32.mrb[0].mxu0
    %v632 = vadd.f32 %v563, %v631
    %v633 = vpop.f32.mrb[0].mxu0
    %634 = vdwg.mxu0
    %635 = vst [vmem:[%s12] sm:$0xf] %v632
    // Predicated region
    $region66: #{ctrl_forward.4} parent=1 // pred_check
      _
    $region67: #{ctrl_forward.4} parent=1 // pred_check_branch
      %637 = sbr.rel (0) target = $region69
    $region68: #{ctrl_forward.4} parent=1 // pred_region
      _
    $region69: #{ctrl_forward.4} parent=1 // pred_fallthru
      _
    // Predicated region
    $region70: #{ctrl_forward.4} parent=1 // pred_check
      _
    $region71: #{ctrl_forward.4} parent=1 // pred_check_branch
      %639 = sbr.rel (0) target = $region73
    $region72: #{ctrl_forward.4} parent=1 // pred_region
      _
    $region73: #{ctrl_forward.4} parent=1 // pred_fallthru
      _
    // Predicated region
    $region74: #{ctrl_forward.4} parent=1 // pred_check
      _
    $region75: #{ctrl_forward.4} parent=1 // pred_check_branch
      %641 = sbr.rel (0) target = $region77
    $region76: #{ctrl_forward.4} parent=1 // pred_region
      _
    $region77: #{ctrl_forward.4} parent=1 // pred_fallthru
      _
    // Predicated region
    $region78: #{ctrl_forward.4} parent=1 // pred_check
      _
    $region79: #{ctrl_forward.4} parent=1 // pred_check_branch
      %643 = sbr.rel (0) target = $region81
    $region80: #{ctrl_forward.4} parent=1 // pred_region
      _
    $region81: #{ctrl_forward.4} parent=1 // pred_fallthru
      _
    // Predicated region
    $region82: #{ctrl_forward.4} parent=1 // pred_check
      _
    $region83: #{ctrl_forward.4} parent=1 // pred_check_branch
      %645 = sbr.rel (0) target = $region85
    $region84: #{ctrl_forward.4} parent=1 // pred_region
      _
    $region85: #{ctrl_forward.4} parent=1 // pred_fallthru
      _
    // Predicated region
    $region86: #{ctrl_forward.4} parent=1 // pred_check
      _
    $region87: #{ctrl_forward.4} parent=1 // pred_check_branch
      %647 = sbr.rel (0) target = $region89
    $region88: #{ctrl_forward.4} parent=1 // pred_region
      _
    $region89: #{ctrl_forward.4} parent=1 // pred_fallthru
      _
    // Predicated region
    $region90: #{ctrl_forward.4} parent=1 // pred_check
      _
    $region91: #{ctrl_forward.4} parent=1 // pred_check_branch
      %649 = sbr.rel (0) target = $region93
    $region92: #{ctrl_forward.4} parent=1 // pred_region
      _
    $region93: #{ctrl_forward.4} parent=1 // pred_fallthru
      _
    // Predicated region
    $region94: #{ctrl_forward.4} parent=1 // pred_check
      _
    $region95: #{ctrl_forward.4} parent=1 // pred_check_branch
      %651 = sbr.rel (0) target = $region97
    $region96: #{ctrl_forward.4} parent=1 // pred_region
      _
    $region97: #{ctrl_forward.4} parent=1 // pred_fallthru
      _
    %652 = vsyncpa [#allocation3], 1
    %653 = vsyncpa [#allocation5], 1
    %654 = vsyncpa [#allocation8], 1
    %655 = vsyncpa [#allocation11], 1

// kernel: ctrl_forward.3
$region0: #{ctrl_forward.3}
  #allocation0 [shape = 'u32[]', space=smem, size = 0x4, offset = 0x4, fixed_abs, tag = 'smem constant byte address 0x4 - core index']
  #allocation1 [shape = 'u32[144,128]{1,0:T(1,128)}', space=vmem, size = 0x12000, scoped, tag = 'internal scratch']
  #allocation2 [shape = 'f32[32,1536]{1,0:T(8,128)}', space=vmem, size = 0x30000, scoped, tag = 'scratch operand']
  %s0 = inlined_call_operand.vmem [shape: f32[32,384], index: 0, kind: input, shape index: {}]
  %s1 = inlined_call_operand.hbm [shape: f32[384,1536], index: 1, kind: input, shape index: {}]
  %s2 = inlined_call_operand.hbm [shape: f32[1,1536], index: 2, kind: input, shape index: {}]
  %s3 = inlined_call_operand.hbm [shape: f32[256,768], index: 3, kind: input, shape index: {}]
  %s4 = inlined_call_operand.hbm [shape: f32[1,768], index: 4, kind: input, shape index: {}]
  %s5 = inlined_call_operand.hbm [shape: f32[256,768], index: 5, kind: input, shape index: {}]
  %s6 = inlined_call_operand.hbm [shape: f32[1,768], index: 6, kind: input, shape index: {}]
  %s7 = inlined_call_operand.vmem [shape: f32[4,512], index: 7, kind: output, shape index: {}]
  %s8 = sld [smem:[#allocation0]]
  $region62: #{ctrl_forward.3} parent=0
    _
  %s10 = ssub.s32 1, %s8
  %s11 = scalar_select 0, %s10, %s8
  $region1: #{ctrl_forward.3} parent=0
    #allocation3 [shape = 'u8[2359296]{0}', space=vmem, size = 0x240000, scoped, tag = 'input window, operand 1, single buffered']
    #allocation4 [shape = 's32[1]{0}', space=sflag, size = 0x4, scoped, tag = 'scoped memory for ctrl_forward.3']
    #allocation5 [shape = 'u8[6144]{0}', space=vmem, size = 0x1800, scoped, tag = 'input window, operand 2, single buffered']
    #allocation6 [shape = 's32[1]{0}', space=sflag, size = 0x4, scoped, tag = 'scoped memory for ctrl_forward.3']
    #allocation7 [shape = 'u8[786432]{0}', space=vmem, size = 0xc0000, scoped, tag = 'input window, operand 3, single buffered']
    #allocation8 [shape = 'u8[3072]{0}', space=vmem, size = 0xc00, scoped, tag = 'input window, operand 4, single buffered']
    #allocation9 [shape = 's32[1]{0}', space=sflag, size = 0x4, scoped, tag = 'scoped memory for ctrl_forward.3']
    #allocation10 [shape = 'u8[786432]{0}', space=vmem, size = 0xc0000, scoped, tag = 'input window, operand 5, single buffered']
    #allocation11 [shape = 'u8[3072]{0}', space=vmem, size = 0xc00, scoped, tag = 'input window, operand 6, single buffered']
    #allocation12 [shape = 's32[1]{0}', space=sflag, size = 0x4, scoped, tag = 'scoped memory for ctrl_forward.3']
    %12 = vsyncpa [#allocation4], 0
    %13 = vsyncpa [#allocation6], 0
    %14 = vsyncpa [#allocation9], 0
    %15 = vsyncpa [#allocation12], 0
    // Predicated region
    $region2: #{ctrl_forward.3} parent=1 // pred_check
      _
    $region3: #{ctrl_forward.3} parent=1 // pred_check_branch
      %17 = sbr.rel (0) target = $region5
    $region4: #{ctrl_forward.3} parent=1 // pred_region
      _
    $region5: #{ctrl_forward.3} parent=1 // pred_fallthru
      _
    // Predicated region
    $region6: #{ctrl_forward.3} parent=1 // pred_check
      _
    $region7: #{ctrl_forward.3} parent=1 // pred_check_branch
      %19 = sbr.rel (0) target = $region9
    $region8: #{ctrl_forward.3} parent=1 // pred_region
      %s21 = ssub.s32 73728, 73728
      %22 = vsyncadd [#allocation4], %s21
      %s23 = sshll.u32 [#allocation3], 4
      %s24 = int_to_ptr.vmem [resolvable:$true] %s23
      %29 = dma.hbm_to_vmem [thread:$0]  %s1, 73728, %s24, [#allocation4], 1536, 1536, 96
    $region9: #{ctrl_forward.3} parent=1 // pred_fallthru
      _
    // Predicated region
    $region10: #{ctrl_forward.3} parent=1 // pred_check
      _
    $region11: #{ctrl_forward.3} parent=1 // pred_check_branch
      %31 = sbr.rel (0) target = $region13
    $region12: #{ctrl_forward.3} parent=1 // pred_region
      %s33 = ssub.s32 192, 192
      %34 = vsyncadd [#allocation6], %s33
      %s36 = sshll.u32 [#allocation5], 4
      %s37 = int_to_ptr.vmem [resolvable:$true] %s36
      %39 = dma.hbm_to_vmem [thread:$0]  %s2, 192, %s37, [#allocation6]
    $region13: #{ctrl_forward.3} parent=1 // pred_fallthru
      _
    // Predicated region
    $region14: #{ctrl_forward.3} parent=1 // pred_check
      _
    $region15: #{ctrl_forward.3} parent=1 // pred_check_branch
      %41 = sbr.rel (0) target = $region17
    $region16: #{ctrl_forward.3} parent=1 // pred_region
      %s43 = ssub.s32 24576, 24576
      %44 = vsyncadd [#allocation6], %s43
      %s45 = sshll.u32 [#allocation7], 4
      %s46 = int_to_ptr.vmem [resolvable:$true] %s45
      %51 = dma.hbm_to_vmem [thread:$0]  %s3, 24576, %s46, [#allocation6], 768, 768, 48
    $region17: #{ctrl_forward.3} parent=1 // pred_fallthru
      _
    // Predicated region
    $region18: #{ctrl_forward.3} parent=1 // pred_check
      _
    $region19: #{ctrl_forward.3} parent=1 // pred_check_branch
      %53 = sbr.rel (0) target = $region21
    $region20: #{ctrl_forward.3} parent=1 // pred_region
      %s55 = ssub.s32 96, 96
      %56 = vsyncadd [#allocation9], %s55
      %s58 = sshll.u32 [#allocation8], 4
      %s59 = int_to_ptr.vmem [resolvable:$true] %s58
      %61 = dma.hbm_to_vmem [thread:$0]  %s4, 96, %s59, [#allocation9]
    $region21: #{ctrl_forward.3} parent=1 // pred_fallthru
      _
    // Predicated region
    $region22: #{ctrl_forward.3} parent=1 // pred_check
      _
    $region23: #{ctrl_forward.3} parent=1 // pred_check_branch
      %63 = sbr.rel (0) target = $region25
    $region24: #{ctrl_forward.3} parent=1 // pred_region
      %s65 = ssub.s32 24576, 24576
      %66 = vsyncadd [#allocation9], %s65
      %s67 = sshll.u32 [#allocation10], 4
      %s68 = int_to_ptr.vmem [resolvable:$true] %s67
      %73 = dma.hbm_to_vmem [thread:$0]  %s5, 24576, %s68, [#allocation9], 768, 768, 48
    $region25: #{ctrl_forward.3} parent=1 // pred_fallthru
      _
    // Predicated region
    $region26: #{ctrl_forward.3} parent=1 // pred_check
      _
    $region27: #{ctrl_forward.3} parent=1 // pred_check_branch
      %75 = sbr.rel (0) target = $region29
    $region28: #{ctrl_forward.3} parent=1 // pred_region
      %s77 = ssub.s32 96, 96
      %78 = vsyncadd [#allocation12], %s77
      %s80 = sshll.u32 [#allocation11], 4
      %s81 = int_to_ptr.vmem [resolvable:$true] %s80
      %83 = dma.hbm_to_vmem [thread:$0]  %s6, 96, %s81, [#allocation12]
    $region29: #{ctrl_forward.3} parent=1 // pred_fallthru
      _
    // Predicated region
    $region30: #{ctrl_forward.3} parent=1 // pred_check
      _
    $region31: #{ctrl_forward.3} parent=1 // pred_check_branch
      %85 = sbr.rel (0) target = $region33
    $region32: #{ctrl_forward.3} parent=1 // pred_region
      %86 = dma.done [#allocation4], 73728
    $region33: #{ctrl_forward.3} parent=1 // pred_fallthru
      _
    // Predicated region
    $region34: #{ctrl_forward.3} parent=1 // pred_check
      _
    $region35: #{ctrl_forward.3} parent=1 // pred_check_branch
      %88 = sbr.rel (0) target = $region37
    $region36: #{ctrl_forward.3} parent=1 // pred_region
      %89 = dma.done [#allocation6], 192
    $region37: #{ctrl_forward.3} parent=1 // pred_fallthru
      _
    // Predicated region
    $region38: #{ctrl_forward.3} parent=1 // pred_check
      _
    $region39: #{ctrl_forward.3} parent=1 // pred_check_branch
      %91 = sbr.rel (0) target = $region41
    $region40: #{ctrl_forward.3} parent=1 // pred_region
      %92 = dma.done [#allocation6], 24576
    $region41: #{ctrl_forward.3} parent=1 // pred_fallthru
      _
    // Predicated region
    $region42: #{ctrl_forward.3} parent=1 // pred_check
      _
    $region43: #{ctrl_forward.3} parent=1 // pred_check_branch
      %94 = sbr.rel (0) target = $region45
    $region44: #{ctrl_forward.3} parent=1 // pred_region
      %95 = dma.done [#allocation9], 96
    $region45: #{ctrl_forward.3} parent=1 // pred_fallthru
      _
    // Predicated region
    $region46: #{ctrl_forward.3} parent=1 // pred_check
      _
    $region47: #{ctrl_forward.3} parent=1 // pred_check_branch
      %97 = sbr.rel (0) target = $region49
    $region48: #{ctrl_forward.3} parent=1 // pred_region
      %98 = dma.done [#allocation9], 24576
    $region49: #{ctrl_forward.3} parent=1 // pred_fallthru
      _
    // Predicated region
    $region50: #{ctrl_forward.3} parent=1 // pred_check
      _
    $region51: #{ctrl_forward.3} parent=1 // pred_check_branch
      %100 = sbr.rel (0) target = $region53
    $region52: #{ctrl_forward.3} parent=1 // pred_region
      %101 = dma.done [#allocation12], 96
    $region53: #{ctrl_forward.3} parent=1 // pred_fallthru
      _
    %v102 = vld [vmem:[%s0] sm:$0xff]
    %v103 = vld [vmem:[%s0 + $0x8] sm:$0xff]
    %v104 = vld [vmem:[%s0 + $0x10] sm:$0xff]
    %v105 = vld [vmem:[%s0 + $0x18] sm:$0xff]
    %v106 = vld [vmem:[%s0 + $0x20] sm:$0xff]
    %v107 = vld [vmem:[%s0 + $0x28] sm:$0xff]
    %v108 = vld [vmem:[%s0 + $0x30] sm:$0xff]
    %v109 = vld [vmem:[%s0 + $0x38] sm:$0xff]
    %v110 = vld [vmem:[%s0 + $0x40] sm:$0xff]
    %v111 = vld [vmem:[%s0 + $0x48] sm:$0xff]
    %v112 = vld [vmem:[%s0 + $0x50] sm:$0xff]
    %v113 = vld [vmem:[%s0 + $0x58] sm:$0xff]
    %v114 = vld [vmem:[#allocation3] sm:$0xff]
    %v115 = vld [vmem:[#allocation3 + $0x8] sm:$0xff]
    %v116 = vld [vmem:[#allocation3 + $0x10] sm:$0xff]
    %v117 = vld [vmem:[#allocation3 + $0x18] sm:$0xff]
    %v118 = vld [vmem:[#allocation3 + $0x20] sm:$0xff]
    %v119 = vld [vmem:[#allocation3 + $0x28] sm:$0xff]
    %v120 = vld [vmem:[#allocation3 + $0x30] sm:$0xff]
    %v121 = vld [vmem:[#allocation3 + $0x38] sm:$0xff]
    %v122 = vld [vmem:[#allocation3 + $0x40] sm:$0xff]
    %v123 = vld [vmem:[#allocation3 + $0x48] sm:$0xff]
    %v124 = vld [vmem:[#allocation3 + $0x50] sm:$0xff]
    %v125 = vld [vmem:[#allocation3 + $0x58] sm:$0xff]
    %v126 = vld [vmem:[#allocation3 + $0x60] sm:$0xff]
    %v127 = vld [vmem:[#allocation3 + $0x68] sm:$0xff]
    %v128 = vld [vmem:[#allocation3 + $0x70] sm:$0xff]
    %v129 = vld [vmem:[#allocation3 + $0x78] sm:$0xff]
    %v130 = vld [vmem:[#allocation3 + $0x80] sm:$0xff]
    %v131 = vld [vmem:[#allocation3 + $0x88] sm:$0xff]
    %v132 = vld [vmem:[#allocation3 + $0x90] sm:$0xff]
    %v133 = vld [vmem:[#allocation3 + $0x98] sm:$0xff]
    %v134 = vld [vmem:[#allocation3 + $0xa0] sm:$0xff]
    %v135 = vld [vmem:[#allocation3 + $0xa8] sm:$0xff]
    %v136 = vld [vmem:[#allocation3 + $0xb0] sm:$0xff]
    %v137 = vld [vmem:[#allocation3 + $0xb8] sm:$0xff]
    %v138 = vld [vmem:[#allocation3 + $0xc0] sm:$0xff]
    %v139 = vld [vmem:[#allocation3 + $0xc8] sm:$0xff]
    %v140 = vld [vmem:[#allocation3 + $0xd0] sm:$0xff]
    %v141 = vld [vmem:[#allocation3 + $0xd8] sm:$0xff]
    %v142 = vld [vmem:[#allocation3 + $0xe0] sm:$0xff]
    %v143 = vld [vmem:[#allocation3 + $0xe8] sm:$0xff]
    %v144 = vld [vmem:[#allocation3 + $0xf0] sm:$0xff]
    %v145 = vld [vmem:[#allocation3 + $0xf8] sm:$0xff]
    %v146 = vld [vmem:[#allocation3 + $0x100] sm:$0xff]
    %v147 = vld [vmem:[#allocation3 + $0x108] sm:$0xff]
    %v148 = vld [vmem:[#allocation3 + $0x110] sm:$0xff]
    %v149 = vld [vmem:[#allocation3 + $0x118] sm:$0xff]
    %v150 = vld [vmem:[#allocation3 + $0x120] sm:$0xff]
    %v151 = vld [vmem:[#allocation3 + $0x128] sm:$0xff]
    %v152 = vld [vmem:[#allocation3 + $0x130] sm:$0xff]
    %v153 = vld [vmem:[#allocation3 + $0x138] sm:$0xff]
    %v154 = vld [vmem:[#allocation3 + $0x140] sm:$0xff]
    %v155 = vld [vmem:[#allocation3 + $0x148] sm:$0xff]
    %v156 = vld [vmem:[#allocation3 + $0x150] sm:$0xff]
    %v157 = vld [vmem:[#allocation3 + $0x158] sm:$0xff]
    %v158 = vld [vmem:[#allocation3 + $0x160] sm:$0xff]
    %v159 = vld [vmem:[#allocation3 + $0x168] sm:$0xff]
    %v160 = vld [vmem:[#allocation3 + $0x170] sm:$0xff]
    %v161 = vld [vmem:[#allocation3 + $0x178] sm:$0xff]
    %v162 = vld [vmem:[#allocation3 + $0x180] sm:$0xff]
    %v163 = vld [vmem:[#allocation3 + $0x188] sm:$0xff]
    %v164 = vld [vmem:[#allocation3 + $0x190] sm:$0xff]
    %v165 = vld [vmem:[#allocation3 + $0x198] sm:$0xff]
    %v166 = vld [vmem:[#allocation3 + $0x1a0] sm:$0xff]
    %v167 = vld [vmem:[#allocation3 + $0x1a8] sm:$0xff]
    %v168 = vld [vmem:[#allocation3 + $0x1b0] sm:$0xff]
    %v169 = vld [vmem:[#allocation3 + $0x1b8] sm:$0xff]
    %v170 = vld [vmem:[#allocation3 + $0x1c0] sm:$0xff]
    %v171 = vld [vmem:[#allocation3 + $0x1c8] sm:$0xff]
    %v172 = vld [vmem:[#allocation3 + $0x1d0] sm:$0xff]
    %v173 = vld [vmem:[#allocation3 + $0x1d8] sm:$0xff]
    %v174 = vld [vmem:[#allocation3 + $0x1e0] sm:$0xff]
    %v175 = vld [vmem:[#allocation3 + $0x1e8] sm:$0xff]
    %v176 = vld [vmem:[#allocation3 + $0x1f0] sm:$0xff]
    %v177 = vld [vmem:[#allocation3 + $0x1f8] sm:$0xff]
    %v178 = vld [vmem:[#allocation3 + $0x200] sm:$0xff]
    %v179 = vld [vmem:[#allocation3 + $0x208] sm:$0xff]
    %v180 = vld [vmem:[#allocation3 + $0x210] sm:$0xff]
    %v181 = vld [vmem:[#allocation3 + $0x218] sm:$0xff]
    %v182 = vld [vmem:[#allocation3 + $0x220] sm:$0xff]
    %v183 = vld [vmem:[#allocation3 + $0x228] sm:$0xff]
    %v184 = vld [vmem:[#allocation3 + $0x230] sm:$0xff]
    %v185 = vld [vmem:[#allocation3 + $0x238] sm:$0xff]
    %v186 = vld [vmem:[#allocation3 + $0x240] sm:$0xff]
    %v187 = vld [vmem:[#allocation3 + $0x248] sm:$0xff]
    %v188 = vld [vmem:[#allocation3 + $0x250] sm:$0xff]
    %v189 = vld [vmem:[#allocation3 + $0x258] sm:$0xff]
    %v190 = vld [vmem:[#allocation3 + $0x260] sm:$0xff]
    %v191 = vld [vmem:[#allocation3 + $0x268] sm:$0xff]
    %v192 = vld [vmem:[#allocation3 + $0x270] sm:$0xff]
    %v193 = vld [vmem:[#allocation3 + $0x278] sm:$0xff]
    %v194 = vld [vmem:[#allocation3 + $0x280] sm:$0xff]
    %v195 = vld [vmem:[#allocation3 + $0x288] sm:$0xff]
    %v196 = vld [vmem:[#allocation3 + $0x290] sm:$0xff]
    %v197 = vld [vmem:[#allocation3 + $0x298] sm:$0xff]
    %v198 = vld [vmem:[#allocation3 + $0x2a0] sm:$0xff]
    %v199 = vld [vmem:[#allocation3 + $0x2a8] sm:$0xff]
    %v200 = vld [vmem:[#allocation3 + $0x2b0] sm:$0xff]
    %v201 = vld [vmem:[#allocation3 + $0x2b8] sm:$0xff]
    %v202 = vld [vmem:[#allocation3 + $0x2c0] sm:$0xff]
    %v203 = vld [vmem:[#allocation3 + $0x2c8] sm:$0xff]
    %v204 = vld [vmem:[#allocation3 + $0x2d0] sm:$0xff]
    %v205 = vld [vmem:[#allocation3 + $0x2d8] sm:$0xff]
    %v206 = vld [vmem:[#allocation3 + $0x2e0] sm:$0xff]
    %v207 = vld [vmem:[#allocation3 + $0x2e8] sm:$0xff]
    %v208 = vld [vmem:[#allocation3 + $0x2f0] sm:$0xff]
    %v209 = vld [vmem:[#allocation3 + $0x2f8] sm:$0xff]
    %v210 = vld [vmem:[#allocation3 + $0x300] sm:$0xff]
    %v211 = vld [vmem:[#allocation3 + $0x308] sm:$0xff]
    %v212 = vld [vmem:[#allocation3 + $0x310] sm:$0xff]
    %v213 = vld [vmem:[#allocation3 + $0x318] sm:$0xff]
    %v214 = vld [vmem:[#allocation3 + $0x320] sm:$0xff]
    %v215 = vld [vmem:[#allocation3 + $0x328] sm:$0xff]
    %v216 = vld [vmem:[#allocation3 + $0x330] sm:$0xff]
    %v217 = vld [vmem:[#allocation3 + $0x338] sm:$0xff]
    %v218 = vld [vmem:[#allocation3 + $0x340] sm:$0xff]
    %v219 = vld [vmem:[#allocation3 + $0x348] sm:$0xff]
    %v220 = vld [vmem:[#allocation3 + $0x350] sm:$0xff]
    %v221 = vld [vmem:[#allocation3 + $0x358] sm:$0xff]
    %v222 = vld [vmem:[#allocation3 + $0x360] sm:$0xff]
    %v223 = vld [vmem:[#allocation3 + $0x368] sm:$0xff]
    %v224 = vld [vmem:[#allocation3 + $0x370] sm:$0xff]
    %v225 = vld [vmem:[#allocation3 + $0x378] sm:$0xff]
    %v226 = vld [vmem:[#allocation3 + $0x380] sm:$0xff]
    %v227 = vld [vmem:[#allocation3 + $0x388] sm:$0xff]
    %v228 = vld [vmem:[#allocation3 + $0x390] sm:$0xff]
    %v229 = vld [vmem:[#allocation3 + $0x398] sm:$0xff]
    %v230 = vld [vmem:[#allocation3 + $0x3a0] sm:$0xff]
    %v231 = vld [vmem:[#allocation3 + $0x3a8] sm:$0xff]
    %v232 = vld [vmem:[#allocation3 + $0x3b0] sm:$0xff]
    %v233 = vld [vmem:[#allocation3 + $0x3b8] sm:$0xff]
    %v234 = vld [vmem:[#allocation3 + $0x3c0] sm:$0xff]
    %v235 = vld [vmem:[#allocation3 + $0x3c8] sm:$0xff]
    %v236 = vld [vmem:[#allocation3 + $0x3d0] sm:$0xff]
    %v237 = vld [vmem:[#allocation3 + $0x3d8] sm:$0xff]
    %v238 = vld [vmem:[#allocation3 + $0x3e0] sm:$0xff]
    %v239 = vld [vmem:[#allocation3 + $0x3e8] sm:$0xff]
    %v240 = vld [vmem:[#allocation3 + $0x3f0] sm:$0xff]
    %v241 = vld [vmem:[#allocation3 + $0x3f8] sm:$0xff]
    %v242 = vld [vmem:[#allocation3 + $0x400] sm:$0xff]
    %v243 = vld [vmem:[#allocation3 + $0x408] sm:$0xff]
    %v244 = vld [vmem:[#allocation3 + $0x410] sm:$0xff]
    %v245 = vld [vmem:[#allocation3 + $0x418] sm:$0xff]
    %v246 = vld [vmem:[#allocation3 + $0x420] sm:$0xff]
    %v247 = vld [vmem:[#allocation3 + $0x428] sm:$0xff]
    %v248 = vld [vmem:[#allocation3 + $0x430] sm:$0xff]
    %v249 = vld [vmem:[#allocation3 + $0x438] sm:$0xff]
    %v250 = vld [vmem:[#allocation3 + $0x440] sm:$0xff]
    %v251 = vld [vmem:[#allocation3 + $0x448] sm:$0xff]
    %v252 = vld [vmem:[#allocation3 + $0x450] sm:$0xff]
    %v253 = vld [vmem:[#allocation3 + $0x458] sm:$0xff]
    %v254 = vld [vmem:[#allocation3 + $0x460] sm:$0xff]
    %v255 = vld [vmem:[#allocation3 + $0x468] sm:$0xff]
    %v256 = vld [vmem:[#allocation3 + $0x470] sm:$0xff]
    %v257 = vld [vmem:[#allocation3 + $0x478] sm:$0xff]
    %v258 = vld [vmem:[#allocation3 + $0x480] sm:$0xff]
    %v259 = vld [vmem:[#allocation3 + $0x488] sm:$0xff]
    %v260 = vld [vmem:[#allocation3 + $0x490] sm:$0xff]
    %v261 = vld [vmem:[#allocation3 + $0x498] sm:$0xff]
    %v262 = vld [vmem:[#allocation3 + $0x4a0] sm:$0xff]
    %v263 = vld [vmem:[#allocation3 + $0x4a8] sm:$0xff]
    %v264 = vld [vmem:[#allocation3 + $0x4b0] sm:$0xff]
    %v265 = vld [vmem:[#allocation3 + $0x4b8] sm:$0xff]
    %v266 = vld [vmem:[#allocation3 + $0x4c0] sm:$0xff]
    %v267 = vld [vmem:[#allocation3 + $0x4c8] sm:$0xff]
    %v268 = vld [vmem:[#allocation3 + $0x4d0] sm:$0xff]
    %v269 = vld [vmem:[#allocation3 + $0x4d8] sm:$0xff]
    %v270 = vld [vmem:[#allocation3 + $0x4e0] sm:$0xff]
    %v271 = vld [vmem:[#allocation3 + $0x4e8] sm:$0xff]
    %v272 = vld [vmem:[#allocation3 + $0x4f0] sm:$0xff]
    %v273 = vld [vmem:[#allocation3 + $0x4f8] sm:$0xff]
    %v274 = vld [vmem:[#allocation3 + $0x500] sm:$0xff]
    %v275 = vld [vmem:[#allocation3 + $0x508] sm:$0xff]
    %v276 = vld [vmem:[#allocation3 + $0x510] sm:$0xff]
    %v277 = vld [vmem:[#allocation3 + $0x518] sm:$0xff]
    %v278 = vld [vmem:[#allocation3 + $0x520] sm:$0xff]
    %v279 = vld [vmem:[#allocation3 + $0x528] sm:$0xff]
    %v280 = vld [vmem:[#allocation3 + $0x530] sm:$0xff]
    %v281 = vld [vmem:[#allocation3 + $0x538] sm:$0xff]
    %v282 = vld [vmem:[#allocation3 + $0x540] sm:$0xff]
    %v283 = vld [vmem:[#allocation3 + $0x548] sm:$0xff]
    %v284 = vld [vmem:[#allocation3 + $0x550] sm:$0xff]
    %v285 = vld [vmem:[#allocation3 + $0x558] sm:$0xff]
    %v286 = vld [vmem:[#allocation3 + $0x560] sm:$0xff]
    %v287 = vld [vmem:[#allocation3 + $0x568] sm:$0xff]
    %v288 = vld [vmem:[#allocation3 + $0x570] sm:$0xff]
    %v289 = vld [vmem:[#allocation3 + $0x578] sm:$0xff]
    %v290 = vld [vmem:[#allocation3 + $0x580] sm:$0xff]
    %v291 = vld [vmem:[#allocation3 + $0x588] sm:$0xff]
    %v292 = vld [vmem:[#allocation3 + $0x590] sm:$0xff]
    %v293 = vld [vmem:[#allocation3 + $0x598] sm:$0xff]
    %v294 = vld [vmem:[#allocation3 + $0x5a0] sm:$0xff]
    %v295 = vld [vmem:[#allocation3 + $0x5a8] sm:$0xff]
    %v296 = vld [vmem:[#allocation3 + $0x5b0] sm:$0xff]
    %v297 = vld [vmem:[#allocation3 + $0x5b8] sm:$0xff]
    %v298 = vld [vmem:[#allocation3 + $0x5c0] sm:$0xff]
    %v299 = vld [vmem:[#allocation3 + $0x5c8] sm:$0xff]
    %v300 = vld [vmem:[#allocation3 + $0x5d0] sm:$0xff]
    %v301 = vld [vmem:[#allocation3 + $0x5d8] sm:$0xff]
    %v302 = vld [vmem:[#allocation3 + $0x5e0] sm:$0xff]
    %v303 = vld [vmem:[#allocation3 + $0x5e8] sm:$0xff]
    %v304 = vld [vmem:[#allocation3 + $0x5f0] sm:$0xff]
    %v305 = vld [vmem:[#allocation3 + $0x5f8] sm:$0xff]
    %v306 = vld [vmem:[#allocation3 + $0x600] sm:$0xff]
    %v307 = vld [vmem:[#allocation3 + $0x608] sm:$0xff]
    %v308 = vld [vmem:[#allocation3 + $0x610] sm:$0xff]
    %v309 = vld [vmem:[#allocation3 + $0x618] sm:$0xff]
    %v310 = vld [vmem:[#allocation3 + $0x620] sm:$0xff]
    %v311 = vld [vmem:[#allocation3 + $0x628] sm:$0xff]
    %v312 = vld [vmem:[#allocation3 + $0x630] sm:$0xff]
    %v313 = vld [vmem:[#allocation3 + $0x638] sm:$0xff]
    %v314 = vld [vmem:[#allocation3 + $0x640] sm:$0xff]
    %v315 = vld [vmem:[#allocation3 + $0x648] sm:$0xff]
    %v316 = vld [vmem:[#allocation3 + $0x650] sm:$0xff]
    %v317 = vld [vmem:[#allocation3 + $0x658] sm:$0xff]
    %v318 = vld [vmem:[#allocation3 + $0x660] sm:$0xff]
    %v319 = vld [vmem:[#allocation3 + $0x668] sm:$0xff]
    %v320 = vld [vmem:[#allocation3 + $0x670] sm:$0xff]
    %v321 = vld [vmem:[#allocation3 + $0x678] sm:$0xff]
    %v322 = vld [vmem:[#allocation3 + $0x680] sm:$0xff]
    %v323 = vld [vmem:[#allocation3 + $0x688] sm:$0xff]
    %v324 = vld [vmem:[#allocation3 + $0x690] sm:$0xff]
    %v325 = vld [vmem:[#allocation3 + $0x698] sm:$0xff]
    %v326 = vld [vmem:[#allocation3 + $0x6a0] sm:$0xff]
    %v327 = vld [vmem:[#allocation3 + $0x6a8] sm:$0xff]
    %v328 = vld [vmem:[#allocation3 + $0x6b0] sm:$0xff]
    %v329 = vld [vmem:[#allocation3 + $0x6b8] sm:$0xff]
    %v330 = vld [vmem:[#allocation3 + $0x6c0] sm:$0xff]
    %v331 = vld [vmem:[#allocation3 + $0x6c8] sm:$0xff]
    %v332 = vld [vmem:[#allocation3 + $0x6d0] sm:$0xff]
    %v333 = vld [vmem:[#allocation3 + $0x6d8] sm:$0xff]
    %v334 = vld [vmem:[#allocation3 + $0x6e0] sm:$0xff]
    %v335 = vld [vmem:[#allocation3 + $0x6e8] sm:$0xff]
    %v336 = vld [vmem:[#allocation3 + $0x6f0] sm:$0xff]
    %v337 = vld [vmem:[#allocation3 + $0x6f8] sm:$0xff]
    %v338 = vld [vmem:[#allocation3 + $0x700] sm:$0xff]
    %v339 = vld [vmem:[#allocation3 + $0x708] sm:$0xff]
    %v340 = vld [vmem:[#allocation3 + $0x710] sm:$0xff]
    %v341 = vld [vmem:[#allocation3 + $0x718] sm:$0xff]
    %v342 = vld [vmem:[#allocation3 + $0x720] sm:$0xff]
    %v343 = vld [vmem:[#allocation3 + $0x728] sm:$0xff]
    %v344 = vld [vmem:[#allocation3 + $0x730] sm:$0xff]
    %v345 = vld [vmem:[#allocation3 + $0x738] sm:$0xff]
    %v346 = vld [vmem:[#allocation3 + $0x740] sm:$0xff]
    %v347 = vld [vmem:[#allocation3 + $0x748] sm:$0xff]
    %v348 = vld [vmem:[#allocation3 + $0x750] sm:$0xff]
    %v349 = vld [vmem:[#allocation3 + $0x758] sm:$0xff]
    %v350 = vld [vmem:[#allocation3 + $0x760] sm:$0xff]
    %v351 = vld [vmem:[#allocation3 + $0x768] sm:$0xff]
    %v352 = vld [vmem:[#allocation3 + $0x770] sm:$0xff]
    %v353 = vld [vmem:[#allocation3 + $0x778] sm:$0xff]
    %v354 = vld [vmem:[#allocation3 + $0x780] sm:$0xff]
    %v355 = vld [vmem:[#allocation3 + $0x788] sm:$0xff]
    %v356 = vld [vmem:[#allocation3 + $0x790] sm:$0xff]
    %v357 = vld [vmem:[#allocation3 + $0x798] sm:$0xff]
    %v358 = vld [vmem:[#allocation3 + $0x7a0] sm:$0xff]
    %v359 = vld [vmem:[#allocation3 + $0x7a8] sm:$0xff]
    %v360 = vld [vmem:[#allocation3 + $0x7b0] sm:$0xff]
    %v361 = vld [vmem:[#allocation3 + $0x7b8] sm:$0xff]
    %v362 = vld [vmem:[#allocation3 + $0x7c0] sm:$0xff]
    %v363 = vld [vmem:[#allocation3 + $0x7c8] sm:$0xff]
    %v364 = vld [vmem:[#allocation3 + $0x7d0] sm:$0xff]
    %v365 = vld [vmem:[#allocation3 + $0x7d8] sm:$0xff]
    %v366 = vld [vmem:[#allocation3 + $0x7e0] sm:$0xff]
    %v367 = vld [vmem:[#allocation3 + $0x7e8] sm:$0xff]
    %v368 = vld [vmem:[#allocation3 + $0x7f0] sm:$0xff]
    %v369 = vld [vmem:[#allocation3 + $0x7f8] sm:$0xff]
    %v370 = vld [vmem:[#allocation3 + $0x800] sm:$0xff]
    %v371 = vld [vmem:[#allocation3 + $0x808] sm:$0xff]
    %v372 = vld [vmem:[#allocation3 + $0x810] sm:$0xff]
    %v373 = vld [vmem:[#allocation3 + $0x818] sm:$0xff]
    %v374 = vld [vmem:[#allocation3 + $0x820] sm:$0xff]
    %v375 = vld [vmem:[#allocation3 + $0x828] sm:$0xff]
    %v376 = vld [vmem:[#allocation3 + $0x830] sm:$0xff]
    %v377 = vld [vmem:[#allocation3 + $0x838] sm:$0xff]
    %v378 = vld [vmem:[#allocation3 + $0x840] sm:$0xff]
    %v379 = vld [vmem:[#allocation3 + $0x848] sm:$0xff]
    %v380 = vld [vmem:[#allocation3 + $0x850] sm:$0xff]
    %v381 = vld [vmem:[#allocation3 + $0x858] sm:$0xff]
    %v382 = vld [vmem:[#allocation3 + $0x860] sm:$0xff]
    %v383 = vld [vmem:[#allocation3 + $0x868] sm:$0xff]
    %v384 = vld [vmem:[#allocation3 + $0x870] sm:$0xff]
    %v385 = vld [vmem:[#allocation3 + $0x878] sm:$0xff]
    %v386 = vld [vmem:[#allocation3 + $0x880] sm:$0xff]
    %v387 = vld [vmem:[#allocation3 + $0x888] sm:$0xff]
    %v388 = vld [vmem:[#allocation3 + $0x890] sm:$0xff]
    %v389 = vld [vmem:[#allocation3 + $0x898] sm:$0xff]
    %v390 = vld [vmem:[#allocation3 + $0x8a0] sm:$0xff]
    %v391 = vld [vmem:[#allocation3 + $0x8a8] sm:$0xff]
    %v392 = vld [vmem:[#allocation3 + $0x8b0] sm:$0xff]
    %v393 = vld [vmem:[#allocation3 + $0x8b8] sm:$0xff]
    %v394 = vld [vmem:[#allocation3 + $0x8c0] sm:$0xff]
    %v395 = vld [vmem:[#allocation3 + $0x8c8] sm:$0xff]
    %v396 = vld [vmem:[#allocation3 + $0x8d0] sm:$0xff]
    %v397 = vld [vmem:[#allocation3 + $0x8d8] sm:$0xff]
    %v398 = vld [vmem:[#allocation3 + $0x8e0] sm:$0xff]
    %v399 = vld [vmem:[#allocation3 + $0x8e8] sm:$0xff]
    %v400 = vld [vmem:[#allocation3 + $0x8f0] sm:$0xff]
    %v401 = vld [vmem:[#allocation3 + $0x8f8] sm:$0xff]
    %v402 = vld [vmem:[#allocation3 + $0x900] sm:$0xff]
    %v403 = vld [vmem:[#allocation3 + $0x908] sm:$0xff]
    %v404 = vld [vmem:[#allocation3 + $0x910] sm:$0xff]
    %v405 = vld [vmem:[#allocation3 + $0x918] sm:$0xff]
    %v406 = vld [vmem:[#allocation3 + $0x920] sm:$0xff]
    %v407 = vld [vmem:[#allocation3 + $0x928] sm:$0xff]
    %v408 = vld [vmem:[#allocation3 + $0x930] sm:$0xff]
    %v409 = vld [vmem:[#allocation3 + $0x938] sm:$0xff]
    %v410 = vld [vmem:[#allocation3 + $0x940] sm:$0xff]
    %v411 = vld [vmem:[#allocation3 + $0x948] sm:$0xff]
    %v412 = vld [vmem:[#allocation3 + $0x950] sm:$0xff]
    %v413 = vld [vmem:[#allocation3 + $0x958] sm:$0xff]
    %v414 = vld [vmem:[#allocation3 + $0x960] sm:$0xff]
    %v415 = vld [vmem:[#allocation3 + $0x968] sm:$0xff]
    %v416 = vld [vmem:[#allocation3 + $0x970] sm:$0xff]
    %v417 = vld [vmem:[#allocation3 + $0x978] sm:$0xff]
    %v418 = vld [vmem:[#allocation3 + $0x980] sm:$0xff]
    %v419 = vld [vmem:[#allocation3 + $0x988] sm:$0xff]
    %v420 = vld [vmem:[#allocation3 + $0x990] sm:$0xff]
    %v421 = vld [vmem:[#allocation3 + $0x998] sm:$0xff]
    %v422 = vld [vmem:[#allocation3 + $0x9a0] sm:$0xff]
    %v423 = vld [vmem:[#allocation3 + $0x9a8] sm:$0xff]
    %v424 = vld [vmem:[#allocation3 + $0x9b0] sm:$0xff]
    %v425 = vld [vmem:[#allocation3 + $0x9b8] sm:$0xff]
    %v426 = vld [vmem:[#allocation3 + $0x9c0] sm:$0xff]
    %v427 = vld [vmem:[#allocation3 + $0x9c8] sm:$0xff]
    %v428 = vld [vmem:[#allocation3 + $0x9d0] sm:$0xff]
    %v429 = vld [vmem:[#allocation3 + $0x9d8] sm:$0xff]
    %v430 = vld [vmem:[#allocation3 + $0x9e0] sm:$0xff]
    %v431 = vld [vmem:[#allocation3 + $0x9e8] sm:$0xff]
    %v432 = vld [vmem:[#allocation3 + $0x9f0] sm:$0xff]
    %v433 = vld [vmem:[#allocation3 + $0x9f8] sm:$0xff]
    %v434 = vld [vmem:[#allocation3 + $0xa00] sm:$0xff]
    %v435 = vld [vmem:[#allocation3 + $0xa08] sm:$0xff]
    %v436 = vld [vmem:[#allocation3 + $0xa10] sm:$0xff]
    %v437 = vld [vmem:[#allocation3 + $0xa18] sm:$0xff]
    %v438 = vld [vmem:[#allocation3 + $0xa20] sm:$0xff]
    %v439 = vld [vmem:[#allocation3 + $0xa28] sm:$0xff]
    %v440 = vld [vmem:[#allocation3 + $0xa30] sm:$0xff]
    %v441 = vld [vmem:[#allocation3 + $0xa38] sm:$0xff]
    %v442 = vld [vmem:[#allocation3 + $0xa40] sm:$0xff]
    %v443 = vld [vmem:[#allocation3 + $0xa48] sm:$0xff]
    %v444 = vld [vmem:[#allocation3 + $0xa50] sm:$0xff]
    %v445 = vld [vmem:[#allocation3 + $0xa58] sm:$0xff]
    %v446 = vld [vmem:[#allocation3 + $0xa60] sm:$0xff]
    %v447 = vld [vmem:[#allocation3 + $0xa68] sm:$0xff]
    %v448 = vld [vmem:[#allocation3 + $0xa70] sm:$0xff]
    %v449 = vld [vmem:[#allocation3 + $0xa78] sm:$0xff]
    %v450 = vld [vmem:[#allocation3 + $0xa80] sm:$0xff]
    %v451 = vld [vmem:[#allocation3 + $0xa88] sm:$0xff]
    %v452 = vld [vmem:[#allocation3 + $0xa90] sm:$0xff]
    %v453 = vld [vmem:[#allocation3 + $0xa98] sm:$0xff]
    %v454 = vld [vmem:[#allocation3 + $0xaa0] sm:$0xff]
    %v455 = vld [vmem:[#allocation3 + $0xaa8] sm:$0xff]
    %v456 = vld [vmem:[#allocation3 + $0xab0] sm:$0xff]
    %v457 = vld [vmem:[#allocation3 + $0xab8] sm:$0xff]
    %v458 = vld [vmem:[#allocation3 + $0xac0] sm:$0xff]
    %v459 = vld [vmem:[#allocation3 + $0xac8] sm:$0xff]
    %v460 = vld [vmem:[#allocation3 + $0xad0] sm:$0xff]
    %v461 = vld [vmem:[#allocation3 + $0xad8] sm:$0xff]
    %v462 = vld [vmem:[#allocation3 + $0xae0] sm:$0xff]
    %v463 = vld [vmem:[#allocation3 + $0xae8] sm:$0xff]
    %v464 = vld [vmem:[#allocation3 + $0xaf0] sm:$0xff]
    %v465 = vld [vmem:[#allocation3 + $0xaf8] sm:$0xff]
    %v466 = vld [vmem:[#allocation3 + $0xb00] sm:$0xff]
    %v467 = vld [vmem:[#allocation3 + $0xb08] sm:$0xff]
    %v468 = vld [vmem:[#allocation3 + $0xb10] sm:$0xff]
    %v469 = vld [vmem:[#allocation3 + $0xb18] sm:$0xff]
    %v470 = vld [vmem:[#allocation3 + $0xb20] sm:$0xff]
    %v471 = vld [vmem:[#allocation3 + $0xb28] sm:$0xff]
    %v472 = vld [vmem:[#allocation3 + $0xb30] sm:$0xff]
    %v473 = vld [vmem:[#allocation3 + $0xb38] sm:$0xff]
    %v474 = vld [vmem:[#allocation3 + $0xb40] sm:$0xff]
    %v475 = vld [vmem:[#allocation3 + $0xb48] sm:$0xff]
    %v476 = vld [vmem:[#allocation3 + $0xb50] sm:$0xff]
    %v477 = vld [vmem:[#allocation3 + $0xb58] sm:$0xff]
    %v478 = vld [vmem:[#allocation3 + $0xb60] sm:$0xff]
    %v479 = vld [vmem:[#allocation3 + $0xb68] sm:$0xff]
    %v480 = vld [vmem:[#allocation3 + $0xb70] sm:$0xff]
    %v481 = vld [vmem:[#allocation3 + $0xb78] sm:$0xff]
    %v482 = vld [vmem:[#allocation3 + $0xb80] sm:$0xff]
    %v483 = vld [vmem:[#allocation3 + $0xb88] sm:$0xff]
    %v484 = vld [vmem:[#allocation3 + $0xb90] sm:$0xff]
    %v485 = vld [vmem:[#allocation3 + $0xb98] sm:$0xff]
    %v486 = vld [vmem:[#allocation3 + $0xba0] sm:$0xff]
    %v487 = vld [vmem:[#allocation3 + $0xba8] sm:$0xff]
    %v488 = vld [vmem:[#allocation3 + $0xbb0] sm:$0xff]
    %v489 = vld [vmem:[#allocation3 + $0xbb8] sm:$0xff]
    %v490 = vld [vmem:[#allocation3 + $0xbc0] sm:$0xff]
    %v491 = vld [vmem:[#allocation3 + $0xbc8] sm:$0xff]
    %v492 = vld [vmem:[#allocation3 + $0xbd0] sm:$0xff]
    %v493 = vld [vmem:[#allocation3 + $0xbd8] sm:$0xff]
    %v494 = vld [vmem:[#allocation3 + $0xbe0] sm:$0xff]
    %v495 = vld [vmem:[#allocation3 + $0xbe8] sm:$0xff]
    %v496 = vld [vmem:[#allocation3 + $0xbf0] sm:$0xff]
    %v497 = vld [vmem:[#allocation3 + $0xbf8] sm:$0xff]
    %v498 = vld [vmem:[#allocation3 + $0xc00] sm:$0xff]
    %v499 = vld [vmem:[#allocation3 + $0xc08] sm:$0xff]
    %v500 = vld [vmem:[#allocation3 + $0xc10] sm:$0xff]
    %v501 = vld [vmem:[#allocation3 + $0xc18] sm:$0xff]
    %v502 = vld [vmem:[#allocation3 + $0xc20] sm:$0xff]
    %v503 = vld [vmem:[#allocation3 + $0xc28] sm:$0xff]
    %v504 = vld [vmem:[#allocation3 + $0xc30] sm:$0xff]
    %v505 = vld [vmem:[#allocation3 + $0xc38] sm:$0xff]
    %v506 = vld [vmem:[#allocation3 + $0xc40] sm:$0xff]
    %v507 = vld [vmem:[#allocation3 + $0xc48] sm:$0xff]
    %v508 = vld [vmem:[#allocation3 + $0xc50] sm:$0xff]
    %v509 = vld [vmem:[#allocation3 + $0xc58] sm:$0xff]
    %v510 = vld [vmem:[#allocation3 + $0xc60] sm:$0xff]
    %v511 = vld [vmem:[#allocation3 + $0xc68] sm:$0xff]
    %v512 = vld [vmem:[#allocation3 + $0xc70] sm:$0xff]
    %v513 = vld [vmem:[#allocation3 + $0xc78] sm:$0xff]
    %v514 = vld [vmem:[#allocation3 + $0xc80] sm:$0xff]
    %v515 = vld [vmem:[#allocation3 + $0xc88] sm:$0xff]
    %v516 = vld [vmem:[#allocation3 + $0xc90] sm:$0xff]
    %v517 = vld [vmem:[#allocation3 + $0xc98] sm:$0xff]
    %v518 = vld [vmem:[#allocation3 + $0xca0] sm:$0xff]
    %v519 = vld [vmem:[#allocation3 + $0xca8] sm:$0xff]
    %v520 = vld [vmem:[#allocation3 + $0xcb0] sm:$0xff]
    %v521 = vld [vmem:[#allocation3 + $0xcb8] sm:$0xff]
    %v522 = vld [vmem:[#allocation3 + $0xcc0] sm:$0xff]
    %v523 = vld [vmem:[#allocation3 + $0xcc8] sm:$0xff]
    %v524 = vld [vmem:[#allocation3 + $0xcd0] sm:$0xff]
    %v525 = vld [vmem:[#allocation3 + $0xcd8] sm:$0xff]
    %v526 = vld [vmem:[#allocation3 + $0xce0] sm:$0xff]
    %v527 = vld [vmem:[#allocation3 + $0xce8] sm:$0xff]
    %v528 = vld [vmem:[#allocation3 + $0xcf0] sm:$0xff]
    %v529 = vld [vmem:[#allocation3 + $0xcf8] sm:$0xff]
    %v530 = vld [vmem:[#allocation3 + $0xd00] sm:$0xff]
    %v531 = vld [vmem:[#allocation3 + $0xd08] sm:$0xff]
    %v532 = vld [vmem:[#allocation3 + $0xd10] sm:$0xff]
    %v533 = vld [vmem:[#allocation3 + $0xd18] sm:$0xff]
    %v534 = vld [vmem:[#allocation3 + $0xd20] sm:$0xff]
    %v535 = vld [vmem:[#allocation3 + $0xd28] sm:$0xff]
    %v536 = vld [vmem:[#allocation3 + $0xd30] sm:$0xff]
    %v537 = vld [vmem:[#allocation3 + $0xd38] sm:$0xff]
    %v538 = vld [vmem:[#allocation3 + $0xd40] sm:$0xff]
    %v539 = vld [vmem:[#allocation3 + $0xd48] sm:$0xff]
    %v540 = vld [vmem:[#allocation3 + $0xd50] sm:$0xff]
    %v541 = vld [vmem:[#allocation3 + $0xd58] sm:$0xff]
    %v542 = vld [vmem:[#allocation3 + $0xd60] sm:$0xff]
    %v543 = vld [vmem:[#allocation3 + $0xd68] sm:$0xff]
    %v544 = vld [vmem:[#allocation3 + $0xd70] sm:$0xff]
    %v545 = vld [vmem:[#allocation3 + $0xd78] sm:$0xff]
    %v546 = vld [vmem:[#allocation3 + $0xd80] sm:$0xff]
    %v547 = vld [vmem:[#allocation3 + $0xd88] sm:$0xff]
    %v548 = vld [vmem:[#allocation3 + $0xd90] sm:$0xff]
    %v549 = vld [vmem:[#allocation3 + $0xd98] sm:$0xff]
    %v550 = vld [vmem:[#allocation3 + $0xda0] sm:$0xff]
    %v551 = vld [vmem:[#allocation3 + $0xda8] sm:$0xff]
    %v552 = vld [vmem:[#allocation3 + $0xdb0] sm:$0xff]
    %v553 = vld [vmem:[#allocation3 + $0xdb8] sm:$0xff]
    %v554 = vld [vmem:[#allocation3 + $0xdc0] sm:$0xff]
    %v555 = vld [vmem:[#allocation3 + $0xdc8] sm:$0xff]
    %v556 = vld [vmem:[#allocation3 + $0xdd0] sm:$0xff]
    %v557 = vld [vmem:[#allocation3 + $0xdd8] sm:$0xff]
    %v558 = vld [vmem:[#allocation3 + $0xde0] sm:$0xff]
    %v559 = vld [vmem:[#allocation3 + $0xde8] sm:$0xff]
    %v560 = vld [vmem:[#allocation3 + $0xdf0] sm:$0xff]
    %v561 = vld [vmem:[#allocation3 + $0xdf8] sm:$0xff]
    %v562 = vld [vmem:[#allocation3 + $0xe00] sm:$0xff]
    %v563 = vld [vmem:[#allocation3 + $0xe08] sm:$0xff]
    %v564 = vld [vmem:[#allocation3 + $0xe10] sm:$0xff]
    %v565 = vld [vmem:[#allocation3 + $0xe18] sm:$0xff]
    %v566 = vld [vmem:[#allocation3 + $0xe20] sm:$0xff]
    %v567 = vld [vmem:[#allocation3 + $0xe28] sm:$0xff]
    %v568 = vld [vmem:[#allocation3 + $0xe30] sm:$0xff]
    %v569 = vld [vmem:[#allocation3 + $0xe38] sm:$0xff]
    %v570 = vld [vmem:[#allocation3 + $0xe40] sm:$0xff]
    %v571 = vld [vmem:[#allocation3 + $0xe48] sm:$0xff]
    %v572 = vld [vmem:[#allocation3 + $0xe50] sm:$0xff]
    %v573 = vld [vmem:[#allocation3 + $0xe58] sm:$0xff]
    %v574 = vld [vmem:[#allocation3 + $0xe60] sm:$0xff]
    %v575 = vld [vmem:[#allocation3 + $0xe68] sm:$0xff]
    %v576 = vld [vmem:[#allocation3 + $0xe70] sm:$0xff]
    %v577 = vld [vmem:[#allocation3 + $0xe78] sm:$0xff]
    %v578 = vld [vmem:[#allocation3 + $0xe80] sm:$0xff]
    %v579 = vld [vmem:[#allocation3 + $0xe88] sm:$0xff]
    %v580 = vld [vmem:[#allocation3 + $0xe90] sm:$0xff]
    %v581 = vld [vmem:[#allocation3 + $0xe98] sm:$0xff]
    %v582 = vld [vmem:[#allocation3 + $0xea0] sm:$0xff]
    %v583 = vld [vmem:[#allocation3 + $0xea8] sm:$0xff]
    %v584 = vld [vmem:[#allocation3 + $0xeb0] sm:$0xff]
    %v585 = vld [vmem:[#allocation3 + $0xeb8] sm:$0xff]
    %v586 = vld [vmem:[#allocation3 + $0xec0] sm:$0xff]
    %v587 = vld [vmem:[#allocation3 + $0xec8] sm:$0xff]
    %v588 = vld [vmem:[#allocation3 + $0xed0] sm:$0xff]
    %v589 = vld [vmem:[#allocation3 + $0xed8] sm:$0xff]
    %v590 = vld [vmem:[#allocation3 + $0xee0] sm:$0xff]
    %v591 = vld [vmem:[#allocation3 + $0xee8] sm:$0xff]
    %v592 = vld [vmem:[#allocation3 + $0xef0] sm:$0xff]
    %v593 = vld [vmem:[#allocation3 + $0xef8] sm:$0xff]
    %v594 = vld [vmem:[#allocation3 + $0xf00] sm:$0xff]
    %v595 = vld [vmem:[#allocation3 + $0xf08] sm:$0xff]
    %v596 = vld [vmem:[#allocation3 + $0xf10] sm:$0xff]
    %v597 = vld [vmem:[#allocation3 + $0xf18] sm:$0xff]
    %v598 = vld [vmem:[#allocation3 + $0xf20] sm:$0xff]
    %v599 = vld [vmem:[#allocation3 + $0xf28] sm:$0xff]
    %v600 = vld [vmem:[#allocation3 + $0xf30] sm:$0xff]
    %v601 = vld [vmem:[#allocation3 + $0xf38] sm:$0xff]
    %v602 = vld [vmem:[#allocation3 + $0xf40] sm:$0xff]
    %v603 = vld [vmem:[#allocation3 + $0xf48] sm:$0xff]
    %v604 = vld [vmem:[#allocation3 + $0xf50] sm:$0xff]
    %v605 = vld [vmem:[#allocation3 + $0xf58] sm:$0xff]
    %v606 = vld [vmem:[#allocation3 + $0xf60] sm:$0xff]
    %v607 = vld [vmem:[#allocation3 + $0xf68] sm:$0xff]
    %v608 = vld [vmem:[#allocation3 + $0xf70] sm:$0xff]
    %v609 = vld [vmem:[#allocation3 + $0xf78] sm:$0xff]
    %v610 = vld [vmem:[#allocation3 + $0xf80] sm:$0xff]
    %v611 = vld [vmem:[#allocation3 + $0xf88] sm:$0xff]
    %v612 = vld [vmem:[#allocation3 + $0xf90] sm:$0xff]
    %v613 = vld [vmem:[#allocation3 + $0xf98] sm:$0xff]
    %v614 = vld [vmem:[#allocation3 + $0xfa0] sm:$0xff]
    %v615 = vld [vmem:[#allocation3 + $0xfa8] sm:$0xff]
    %v616 = vld [vmem:[#allocation3 + $0xfb0] sm:$0xff]
    %v617 = vld [vmem:[#allocation3 + $0xfb8] sm:$0xff]
    %v618 = vld [vmem:[#allocation3 + $0xfc0] sm:$0xff]
    %v619 = vld [vmem:[#allocation3 + $0xfc8] sm:$0xff]
    %v620 = vld [vmem:[#allocation3 + $0xfd0] sm:$0xff]
    %v621 = vld [vmem:[#allocation3 + $0xfd8] sm:$0xff]
    %v622 = vld [vmem:[#allocation3 + $0xfe0] sm:$0xff]
    %v623 = vld [vmem:[#allocation3 + $0xfe8] sm:$0xff]
    %v624 = vld [vmem:[#allocation3 + $0xff0] sm:$0xff]
    %v625 = vld [vmem:[#allocation3 + $0xff8] sm:$0xff]
    %v626 = vld [vmem:[#allocation3 + $0x1000] sm:$0xff]
    %v627 = vld [vmem:[#allocation3 + $0x1008] sm:$0xff]
    %v628 = vld [vmem:[#allocation3 + $0x1010] sm:$0xff]
    %v629 = vld [vmem:[#allocation3 + $0x1018] sm:$0xff]
    %v630 = vld [vmem:[#allocation3 + $0x1020] sm:$0xff]
    %v631 = vld [vmem:[#allocation3 + $0x1028] sm:$0xff]
    %v632 = vld [vmem:[#allocation3 + $0x1030] sm:$0xff]
    %v633 = vld [vmem:[#allocation3 + $0x1038] sm:$0xff]
    %v634 = vld [vmem:[#allocation3 + $0x1040] sm:$0xff]
    %v635 = vld [vmem:[#allocation3 + $0x1048] sm:$0xff]
    %v636 = vld [vmem:[#allocation3 + $0x1050] sm:$0xff]
    %v637 = vld [vmem:[#allocation3 + $0x1058] sm:$0xff]
    %v638 = vld [vmem:[#allocation3 + $0x1060] sm:$0xff]
    %v639 = vld [vmem:[#allocation3 + $0x1068] sm:$0xff]
    %v640 = vld [vmem:[#allocation3 + $0x1070] sm:$0xff]
    %v641 = vld [vmem:[#allocation3 + $0x1078] sm:$0xff]
    %v642 = vld [vmem:[#allocation3 + $0x1080] sm:$0xff]
    %v643 = vld [vmem:[#allocation3 + $0x1088] sm:$0xff]
    %v644 = vld [vmem:[#allocation3 + $0x1090] sm:$0xff]
    %v645 = vld [vmem:[#allocation3 + $0x1098] sm:$0xff]
    %v646 = vld [vmem:[#allocation3 + $0x10a0] sm:$0xff]
    %v647 = vld [vmem:[#allocation3 + $0x10a8] sm:$0xff]
    %v648 = vld [vmem:[#allocation3 + $0x10b0] sm:$0xff]
    %v649 = vld [vmem:[#allocation3 + $0x10b8] sm:$0xff]
    %v650 = vld [vmem:[#allocation3 + $0x10c0] sm:$0xff]
    %v651 = vld [vmem:[#allocation3 + $0x10c8] sm:$0xff]
    %v652 = vld [vmem:[#allocation3 + $0x10d0] sm:$0xff]
    %v653 = vld [vmem:[#allocation3 + $0x10d8] sm:$0xff]
    %v654 = vld [vmem:[#allocation3 + $0x10e0] sm:$0xff]
    %v655 = vld [vmem:[#allocation3 + $0x10e8] sm:$0xff]
    %v656 = vld [vmem:[#allocation3 + $0x10f0] sm:$0xff]
    %v657 = vld [vmem:[#allocation3 + $0x10f8] sm:$0xff]
    %v658 = vld [vmem:[#allocation3 + $0x1100] sm:$0xff]
    %v659 = vld [vmem:[#allocation3 + $0x1108] sm:$0xff]
    %v660 = vld [vmem:[#allocation3 + $0x1110] sm:$0xff]
    %v661 = vld [vmem:[#allocation3 + $0x1118] sm:$0xff]
    %v662 = vld [vmem:[#allocation3 + $0x1120] sm:$0xff]
    %v663 = vld [vmem:[#allocation3 + $0x1128] sm:$0xff]
    %v664 = vld [vmem:[#allocation3 + $0x1130] sm:$0xff]
    %v665 = vld [vmem:[#allocation3 + $0x1138] sm:$0xff]
    %v666 = vld [vmem:[#allocation3 + $0x1140] sm:$0xff]
    %v667 = vld [vmem:[#allocation3 + $0x1148] sm:$0xff]
    %v668 = vld [vmem:[#allocation3 + $0x1150] sm:$0xff]
    %v669 = vld [vmem:[#allocation3 + $0x1158] sm:$0xff]
    %v670 = vld [vmem:[#allocation3 + $0x1160] sm:$0xff]
    %v671 = vld [vmem:[#allocation3 + $0x1168] sm:$0xff]
    %v672 = vld [vmem:[#allocation3 + $0x1170] sm:$0xff]
    %v673 = vld [vmem:[#allocation3 + $0x1178] sm:$0xff]
    %v674 = vld [vmem:[#allocation3 + $0x1180] sm:$0xff]
    %v675 = vld [vmem:[#allocation3 + $0x1188] sm:$0xff]
    %v676 = vld [vmem:[#allocation3 + $0x1190] sm:$0xff]
    %v677 = vld [vmem:[#allocation3 + $0x1198] sm:$0xff]
    %v678 = vld [vmem:[#allocation3 + $0x11a0] sm:$0xff]
    %v679 = vld [vmem:[#allocation3 + $0x11a8] sm:$0xff]
    %v680 = vld [vmem:[#allocation3 + $0x11b0] sm:$0xff]
    %v681 = vld [vmem:[#allocation3 + $0x11b8] sm:$0xff]
    %v682 = vld [vmem:[#allocation3 + $0x11c0] sm:$0xff]
    %v683 = vld [vmem:[#allocation3 + $0x11c8] sm:$0xff]
    %v684 = vld [vmem:[#allocation3 + $0x11d0] sm:$0xff]
    %v685 = vld [vmem:[#allocation3 + $0x11d8] sm:$0xff]
    %v686 = vld [vmem:[#allocation3 + $0x11e0] sm:$0xff]
    %v687 = vld [vmem:[#allocation3 + $0x11e8] sm:$0xff]
    %v688 = vld [vmem:[#allocation3 + $0x11f0] sm:$0xff]
    %v689 = vld [vmem:[#allocation3 + $0x11f8] sm:$0xff]
    %v690 = vld [vmem:[#allocation5] sm:$0xff]
    %v691 = vld [vmem:[#allocation5 + $0x8] sm:$0xf]
    %v694 = vlaneseq
    %v695 = vshrl.u32 %v694, 7
    %v696 = vsub.s32 0, %v695
    %v697 = vrot.slane %v690, %v696
    %v698 = vlaneseq
    %v699 = vshrl.u32 %v698, 7
    %v700 = vsub.s32 1, %v699
    %v701 = vrot.slane %v690, %v700
    %v702 = vlaneseq
    %v703 = vshrl.u32 %v702, 7
    %v704 = vsub.s32 2, %v703
    %v705 = vrot.slane %v690, %v704
    %v706 = vlaneseq
    %v707 = vshrl.u32 %v706, 7
    %v708 = vsub.s32 3, %v707
    %v709 = vrot.slane %v690, %v708
    %v710 = vlaneseq
    %v711 = vshrl.u32 %v710, 7
    %v712 = vsub.s32 4, %v711
    %v713 = vrot.slane %v690, %v712
    %v714 = vlaneseq
    %v715 = vshrl.u32 %v714, 7
    %v716 = vsub.s32 5, %v715
    %v717 = vrot.slane %v690, %v716
    %v718 = vlaneseq
    %v719 = vshrl.u32 %v718, 7
    %v720 = vsub.s32 6, %v719
    %v721 = vrot.slane %v690, %v720
    %v722 = vlaneseq
    %v723 = vshrl.u32 %v722, 7
    %v724 = vsub.s32 7, %v723
    %v725 = vrot.slane %v690, %v724
    %v726 = vlaneseq
    %v727 = vshrl.u32 %v726, 7
    %v728 = vsub.s32 0, %v727
    %v729 = vrot.slane %v691, %v728
    %v730 = vlaneseq
    %v731 = vshrl.u32 %v730, 7
    %v732 = vsub.s32 1, %v731
    %v733 = vrot.slane %v691, %v732
    %v734 = vlaneseq
    %v735 = vshrl.u32 %v734, 7
    %v736 = vsub.s32 2, %v735
    %v737 = vrot.slane %v691, %v736
    %v738 = vlaneseq
    %v739 = vshrl.u32 %v738, 7
    %v740 = vsub.s32 3, %v739
    %v741 = vrot.slane %v691, %v740
    %754 = vmatprep.subr.mxu0 %v115
    %755 = vmatpush1.msra.mxu0 %v114
    %756 = vmatprep.subr.mxu0 %v127
    %757 = vmatpush1.msra.mxu0 %v126
    %758 = vmatprep.subr.mxu0 %v139
    %759 = vmatpush1.msra.mxu0 %v138
    %760 = vmatprep.subr.mxu0 %v151
    %761 = vmatpush1.msra.mxu0 %v150
    %762 = vmatprep.subr.mxu0 %v163
    %763 = vmatpush1.msra.mxu0 %v162
    %764 = vmatprep.subr.mxu0 %v175
    %765 = vmatpush1.msra.mxu0 %v174
    %766 = vmatprep.subr.mxu0 %v187
    %767 = vmatpush1.msra.mxu0 %v186
    %768 = vmatprep.subr.mxu0 %v199
    %769 = vmatpush1.msra.mxu0 %v198
    %770 = vmatprep.subr.mxu0 %v211
    %771 = vmatpush1.msra.mxu0 %v210
    %772 = vmatprep.subr.mxu0 %v223
    %773 = vmatpush1.msra.mxu0 %v222
    %774 = vmatprep.subr.mxu0 %v235
    %775 = vmatpush1.msra.mxu0 %v234
    %776 = vmatprep.subr.mxu0 %v247
    %777 = vmatpush1.msra.mxu0 %v246
    %778 = vmatprep.subr.mxu0 %v259
    %779 = vmatpush1.msra.mxu0 %v258
    %780 = vmatprep.subr.mxu0 %v271
    %781 = vmatpush1.msra.mxu0 %v270
    %782 = vmatprep.subr.mxu0 %v283
    %783 = vmatpush1.msra.mxu0 %v282
    %784 = vmatprep.subr.mxu0 %v295
    %785 = vmatpush1.msra.mxu0 %v294
    %786 = vmatprep.subr.mxu0 %v307
    %787 = vmatpush1.msra.mxu0 %v306
    %788 = vmatprep.subr.mxu0 %v319
    %789 = vmatpush1.msra.mxu0 %v318
    %790 = vmatprep.subr.mxu0 %v331
    %791 = vmatpush1.msra.mxu0 %v330
    %792 = vmatprep.subr.mxu0 %v343
    %793 = vmatpush1.msra.mxu0 %v342
    %794 = vmatprep.subr.mxu0 %v355
    %795 = vmatpush1.msra.mxu0 %v354
    %796 = vmatprep.subr.mxu0 %v367
    %797 = vmatpush1.msra.mxu0 %v366
    %798 = vmatprep.subr.mxu0 %v379
    %799 = vmatpush1.msra.mxu0 %v378
    %800 = vmatprep.subr.mxu0 %v391
    %801 = vmatpush1.msra.mxu0 %v390
    %802 = vmatprep.subr.mxu0 %v403
    %803 = vmatpush1.msra.mxu0 %v402
    %804 = vmatprep.subr.mxu0 %v415
    %805 = vmatpush1.msra.mxu0 %v414
    %806 = vmatprep.subr.mxu0 %v427
    %807 = vmatpush1.msra.mxu0 %v426
    %808 = vmatprep.subr.mxu0 %v439
    %809 = vmatpush1.msra.mxu0 %v438
    %810 = vmatprep.subr.mxu0 %v451
    %811 = vmatpush1.msra.mxu0 %v450
    %812 = vmatprep.subr.mxu0 %v463
    %813 = vmatpush1.msra.mxu0 %v462
    %814 = vmatprep.subr.mxu0 %v475
    %815 = vmatpush1.msra.mxu0 %v474
    %816 = vmatprep.subr.mxu0 %v487
    %817 = vmatpush1.msra.mxu0 %v486
    %818 = vmatprep.mubr.f32.mxu0 %v103
    %819 = vmatmul.mubr.f32.gmra.mrb[0].mxu0 %v102
    %v820 = vpop.f32.mrb[0].mxu0
    %v821 = vadd.f32 %v697, %v820
    %v822 = vpop.f32.mrb[0].mxu0
    %v823 = vadd.f32 %v701, %v822
    %824 = vmatprep.mubr.f32.mxu0 %v106
    %825 = vmatmul.mubr.f32.gmra.mrb[0].mxu0 %v105
    %v826 = vpop.f32.mrb[0].mxu0
    %v827 = vadd.f32 %v697, %v826
    %v828 = vpop.f32.mrb[0].mxu0
    %v829 = vadd.f32 %v701, %v828
    %830 = vmatprep.mubr.f32.mxu0 %v109
    %831 = vmatmul.mubr.f32.gmra.mrb[0].mxu0 %v108
    %v832 = vpop.f32.mrb[0].mxu0
    %v833 = vadd.f32 %v697, %v832
    %v834 = vpop.f32.mrb[0].mxu0
    %v835 = vadd.f32 %v701, %v834
    %836 = vmatprep.mubr.f32.mxu0 %v112
    %837 = vmatmul.mubr.f32.gmra.mrb[0].mxu0 %v111
    %v838 = vpop.f32.mrb[0].mxu0
    %v839 = vadd.f32 %v697, %v838
    %v840 = vpop.f32.mrb[0].mxu0
    %v841 = vadd.f32 %v701, %v840
    %842 = vdwg.mxu0
    %843 = vmatprep.subr.mxu0 %v499
    %844 = vmatpush1.msra.mxu0 %v498
    %845 = vmatprep.subr.mxu0 %v511
    %846 = vmatpush1.msra.mxu0 %v510
    %847 = vmatprep.subr.mxu0 %v523
    %848 = vmatpush1.msra.mxu0 %v522
    %849 = vmatprep.subr.mxu0 %v535
    %850 = vmatpush1.msra.mxu0 %v534
    %851 = vmatprep.subr.mxu0 %v547
    %852 = vmatpush1.msra.mxu0 %v546
    %853 = vmatprep.subr.mxu0 %v559
    %854 = vmatpush1.msra.mxu0 %v558
    %855 = vmatprep.subr.mxu0 %v571
    %856 = vmatpush1.msra.mxu0 %v570
    %857 = vmatprep.subr.mxu0 %v583
    %858 = vmatpush1.msra.mxu0 %v582
    %859 = vmatprep.subr.mxu0 %v595
    %860 = vmatpush1.msra.mxu0 %v594
    %861 = vmatprep.subr.mxu0 %v607
    %862 = vmatpush1.msra.mxu0 %v606
    %863 = vmatprep.subr.mxu0 %v619
    %864 = vmatpush1.msra.mxu0 %v618
    %865 = vmatprep.subr.mxu0 %v631
    %866 = vmatpush1.msra.mxu0 %v630
    %867 = vmatprep.subr.mxu0 %v643
    %868 = vmatpush1.msra.mxu0 %v642
    %869 = vmatprep.subr.mxu0 %v655
    %870 = vmatpush1.msra.mxu0 %v654
    %871 = vmatprep.subr.mxu0 %v667
    %872 = vmatpush1.msra.mxu0 %v666
    %873 = vmatprep.subr.mxu0 %v679
    %874 = vmatpush1.msra.mxu0 %v678
    %875 = vmatprep.subr.mxu0 0.0
    %876 = vmatpush1.msra.mxu0 0.0
    %877 = vmatprep.subr.mxu0 0.0
    %878 = vmatpush1.msra.mxu0 0.0
    %879 = vmatprep.subr.mxu0 0.0
    %880 = vmatpush1.msra.mxu0 0.0
    %881 = vmatprep.subr.mxu0 0.0
    %882 = vmatpush1.msra.mxu0 0.0
    %883 = vmatprep.subr.mxu0 0.0
    %884 = vmatpush1.msra.mxu0 0.0
    %885 = vmatprep.subr.mxu0 0.0
    %886 = vmatpush1.msra.mxu0 0.0
    %887 = vmatprep.subr.mxu0 0.0
    %888 = vmatpush1.msra.mxu0 0.0
    %889 = vmatprep.subr.mxu0 0.0
    %890 = vmatpush1.msra.mxu0 0.0
    %891 = vmatprep.subr.mxu0 0.0
    %892 = vmatpush1.msra.mxu0 0.0
    %893 = vmatprep.subr.mxu0 0.0
    %894 = vmatpush1.msra.mxu0 0.0
    %895 = vmatprep.subr.mxu0 0.0
    %896 = vmatpush1.msra.mxu0 0.0
    %897 = vmatprep.subr.mxu0 0.0
    %898 = vmatpush1.msra.mxu0 0.0
    %899 = vmatprep.subr.mxu0 0.0
    %900 = vmatpush1.msra.mxu0 0.0
    %901 = vmatprep.subr.mxu0 0.0
    %902 = vmatpush1.msra.mxu0 0.0
    %903 = vmatprep.subr.mxu0 0.0
    %904 = vmatpush1.msra.mxu0 0.0
    %905 = vmatprep.subr.mxu0 0.0
    %906 = vmatpush1.msra.mxu0 0.0
    %907 = vmatprep.mubr.f32.mxu0 0.0
    %908 = vmatmul.mubr.f32.gmra.mrb[0].mxu0 %v104
    %v909 = vpop.f32.mrb[0].mxu0
    %v910 = vadd.f32 %v821, %v909
    %v911 = vpop.f32.mrb[0].mxu0
    %v912 = vadd.f32 %v823, %v911
    %913 = vmatprep.mubr.f32.mxu0 0.0
    %914 = vmatmul.mubr.f32.gmra.mrb[0].mxu0 %v107
    %v915 = vpop.f32.mrb[0].mxu0
    %v916 = vadd.f32 %v827, %v915
    %v917 = vpop.f32.mrb[0].mxu0
    %v918 = vadd.f32 %v829, %v917
    %919 = vmatprep.mubr.f32.mxu0 0.0
    %920 = vmatmul.mubr.f32.gmra.mrb[0].mxu0 %v110
    %v921 = vpop.f32.mrb[0].mxu0
    %v922 = vadd.f32 %v833, %v921
    %v923 = vpop.f32.mrb[0].mxu0
    %v924 = vadd.f32 %v835, %v923
    %925 = vmatprep.mubr.f32.mxu0 0.0
    %926 = vmatmul.mubr.f32.gmra.mrb[0].mxu0 %v113
    %v927 = vpop.f32.mrb[0].mxu0
    %v928 = vadd.f32 %v839, %v927
    %v929 = vpop.f32.mrb[0].mxu0
    %v930 = vadd.f32 %v841, %v929
    %931 = vdwg.mxu0
    %932 = vmatprep.subr.mxu0 %v117
    %933 = vmatpush1.msra.mxu0 %v116
    %934 = vmatprep.subr.mxu0 %v129
    %935 = vmatpush1.msra.mxu0 %v128
    %936 = vmatprep.subr.mxu0 %v141
    %937 = vmatpush1.msra.mxu0 %v140
    %938 = vmatprep.subr.mxu0 %v153
    %939 = vmatpush1.msra.mxu0 %v152
    %940 = vmatprep.subr.mxu0 %v165
    %941 = vmatpush1.msra.mxu0 %v164
    %942 = vmatprep.subr.mxu0 %v177
    %943 = vmatpush1.msra.mxu0 %v176
    %944 = vmatprep.subr.mxu0 %v189
    %945 = vmatpush1.msra.mxu0 %v188
    %946 = vmatprep.subr.mxu0 %v201
    %947 = vmatpush1.msra.mxu0 %v200
    %948 = vmatprep.subr.mxu0 %v213
    %949 = vmatpush1.msra.mxu0 %v212
    %950 = vmatprep.subr.mxu0 %v225
    %951 = vmatpush1.msra.mxu0 %v224
    %952 = vmatprep.subr.mxu0 %v237
    %953 = vmatpush1.msra.mxu0 %v236
    %954 = vmatprep.subr.mxu0 %v249
    %955 = vmatpush1.msra.mxu0 %v248
    %956 = vmatprep.subr.mxu0 %v261
    %957 = vmatpush1.msra.mxu0 %v260
    %958 = vmatprep.subr.mxu0 %v273
    %959 = vmatpush1.msra.mxu0 %v272
    %960 = vmatprep.subr.mxu0 %v285
    %961 = vmatpush1.msra.mxu0 %v284
    %962 = vmatprep.subr.mxu0 %v297
    %963 = vmatpush1.msra.mxu0 %v296
    %964 = vmatprep.subr.mxu0 %v309
    %965 = vmatpush1.msra.mxu0 %v308
    %966 = vmatprep.subr.mxu0 %v321
    %967 = vmatpush1.msra.mxu0 %v320
    %968 = vmatprep.subr.mxu0 %v333
    %969 = vmatpush1.msra.mxu0 %v332
    %970 = vmatprep.subr.mxu0 %v345
    %971 = vmatpush1.msra.mxu0 %v344
    %972 = vmatprep.subr.mxu0 %v357
    %973 = vmatpush1.msra.mxu0 %v356
    %974 = vmatprep.subr.mxu0 %v369
    %975 = vmatpush1.msra.mxu0 %v368
    %976 = vmatprep.subr.mxu0 %v381
    %977 = vmatpush1.msra.mxu0 %v380
    %978 = vmatprep.subr.mxu0 %v393
    %979 = vmatpush1.msra.mxu0 %v392
    %980 = vmatprep.subr.mxu0 %v405
    %981 = vmatpush1.msra.mxu0 %v404
    %982 = vmatprep.subr.mxu0 %v417
    %983 = vmatpush1.msra.mxu0 %v416
    %984 = vmatprep.subr.mxu0 %v429
    %985 = vmatpush1.msra.mxu0 %v428
    %986 = vmatprep.subr.mxu0 %v441
    %987 = vmatpush1.msra.mxu0 %v440
    %988 = vmatprep.subr.mxu0 %v453
    %989 = vmatpush1.msra.mxu0 %v452
    %990 = vmatprep.subr.mxu0 %v465
    %991 = vmatpush1.msra.mxu0 %v464
    %992 = vmatprep.subr.mxu0 %v477
    %993 = vmatpush1.msra.mxu0 %v476
    %994 = vmatprep.subr.mxu0 %v489
    %995 = vmatpush1.msra.mxu0 %v488
    %996 = vmatprep.mubr.f32.mxu0 %v103
    %997 = vmatmul.mubr.f32.gmra.mrb[0].mxu0 %v102
    %v998 = vpop.f32.mrb[0].mxu0
    %v999 = vadd.f32 %v705, %v998
    %v1000 = vpop.f32.mrb[0].mxu0
    %v1001 = vadd.f32 %v709, %v1000
    %1002 = vmatprep.mubr.f32.mxu0 %v106
    %1003 = vmatmul.mubr.f32.gmra.mrb[0].mxu0 %v105
    %v1004 = vpop.f32.mrb[0].mxu0
    %v1005 = vadd.f32 %v705, %v1004
    %v1006 = vpop.f32.mrb[0].mxu0
    %v1007 = vadd.f32 %v709, %v1006
    %1008 = vmatprep.mubr.f32.mxu0 %v109
    %1009 = vmatmul.mubr.f32.gmra.mrb[0].mxu0 %v108
    %v1010 = vpop.f32.mrb[0].mxu0
    %v1011 = vadd.f32 %v705, %v1010
    %v1012 = vpop.f32.mrb[0].mxu0
    %v1013 = vadd.f32 %v709, %v1012
    %1014 = vmatprep.mubr.f32.mxu0 %v112
    %1015 = vmatmul.mubr.f32.gmra.mrb[0].mxu0 %v111
    %v1016 = vpop.f32.mrb[0].mxu0
    %v1017 = vadd.f32 %v705, %v1016
    %v1018 = vpop.f32.mrb[0].mxu0
    %v1019 = vadd.f32 %v709, %v1018
    %1020 = vdwg.mxu0
    %1021 = vmatprep.subr.mxu0 %v501
    %1022 = vmatpush1.msra.mxu0 %v500
    %1023 = vmatprep.subr.mxu0 %v513
    %1024 = vmatpush1.msra.mxu0 %v512
    %1025 = vmatprep.subr.mxu0 %v525
    %1026 = vmatpush1.msra.mxu0 %v524
    %1027 = vmatprep.subr.mxu0 %v537
    %1028 = vmatpush1.msra.mxu0 %v536
    %1029 = vmatprep.subr.mxu0 %v549
    %1030 = vmatpush1.msra.mxu0 %v548
    %1031 = vmatprep.subr.mxu0 %v561
    %1032 = vmatpush1.msra.mxu0 %v560
    %1033 = vmatprep.subr.mxu0 %v573
    %1034 = vmatpush1.msra.mxu0 %v572
    %1035 = vmatprep.subr.mxu0 %v585
    %1036 = vmatpush1.msra.mxu0 %v584
    %1037 = vmatprep.subr.mxu0 %v597
    %1038 = vmatpush1.msra.mxu0 %v596
    %1039 = vmatprep.subr.mxu0 %v609
    %1040 = vmatpush1.msra.mxu0 %v608
    %1041 = vmatprep.subr.mxu0 %v621
    %1042 = vmatpush1.msra.mxu0 %v620
    %1043 = vmatprep.subr.mxu0 %v633
    %1044 = vmatpush1.msra.mxu0 %v632
    %1045 = vmatprep.subr.mxu0 %v645
    %1046 = vmatpush1.msra.mxu0 %v644
    %1047 = vmatprep.subr.mxu0 %v657
    %1048 = vmatpush1.msra.mxu0 %v656
    %1049 = vmatprep.subr.mxu0 %v669
    %1050 = vmatpush1.msra.mxu0 %v668
    %1051 = vmatprep.subr.mxu0 %v681
    %1052 = vmatpush1.msra.mxu0 %v680
    %1053 = vmatprep.subr.mxu0 0.0
    %1054 = vmatpush1.msra.mxu0 0.0
    %1055 = vmatprep.subr.mxu0 0.0
    %1056 = vmatpush1.msra.mxu0 0.0
    %1057 = vmatprep.subr.mxu0 0.0
    %1058 = vmatpush1.msra.mxu0 0.0
    %1059 = vmatprep.subr.mxu0 0.0
    %1060 = vmatpush1.msra.mxu0 0.0
    %1061 = vmatprep.subr.mxu0 0.0
    %1062 = vmatpush1.msra.mxu0 0.0
    %1063 = vmatprep.subr.mxu0 0.0
    %1064 = vmatpush1.msra.mxu0 0.0
    %1065 = vmatprep.subr.mxu0 0.0
    %1066 = vmatpush1.msra.mxu0 0.0
    %1067 = vmatprep.subr.mxu0 0.0
    %1068 = vmatpush1.msra.mxu0 0.0
    %1069 = vmatprep.subr.mxu0 0.0
    %1070 = vmatpush1.msra.mxu0 0.0
    %1071 = vmatprep.subr.mxu0 0.0
    %1072 = vmatpush1.msra.mxu0 0.0
    %1073 = vmatprep.subr.mxu0 0.0
    %1074 = vmatpush1.msra.mxu0 0.0
    %1075 = vmatprep.subr.mxu0 0.0
    %1076 = vmatpush1.msra.mxu0 0.0
    %1077 = vmatprep.subr.mxu0 0.0
    %1078 = vmatpush1.msra.mxu0 0.0
    %1079 = vmatprep.subr.mxu0 0.0
    %1080 = vmatpush1.msra.mxu0 0.0
    %1081 = vmatprep.subr.mxu0 0.0
    %1082 = vmatpush1.msra.mxu0 0.0
    %1083 = vmatprep.subr.mxu0 0.0
    %1084 = vmatpush1.msra.mxu0 0.0
    %1085 = vmatprep.mubr.f32.mxu0 0.0
    %1086 = vmatmul.mubr.f32.gmra.mrb[0].mxu0 %v104
    %v1087 = vpop.f32.mrb[0].mxu0
    %v1088 = vadd.f32 %v999, %v1087
    %v1089 = vpop.f32.mrb[0].mxu0
    %v1090 = vadd.f32 %v1001, %v1089
    %1091 = vmatprep.mubr.f32.mxu0 0.0
    %1092 = vmatmul.mubr.f32.gmra.mrb[0].mxu0 %v107
    %v1093 = vpop.f32.mrb[0].mxu0
    %v1094 = vadd.f32 %v1005, %v1093
    %v1095 = vpop.f32.mrb[0].mxu0
    %v1096 = vadd.f32 %v1007, %v1095
    %1097 = vmatprep.mubr.f32.mxu0 0.0
    %1098 = vmatmul.mubr.f32.gmra.mrb[0].mxu0 %v110
    %v1099 = vpop.f32.mrb[0].mxu0
    %v1100 = vadd.f32 %v1011, %v1099
    %v1101 = vpop.f32.mrb[0].mxu0
    %v1102 = vadd.f32 %v1013, %v1101
    %1103 = vmatprep.mubr.f32.mxu0 0.0
    %1104 = vmatmul.mubr.f32.gmra.mrb[0].mxu0 %v113
    %v1105 = vpop.f32.mrb[0].mxu0
    %v1106 = vadd.f32 %v1017, %v1105
    %v1107 = vpop.f32.mrb[0].mxu0
    %v1108 = vadd.f32 %v1019, %v1107
    %1109 = vdwg.mxu0
    %1110 = vmatprep.subr.mxu0 %v119
    %1111 = vmatpush1.msra.mxu0 %v118
    %1112 = vmatprep.subr.mxu0 %v131
    %1113 = vmatpush1.msra.mxu0 %v130
    %1114 = vmatprep.subr.mxu0 %v143
    %1115 = vmatpush1.msra.mxu0 %v142
    %1116 = vmatprep.subr.mxu0 %v155
    %1117 = vmatpush1.msra.mxu0 %v154
    %1118 = vmatprep.subr.mxu0 %v167
    %1119 = vmatpush1.msra.mxu0 %v166
    %1120 = vmatprep.subr.mxu0 %v179
    %1121 = vmatpush1.msra.mxu0 %v178
    %1122 = vmatprep.subr.mxu0 %v191
    %1123 = vmatpush1.msra.mxu0 %v190
    %1124 = vmatprep.subr.mxu0 %v203
    %1125 = vmatpush1.msra.mxu0 %v202
    %1126 = vmatprep.subr.mxu0 %v215
    %1127 = vmatpush1.msra.mxu0 %v214
    %1128 = vmatprep.subr.mxu0 %v227
    %1129 = vmatpush1.msra.mxu0 %v226
    %1130 = vmatprep.subr.mxu0 %v239
    %1131 = vmatpush1.msra.mxu0 %v238
    %1132 = vmatprep.subr.mxu0 %v251
    %1133 = vmatpush1.msra.mxu0 %v250
    %1134 = vmatprep.subr.mxu0 %v263
    %1135 = vmatpush1.msra.mxu0 %v262
    %1136 = vmatprep.subr.mxu0 %v275
    %1137 = vmatpush1.msra.mxu0 %v274
    %1138 = vmatprep.subr.mxu0 %v287
    %1139 = vmatpush1.msra.mxu0 %v286
    %1140 = vmatprep.subr.mxu0 %v299
    %1141 = vmatpush1.msra.mxu0 %v298
    %1142 = vmatprep.subr.mxu0 %v311
    %1143 = vmatpush1.msra.mxu0 %v310
    %1144 = vmatprep.subr.mxu0 %v323
    %1145 = vmatpush1.msra.mxu0 %v322
    %1146 = vmatprep.subr.mxu0 %v335
    %1147 = vmatpush1.msra.mxu0 %v334
    %1148 = vmatprep.subr.mxu0 %v347
    %1149 = vmatpush1.msra.mxu0 %v346
    %1150 = vmatprep.subr.mxu0 %v359
    %1151 = vmatpush1.msra.mxu0 %v358
    %1152 = vmatprep.subr.mxu0 %v371
    %1153 = vmatpush1.msra.mxu0 %v370
    %1154 = vmatprep.subr.mxu0 %v383
    %1155 = vmatpush1.msra.mxu0 %v382
    %1156 = vmatprep.subr.mxu0 %v395
    %1157 = vmatpush1.msra.mxu0 %v394
    %1158 = vmatprep.subr.mxu0 %v407
    %1159 = vmatpush1.msra.mxu0 %v406
    %1160 = vmatprep.subr.mxu0 %v419
    %1161 = vmatpush1.msra.mxu0 %v418
    %1162 = vmatprep.subr.mxu0 %v431
    %1163 = vmatpush1.msra.mxu0 %v430
    %1164 = vmatprep.subr.mxu0 %v443
    %1165 = vmatpush1.msra.mxu0 %v442
    %1166 = vmatprep.subr.mxu0 %v455
    %1167 = vmatpush1.msra.mxu0 %v454
    %1168 = vmatprep.subr.mxu0 %v467
    %1169 = vmatpush1.msra.mxu0 %v466
    %1170 = vmatprep.subr.mxu0 %v479
    %1171 = vmatpush1.msra.mxu0 %v478
    %1172 = vmatprep.subr.mxu0 %v491
    %1173 = vmatpush1.msra.mxu0 %v490
    %1174 = vmatprep.mubr.f32.mxu0 %v103
    %1175 = vmatmul.mubr.f32.gmra.mrb[0].mxu0 %v102
    %v1176 = vpop.f32.mrb[0].mxu0
    %v1177 = vadd.f32 %v713, %v1176
    %v1178 = vpop.f32.mrb[0].mxu0
    %v1179 = vadd.f32 %v717, %v1178
    %1180 = vmatprep.mubr.f32.mxu0 %v106
    %1181 = vmatmul.mubr.f32.gmra.mrb[0].mxu0 %v105
    %v1182 = vpop.f32.mrb[0].mxu0
    %v1183 = vadd.f32 %v713, %v1182
    %v1184 = vpop.f32.mrb[0].mxu0
    %v1185 = vadd.f32 %v717, %v1184
    %1186 = vmatprep.mubr.f32.mxu0 %v109
    %1187 = vmatmul.mubr.f32.gmra.mrb[0].mxu0 %v108
    %v1188 = vpop.f32.mrb[0].mxu0
    %v1189 = vadd.f32 %v713, %v1188
    %v1190 = vpop.f32.mrb[0].mxu0
    %v1191 = vadd.f32 %v717, %v1190
    %1192 = vmatprep.mubr.f32.mxu0 %v112
    %1193 = vmatmul.mubr.f32.gmra.mrb[0].mxu0 %v111
    %v1194 = vpop.f32.mrb[0].mxu0
    %v1195 = vadd.f32 %v713, %v1194
    %v1196 = vpop.f32.mrb[0].mxu0
    %v1197 = vadd.f32 %v717, %v1196
    %1198 = vdwg.mxu0
    %1199 = vmatprep.subr.mxu0 %v503
    %1200 = vmatpush1.msra.mxu0 %v502
    %1201 = vmatprep.subr.mxu0 %v515
    %1202 = vmatpush1.msra.mxu0 %v514
    %1203 = vmatprep.subr.mxu0 %v527
    %1204 = vmatpush1.msra.mxu0 %v526
    %1205 = vmatprep.subr.mxu0 %v539
    %1206 = vmatpush1.msra.mxu0 %v538
    %1207 = vmatprep.subr.mxu0 %v551
    %1208 = vmatpush1.msra.mxu0 %v550
    %1209 = vmatprep.subr.mxu0 %v563
    %1210 = vmatpush1.msra.mxu0 %v562
    %1211 = vmatprep.subr.mxu0 %v575
    %1212 = vmatpush1.msra.mxu0 %v574
    %1213 = vmatprep.subr.mxu0 %v587
    %1214 = vmatpush1.msra.mxu0 %v586
    %1215 = vmatprep.subr.mxu0 %v599
    %1216 = vmatpush1.msra.mxu0 %v598
    %1217 = vmatprep.subr.mxu0 %v611
    %1218 = vmatpush1.msra.mxu0 %v610
    %1219 = vmatprep.subr.mxu0 %v623
    %1220 = vmatpush1.msra.mxu0 %v622
    %1221 = vmatprep.subr.mxu0 %v635
    %1222 = vmatpush1.msra.mxu0 %v634
    %1223 = vmatprep.subr.mxu0 %v647
    %1224 = vmatpush1.msra.mxu0 %v646
    %1225 = vmatprep.subr.mxu0 %v659
    %1226 = vmatpush1.msra.mxu0 %v658
    %1227 = vmatprep.subr.mxu0 %v671
    %1228 = vmatpush1.msra.mxu0 %v670
    %1229 = vmatprep.subr.mxu0 %v683
    %1230 = vmatpush1.msra.mxu0 %v682
    %1231 = vmatprep.subr.mxu0 0.0
    %1232 = vmatpush1.msra.mxu0 0.0
    %1233 = vmatprep.subr.mxu0 0.0
    %1234 = vmatpush1.msra.mxu0 0.0
    %1235 = vmatprep.subr.mxu0 0.0
    %1236 = vmatpush1.msra.mxu0 0.0
    %1237 = vmatprep.subr.mxu0 0.0
    %1238 = vmatpush1.msra.mxu0 0.0
    %1239 = vmatprep.subr.mxu0 0.0
    %1240 = vmatpush1.msra.mxu0 0.0
    %1241 = vmatprep.subr.mxu0 0.0
    %1242 = vmatpush1.msra.mxu0 0.0
    %1243 = vmatprep.subr.mxu0 0.0
    %1244 = vmatpush1.msra.mxu0 0.0
    %1245 = vmatprep.subr.mxu0 0.0
    %1246 = vmatpush1.msra.mxu0 0.0
    %1247 = vmatprep.subr.mxu0 0.0
    %1248 = vmatpush1.msra.mxu0 0.0
    %1249 = vmatprep.subr.mxu0 0.0
    %1250 = vmatpush1.msra.mxu0 0.0
    %1251 = vmatprep.subr.mxu0 0.0
    %1252 = vmatpush1.msra.mxu0 0.0
    %1253 = vmatprep.subr.mxu0 0.0
    %1254 = vmatpush1.msra.mxu0 0.0
    %1255 = vmatprep.subr.mxu0 0.0
    %1256 = vmatpush1.msra.mxu0 0.0
    %1257 = vmatprep.subr.mxu0 0.0
    %1258 = vmatpush1.msra.mxu0 0.0
    %1259 = vmatprep.subr.mxu0 0.0
    %1260 = vmatpush1.msra.mxu0 0.0
    %1261 = vmatprep.subr.mxu0 0.0
    %1262 = vmatpush1.msra.mxu0 0.0
    %1263 = vmatprep.mubr.f32.mxu0 0.0
    %1264 = vmatmul.mubr.f32.gmra.mrb[0].mxu0 %v104
    %v1265 = vpop.f32.mrb[0].mxu0
    %v1266 = vadd.f32 %v1177, %v1265
    %v1267 = vpop.f32.mrb[0].mxu0
    %v1268 = vadd.f32 %v1179, %v1267
    %1269 = vmatprep.mubr.f32.mxu0 0.0
    %1270 = vmatmul.mubr.f32.gmra.mrb[0].mxu0 %v107
    %v1271 = vpop.f32.mrb[0].mxu0
    %v1272 = vadd.f32 %v1183, %v1271
    %v1273 = vpop.f32.mrb[0].mxu0
    %v1274 = vadd.f32 %v1185, %v1273
    %1275 = vmatprep.mubr.f32.mxu0 0.0
    %1276 = vmatmul.mubr.f32.gmra.mrb[0].mxu0 %v110
    %v1277 = vpop.f32.mrb[0].mxu0
    %v1278 = vadd.f32 %v1189, %v1277
    %v1279 = vpop.f32.mrb[0].mxu0
    %v1280 = vadd.f32 %v1191, %v1279
    %1281 = vmatprep.mubr.f32.mxu0 0.0
    %1282 = vmatmul.mubr.f32.gmra.mrb[0].mxu0 %v113
    %v1283 = vpop.f32.mrb[0].mxu0
    %v1284 = vadd.f32 %v1195, %v1283
    %v1285 = vpop.f32.mrb[0].mxu0
    %v1286 = vadd.f32 %v1197, %v1285
    %1287 = vdwg.mxu0
    %1288 = vmatprep.subr.mxu0 %v121
    %1289 = vmatpush1.msra.mxu0 %v120
    %1290 = vmatprep.subr.mxu0 %v133
    %1291 = vmatpush1.msra.mxu0 %v132
    %1292 = vmatprep.subr.mxu0 %v145
    %1293 = vmatpush1.msra.mxu0 %v144
    %1294 = vmatprep.subr.mxu0 %v157
    %1295 = vmatpush1.msra.mxu0 %v156
    %1296 = vmatprep.subr.mxu0 %v169
    %1297 = vmatpush1.msra.mxu0 %v168
    %1298 = vmatprep.subr.mxu0 %v181
    %1299 = vmatpush1.msra.mxu0 %v180
    %1300 = vmatprep.subr.mxu0 %v193
    %1301 = vmatpush1.msra.mxu0 %v192
    %1302 = vmatprep.subr.mxu0 %v205
    %1303 = vmatpush1.msra.mxu0 %v204
    %1304 = vmatprep.subr.mxu0 %v217
    %1305 = vmatpush1.msra.mxu0 %v216
    %1306 = vmatprep.subr.mxu0 %v229
    %1307 = vmatpush1.msra.mxu0 %v228
    %1308 = vmatprep.subr.mxu0 %v241
    %1309 = vmatpush1.msra.mxu0 %v240
    %1310 = vmatprep.subr.mxu0 %v253
    %1311 = vmatpush1.msra.mxu0 %v252
    %1312 = vmatprep.subr.mxu0 %v265
    %1313 = vmatpush1.msra.mxu0 %v264
    %1314 = vmatprep.subr.mxu0 %v277
    %1315 = vmatpush1.msra.mxu0 %v276
    %1316 = vmatprep.subr.mxu0 %v289
    %1317 = vmatpush1.msra.mxu0 %v288
    %1318 = vmatprep.subr.mxu0 %v301
    %1319 = vmatpush1.msra.mxu0 %v300
    %1320 = vmatprep.subr.mxu0 %v313
    %1321 = vmatpush1.msra.mxu0 %v312
    %1322 = vmatprep.subr.mxu0 %v325
    %1323 = vmatpush1.msra.mxu0 %v324
    %1324 = vmatprep.subr.mxu0 %v337
    %1325 = vmatpush1.msra.mxu0 %v336
    %1326 = vmatprep.subr.mxu0 %v349
    %1327 = vmatpush1.msra.mxu0 %v348
    %1328 = vmatprep.subr.mxu0 %v361
    %1329 = vmatpush1.msra.mxu0 %v360
    %1330 = vmatprep.subr.mxu0 %v373
    %1331 = vmatpush1.msra.mxu0 %v372
    %1332 = vmatprep.subr.mxu0 %v385
    %1333 = vmatpush1.msra.mxu0 %v384
    %1334 = vmatprep.subr.mxu0 %v397
    %1335 = vmatpush1.msra.mxu0 %v396
    %1336 = vmatprep.subr.mxu0 %v409
    %1337 = vmatpush1.msra.mxu0 %v408
    %1338 = vmatprep.subr.mxu0 %v421
    %1339 = vmatpush1.msra.mxu0 %v420
    %1340 = vmatprep.subr.mxu0 %v433
    %1341 = vmatpush1.msra.mxu0 %v432
    %1342 = vmatprep.subr.mxu0 %v445
    %1343 = vmatpush1.msra.mxu0 %v444
    %1344 = vmatprep.subr.mxu0 %v457
    %1345 = vmatpush1.msra.mxu0 %v456
    %1346 = vmatprep.subr.mxu0 %v469
    %1347 = vmatpush1.msra.mxu0 %v468
    %1348 = vmatprep.subr.mxu0 %v481
    %1349 = vmatpush1.msra.mxu0 %v480
    %1350 = vmatprep.subr.mxu0 %v493
    %1351 = vmatpush1.msra.mxu0 %v492
    %1352 = vmatprep.mubr.f32.mxu0 %v103
    %1353 = vmatmul.mubr.f32.gmra.mrb[0].mxu0 %v102
    %v1354 = vpop.f32.mrb[0].mxu0
    %v1355 = vadd.f32 %v721, %v1354
    %v1356 = vpop.f32.mrb[0].mxu0
    %v1357 = vadd.f32 %v725, %v1356
    %1358 = vmatprep.mubr.f32.mxu0 %v106
    %1359 = vmatmul.mubr.f32.gmra.mrb[0].mxu0 %v105
    %v1360 = vpop.f32.mrb[0].mxu0
    %v1361 = vadd.f32 %v721, %v1360
    %v1362 = vpop.f32.mrb[0].mxu0
    %v1363 = vadd.f32 %v725, %v1362
    %1364 = vmatprep.mubr.f32.mxu0 %v109
    %1365 = vmatmul.mubr.f32.gmra.mrb[0].mxu0 %v108
    %v1366 = vpop.f32.mrb[0].mxu0
    %v1367 = vadd.f32 %v721, %v1366
    %v1368 = vpop.f32.mrb[0].mxu0
    %v1369 = vadd.f32 %v725, %v1368
    %1370 = vmatprep.mubr.f32.mxu0 %v112
    %1371 = vmatmul.mubr.f32.gmra.mrb[0].mxu0 %v111
    %v1372 = vpop.f32.mrb[0].mxu0
    %v1373 = vadd.f32 %v721, %v1372
    %v1374 = vpop.f32.mrb[0].mxu0
    %v1375 = vadd.f32 %v725, %v1374
    %1376 = vdwg.mxu0
    %1377 = vmatprep.subr.mxu0 %v505
    %1378 = vmatpush1.msra.mxu0 %v504
    %1379 = vmatprep.subr.mxu0 %v517
    %1380 = vmatpush1.msra.mxu0 %v516
    %1381 = vmatprep.subr.mxu0 %v529
    %1382 = vmatpush1.msra.mxu0 %v528
    %1383 = vmatprep.subr.mxu0 %v541
    %1384 = vmatpush1.msra.mxu0 %v540
    %1385 = vmatprep.subr.mxu0 %v553
    %1386 = vmatpush1.msra.mxu0 %v552
    %1387 = vmatprep.subr.mxu0 %v565
    %1388 = vmatpush1.msra.mxu0 %v564
    %1389 = vmatprep.subr.mxu0 %v577
    %1390 = vmatpush1.msra.mxu0 %v576
    %1391 = vmatprep.subr.mxu0 %v589
    %1392 = vmatpush1.msra.mxu0 %v588
    %1393 = vmatprep.subr.mxu0 %v601
    %1394 = vmatpush1.msra.mxu0 %v600
    %1395 = vmatprep.subr.mxu0 %v613
    %1396 = vmatpush1.msra.mxu0 %v612
    %1397 = vmatprep.subr.mxu0 %v625
    %1398 = vmatpush1.msra.mxu0 %v624
    %1399 = vmatprep.subr.mxu0 %v637
    %1400 = vmatpush1.msra.mxu0 %v636
    %1401 = vmatprep.subr.mxu0 %v649
    %1402 = vmatpush1.msra.mxu0 %v648
    %1403 = vmatprep.subr.mxu0 %v661
    %1404 = vmatpush1.msra.mxu0 %v660
    %1405 = vmatprep.subr.mxu0 %v673
    %1406 = vmatpush1.msra.mxu0 %v672
    %1407 = vmatprep.subr.mxu0 %v685
    %1408 = vmatpush1.msra.mxu0 %v684
    %1409 = vmatprep.subr.mxu0 0.0
    %1410 = vmatpush1.msra.mxu0 0.0
    %1411 = vmatprep.subr.mxu0 0.0
    %1412 = vmatpush1.msra.mxu0 0.0
    %1413 = vmatprep.subr.mxu0 0.0
    %1414 = vmatpush1.msra.mxu0 0.0
    %1415 = vmatprep.subr.mxu0 0.0
    %1416 = vmatpush1.msra.mxu0 0.0
    %1417 = vmatprep.subr.mxu0 0.0
    %1418 = vmatpush1.msra.mxu0 0.0
    %1419 = vmatprep.subr.mxu0 0.0
    %1420 = vmatpush1.msra.mxu0 0.0
    %1421 = vmatprep.subr.mxu0 0.0
    %1422 = vmatpush1.msra.mxu0 0.0
    %1423 = vmatprep.subr.mxu0 0.0
    %1424 = vmatpush1.msra.mxu0 0.0
    %1425 = vmatprep.subr.mxu0 0.0
    %1426 = vmatpush1.msra.mxu0 0.0
    %1427 = vmatprep.subr.mxu0 0.0
    %1428 = vmatpush1.msra.mxu0 0.0
    %1429 = vmatprep.subr.mxu0 0.0
    %1430 = vmatpush1.msra.mxu0 0.0
    %1431 = vmatprep.subr.mxu0 0.0
    %1432 = vmatpush1.msra.mxu0 0.0
    %1433 = vmatprep.subr.mxu0 0.0
    %1434 = vmatpush1.msra.mxu0 0.0
    %1435 = vmatprep.subr.mxu0 0.0
    %1436 = vmatpush1.msra.mxu0 0.0
    %1437 = vmatprep.subr.mxu0 0.0
    %1438 = vmatpush1.msra.mxu0 0.0
    %1439 = vmatprep.subr.mxu0 0.0
    %1440 = vmatpush1.msra.mxu0 0.0
    %1441 = vmatprep.mubr.f32.mxu0 0.0
    %1442 = vmatmul.mubr.f32.gmra.mrb[0].mxu0 %v104
    %v1443 = vpop.f32.mrb[0].mxu0
    %v1444 = vadd.f32 %v1355, %v1443
    %v1445 = vpop.f32.mrb[0].mxu0
    %v1446 = vadd.f32 %v1357, %v1445
    %1447 = vmatprep.mubr.f32.mxu0 0.0
    %1448 = vmatmul.mubr.f32.gmra.mrb[0].mxu0 %v107
    %v1449 = vpop.f32.mrb[0].mxu0
    %v1450 = vadd.f32 %v1361, %v1449
    %v1451 = vpop.f32.mrb[0].mxu0
    %v1452 = vadd.f32 %v1363, %v1451
    %1453 = vmatprep.mubr.f32.mxu0 0.0
    %1454 = vmatmul.mubr.f32.gmra.mrb[0].mxu0 %v110
    %v1455 = vpop.f32.mrb[0].mxu0
    %v1456 = vadd.f32 %v1367, %v1455
    %v1457 = vpop.f32.mrb[0].mxu0
    %v1458 = vadd.f32 %v1369, %v1457
    %1459 = vmatprep.mubr.f32.mxu0 0.0
    %1460 = vmatmul.mubr.f32.gmra.mrb[0].mxu0 %v113
    %v1461 = vpop.f32.mrb[0].mxu0
    %v1462 = vadd.f32 %v1373, %v1461
    %v1463 = vpop.f32.mrb[0].mxu0
    %v1464 = vadd.f32 %v1375, %v1463
    %1465 = vdwg.mxu0
    %1466 = vmatprep.subr.mxu0 %v123
    %1467 = vmatpush1.msra.mxu0 %v122
    %1468 = vmatprep.subr.mxu0 %v135
    %1469 = vmatpush1.msra.mxu0 %v134
    %1470 = vmatprep.subr.mxu0 %v147
    %1471 = vmatpush1.msra.mxu0 %v146
    %1472 = vmatprep.subr.mxu0 %v159
    %1473 = vmatpush1.msra.mxu0 %v158
    %1474 = vmatprep.subr.mxu0 %v171
    %1475 = vmatpush1.msra.mxu0 %v170
    %1476 = vmatprep.subr.mxu0 %v183
    %1477 = vmatpush1.msra.mxu0 %v182
    %1478 = vmatprep.subr.mxu0 %v195
    %1479 = vmatpush1.msra.mxu0 %v194
    %1480 = vmatprep.subr.mxu0 %v207
    %1481 = vmatpush1.msra.mxu0 %v206
    %1482 = vmatprep.subr.mxu0 %v219
    %1483 = vmatpush1.msra.mxu0 %v218
    %1484 = vmatprep.subr.mxu0 %v231
    %1485 = vmatpush1.msra.mxu0 %v230
    %1486 = vmatprep.subr.mxu0 %v243
    %1487 = vmatpush1.msra.mxu0 %v242
    %1488 = vmatprep.subr.mxu0 %v255
    %1489 = vmatpush1.msra.mxu0 %v254
    %1490 = vmatprep.subr.mxu0 %v267
    %1491 = vmatpush1.msra.mxu0 %v266
    %1492 = vmatprep.subr.mxu0 %v279
    %1493 = vmatpush1.msra.mxu0 %v278
    %1494 = vmatprep.subr.mxu0 %v291
    %1495 = vmatpush1.msra.mxu0 %v290
    %1496 = vmatprep.subr.mxu0 %v303
    %1497 = vmatpush1.msra.mxu0 %v302
    %1498 = vmatprep.subr.mxu0 %v315
    %1499 = vmatpush1.msra.mxu0 %v314
    %1500 = vmatprep.subr.mxu0 %v327
    %1501 = vmatpush1.msra.mxu0 %v326
    %1502 = vmatprep.subr.mxu0 %v339
    %1503 = vmatpush1.msra.mxu0 %v338
    %1504 = vmatprep.subr.mxu0 %v351
    %1505 = vmatpush1.msra.mxu0 %v350
    %1506 = vmatprep.subr.mxu0 %v363
    %1507 = vmatpush1.msra.mxu0 %v362
    %1508 = vmatprep.subr.mxu0 %v375
    %1509 = vmatpush1.msra.mxu0 %v374
    %1510 = vmatprep.subr.mxu0 %v387
    %1511 = vmatpush1.msra.mxu0 %v386
    %1512 = vmatprep.subr.mxu0 %v399
    %1513 = vmatpush1.msra.mxu0 %v398
    %1514 = vmatprep.subr.mxu0 %v411
    %1515 = vmatpush1.msra.mxu0 %v410
    %1516 = vmatprep.subr.mxu0 %v423
    %1517 = vmatpush1.msra.mxu0 %v422
    %1518 = vmatprep.subr.mxu0 %v435
    %1519 = vmatpush1.msra.mxu0 %v434
    %1520 = vmatprep.subr.mxu0 %v447
    %1521 = vmatpush1.msra.mxu0 %v446
    %1522 = vmatprep.subr.mxu0 %v459
    %1523 = vmatpush1.msra.mxu0 %v458
    %1524 = vmatprep.subr.mxu0 %v471
    %1525 = vmatpush1.msra.mxu0 %v470
    %1526 = vmatprep.subr.mxu0 %v483
    %1527 = vmatpush1.msra.mxu0 %v482
    %1528 = vmatprep.subr.mxu0 %v495
    %1529 = vmatpush1.msra.mxu0 %v494
    %1530 = vmatprep.mubr.f32.mxu0 %v103
    %1531 = vmatmul.mubr.f32.gmra.mrb[0].mxu0 %v102
    %v1532 = vpop.f32.mrb[0].mxu0
    %v1533 = vadd.f32 %v729, %v1532
    %v1534 = vpop.f32.mrb[0].mxu0
    %v1535 = vadd.f32 %v733, %v1534
    %1536 = vmatprep.mubr.f32.mxu0 %v106
    %1537 = vmatmul.mubr.f32.gmra.mrb[0].mxu0 %v105
    %v1538 = vpop.f32.mrb[0].mxu0
    %v1539 = vadd.f32 %v729, %v1538
    %v1540 = vpop.f32.mrb[0].mxu0
    %v1541 = vadd.f32 %v733, %v1540
    %1542 = vmatprep.mubr.f32.mxu0 %v109
    %1543 = vmatmul.mubr.f32.gmra.mrb[0].mxu0 %v108
    %v1544 = vpop.f32.mrb[0].mxu0
    %v1545 = vadd.f32 %v729, %v1544
    %v1546 = vpop.f32.mrb[0].mxu0
    %v1547 = vadd.f32 %v733, %v1546
    %1548 = vmatprep.mubr.f32.mxu0 %v112
    %1549 = vmatmul.mubr.f32.gmra.mrb[0].mxu0 %v111
    %v1550 = vpop.f32.mrb[0].mxu0
    %v1551 = vadd.f32 %v729, %v1550
    %v1552 = vpop.f32.mrb[0].mxu0
    %v1553 = vadd.f32 %v733, %v1552
    %1554 = vdwg.mxu0
    %1555 = vmatprep.subr.mxu0 %v507
    %1556 = vmatpush1.msra.mxu0 %v506
    %1557 = vmatprep.subr.mxu0 %v519
    %1558 = vmatpush1.msra.mxu0 %v518
    %1559 = vmatprep.subr.mxu0 %v531
    %1560 = vmatpush1.msra.mxu0 %v530
    %1561 = vmatprep.subr.mxu0 %v543
    %1562 = vmatpush1.msra.mxu0 %v542
    %1563 = vmatprep.subr.mxu0 %v555
    %1564 = vmatpush1.msra.mxu0 %v554
    %1565 = vmatprep.subr.mxu0 %v567
    %1566 = vmatpush1.msra.mxu0 %v566
    %1567 = vmatprep.subr.mxu0 %v579
    %1568 = vmatpush1.msra.mxu0 %v578
    %1569 = vmatprep.subr.mxu0 %v591
    %1570 = vmatpush1.msra.mxu0 %v590
    %1571 = vmatprep.subr.mxu0 %v603
    %1572 = vmatpush1.msra.mxu0 %v602
    %1573 = vmatprep.subr.mxu0 %v615
    %1574 = vmatpush1.msra.mxu0 %v614
    %1575 = vmatprep.subr.mxu0 %v627
    %1576 = vmatpush1.msra.mxu0 %v626
    %1577 = vmatprep.subr.mxu0 %v639
    %1578 = vmatpush1.msra.mxu0 %v638
    %1579 = vmatprep.subr.mxu0 %v651
    %1580 = vmatpush1.msra.mxu0 %v650
    %1581 = vmatprep.subr.mxu0 %v663
    %1582 = vmatpush1.msra.mxu0 %v662
    %1583 = vmatprep.subr.mxu0 %v675
    %1584 = vmatpush1.msra.mxu0 %v674
    %1585 = vmatprep.subr.mxu0 %v687
    %1586 = vmatpush1.msra.mxu0 %v686
    %1587 = vmatprep.subr.mxu0 0.0
    %1588 = vmatpush1.msra.mxu0 0.0
    %1589 = vmatprep.subr.mxu0 0.0
    %1590 = vmatpush1.msra.mxu0 0.0
    %1591 = vmatprep.subr.mxu0 0.0
    %1592 = vmatpush1.msra.mxu0 0.0
    %1593 = vmatprep.subr.mxu0 0.0
    %1594 = vmatpush1.msra.mxu0 0.0
    %1595 = vmatprep.subr.mxu0 0.0
    %1596 = vmatpush1.msra.mxu0 0.0
    %1597 = vmatprep.subr.mxu0 0.0
    %1598 = vmatpush1.msra.mxu0 0.0
    %1599 = vmatprep.subr.mxu0 0.0
    %1600 = vmatpush1.msra.mxu0 0.0
    %1601 = vmatprep.subr.mxu0 0.0
    %1602 = vmatpush1.msra.mxu0 0.0
    %1603 = vmatprep.subr.mxu0 0.0
    %1604 = vmatpush1.msra.mxu0 0.0
    %1605 = vmatprep.subr.mxu0 0.0
    %1606 = vmatpush1.msra.mxu0 0.0
    %1607 = vmatprep.subr.mxu0 0.0
    %1608 = vmatpush1.msra.mxu0 0.0
    %1609 = vmatprep.subr.mxu0 0.0
    %1610 = vmatpush1.msra.mxu0 0.0
    %1611 = vmatprep.subr.mxu0 0.0
    %1612 = vmatpush1.msra.mxu0 0.0
    %1613 = vmatprep.subr.mxu0 0.0
    %1614 = vmatpush1.msra.mxu0 0.0
    %1615 = vmatprep.subr.mxu0 0.0
    %1616 = vmatpush1.msra.mxu0 0.0
    %1617 = vmatprep.subr.mxu0 0.0
    %1618 = vmatpush1.msra.mxu0 0.0
    %1619 = vmatprep.mubr.f32.mxu0 0.0
    %1620 = vmatmul.mubr.f32.gmra.mrb[0].mxu0 %v104
    %v1621 = vpop.f32.mrb[0].mxu0
    %v1622 = vadd.f32 %v1533, %v1621
    %v1623 = vpop.f32.mrb[0].mxu0
    %v1624 = vadd.f32 %v1535, %v1623
    %1625 = vmatprep.mubr.f32.mxu0 0.0
    %1626 = vmatmul.mubr.f32.gmra.mrb[0].mxu0 %v107
    %v1627 = vpop.f32.mrb[0].mxu0
    %v1628 = vadd.f32 %v1539, %v1627
    %v1629 = vpop.f32.mrb[0].mxu0
    %v1630 = vadd.f32 %v1541, %v1629
    %1631 = vmatprep.mubr.f32.mxu0 0.0
    %1632 = vmatmul.mubr.f32.gmra.mrb[0].mxu0 %v110
    %v1633 = vpop.f32.mrb[0].mxu0
    %v1634 = vadd.f32 %v1545, %v1633
    %v1635 = vpop.f32.mrb[0].mxu0
    %v1636 = vadd.f32 %v1547, %v1635
    %1637 = vmatprep.mubr.f32.mxu0 0.0
    %1638 = vmatmul.mubr.f32.gmra.mrb[0].mxu0 %v113
    %v1639 = vpop.f32.mrb[0].mxu0
    %v1640 = vadd.f32 %v1551, %v1639
    %v1641 = vpop.f32.mrb[0].mxu0
    %v1642 = vadd.f32 %v1553, %v1641
    %1643 = vdwg.mxu0
    %1644 = vmatprep.subr.mxu0 %v125
    %1645 = vmatpush1.msra.mxu0 %v124
    %1646 = vmatprep.subr.mxu0 %v137
    %1647 = vmatpush1.msra.mxu0 %v136
    %1648 = vmatprep.subr.mxu0 %v149
    %1649 = vmatpush1.msra.mxu0 %v148
    %1650 = vmatprep.subr.mxu0 %v161
    %1651 = vmatpush1.msra.mxu0 %v160
    %1652 = vmatprep.subr.mxu0 %v173
    %1653 = vmatpush1.msra.mxu0 %v172
    %1654 = vmatprep.subr.mxu0 %v185
    %1655 = vmatpush1.msra.mxu0 %v184
    %1656 = vmatprep.subr.mxu0 %v197
    %1657 = vmatpush1.msra.mxu0 %v196
    %1658 = vmatprep.subr.mxu0 %v209
    %1659 = vmatpush1.msra.mxu0 %v208
    %1660 = vmatprep.subr.mxu0 %v221
    %1661 = vmatpush1.msra.mxu0 %v220
    %1662 = vmatprep.subr.mxu0 %v233
    %1663 = vmatpush1.msra.mxu0 %v232
    %1664 = vmatprep.subr.mxu0 %v245
    %1665 = vmatpush1.msra.mxu0 %v244
    %1666 = vmatprep.subr.mxu0 %v257
    %1667 = vmatpush1.msra.mxu0 %v256
    %1668 = vmatprep.subr.mxu0 %v269
    %1669 = vmatpush1.msra.mxu0 %v268
    %1670 = vmatprep.subr.mxu0 %v281
    %1671 = vmatpush1.msra.mxu0 %v280
    %1672 = vmatprep.subr.mxu0 %v293
    %1673 = vmatpush1.msra.mxu0 %v292
    %1674 = vmatprep.subr.mxu0 %v305
    %1675 = vmatpush1.msra.mxu0 %v304
    %1676 = vmatprep.subr.mxu0 %v317
    %1677 = vmatpush1.msra.mxu0 %v316
    %1678 = vmatprep.subr.mxu0 %v329
    %1679 = vmatpush1.msra.mxu0 %v328
    %1680 = vmatprep.subr.mxu0 %v341
    %1681 = vmatpush1.msra.mxu0 %v340
    %1682 = vmatprep.subr.mxu0 %v353
    %1683 = vmatpush1.msra.mxu0 %v352
    %1684 = vmatprep.subr.mxu0 %v365
    %1685 = vmatpush1.msra.mxu0 %v364
    %1686 = vmatprep.subr.mxu0 %v377
    %1687 = vmatpush1.msra.mxu0 %v376
    %1688 = vmatprep.subr.mxu0 %v389
    %1689 = vmatpush1.msra.mxu0 %v388
    %1690 = vmatprep.subr.mxu0 %v401
    %1691 = vmatpush1.msra.mxu0 %v400
    %1692 = vmatprep.subr.mxu0 %v413
    %1693 = vmatpush1.msra.mxu0 %v412
    %1694 = vmatprep.subr.mxu0 %v425
    %1695 = vmatpush1.msra.mxu0 %v424
    %1696 = vmatprep.subr.mxu0 %v437
    %1697 = vmatpush1.msra.mxu0 %v436
    %1698 = vmatprep.subr.mxu0 %v449
    %1699 = vmatpush1.msra.mxu0 %v448
    %1700 = vmatprep.subr.mxu0 %v461
    %1701 = vmatpush1.msra.mxu0 %v460
    %1702 = vmatprep.subr.mxu0 %v473
    %1703 = vmatpush1.msra.mxu0 %v472
    %1704 = vmatprep.subr.mxu0 %v485
    %1705 = vmatpush1.msra.mxu0 %v484
    %1706 = vmatprep.subr.mxu0 %v497
    %1707 = vmatpush1.msra.mxu0 %v496
    %1708 = vmatprep.mubr.f32.mxu0 %v103
    %1709 = vmatmul.mubr.f32.gmra.mrb[0].mxu0 %v102
    %v1710 = vpop.f32.mrb[0].mxu0
    %v1711 = vadd.f32 %v737, %v1710
    %v1712 = vpop.f32.mrb[0].mxu0
    %v1713 = vadd.f32 %v741, %v1712
    %1714 = vmatprep.mubr.f32.mxu0 %v106
    %1715 = vmatmul.mubr.f32.gmra.mrb[0].mxu0 %v105
    %v1716 = vpop.f32.mrb[0].mxu0
    %v1717 = vadd.f32 %v737, %v1716
    %v1718 = vpop.f32.mrb[0].mxu0
    %v1719 = vadd.f32 %v741, %v1718
    %1720 = vmatprep.mubr.f32.mxu0 %v109
    %1721 = vmatmul.mubr.f32.gmra.mrb[0].mxu0 %v108
    %v1722 = vpop.f32.mrb[0].mxu0
    %v1723 = vadd.f32 %v737, %v1722
    %v1724 = vpop.f32.mrb[0].mxu0
    %v1725 = vadd.f32 %v741, %v1724
    %1726 = vmatprep.mubr.f32.mxu0 %v112
    %1727 = vmatmul.mubr.f32.gmra.mrb[0].mxu0 %v111
    %v1728 = vpop.f32.mrb[0].mxu0
    %v1729 = vadd.f32 %v737, %v1728
    %v1730 = vpop.f32.mrb[0].mxu0
    %v1731 = vadd.f32 %v741, %v1730
    %1732 = vdwg.mxu0
    %1733 = vmatprep.subr.mxu0 %v509
    %1734 = vmatpush1.msra.mxu0 %v508
    %1735 = vmatprep.subr.mxu0 %v521
    %1736 = vmatpush1.msra.mxu0 %v520
    %1737 = vmatprep.subr.mxu0 %v533
    %1738 = vmatpush1.msra.mxu0 %v532
    %1739 = vmatprep.subr.mxu0 %v545
    %1740 = vmatpush1.msra.mxu0 %v544
    %1741 = vmatprep.subr.mxu0 %v557
    %1742 = vmatpush1.msra.mxu0 %v556
    %1743 = vmatprep.subr.mxu0 %v569
    %1744 = vmatpush1.msra.mxu0 %v568
    %1745 = vmatprep.subr.mxu0 %v581
    %1746 = vmatpush1.msra.mxu0 %v580
    %1747 = vmatprep.subr.mxu0 %v593
    %1748 = vmatpush1.msra.mxu0 %v592
    %1749 = vmatprep.subr.mxu0 %v605
    %1750 = vmatpush1.msra.mxu0 %v604
    %1751 = vmatprep.subr.mxu0 %v617
    %1752 = vmatpush1.msra.mxu0 %v616
    %1753 = vmatprep.subr.mxu0 %v629
    %1754 = vmatpush1.msra.mxu0 %v628
    %1755 = vmatprep.subr.mxu0 %v641
    %1756 = vmatpush1.msra.mxu0 %v640
    %1757 = vmatprep.subr.mxu0 %v653
    %1758 = vmatpush1.msra.mxu0 %v652
    %1759 = vmatprep.subr.mxu0 %v665
    %1760 = vmatpush1.msra.mxu0 %v664
    %1761 = vmatprep.subr.mxu0 %v677
    %1762 = vmatpush1.msra.mxu0 %v676
    %1763 = vmatprep.subr.mxu0 %v689
    %1764 = vmatpush1.msra.mxu0 %v688
    %1765 = vmatprep.subr.mxu0 0.0
    %1766 = vmatpush1.msra.mxu0 0.0
    %1767 = vmatprep.subr.mxu0 0.0
    %1768 = vmatpush1.msra.mxu0 0.0
    %1769 = vmatprep.subr.mxu0 0.0
    %1770 = vmatpush1.msra.mxu0 0.0
    %1771 = vmatprep.subr.mxu0 0.0
    %1772 = vmatpush1.msra.mxu0 0.0
    %1773 = vmatprep.subr.mxu0 0.0
    %1774 = vmatpush1.msra.mxu0 0.0
    %1775 = vmatprep.subr.mxu0 0.0
    %1776 = vmatpush1.msra.mxu0 0.0
    %1777 = vmatprep.subr.mxu0 0.0
    %1778 = vmatpush1.msra.mxu0 0.0
    %1779 = vmatprep.subr.mxu0 0.0
    %1780 = vmatpush1.msra.mxu0 0.0
    %1781 = vmatprep.subr.mxu0 0.0
    %1782 = vmatpush1.msra.mxu0 0.0
    %1783 = vmatprep.subr.mxu0 0.0
    %1784 = vmatpush1.msra.mxu0 0.0
    %1785 = vmatprep.subr.mxu0 0.0
    %1786 = vmatpush1.msra.mxu0 0.0
    %1787 = vmatprep.subr.mxu0 0.0
    %1788 = vmatpush1.msra.mxu0 0.0
    %1789 = vmatprep.subr.mxu0 0.0
    %1790 = vmatpush1.msra.mxu0 0.0
    %1791 = vmatprep.subr.mxu0 0.0
    %1792 = vmatpush1.msra.mxu0 0.0
    %1793 = vmatprep.subr.mxu0 0.0
    %1794 = vmatpush1.msra.mxu0 0.0
    %1795 = vmatprep.subr.mxu0 0.0
    %1796 = vmatpush1.msra.mxu0 0.0
    %1797 = vmatprep.mubr.f32.mxu0 0.0
    %1798 = vmatmul.mubr.f32.gmra.mrb[0].mxu0 %v104
    %v1799 = vpop.f32.mrb[0].mxu0
    %v1800 = vadd.f32 %v1711, %v1799
    %v1801 = vpop.f32.mrb[0].mxu0
    %v1802 = vadd.f32 %v1713, %v1801
    %1803 = vmatprep.mubr.f32.mxu0 0.0
    %1804 = vmatmul.mubr.f32.gmra.mrb[0].mxu0 %v107
    %v1805 = vpop.f32.mrb[0].mxu0
    %v1806 = vadd.f32 %v1717, %v1805
    %v1807 = vpop.f32.mrb[0].mxu0
    %v1808 = vadd.f32 %v1719, %v1807
    %1809 = vmatprep.mubr.f32.mxu0 0.0
    %1810 = vmatmul.mubr.f32.gmra.mrb[0].mxu0 %v110
    %v1811 = vpop.f32.mrb[0].mxu0
    %v1812 = vadd.f32 %v1723, %v1811
    %v1813 = vpop.f32.mrb[0].mxu0
    %v1814 = vadd.f32 %v1725, %v1813
    %1815 = vmatprep.mubr.f32.mxu0 0.0
    %1816 = vmatmul.mubr.f32.gmra.mrb[0].mxu0 %v113
    %v1817 = vpop.f32.mrb[0].mxu0
    %v1818 = vadd.f32 %v1729, %v1817
    %v1819 = vpop.f32.mrb[0].mxu0
    %v1820 = vadd.f32 %v1731, %v1819
    %1821 = vdwg.mxu0
    %1822 = vst [vmem:[#allocation2] sm:$0xff] %v910
    %1823 = vst [vmem:[#allocation2 + $0x8] sm:$0xff] %v912
    %1824 = vst [vmem:[#allocation2 + $0x10] sm:$0xff] %v1088
    %1825 = vst [vmem:[#allocation2 + $0x18] sm:$0xff] %v1090
    %1826 = vst [vmem:[#allocation2 + $0x20] sm:$0xff] %v1266
    %1827 = vst [vmem:[#allocation2 + $0x28] sm:$0xff] %v1268
    %1828 = vst [vmem:[#allocation2 + $0x30] sm:$0xff] %v1444
    %1829 = vst [vmem:[#allocation2 + $0x38] sm:$0xff] %v1446
    %1830 = vst [vmem:[#allocation2 + $0x40] sm:$0xff] %v1622
    %1831 = vst [vmem:[#allocation2 + $0x48] sm:$0xff] %v1624
    %1832 = vst [vmem:[#allocation2 + $0x50] sm:$0xff] %v1800
    %1833 = vst [vmem:[#allocation2 + $0x58] sm:$0xff] %v1802
    %1834 = vst [vmem:[#allocation2 + $0x60] sm:$0xff] %v916
    %1835 = vst [vmem:[#allocation2 + $0x68] sm:$0xff] %v918
    %1836 = vst [vmem:[#allocation2 + $0x70] sm:$0xff] %v1094
    %1837 = vst [vmem:[#allocation2 + $0x78] sm:$0xff] %v1096
    %1838 = vst [vmem:[#allocation2 + $0x80] sm:$0xff] %v1272
    %1839 = vst [vmem:[#allocation2 + $0x88] sm:$0xff] %v1274
    %1840 = vst [vmem:[#allocation2 + $0x90] sm:$0xff] %v1450
    %1841 = vst [vmem:[#allocation2 + $0x98] sm:$0xff] %v1452
    %1842 = vst [vmem:[#allocation2 + $0xa0] sm:$0xff] %v1628
    %1843 = vst [vmem:[#allocation2 + $0xa8] sm:$0xff] %v1630
    %1844 = vst [vmem:[#allocation2 + $0xb0] sm:$0xff] %v1806
    %1845 = vst [vmem:[#allocation2 + $0xb8] sm:$0xff] %v1808
    %1846 = vst [vmem:[#allocation2 + $0xc0] sm:$0xff] %v922
    %1847 = vst [vmem:[#allocation2 + $0xc8] sm:$0xff] %v924
    %1848 = vst [vmem:[#allocation2 + $0xd0] sm:$0xff] %v1100
    %1849 = vst [vmem:[#allocation2 + $0xd8] sm:$0xff] %v1102
    %1850 = vst [vmem:[#allocation2 + $0xe0] sm:$0xff] %v1278
    %1851 = vst [vmem:[#allocation2 + $0xe8] sm:$0xff] %v1280
    %1852 = vst [vmem:[#allocation2 + $0xf0] sm:$0xff] %v1456
    %1853 = vst [vmem:[#allocation2 + $0xf8] sm:$0xff] %v1458
    %1854 = vst [vmem:[#allocation2 + $0x100] sm:$0xff] %v1634
    %1855 = vst [vmem:[#allocation2 + $0x108] sm:$0xff] %v1636
    %1856 = vst [vmem:[#allocation2 + $0x110] sm:$0xff] %v1812
    %1857 = vst [vmem:[#allocation2 + $0x118] sm:$0xff] %v1814
    %1858 = vst [vmem:[#allocation2 + $0x120] sm:$0xff] %v928
    %1859 = vst [vmem:[#allocation2 + $0x128] sm:$0xff] %v930
    %1860 = vst [vmem:[#allocation2 + $0x130] sm:$0xff] %v1106
    %1861 = vst [vmem:[#allocation2 + $0x138] sm:$0xff] %v1108
    %1862 = vst [vmem:[#allocation2 + $0x140] sm:$0xff] %v1284
    %1863 = vst [vmem:[#allocation2 + $0x148] sm:$0xff] %v1286
    %1864 = vst [vmem:[#allocation2 + $0x150] sm:$0xff] %v1462
    %1865 = vst [vmem:[#allocation2 + $0x158] sm:$0xff] %v1464
    %1866 = vst [vmem:[#allocation2 + $0x160] sm:$0xff] %v1640
    %1867 = vst [vmem:[#allocation2 + $0x168] sm:$0xff] %v1642
    %1868 = vst [vmem:[#allocation2 + $0x170] sm:$0xff] %v1818
    %1869 = vst [vmem:[#allocation2 + $0x178] sm:$0xff] %v1820
    %v1870 = vld [vmem:[#allocation7] sm:$0xff]
    %v1871 = vld [vmem:[#allocation7 + $0x8] sm:$0xff]
    %v1872 = vld [vmem:[#allocation7 + $0x10] sm:$0xff]
    %v1873 = vld [vmem:[#allocation7 + $0x18] sm:$0xff]
    %v1874 = vld [vmem:[#allocation7 + $0x20] sm:$0xff]
    %v1875 = vld [vmem:[#allocation7 + $0x28] sm:$0xff]
    %v1876 = vld [vmem:[#allocation7 + $0x30] sm:$0xff]
    %v1877 = vld [vmem:[#allocation7 + $0x38] sm:$0xff]
    %v1878 = vld [vmem:[#allocation7 + $0x40] sm:$0xff]
    %v1879 = vld [vmem:[#allocation7 + $0x48] sm:$0xff]
    %v1880 = vld [vmem:[#allocation7 + $0x50] sm:$0xff]
    %v1881 = vld [vmem:[#allocation7 + $0x58] sm:$0xff]
    %v1882 = vld [vmem:[#allocation7 + $0x60] sm:$0xff]
    %v1883 = vld [vmem:[#allocation7 + $0x68] sm:$0xff]
    %v1884 = vld [vmem:[#allocation7 + $0x70] sm:$0xff]
    %v1885 = vld [vmem:[#allocation7 + $0x78] sm:$0xff]
    %v1886 = vld [vmem:[#allocation7 + $0x80] sm:$0xff]
    %v1887 = vld [vmem:[#allocation7 + $0x88] sm:$0xff]
    %v1888 = vld [vmem:[#allocation7 + $0x90] sm:$0xff]
    %v1889 = vld [vmem:[#allocation7 + $0x98] sm:$0xff]
    %v1890 = vld [vmem:[#allocation7 + $0xa0] sm:$0xff]
    %v1891 = vld [vmem:[#allocation7 + $0xa8] sm:$0xff]
    %v1892 = vld [vmem:[#allocation7 + $0xb0] sm:$0xff]
    %v1893 = vld [vmem:[#allocation7 + $0xb8] sm:$0xff]
    %v1894 = vld [vmem:[#allocation7 + $0xc0] sm:$0xff]
    %v1895 = vld [vmem:[#allocation7 + $0xc8] sm:$0xff]
    %v1896 = vld [vmem:[#allocation7 + $0xd0] sm:$0xff]
    %v1897 = vld [vmem:[#allocation7 + $0xd8] sm:$0xff]
    %v1898 = vld [vmem:[#allocation7 + $0xe0] sm:$0xff]
    %v1899 = vld [vmem:[#allocation7 + $0xe8] sm:$0xff]
    %v1900 = vld [vmem:[#allocation7 + $0xf0] sm:$0xff]
    %v1901 = vld [vmem:[#allocation7 + $0xf8] sm:$0xff]
    %v1902 = vld [vmem:[#allocation7 + $0x100] sm:$0xff]
    %v1903 = vld [vmem:[#allocation7 + $0x108] sm:$0xff]
    %v1904 = vld [vmem:[#allocation7 + $0x110] sm:$0xff]
    %v1905 = vld [vmem:[#allocation7 + $0x118] sm:$0xff]
    %v1906 = vld [vmem:[#allocation7 + $0x120] sm:$0xff]
    %v1907 = vld [vmem:[#allocation7 + $0x128] sm:$0xff]
    %v1908 = vld [vmem:[#allocation7 + $0x130] sm:$0xff]
    %v1909 = vld [vmem:[#allocation7 + $0x138] sm:$0xff]
    %v1910 = vld [vmem:[#allocation7 + $0x140] sm:$0xff]
    %v1911 = vld [vmem:[#allocation7 + $0x148] sm:$0xff]
    %v1912 = vld [vmem:[#allocation7 + $0x150] sm:$0xff]
    %v1913 = vld [vmem:[#allocation7 + $0x158] sm:$0xff]
    %v1914 = vld [vmem:[#allocation7 + $0x160] sm:$0xff]
    %v1915 = vld [vmem:[#allocation7 + $0x168] sm:$0xff]
    %v1916 = vld [vmem:[#allocation7 + $0x170] sm:$0xff]
    %v1917 = vld [vmem:[#allocation7 + $0x178] sm:$0xff]
    %v1918 = vld [vmem:[#allocation7 + $0x180] sm:$0xff]
    %v1919 = vld [vmem:[#allocation7 + $0x188] sm:$0xff]
    %v1920 = vld [vmem:[#allocation7 + $0x190] sm:$0xff]
    %v1921 = vld [vmem:[#allocation7 + $0x198] sm:$0xff]
    %v1922 = vld [vmem:[#allocation7 + $0x1a0] sm:$0xff]
    %v1923 = vld [vmem:[#allocation7 + $0x1a8] sm:$0xff]
    %v1924 = vld [vmem:[#allocation7 + $0x1b0] sm:$0xff]
    %v1925 = vld [vmem:[#allocation7 + $0x1b8] sm:$0xff]
    %v1926 = vld [vmem:[#allocation7 + $0x1c0] sm:$0xff]
    %v1927 = vld [vmem:[#allocation7 + $0x1c8] sm:$0xff]
    %v1928 = vld [vmem:[#allocation7 + $0x1d0] sm:$0xff]
    %v1929 = vld [vmem:[#allocation7 + $0x1d8] sm:$0xff]
    %v1930 = vld [vmem:[#allocation7 + $0x1e0] sm:$0xff]
    %v1931 = vld [vmem:[#allocation7 + $0x1e8] sm:$0xff]
    %v1932 = vld [vmem:[#allocation7 + $0x1f0] sm:$0xff]
    %v1933 = vld [vmem:[#allocation7 + $0x1f8] sm:$0xff]
    %v1934 = vld [vmem:[#allocation7 + $0x200] sm:$0xff]
    %v1935 = vld [vmem:[#allocation7 + $0x208] sm:$0xff]
    %v1936 = vld [vmem:[#allocation7 + $0x210] sm:$0xff]
    %v1937 = vld [vmem:[#allocation7 + $0x218] sm:$0xff]
    %v1938 = vld [vmem:[#allocation7 + $0x220] sm:$0xff]
    %v1939 = vld [vmem:[#allocation7 + $0x228] sm:$0xff]
    %v1940 = vld [vmem:[#allocation7 + $0x230] sm:$0xff]
    %v1941 = vld [vmem:[#allocation7 + $0x238] sm:$0xff]
    %v1942 = vld [vmem:[#allocation7 + $0x240] sm:$0xff]
    %v1943 = vld [vmem:[#allocation7 + $0x248] sm:$0xff]
    %v1944 = vld [vmem:[#allocation7 + $0x250] sm:$0xff]
    %v1945 = vld [vmem:[#allocation7 + $0x258] sm:$0xff]
    %v1946 = vld [vmem:[#allocation7 + $0x260] sm:$0xff]
    %v1947 = vld [vmem:[#allocation7 + $0x268] sm:$0xff]
    %v1948 = vld [vmem:[#allocation7 + $0x270] sm:$0xff]
    %v1949 = vld [vmem:[#allocation7 + $0x278] sm:$0xff]
    %v1950 = vld [vmem:[#allocation7 + $0x280] sm:$0xff]
    %v1951 = vld [vmem:[#allocation7 + $0x288] sm:$0xff]
    %v1952 = vld [vmem:[#allocation7 + $0x290] sm:$0xff]
    %v1953 = vld [vmem:[#allocation7 + $0x298] sm:$0xff]
    %v1954 = vld [vmem:[#allocation7 + $0x2a0] sm:$0xff]
    %v1955 = vld [vmem:[#allocation7 + $0x2a8] sm:$0xff]
    %v1956 = vld [vmem:[#allocation7 + $0x2b0] sm:$0xff]
    %v1957 = vld [vmem:[#allocation7 + $0x2b8] sm:$0xff]
    %v1958 = vld [vmem:[#allocation7 + $0x2c0] sm:$0xff]
    %v1959 = vld [vmem:[#allocation7 + $0x2c8] sm:$0xff]
    %v1960 = vld [vmem:[#allocation7 + $0x2d0] sm:$0xff]
    %v1961 = vld [vmem:[#allocation7 + $0x2d8] sm:$0xff]
    %v1962 = vld [vmem:[#allocation7 + $0x2e0] sm:$0xff]
    %v1963 = vld [vmem:[#allocation7 + $0x2e8] sm:$0xff]
    %v1964 = vld [vmem:[#allocation7 + $0x2f0] sm:$0xff]
    %v1965 = vld [vmem:[#allocation7 + $0x2f8] sm:$0xff]
    %v1966 = vld [vmem:[#allocation7 + $0x300] sm:$0xff]
    %v1967 = vld [vmem:[#allocation7 + $0x308] sm:$0xff]
    %v1968 = vld [vmem:[#allocation7 + $0x310] sm:$0xff]
    %v1969 = vld [vmem:[#allocation7 + $0x318] sm:$0xff]
    %v1970 = vld [vmem:[#allocation7 + $0x320] sm:$0xff]
    %v1971 = vld [vmem:[#allocation7 + $0x328] sm:$0xff]
    %v1972 = vld [vmem:[#allocation7 + $0x330] sm:$0xff]
    %v1973 = vld [vmem:[#allocation7 + $0x338] sm:$0xff]
    %v1974 = vld [vmem:[#allocation7 + $0x340] sm:$0xff]
    %v1975 = vld [vmem:[#allocation7 + $0x348] sm:$0xff]
    %v1976 = vld [vmem:[#allocation7 + $0x350] sm:$0xff]
    %v1977 = vld [vmem:[#allocation7 + $0x358] sm:$0xff]
    %v1978 = vld [vmem:[#allocation7 + $0x360] sm:$0xff]
    %v1979 = vld [vmem:[#allocation7 + $0x368] sm:$0xff]
    %v1980 = vld [vmem:[#allocation7 + $0x370] sm:$0xff]
    %v1981 = vld [vmem:[#allocation7 + $0x378] sm:$0xff]
    %v1982 = vld [vmem:[#allocation7 + $0x380] sm:$0xff]
    %v1983 = vld [vmem:[#allocation7 + $0x388] sm:$0xff]
    %v1984 = vld [vmem:[#allocation7 + $0x390] sm:$0xff]
    %v1985 = vld [vmem:[#allocation7 + $0x398] sm:$0xff]
    %v1986 = vld [vmem:[#allocation7 + $0x3a0] sm:$0xff]
    %v1987 = vld [vmem:[#allocation7 + $0x3a8] sm:$0xff]
    %v1988 = vld [vmem:[#allocation7 + $0x3b0] sm:$0xff]
    %v1989 = vld [vmem:[#allocation7 + $0x3b8] sm:$0xff]
    %v1990 = vld [vmem:[#allocation7 + $0x3c0] sm:$0xff]
    %v1991 = vld [vmem:[#allocation7 + $0x3c8] sm:$0xff]
    %v1992 = vld [vmem:[#allocation7 + $0x3d0] sm:$0xff]
    %v1993 = vld [vmem:[#allocation7 + $0x3d8] sm:$0xff]
    %v1994 = vld [vmem:[#allocation7 + $0x3e0] sm:$0xff]
    %v1995 = vld [vmem:[#allocation7 + $0x3e8] sm:$0xff]
    %v1996 = vld [vmem:[#allocation7 + $0x3f0] sm:$0xff]
    %v1997 = vld [vmem:[#allocation7 + $0x3f8] sm:$0xff]
    %v1998 = vld [vmem:[#allocation7 + $0x400] sm:$0xff]
    %v1999 = vld [vmem:[#allocation7 + $0x408] sm:$0xff]
    %v2000 = vld [vmem:[#allocation7 + $0x410] sm:$0xff]
    %v2001 = vld [vmem:[#allocation7 + $0x418] sm:$0xff]
    %v2002 = vld [vmem:[#allocation7 + $0x420] sm:$0xff]
    %v2003 = vld [vmem:[#allocation7 + $0x428] sm:$0xff]
    %v2004 = vld [vmem:[#allocation7 + $0x430] sm:$0xff]
    %v2005 = vld [vmem:[#allocation7 + $0x438] sm:$0xff]
    %v2006 = vld [vmem:[#allocation7 + $0x440] sm:$0xff]
    %v2007 = vld [vmem:[#allocation7 + $0x448] sm:$0xff]
    %v2008 = vld [vmem:[#allocation7 + $0x450] sm:$0xff]
    %v2009 = vld [vmem:[#allocation7 + $0x458] sm:$0xff]
    %v2010 = vld [vmem:[#allocation7 + $0x460] sm:$0xff]
    %v2011 = vld [vmem:[#allocation7 + $0x468] sm:$0xff]
    %v2012 = vld [vmem:[#allocation7 + $0x470] sm:$0xff]
    %v2013 = vld [vmem:[#allocation7 + $0x478] sm:$0xff]
    %v2014 = vld [vmem:[#allocation7 + $0x480] sm:$0xff]
    %v2015 = vld [vmem:[#allocation7 + $0x488] sm:$0xff]
    %v2016 = vld [vmem:[#allocation7 + $0x490] sm:$0xff]
    %v2017 = vld [vmem:[#allocation7 + $0x498] sm:$0xff]
    %v2018 = vld [vmem:[#allocation7 + $0x4a0] sm:$0xff]
    %v2019 = vld [vmem:[#allocation7 + $0x4a8] sm:$0xff]
    %v2020 = vld [vmem:[#allocation7 + $0x4b0] sm:$0xff]
    %v2021 = vld [vmem:[#allocation7 + $0x4b8] sm:$0xff]
    %v2022 = vld [vmem:[#allocation7 + $0x4c0] sm:$0xff]
    %v2023 = vld [vmem:[#allocation7 + $0x4c8] sm:$0xff]
    %v2024 = vld [vmem:[#allocation7 + $0x4d0] sm:$0xff]
    %v2025 = vld [vmem:[#allocation7 + $0x4d8] sm:$0xff]
    %v2026 = vld [vmem:[#allocation7 + $0x4e0] sm:$0xff]
    %v2027 = vld [vmem:[#allocation7 + $0x4e8] sm:$0xff]
    %v2028 = vld [vmem:[#allocation7 + $0x4f0] sm:$0xff]
    %v2029 = vld [vmem:[#allocation7 + $0x4f8] sm:$0xff]
    %v2030 = vld [vmem:[#allocation7 + $0x500] sm:$0xff]
    %v2031 = vld [vmem:[#allocation7 + $0x508] sm:$0xff]
    %v2032 = vld [vmem:[#allocation7 + $0x510] sm:$0xff]
    %v2033 = vld [vmem:[#allocation7 + $0x518] sm:$0xff]
    %v2034 = vld [vmem:[#allocation7 + $0x520] sm:$0xff]
    %v2035 = vld [vmem:[#allocation7 + $0x528] sm:$0xff]
    %v2036 = vld [vmem:[#allocation7 + $0x530] sm:$0xff]
    %v2037 = vld [vmem:[#allocation7 + $0x538] sm:$0xff]
    %v2038 = vld [vmem:[#allocation7 + $0x540] sm:$0xff]
    %v2039 = vld [vmem:[#allocation7 + $0x548] sm:$0xff]
    %v2040 = vld [vmem:[#allocation7 + $0x550] sm:$0xff]
    %v2041 = vld [vmem:[#allocation7 + $0x558] sm:$0xff]
    %v2042 = vld [vmem:[#allocation7 + $0x560] sm:$0xff]
    %v2043 = vld [vmem:[#allocation7 + $0x568] sm:$0xff]
    %v2044 = vld [vmem:[#allocation7 + $0x570] sm:$0xff]
    %v2045 = vld [vmem:[#allocation7 + $0x578] sm:$0xff]
    %v2046 = vld [vmem:[#allocation7 + $0x580] sm:$0xff]
    %v2047 = vld [vmem:[#allocation7 + $0x588] sm:$0xff]
    %v2048 = vld [vmem:[#allocation7 + $0x590] sm:$0xff]
    %v2049 = vld [vmem:[#allocation7 + $0x598] sm:$0xff]
    %v2050 = vld [vmem:[#allocation7 + $0x5a0] sm:$0xff]
    %v2051 = vld [vmem:[#allocation7 + $0x5a8] sm:$0xff]
    %v2052 = vld [vmem:[#allocation7 + $0x5b0] sm:$0xff]
    %v2053 = vld [vmem:[#allocation7 + $0x5b8] sm:$0xff]
    %v2054 = vld [vmem:[#allocation7 + $0x5c0] sm:$0xff]
    %v2055 = vld [vmem:[#allocation7 + $0x5c8] sm:$0xff]
    %v2056 = vld [vmem:[#allocation7 + $0x5d0] sm:$0xff]
    %v2057 = vld [vmem:[#allocation7 + $0x5d8] sm:$0xff]
    %v2058 = vld [vmem:[#allocation7 + $0x5e0] sm:$0xff]
    %v2059 = vld [vmem:[#allocation7 + $0x5e8] sm:$0xff]
    %v2060 = vld [vmem:[#allocation7 + $0x5f0] sm:$0xff]
    %v2061 = vld [vmem:[#allocation7 + $0x5f8] sm:$0xff]
    %v2062 = vld [vmem:[#allocation10] sm:$0xff]
    %v2063 = vld [vmem:[#allocation10 + $0x8] sm:$0xff]
    %v2064 = vld [vmem:[#allocation10 + $0x10] sm:$0xff]
    %v2065 = vld [vmem:[#allocation10 + $0x18] sm:$0xff]
    %v2066 = vld [vmem:[#allocation10 + $0x20] sm:$0xff]
    %v2067 = vld [vmem:[#allocation10 + $0x28] sm:$0xff]
    %v2068 = vld [vmem:[#allocation10 + $0x30] sm:$0xff]
    %v2069 = vld [vmem:[#allocation10 + $0x38] sm:$0xff]
    %v2070 = vld [vmem:[#allocation10 + $0x40] sm:$0xff]
    %v2071 = vld [vmem:[#allocation10 + $0x48] sm:$0xff]
    %v2072 = vld [vmem:[#allocation10 + $0x50] sm:$0xff]
    %v2073 = vld [vmem:[#allocation10 + $0x58] sm:$0xff]
    %v2074 = vld [vmem:[#allocation10 + $0x60] sm:$0xff]
    %v2075 = vld [vmem:[#allocation10 + $0x68] sm:$0xff]
    %v2076 = vld [vmem:[#allocation10 + $0x70] sm:$0xff]
    %v2077 = vld [vmem:[#allocation10 + $0x78] sm:$0xff]
    %v2078 = vld [vmem:[#allocation10 + $0x80] sm:$0xff]
    %v2079 = vld [vmem:[#allocation10 + $0x88] sm:$0xff]
    %v2080 = vld [vmem:[#allocation10 + $0x90] sm:$0xff]
    %v2081 = vld [vmem:[#allocation10 + $0x98] sm:$0xff]
    %v2082 = vld [vmem:[#allocation10 + $0xa0] sm:$0xff]
    %v2083 = vld [vmem:[#allocation10 + $0xa8] sm:$0xff]
    %v2084 = vld [vmem:[#allocation10 + $0xb0] sm:$0xff]
    %v2085 = vld [vmem:[#allocation10 + $0xb8] sm:$0xff]
    %v2086 = vld [vmem:[#allocation10 + $0xc0] sm:$0xff]
    %v2087 = vld [vmem:[#allocation10 + $0xc8] sm:$0xff]
    %v2088 = vld [vmem:[#allocation10 + $0xd0] sm:$0xff]
    %v2089 = vld [vmem:[#allocation10 + $0xd8] sm:$0xff]
    %v2090 = vld [vmem:[#allocation10 + $0xe0] sm:$0xff]
    %v2091 = vld [vmem:[#allocation10 + $0xe8] sm:$0xff]
    %v2092 = vld [vmem:[#allocation10 + $0xf0] sm:$0xff]
    %v2093 = vld [vmem:[#allocation10 + $0xf8] sm:$0xff]
    %v2094 = vld [vmem:[#allocation10 + $0x100] sm:$0xff]
    %v2095 = vld [vmem:[#allocation10 + $0x108] sm:$0xff]
    %v2096 = vld [vmem:[#allocation10 + $0x110] sm:$0xff]
    %v2097 = vld [vmem:[#allocation10 + $0x118] sm:$0xff]
    %v2098 = vld [vmem:[#allocation10 + $0x120] sm:$0xff]
    %v2099 = vld [vmem:[#allocation10 + $0x128] sm:$0xff]
    %v2100 = vld [vmem:[#allocation10 + $0x130] sm:$0xff]
    %v2101 = vld [vmem:[#allocation10 + $0x138] sm:$0xff]
    %v2102 = vld [vmem:[#allocation10 + $0x140] sm:$0xff]
    %v2103 = vld [vmem:[#allocation10 + $0x148] sm:$0xff]
    %v2104 = vld [vmem:[#allocation10 + $0x150] sm:$0xff]
    %v2105 = vld [vmem:[#allocation10 + $0x158] sm:$0xff]
    %v2106 = vld [vmem:[#allocation10 + $0x160] sm:$0xff]
    %v2107 = vld [vmem:[#allocation10 + $0x168] sm:$0xff]
    %v2108 = vld [vmem:[#allocation10 + $0x170] sm:$0xff]
    %v2109 = vld [vmem:[#allocation10 + $0x178] sm:$0xff]
    %v2110 = vld [vmem:[#allocation10 + $0x180] sm:$0xff]
    %v2111 = vld [vmem:[#allocation10 + $0x188] sm:$0xff]
    %v2112 = vld [vmem:[#allocation10 + $0x190] sm:$0xff]
    %v2113 = vld [vmem:[#allocation10 + $0x198] sm:$0xff]
    %v2114 = vld [vmem:[#allocation10 + $0x1a0] sm:$0xff]
    %v2115 = vld [vmem:[#allocation10 + $0x1a8] sm:$0xff]
    %v2116 = vld [vmem:[#allocation10 + $0x1b0] sm:$0xff]
    %v2117 = vld [vmem:[#allocation10 + $0x1b8] sm:$0xff]
    %v2118 = vld [vmem:[#allocation10 + $0x1c0] sm:$0xff]
    %v2119 = vld [vmem:[#allocation10 + $0x1c8] sm:$0xff]
    %v2120 = vld [vmem:[#allocation10 + $0x1d0] sm:$0xff]
    %v2121 = vld [vmem:[#allocation10 + $0x1d8] sm:$0xff]
    %v2122 = vld [vmem:[#allocation10 + $0x1e0] sm:$0xff]
    %v2123 = vld [vmem:[#allocation10 + $0x1e8] sm:$0xff]
    %v2124 = vld [vmem:[#allocation10 + $0x1f0] sm:$0xff]
    %v2125 = vld [vmem:[#allocation10 + $0x1f8] sm:$0xff]
    %v2126 = vld [vmem:[#allocation10 + $0x200] sm:$0xff]
    %v2127 = vld [vmem:[#allocation10 + $0x208] sm:$0xff]
    %v2128 = vld [vmem:[#allocation10 + $0x210] sm:$0xff]
    %v2129 = vld [vmem:[#allocation10 + $0x218] sm:$0xff]
    %v2130 = vld [vmem:[#allocation10 + $0x220] sm:$0xff]
    %v2131 = vld [vmem:[#allocation10 + $0x228] sm:$0xff]
    %v2132 = vld [vmem:[#allocation10 + $0x230] sm:$0xff]
    %v2133 = vld [vmem:[#allocation10 + $0x238] sm:$0xff]
    %v2134 = vld [vmem:[#allocation10 + $0x240] sm:$0xff]
    %v2135 = vld [vmem:[#allocation10 + $0x248] sm:$0xff]
    %v2136 = vld [vmem:[#allocation10 + $0x250] sm:$0xff]
    %v2137 = vld [vmem:[#allocation10 + $0x258] sm:$0xff]
    %v2138 = vld [vmem:[#allocation10 + $0x260] sm:$0xff]
    %v2139 = vld [vmem:[#allocation10 + $0x268] sm:$0xff]
    %v2140 = vld [vmem:[#allocation10 + $0x270] sm:$0xff]
    %v2141 = vld [vmem:[#allocation10 + $0x278] sm:$0xff]
    %v2142 = vld [vmem:[#allocation10 + $0x280] sm:$0xff]
    %v2143 = vld [vmem:[#allocation10 + $0x288] sm:$0xff]
    %v2144 = vld [vmem:[#allocation10 + $0x290] sm:$0xff]
    %v2145 = vld [vmem:[#allocation10 + $0x298] sm:$0xff]
    %v2146 = vld [vmem:[#allocation10 + $0x2a0] sm:$0xff]
    %v2147 = vld [vmem:[#allocation10 + $0x2a8] sm:$0xff]
    %v2148 = vld [vmem:[#allocation10 + $0x2b0] sm:$0xff]
    %v2149 = vld [vmem:[#allocation10 + $0x2b8] sm:$0xff]
    %v2150 = vld [vmem:[#allocation10 + $0x2c0] sm:$0xff]
    %v2151 = vld [vmem:[#allocation10 + $0x2c8] sm:$0xff]
    %v2152 = vld [vmem:[#allocation10 + $0x2d0] sm:$0xff]
    %v2153 = vld [vmem:[#allocation10 + $0x2d8] sm:$0xff]
    %v2154 = vld [vmem:[#allocation10 + $0x2e0] sm:$0xff]
    %v2155 = vld [vmem:[#allocation10 + $0x2e8] sm:$0xff]
    %v2156 = vld [vmem:[#allocation10 + $0x2f0] sm:$0xff]
    %v2157 = vld [vmem:[#allocation10 + $0x2f8] sm:$0xff]
    %v2158 = vld [vmem:[#allocation10 + $0x300] sm:$0xff]
    %v2159 = vld [vmem:[#allocation10 + $0x308] sm:$0xff]
    %v2160 = vld [vmem:[#allocation10 + $0x310] sm:$0xff]
    %v2161 = vld [vmem:[#allocation10 + $0x318] sm:$0xff]
    %v2162 = vld [vmem:[#allocation10 + $0x320] sm:$0xff]
    %v2163 = vld [vmem:[#allocation10 + $0x328] sm:$0xff]
    %v2164 = vld [vmem:[#allocation10 + $0x330] sm:$0xff]
    %v2165 = vld [vmem:[#allocation10 + $0x338] sm:$0xff]
    %v2166 = vld [vmem:[#allocation10 + $0x340] sm:$0xff]
    %v2167 = vld [vmem:[#allocation10 + $0x348] sm:$0xff]
    %v2168 = vld [vmem:[#allocation10 + $0x350] sm:$0xff]
    %v2169 = vld [vmem:[#allocation10 + $0x358] sm:$0xff]
    %v2170 = vld [vmem:[#allocation10 + $0x360] sm:$0xff]
    %v2171 = vld [vmem:[#allocation10 + $0x368] sm:$0xff]
    %v2172 = vld [vmem:[#allocation10 + $0x370] sm:$0xff]
    %v2173 = vld [vmem:[#allocation10 + $0x378] sm:$0xff]
    %v2174 = vld [vmem:[#allocation10 + $0x380] sm:$0xff]
    %v2175 = vld [vmem:[#allocation10 + $0x388] sm:$0xff]
    %v2176 = vld [vmem:[#allocation10 + $0x390] sm:$0xff]
    %v2177 = vld [vmem:[#allocation10 + $0x398] sm:$0xff]
    %v2178 = vld [vmem:[#allocation10 + $0x3a0] sm:$0xff]
    %v2179 = vld [vmem:[#allocation10 + $0x3a8] sm:$0xff]
    %v2180 = vld [vmem:[#allocation10 + $0x3b0] sm:$0xff]
    %v2181 = vld [vmem:[#allocation10 + $0x3b8] sm:$0xff]
    %v2182 = vld [vmem:[#allocation10 + $0x3c0] sm:$0xff]
    %v2183 = vld [vmem:[#allocation10 + $0x3c8] sm:$0xff]
    %v2184 = vld [vmem:[#allocation10 + $0x3d0] sm:$0xff]
    %v2185 = vld [vmem:[#allocation10 + $0x3d8] sm:$0xff]
    %v2186 = vld [vmem:[#allocation10 + $0x3e0] sm:$0xff]
    %v2187 = vld [vmem:[#allocation10 + $0x3e8] sm:$0xff]
    %v2188 = vld [vmem:[#allocation10 + $0x3f0] sm:$0xff]
    %v2189 = vld [vmem:[#allocation10 + $0x3f8] sm:$0xff]
    %v2190 = vld [vmem:[#allocation10 + $0x400] sm:$0xff]
    %v2191 = vld [vmem:[#allocation10 + $0x408] sm:$0xff]
    %v2192 = vld [vmem:[#allocation10 + $0x410] sm:$0xff]
    %v2193 = vld [vmem:[#allocation10 + $0x418] sm:$0xff]
    %v2194 = vld [vmem:[#allocation10 + $0x420] sm:$0xff]
    %v2195 = vld [vmem:[#allocation10 + $0x428] sm:$0xff]
    %v2196 = vld [vmem:[#allocation10 + $0x430] sm:$0xff]
    %v2197 = vld [vmem:[#allocation10 + $0x438] sm:$0xff]
    %v2198 = vld [vmem:[#allocation10 + $0x440] sm:$0xff]
    %v2199 = vld [vmem:[#allocation10 + $0x448] sm:$0xff]
    %v2200 = vld [vmem:[#allocation10 + $0x450] sm:$0xff]
    %v2201 = vld [vmem:[#allocation10 + $0x458] sm:$0xff]
    %v2202 = vld [vmem:[#allocation10 + $0x460] sm:$0xff]
    %v2203 = vld [vmem:[#allocation10 + $0x468] sm:$0xff]
    %v2204 = vld [vmem:[#allocation10 + $0x470] sm:$0xff]
    %v2205 = vld [vmem:[#allocation10 + $0x478] sm:$0xff]
    %v2206 = vld [vmem:[#allocation10 + $0x480] sm:$0xff]
    %v2207 = vld [vmem:[#allocation10 + $0x488] sm:$0xff]
    %v2208 = vld [vmem:[#allocation10 + $0x490] sm:$0xff]
    %v2209 = vld [vmem:[#allocation10 + $0x498] sm:$0xff]
    %v2210 = vld [vmem:[#allocation10 + $0x4a0] sm:$0xff]
    %v2211 = vld [vmem:[#allocation10 + $0x4a8] sm:$0xff]
    %v2212 = vld [vmem:[#allocation10 + $0x4b0] sm:$0xff]
    %v2213 = vld [vmem:[#allocation10 + $0x4b8] sm:$0xff]
    %v2214 = vld [vmem:[#allocation10 + $0x4c0] sm:$0xff]
    %v2215 = vld [vmem:[#allocation10 + $0x4c8] sm:$0xff]
    %v2216 = vld [vmem:[#allocation10 + $0x4d0] sm:$0xff]
    %v2217 = vld [vmem:[#allocation10 + $0x4d8] sm:$0xff]
    %v2218 = vld [vmem:[#allocation10 + $0x4e0] sm:$0xff]
    %v2219 = vld [vmem:[#allocation10 + $0x4e8] sm:$0xff]
    %v2220 = vld [vmem:[#allocation10 + $0x4f0] sm:$0xff]
    %v2221 = vld [vmem:[#allocation10 + $0x4f8] sm:$0xff]
    %v2222 = vld [vmem:[#allocation10 + $0x500] sm:$0xff]
    %v2223 = vld [vmem:[#allocation10 + $0x508] sm:$0xff]
    %v2224 = vld [vmem:[#allocation10 + $0x510] sm:$0xff]
    %v2225 = vld [vmem:[#allocation10 + $0x518] sm:$0xff]
    %v2226 = vld [vmem:[#allocation10 + $0x520] sm:$0xff]
    %v2227 = vld [vmem:[#allocation10 + $0x528] sm:$0xff]
    %v2228 = vld [vmem:[#allocation10 + $0x530] sm:$0xff]
    %v2229 = vld [vmem:[#allocation10 + $0x538] sm:$0xff]
    %v2230 = vld [vmem:[#allocation10 + $0x540] sm:$0xff]
    %v2231 = vld [vmem:[#allocation10 + $0x548] sm:$0xff]
    %v2232 = vld [vmem:[#allocation10 + $0x550] sm:$0xff]
    %v2233 = vld [vmem:[#allocation10 + $0x558] sm:$0xff]
    %v2234 = vld [vmem:[#allocation10 + $0x560] sm:$0xff]
    %v2235 = vld [vmem:[#allocation10 + $0x568] sm:$0xff]
    %v2236 = vld [vmem:[#allocation10 + $0x570] sm:$0xff]
    %v2237 = vld [vmem:[#allocation10 + $0x578] sm:$0xff]
    %v2238 = vld [vmem:[#allocation10 + $0x580] sm:$0xff]
    %v2239 = vld [vmem:[#allocation10 + $0x588] sm:$0xff]
    %v2240 = vld [vmem:[#allocation10 + $0x590] sm:$0xff]
    %v2241 = vld [vmem:[#allocation10 + $0x598] sm:$0xff]
    %v2242 = vld [vmem:[#allocation10 + $0x5a0] sm:$0xff]
    %v2243 = vld [vmem:[#allocation10 + $0x5a8] sm:$0xff]
    %v2244 = vld [vmem:[#allocation10 + $0x5b0] sm:$0xff]
    %v2245 = vld [vmem:[#allocation10 + $0x5b8] sm:$0xff]
    %v2246 = vld [vmem:[#allocation10 + $0x5c0] sm:$0xff]
    %v2247 = vld [vmem:[#allocation10 + $0x5c8] sm:$0xff]
    %v2248 = vld [vmem:[#allocation10 + $0x5d0] sm:$0xff]
    %v2249 = vld [vmem:[#allocation10 + $0x5d8] sm:$0xff]
    %v2250 = vld [vmem:[#allocation10 + $0x5e0] sm:$0xff]
    %v2251 = vld [vmem:[#allocation10 + $0x5e8] sm:$0xff]
    %v2252 = vld [vmem:[#allocation10 + $0x5f0] sm:$0xff]
    %v2253 = vld [vmem:[#allocation10 + $0x5f8] sm:$0xff]
    %v2254 = vld [vmem:[#allocation8] sm:$0x3f]
    %v2255 = vld [vmem:[#allocation11] sm:$0x3f]
    %v2256 = vld [vmem:[#allocation2] sm:$0xf]
    %v2257 = vld [vmem:[#allocation2 + $0x8] sm:$0xf]
    %v2258 = vld [vmem:[#allocation2 + $0x10] sm:$0xf]
    %v2259 = vld [vmem:[#allocation2 + $0x18] sm:$0xf]
    %v2260 = vld [vmem:[#allocation2 + $0x20] sm:$0xf]
    %v2261 = vld [vmem:[#allocation2 + $0x28] sm:$0xf]
    %v2262 = vld [vmem:[#allocation2 + $0x150] sm:$0xf0]
    %v2263 = vld [vmem:[#allocation2 + $0x158] sm:$0xf0]
    %v2264 = vld [vmem:[#allocation2 + $0x160] sm:$0xf0]
    %v2265 = vld [vmem:[#allocation2 + $0x168] sm:$0xf0]
    %v2266 = vld [vmem:[#allocation2 + $0x170] sm:$0xf0]
    %v2267 = vld [vmem:[#allocation2 + $0x178] sm:$0xf0]
    %v2269 = vlaneseq
    %v2270 = vshrl.u32 %v2269, 7
    %v2271 = vsub.s32 0, %v2270
    %v2272 = vrot.slane %v2254, %v2271
    %v2273 = vlaneseq
    %v2274 = vshrl.u32 %v2273, 7
    %v2275 = vsub.s32 1, %v2274
    %v2276 = vrot.slane %v2254, %v2275
    %v2277 = vlaneseq
    %v2278 = vshrl.u32 %v2277, 7
    %v2279 = vsub.s32 2, %v2278
    %v2280 = vrot.slane %v2254, %v2279
    %v2281 = vlaneseq
    %v2282 = vshrl.u32 %v2281, 7
    %v2283 = vsub.s32 3, %v2282
    %v2284 = vrot.slane %v2254, %v2283
    %v2285 = vlaneseq
    %v2286 = vshrl.u32 %v2285, 7
    %v2287 = vsub.s32 4, %v2286
    %v2288 = vrot.slane %v2254, %v2287
    %v2289 = vlaneseq
    %v2290 = vshrl.u32 %v2289, 7
    %v2291 = vsub.s32 5, %v2290
    %v2292 = vrot.slane %v2254, %v2291
    %2299 = vmatprep.subr.mxu0 %v1871
    %2300 = vmatpush1.msra.mxu0 %v1870
    %2301 = vmatprep.subr.mxu0 %v1877
    %2302 = vmatpush1.msra.mxu0 %v1876
    %2303 = vmatprep.subr.mxu0 %v1883
    %2304 = vmatpush1.msra.mxu0 %v1882
    %2305 = vmatprep.subr.mxu0 %v1889
    %2306 = vmatpush1.msra.mxu0 %v1888
    %2307 = vmatprep.subr.mxu0 %v1895
    %2308 = vmatpush1.msra.mxu0 %v1894
    %2309 = vmatprep.subr.mxu0 %v1901
    %2310 = vmatpush1.msra.mxu0 %v1900
    %2311 = vmatprep.subr.mxu0 %v1907
    %2312 = vmatpush1.msra.mxu0 %v1906
    %2313 = vmatprep.subr.mxu0 %v1913
    %2314 = vmatpush1.msra.mxu0 %v1912
    %2315 = vmatprep.subr.mxu0 %v1919
    %2316 = vmatpush1.msra.mxu0 %v1918
    %2317 = vmatprep.subr.mxu0 %v1925
    %2318 = vmatpush1.msra.mxu0 %v1924
    %2319 = vmatprep.subr.mxu0 %v1931
    %2320 = vmatpush1.msra.mxu0 %v1930
    %2321 = vmatprep.subr.mxu0 %v1937
    %2322 = vmatpush1.msra.mxu0 %v1936
    %2323 = vmatprep.subr.mxu0 %v1943
    %2324 = vmatpush1.msra.mxu0 %v1942
    %2325 = vmatprep.subr.mxu0 %v1949
    %2326 = vmatpush1.msra.mxu0 %v1948
    %2327 = vmatprep.subr.mxu0 %v1955
    %2328 = vmatpush1.msra.mxu0 %v1954
    %2329 = vmatprep.subr.mxu0 %v1961
    %2330 = vmatpush1.msra.mxu0 %v1960
    %2331 = vmatprep.subr.mxu0 %v1967
    %2332 = vmatpush1.msra.mxu0 %v1966
    %2333 = vmatprep.subr.mxu0 %v1973
    %2334 = vmatpush1.msra.mxu0 %v1972
    %2335 = vmatprep.subr.mxu0 %v1979
    %2336 = vmatpush1.msra.mxu0 %v1978
    %2337 = vmatprep.subr.mxu0 %v1985
    %2338 = vmatpush1.msra.mxu0 %v1984
    %2339 = vmatprep.subr.mxu0 %v1991
    %2340 = vmatpush1.msra.mxu0 %v1990
    %2341 = vmatprep.subr.mxu0 %v1997
    %2342 = vmatpush1.msra.mxu0 %v1996
    %2343 = vmatprep.subr.mxu0 %v2003
    %2344 = vmatpush1.msra.mxu0 %v2002
    %2345 = vmatprep.subr.mxu0 %v2009
    %2346 = vmatpush1.msra.mxu0 %v2008
    %2347 = vmatprep.subr.mxu0 %v2015
    %2348 = vmatpush1.msra.mxu0 %v2014
    %2349 = vmatprep.subr.mxu0 %v2021
    %2350 = vmatpush1.msra.mxu0 %v2020
    %2351 = vmatprep.subr.mxu0 %v2027
    %2352 = vmatpush1.msra.mxu0 %v2026
    %2353 = vmatprep.subr.mxu0 %v2033
    %2354 = vmatpush1.msra.mxu0 %v2032
    %2355 = vmatprep.subr.mxu0 %v2039
    %2356 = vmatpush1.msra.mxu0 %v2038
    %2357 = vmatprep.subr.mxu0 %v2045
    %2358 = vmatpush1.msra.mxu0 %v2044
    %2359 = vmatprep.subr.mxu0 %v2051
    %2360 = vmatpush1.msra.mxu0 %v2050
    %2361 = vmatprep.subr.mxu0 %v2057
    %2362 = vmatpush1.msra.mxu0 %v2056
    %2363 = vmatprep.mubr.f32.mxu0 0.0
    %2364 = vmatmul.mubr.f32.gmra.mrb[0].mxu0 0.0
    %v2365 = vpop.f32.mrb[0].mxu0
    %v2366 = vadd.f32 %v2272, %v2365
    %v2367 = vpop.f32.mrb[0].mxu0
    %v2368 = vadd.f32 %v2276, %v2367
    %2369 = vdwg.mxu0
    %2370 = vmatprep.subr.mxu0 %v1873
    %2371 = vmatpush1.msra.mxu0 %v1872
    %2372 = vmatprep.subr.mxu0 %v1879
    %2373 = vmatpush1.msra.mxu0 %v1878
    %2374 = vmatprep.subr.mxu0 %v1885
    %2375 = vmatpush1.msra.mxu0 %v1884
    %2376 = vmatprep.subr.mxu0 %v1891
    %2377 = vmatpush1.msra.mxu0 %v1890
    %2378 = vmatprep.subr.mxu0 %v1897
    %2379 = vmatpush1.msra.mxu0 %v1896
    %2380 = vmatprep.subr.mxu0 %v1903
    %2381 = vmatpush1.msra.mxu0 %v1902
    %2382 = vmatprep.subr.mxu0 %v1909
    %2383 = vmatpush1.msra.mxu0 %v1908
    %2384 = vmatprep.subr.mxu0 %v1915
    %2385 = vmatpush1.msra.mxu0 %v1914
    %2386 = vmatprep.subr.mxu0 %v1921
    %2387 = vmatpush1.msra.mxu0 %v1920
    %2388 = vmatprep.subr.mxu0 %v1927
    %2389 = vmatpush1.msra.mxu0 %v1926
    %2390 = vmatprep.subr.mxu0 %v1933
    %2391 = vmatpush1.msra.mxu0 %v1932
    %2392 = vmatprep.subr.mxu0 %v1939
    %2393 = vmatpush1.msra.mxu0 %v1938
    %2394 = vmatprep.subr.mxu0 %v1945
    %2395 = vmatpush1.msra.mxu0 %v1944
    %2396 = vmatprep.subr.mxu0 %v1951
    %2397 = vmatpush1.msra.mxu0 %v1950
    %2398 = vmatprep.subr.mxu0 %v1957
    %2399 = vmatpush1.msra.mxu0 %v1956
    %2400 = vmatprep.subr.mxu0 %v1963
    %2401 = vmatpush1.msra.mxu0 %v1962
    %2402 = vmatprep.subr.mxu0 %v1969
    %2403 = vmatpush1.msra.mxu0 %v1968
    %2404 = vmatprep.subr.mxu0 %v1975
    %2405 = vmatpush1.msra.mxu0 %v1974
    %2406 = vmatprep.subr.mxu0 %v1981
    %2407 = vmatpush1.msra.mxu0 %v1980
    %2408 = vmatprep.subr.mxu0 %v1987
    %2409 = vmatpush1.msra.mxu0 %v1986
    %2410 = vmatprep.subr.mxu0 %v1993
    %2411 = vmatpush1.msra.mxu0 %v1992
    %2412 = vmatprep.subr.mxu0 %v1999
    %2413 = vmatpush1.msra.mxu0 %v1998
    %2414 = vmatprep.subr.mxu0 %v2005
    %2415 = vmatpush1.msra.mxu0 %v2004
    %2416 = vmatprep.subr.mxu0 %v2011
    %2417 = vmatpush1.msra.mxu0 %v2010
    %2418 = vmatprep.subr.mxu0 %v2017
    %2419 = vmatpush1.msra.mxu0 %v2016
    %2420 = vmatprep.subr.mxu0 %v2023
    %2421 = vmatpush1.msra.mxu0 %v2022
    %2422 = vmatprep.subr.mxu0 %v2029
    %2423 = vmatpush1.msra.mxu0 %v2028
    %2424 = vmatprep.subr.mxu0 %v2035
    %2425 = vmatpush1.msra.mxu0 %v2034
    %2426 = vmatprep.subr.mxu0 %v2041
    %2427 = vmatpush1.msra.mxu0 %v2040
    %2428 = vmatprep.subr.mxu0 %v2047
    %2429 = vmatpush1.msra.mxu0 %v2046
    %2430 = vmatprep.subr.mxu0 %v2053
    %2431 = vmatpush1.msra.mxu0 %v2052
    %2432 = vmatprep.subr.mxu0 %v2059
    %2433 = vmatpush1.msra.mxu0 %v2058
    %2434 = vmatprep.mubr.f32.mxu0 0.0
    %2435 = vmatmul.mubr.f32.gmra.mrb[0].mxu0 0.0
    %v2436 = vpop.f32.mrb[0].mxu0
    %v2437 = vadd.f32 %v2280, %v2436
    %v2438 = vpop.f32.mrb[0].mxu0
    %v2439 = vadd.f32 %v2284, %v2438
    %2440 = vdwg.mxu0
    %2441 = vmatprep.subr.mxu0 %v1875
    %2442 = vmatpush1.msra.mxu0 %v1874
    %2443 = vmatprep.subr.mxu0 %v1881
    %2444 = vmatpush1.msra.mxu0 %v1880
    %2445 = vmatprep.subr.mxu0 %v1887
    %2446 = vmatpush1.msra.mxu0 %v1886
    %2447 = vmatprep.subr.mxu0 %v1893
    %2448 = vmatpush1.msra.mxu0 %v1892
    %2449 = vmatprep.subr.mxu0 %v1899
    %2450 = vmatpush1.msra.mxu0 %v1898
    %2451 = vmatprep.subr.mxu0 %v1905
    %2452 = vmatpush1.msra.mxu0 %v1904
    %2453 = vmatprep.subr.mxu0 %v1911
    %2454 = vmatpush1.msra.mxu0 %v1910
    %2455 = vmatprep.subr.mxu0 %v1917
    %2456 = vmatpush1.msra.mxu0 %v1916
    %2457 = vmatprep.subr.mxu0 %v1923
    %2458 = vmatpush1.msra.mxu0 %v1922
    %2459 = vmatprep.subr.mxu0 %v1929
    %2460 = vmatpush1.msra.mxu0 %v1928
    %2461 = vmatprep.subr.mxu0 %v1935
    %2462 = vmatpush1.msra.mxu0 %v1934
    %2463 = vmatprep.subr.mxu0 %v1941
    %2464 = vmatpush1.msra.mxu0 %v1940
    %2465 = vmatprep.subr.mxu0 %v1947
    %2466 = vmatpush1.msra.mxu0 %v1946
    %2467 = vmatprep.subr.mxu0 %v1953
    %2468 = vmatpush1.msra.mxu0 %v1952
    %2469 = vmatprep.subr.mxu0 %v1959
    %2470 = vmatpush1.msra.mxu0 %v1958
    %2471 = vmatprep.subr.mxu0 %v1965
    %2472 = vmatpush1.msra.mxu0 %v1964
    %2473 = vmatprep.subr.mxu0 %v1971
    %2474 = vmatpush1.msra.mxu0 %v1970
    %2475 = vmatprep.subr.mxu0 %v1977
    %2476 = vmatpush1.msra.mxu0 %v1976
    %2477 = vmatprep.subr.mxu0 %v1983
    %2478 = vmatpush1.msra.mxu0 %v1982
    %2479 = vmatprep.subr.mxu0 %v1989
    %2480 = vmatpush1.msra.mxu0 %v1988
    %2481 = vmatprep.subr.mxu0 %v1995
    %2482 = vmatpush1.msra.mxu0 %v1994
    %2483 = vmatprep.subr.mxu0 %v2001
    %2484 = vmatpush1.msra.mxu0 %v2000
    %2485 = vmatprep.subr.mxu0 %v2007
    %2486 = vmatpush1.msra.mxu0 %v2006
    %2487 = vmatprep.subr.mxu0 %v2013
    %2488 = vmatpush1.msra.mxu0 %v2012
    %2489 = vmatprep.subr.mxu0 %v2019
    %2490 = vmatpush1.msra.mxu0 %v2018
    %2491 = vmatprep.subr.mxu0 %v2025
    %2492 = vmatpush1.msra.mxu0 %v2024
    %2493 = vmatprep.subr.mxu0 %v2031
    %2494 = vmatpush1.msra.mxu0 %v2030
    %2495 = vmatprep.subr.mxu0 %v2037
    %2496 = vmatpush1.msra.mxu0 %v2036
    %2497 = vmatprep.subr.mxu0 %v2043
    %2498 = vmatpush1.msra.mxu0 %v2042
    %2499 = vmatprep.subr.mxu0 %v2049
    %2500 = vmatpush1.msra.mxu0 %v2048
    %2501 = vmatprep.subr.mxu0 %v2055
    %2502 = vmatpush1.msra.mxu0 %v2054
    %2503 = vmatprep.subr.mxu0 %v2061
    %2504 = vmatpush1.msra.mxu0 %v2060
    %2505 = vmatprep.mubr.f32.mxu0 0.0
    %2506 = vmatmul.mubr.f32.gmra.mrb[0].mxu0 0.0
    %v2507 = vpop.f32.mrb[0].mxu0
    %v2508 = vadd.f32 %v2288, %v2507
    %v2509 = vpop.f32.mrb[0].mxu0
    %v2510 = vadd.f32 %v2292, %v2509
    %2511 = vdwg.mxu0
    %v2513 = vlaneseq
    %v2514 = vshrl.u32 %v2513, 7
    %v2515 = vsub.s32 0, %v2514
    %v2516 = vrot.slane %v2255, %v2515
    %v2517 = vlaneseq
    %v2518 = vshrl.u32 %v2517, 7
    %v2519 = vsub.s32 1, %v2518
    %v2520 = vrot.slane %v2255, %v2519
    %v2521 = vlaneseq
    %v2522 = vshrl.u32 %v2521, 7
    %v2523 = vsub.s32 2, %v2522
    %v2524 = vrot.slane %v2255, %v2523
    %v2525 = vlaneseq
    %v2526 = vshrl.u32 %v2525, 7
    %v2527 = vsub.s32 3, %v2526
    %v2528 = vrot.slane %v2255, %v2527
    %v2529 = vlaneseq
    %v2530 = vshrl.u32 %v2529, 7
    %v2531 = vsub.s32 4, %v2530
    %v2532 = vrot.slane %v2255, %v2531
    %v2533 = vlaneseq
    %v2534 = vshrl.u32 %v2533, 7
    %v2535 = vsub.s32 5, %v2534
    %v2536 = vrot.slane %v2255, %v2535
    %2543 = vmatprep.subr.mxu0 %v2063
    %2544 = vmatpush1.msra.mxu0 %v2062
    %2545 = vmatprep.subr.mxu0 %v2069
    %2546 = vmatpush1.msra.mxu0 %v2068
    %2547 = vmatprep.subr.mxu0 %v2075
    %2548 = vmatpush1.msra.mxu0 %v2074
    %2549 = vmatprep.subr.mxu0 %v2081
    %2550 = vmatpush1.msra.mxu0 %v2080
    %2551 = vmatprep.subr.mxu0 %v2087
    %2552 = vmatpush1.msra.mxu0 %v2086
    %2553 = vmatprep.subr.mxu0 %v2093
    %2554 = vmatpush1.msra.mxu0 %v2092
    %2555 = vmatprep.subr.mxu0 %v2099
    %2556 = vmatpush1.msra.mxu0 %v2098
    %2557 = vmatprep.subr.mxu0 %v2105
    %2558 = vmatpush1.msra.mxu0 %v2104
    %2559 = vmatprep.subr.mxu0 %v2111
    %2560 = vmatpush1.msra.mxu0 %v2110
    %2561 = vmatprep.subr.mxu0 %v2117
    %2562 = vmatpush1.msra.mxu0 %v2116
    %2563 = vmatprep.subr.mxu0 %v2123
    %2564 = vmatpush1.msra.mxu0 %v2122
    %2565 = vmatprep.subr.mxu0 %v2129
    %2566 = vmatpush1.msra.mxu0 %v2128
    %2567 = vmatprep.subr.mxu0 %v2135
    %2568 = vmatpush1.msra.mxu0 %v2134
    %2569 = vmatprep.subr.mxu0 %v2141
    %2570 = vmatpush1.msra.mxu0 %v2140
    %2571 = vmatprep.subr.mxu0 %v2147
    %2572 = vmatpush1.msra.mxu0 %v2146
    %2573 = vmatprep.subr.mxu0 %v2153
    %2574 = vmatpush1.msra.mxu0 %v2152
    %2575 = vmatprep.subr.mxu0 %v2159
    %2576 = vmatpush1.msra.mxu0 %v2158
    %2577 = vmatprep.subr.mxu0 %v2165
    %2578 = vmatpush1.msra.mxu0 %v2164
    %2579 = vmatprep.subr.mxu0 %v2171
    %2580 = vmatpush1.msra.mxu0 %v2170
    %2581 = vmatprep.subr.mxu0 %v2177
    %2582 = vmatpush1.msra.mxu0 %v2176
    %2583 = vmatprep.subr.mxu0 %v2183
    %2584 = vmatpush1.msra.mxu0 %v2182
    %2585 = vmatprep.subr.mxu0 %v2189
    %2586 = vmatpush1.msra.mxu0 %v2188
    %2587 = vmatprep.subr.mxu0 %v2195
    %2588 = vmatpush1.msra.mxu0 %v2194
    %2589 = vmatprep.subr.mxu0 %v2201
    %2590 = vmatpush1.msra.mxu0 %v2200
    %2591 = vmatprep.subr.mxu0 %v2207
    %2592 = vmatpush1.msra.mxu0 %v2206
    %2593 = vmatprep.subr.mxu0 %v2213
    %2594 = vmatpush1.msra.mxu0 %v2212
    %2595 = vmatprep.subr.mxu0 %v2219
    %2596 = vmatpush1.msra.mxu0 %v2218
    %2597 = vmatprep.subr.mxu0 %v2225
    %2598 = vmatpush1.msra.mxu0 %v2224
    %2599 = vmatprep.subr.mxu0 %v2231
    %2600 = vmatpush1.msra.mxu0 %v2230
    %2601 = vmatprep.subr.mxu0 %v2237
    %2602 = vmatpush1.msra.mxu0 %v2236
    %2603 = vmatprep.subr.mxu0 %v2243
    %2604 = vmatpush1.msra.mxu0 %v2242
    %2605 = vmatprep.subr.mxu0 %v2249
    %2606 = vmatpush1.msra.mxu0 %v2248
    %2607 = vmatprep.mubr.f32.mxu0 0.0
    %2608 = vmatmul.mubr.f32.gmra.mrb[0].mxu0 0.0
    %v2609 = vpop.f32.mrb[0].mxu0
    %v2610 = vadd.f32 %v2516, %v2609
    %v2611 = vpop.f32.mrb[0].mxu0
    %v2612 = vadd.f32 %v2520, %v2611
    %2613 = vdwg.mxu0
    %2614 = vmatprep.subr.mxu0 %v2065
    %2615 = vmatpush1.msra.mxu0 %v2064
    %2616 = vmatprep.subr.mxu0 %v2071
    %2617 = vmatpush1.msra.mxu0 %v2070
    %2618 = vmatprep.subr.mxu0 %v2077
    %2619 = vmatpush1.msra.mxu0 %v2076
    %2620 = vmatprep.subr.mxu0 %v2083
    %2621 = vmatpush1.msra.mxu0 %v2082
    %2622 = vmatprep.subr.mxu0 %v2089
    %2623 = vmatpush1.msra.mxu0 %v2088
    %2624 = vmatprep.subr.mxu0 %v2095
    %2625 = vmatpush1.msra.mxu0 %v2094
    %2626 = vmatprep.subr.mxu0 %v2101
    %2627 = vmatpush1.msra.mxu0 %v2100
    %2628 = vmatprep.subr.mxu0 %v2107
    %2629 = vmatpush1.msra.mxu0 %v2106
    %2630 = vmatprep.subr.mxu0 %v2113
    %2631 = vmatpush1.msra.mxu0 %v2112
    %2632 = vmatprep.subr.mxu0 %v2119
    %2633 = vmatpush1.msra.mxu0 %v2118
    %2634 = vmatprep.subr.mxu0 %v2125
    %2635 = vmatpush1.msra.mxu0 %v2124
    %2636 = vmatprep.subr.mxu0 %v2131
    %2637 = vmatpush1.msra.mxu0 %v2130
    %2638 = vmatprep.subr.mxu0 %v2137
    %2639 = vmatpush1.msra.mxu0 %v2136
    %2640 = vmatprep.subr.mxu0 %v2143
    %2641 = vmatpush1.msra.mxu0 %v2142
    %2642 = vmatprep.subr.mxu0 %v2149
    %2643 = vmatpush1.msra.mxu0 %v2148
    %2644 = vmatprep.subr.mxu0 %v2155
    %2645 = vmatpush1.msra.mxu0 %v2154
    %2646 = vmatprep.subr.mxu0 %v2161
    %2647 = vmatpush1.msra.mxu0 %v2160
    %2648 = vmatprep.subr.mxu0 %v2167
    %2649 = vmatpush1.msra.mxu0 %v2166
    %2650 = vmatprep.subr.mxu0 %v2173
    %2651 = vmatpush1.msra.mxu0 %v2172
    %2652 = vmatprep.subr.mxu0 %v2179
    %2653 = vmatpush1.msra.mxu0 %v2178
    %2654 = vmatprep.subr.mxu0 %v2185
    %2655 = vmatpush1.msra.mxu0 %v2184
    %2656 = vmatprep.subr.mxu0 %v2191
    %2657 = vmatpush1.msra.mxu0 %v2190
    %2658 = vmatprep.subr.mxu0 %v2197
    %2659 = vmatpush1.msra.mxu0 %v2196
    %2660 = vmatprep.subr.mxu0 %v2203
    %2661 = vmatpush1.msra.mxu0 %v2202
    %2662 = vmatprep.subr.mxu0 %v2209
    %2663 = vmatpush1.msra.mxu0 %v2208
    %2664 = vmatprep.subr.mxu0 %v2215
    %2665 = vmatpush1.msra.mxu0 %v2214
    %2666 = vmatprep.subr.mxu0 %v2221
    %2667 = vmatpush1.msra.mxu0 %v2220
    %2668 = vmatprep.subr.mxu0 %v2227
    %2669 = vmatpush1.msra.mxu0 %v2226
    %2670 = vmatprep.subr.mxu0 %v2233
    %2671 = vmatpush1.msra.mxu0 %v2232
    %2672 = vmatprep.subr.mxu0 %v2239
    %2673 = vmatpush1.msra.mxu0 %v2238
    %2674 = vmatprep.subr.mxu0 %v2245
    %2675 = vmatpush1.msra.mxu0 %v2244
    %2676 = vmatprep.subr.mxu0 %v2251
    %2677 = vmatpush1.msra.mxu0 %v2250
    %2678 = vmatprep.mubr.f32.mxu0 0.0
    %2679 = vmatmul.mubr.f32.gmra.mrb[0].mxu0 0.0
    %v2680 = vpop.f32.mrb[0].mxu0
    %v2681 = vadd.f32 %v2524, %v2680
    %v2682 = vpop.f32.mrb[0].mxu0
    %v2683 = vadd.f32 %v2528, %v2682
    %2684 = vdwg.mxu0
    %2685 = vmatprep.subr.mxu0 %v2067
    %2686 = vmatpush1.msra.mxu0 %v2066
    %2687 = vmatprep.subr.mxu0 %v2073
    %2688 = vmatpush1.msra.mxu0 %v2072
    %2689 = vmatprep.subr.mxu0 %v2079
    %2690 = vmatpush1.msra.mxu0 %v2078
    %2691 = vmatprep.subr.mxu0 %v2085
    %2692 = vmatpush1.msra.mxu0 %v2084
    %2693 = vmatprep.subr.mxu0 %v2091
    %2694 = vmatpush1.msra.mxu0 %v2090
    %2695 = vmatprep.subr.mxu0 %v2097
    %2696 = vmatpush1.msra.mxu0 %v2096
    %2697 = vmatprep.subr.mxu0 %v2103
    %2698 = vmatpush1.msra.mxu0 %v2102
    %2699 = vmatprep.subr.mxu0 %v2109
    %2700 = vmatpush1.msra.mxu0 %v2108
    %2701 = vmatprep.subr.mxu0 %v2115
    %2702 = vmatpush1.msra.mxu0 %v2114
    %2703 = vmatprep.subr.mxu0 %v2121
    %2704 = vmatpush1.msra.mxu0 %v2120
    %2705 = vmatprep.subr.mxu0 %v2127
    %2706 = vmatpush1.msra.mxu0 %v2126
    %2707 = vmatprep.subr.mxu0 %v2133
    %2708 = vmatpush1.msra.mxu0 %v2132
    %2709 = vmatprep.subr.mxu0 %v2139
    %2710 = vmatpush1.msra.mxu0 %v2138
    %2711 = vmatprep.subr.mxu0 %v2145
    %2712 = vmatpush1.msra.mxu0 %v2144
    %2713 = vmatprep.subr.mxu0 %v2151
    %2714 = vmatpush1.msra.mxu0 %v2150
    %2715 = vmatprep.subr.mxu0 %v2157
    %2716 = vmatpush1.msra.mxu0 %v2156
    %2717 = vmatprep.subr.mxu0 %v2163
    %2718 = vmatpush1.msra.mxu0 %v2162
    %2719 = vmatprep.subr.mxu0 %v2169
    %2720 = vmatpush1.msra.mxu0 %v2168
    %2721 = vmatprep.subr.mxu0 %v2175
    %2722 = vmatpush1.msra.mxu0 %v2174
    %2723 = vmatprep.subr.mxu0 %v2181
    %2724 = vmatpush1.msra.mxu0 %v2180
    %2725 = vmatprep.subr.mxu0 %v2187
    %2726 = vmatpush1.msra.mxu0 %v2186
    %2727 = vmatprep.subr.mxu0 %v2193
    %2728 = vmatpush1.msra.mxu0 %v2192
    %2729 = vmatprep.subr.mxu0 %v2199
    %2730 = vmatpush1.msra.mxu0 %v2198
    %2731 = vmatprep.subr.mxu0 %v2205
    %2732 = vmatpush1.msra.mxu0 %v2204
    %2733 = vmatprep.subr.mxu0 %v2211
    %2734 = vmatpush1.msra.mxu0 %v2210
    %2735 = vmatprep.subr.mxu0 %v2217
    %2736 = vmatpush1.msra.mxu0 %v2216
    %2737 = vmatprep.subr.mxu0 %v2223
    %2738 = vmatpush1.msra.mxu0 %v2222
    %2739 = vmatprep.subr.mxu0 %v2229
    %2740 = vmatpush1.msra.mxu0 %v2228
    %2741 = vmatprep.subr.mxu0 %v2235
    %2742 = vmatpush1.msra.mxu0 %v2234
    %2743 = vmatprep.subr.mxu0 %v2241
    %2744 = vmatpush1.msra.mxu0 %v2240
    %2745 = vmatprep.subr.mxu0 %v2247
    %2746 = vmatpush1.msra.mxu0 %v2246
    %2747 = vmatprep.subr.mxu0 %v2253
    %2748 = vmatpush1.msra.mxu0 %v2252
    %2749 = vmatprep.mubr.f32.mxu0 0.0
    %2750 = vmatmul.mubr.f32.gmra.mrb[0].mxu0 0.0
    %v2751 = vpop.f32.mrb[0].mxu0
    %v2752 = vadd.f32 %v2532, %v2751
    %v2753 = vpop.f32.mrb[0].mxu0
    %v2754 = vadd.f32 %v2536, %v2753
    %2755 = vdwg.mxu0
    %v2756 = vadd.f32 %v2256, %v2366
    %v2757 = vadd.f32 %v2257, %v2368
    %v2758 = vxor.u32 %v2756, 2147483648
    %v2759 = vxor.u32 %v2757, 2147483648
    %v2760 = vmul.f32 %v2758, 1.442695
    %v2761 = vpow.pop %v2760
    %v2762 = vmul.f32 %v2759, 1.442695
    %v2763 = vpow.pop %v2762
    %v2764 = vadd.f32 %v2761, 1.0
    %v2765 = vadd.f32 %v2763, 1.0
    %v2766 = vrcp.pop %v2764
    %v2767 = vmul.f32 1.0, %v2766
    %v2768 = vrcp.pop %v2765
    %v2769 = vmul.f32 1.0, %v2768
    %v2770 = vadd.f32 %v2258, %v2437
    %v2771 = vadd.f32 %v2259, %v2439
    %v2772 = vxor.u32 %v2770, 2147483648
    %v2773 = vxor.u32 %v2771, 2147483648
    %v2774 = vmul.f32 %v2772, 1.442695
    %v2775 = vpow.pop %v2774
    %v2776 = vmul.f32 %v2773, 1.442695
    %v2777 = vpow.pop %v2776
    %v2778 = vadd.f32 %v2775, 1.0
    %v2779 = vadd.f32 %v2777, 1.0
    %v2780 = vrcp.pop %v2778
    %v2781 = vmul.f32 1.0, %v2780
    %v2782 = vrcp.pop %v2779
    %v2783 = vmul.f32 1.0, %v2782
    %v2784 = vmul.f32 %v2767, %v2508
    %v2785 = vmul.f32 %v2769, %v2510
    %v2786 = vadd.f32 %v2260, %v2784
    %v2787 = vadd.f32 %v2261, %v2785
    %v2788 = vtanh.pop %v2786
    %v2789 = vtanh.pop %v2787
    %v2790 = vsub.f32 1.0, %v2781
    %v2791 = vsub.f32 1.0, %v2783
    %v2792 = vmul.f32 %v2790, %v2788
    %v2793 = vmul.f32 %v2791, %v2789
    %v2794 = vmul.f32 %v2781, 0.0
    %v2795 = vmul.f32 %v2783, 0.0
    %v2796 = vadd.f32 %v2792, %v2794
    %v2797 = vadd.f32 %v2793, %v2795
    %v2800 = vrot.slane %v2610, 4
    %v2801 = vrot.slane %v2612, 4
    %v2804 = vadd.f32 %v2262, %v2800
    %v2805 = vadd.f32 %v2263, %v2801
    %v2806 = vxor.u32 %v2804, 2147483648
    %v2807 = vxor.u32 %v2805, 2147483648
    %v2808 = vmul.f32 %v2806, 1.442695
    %v2809 = vpow.pop %v2808
    %v2810 = vmul.f32 %v2807, 1.442695
    %v2811 = vpow.pop %v2810
    %v2812 = vadd.f32 %v2809, 1.0
    %v2813 = vadd.f32 %v2811, 1.0
    %v2814 = vrcp.pop %v2812
    %v2815 = vmul.f32 1.0, %v2814
    %v2816 = vrcp.pop %v2813
    %v2817 = vmul.f32 1.0, %v2816
    %v2820 = vrot.slane %v2681, 4
    %v2821 = vrot.slane %v2683, 4
    %v2824 = vadd.f32 %v2264, %v2820
    %v2825 = vadd.f32 %v2265, %v2821
    %v2826 = vxor.u32 %v2824, 2147483648
    %v2827 = vxor.u32 %v2825, 2147483648
    %v2828 = vmul.f32 %v2826, 1.442695
    %v2829 = vpow.pop %v2828
    %v2830 = vmul.f32 %v2827, 1.442695
    %v2831 = vpow.pop %v2830
    %v2832 = vadd.f32 %v2829, 1.0
    %v2833 = vadd.f32 %v2831, 1.0
    %v2834 = vrcp.pop %v2832
    %v2835 = vmul.f32 1.0, %v2834
    %v2836 = vrcp.pop %v2833
    %v2837 = vmul.f32 1.0, %v2836
    %v2840 = vrot.slane %v2752, 4
    %v2841 = vrot.slane %v2754, 4
    %v2844 = vmul.f32 %v2815, %v2840
    %v2845 = vmul.f32 %v2817, %v2841
    %v2846 = vadd.f32 %v2266, %v2844
    %v2847 = vadd.f32 %v2267, %v2845
    %v2848 = vtanh.pop %v2846
    %v2849 = vtanh.pop %v2847
    %v2850 = vsub.f32 1.0, %v2835
    %v2851 = vsub.f32 1.0, %v2837
    %v2852 = vmul.f32 %v2850, %v2848
    %v2853 = vmul.f32 %v2851, %v2849
    %v2854 = vmul.f32 %v2835, 0.0
    %v2855 = vmul.f32 %v2837, 0.0
    %v2856 = vadd.f32 %v2852, %v2854
    %v2857 = vadd.f32 %v2853, %v2855
    %v2858 = vld [vmem:[#allocation2] sm:$0xf0]
    %v2859 = vld [vmem:[#allocation2 + $0x8] sm:$0xf0]
    %v2860 = vld [vmem:[#allocation2 + $0x10] sm:$0xf0]
    %v2861 = vld [vmem:[#allocation2 + $0x18] sm:$0xf0]
    %v2862 = vld [vmem:[#allocation2 + $0x20] sm:$0xf0]
    %v2863 = vld [vmem:[#allocation2 + $0x28] sm:$0xf0]
    %v2864 = vld [vmem:[#allocation2 + $0x150] sm:$0xf]
    %v2865 = vld [vmem:[#allocation2 + $0x158] sm:$0xf]
    %v2866 = vld [vmem:[#allocation2 + $0x160] sm:$0xf]
    %v2867 = vld [vmem:[#allocation2 + $0x168] sm:$0xf]
    %v2868 = vld [vmem:[#allocation2 + $0x170] sm:$0xf]
    %v2869 = vld [vmem:[#allocation2 + $0x178] sm:$0xf]
    %2870 = vmatprep.subr.mxu0 %v1871
    %2871 = vmatpush1.msra.mxu0 %v1870
    %2872 = vmatprep.subr.mxu0 %v1877
    %2873 = vmatpush1.msra.mxu0 %v1876
    %2874 = vmatprep.subr.mxu0 %v1883
    %2875 = vmatpush1.msra.mxu0 %v1882
    %2876 = vmatprep.subr.mxu0 %v1889
    %2877 = vmatpush1.msra.mxu0 %v1888
    %2878 = vmatprep.subr.mxu0 %v1895
    %2879 = vmatpush1.msra.mxu0 %v1894
    %2880 = vmatprep.subr.mxu0 %v1901
    %2881 = vmatpush1.msra.mxu0 %v1900
    %2882 = vmatprep.subr.mxu0 %v1907
    %2883 = vmatpush1.msra.mxu0 %v1906
    %2884 = vmatprep.subr.mxu0 %v1913
    %2885 = vmatpush1.msra.mxu0 %v1912
    %2886 = vmatprep.subr.mxu0 %v1919
    %2887 = vmatpush1.msra.mxu0 %v1918
    %2888 = vmatprep.subr.mxu0 %v1925
    %2889 = vmatpush1.msra.mxu0 %v1924
    %2890 = vmatprep.subr.mxu0 %v1931
    %2891 = vmatpush1.msra.mxu0 %v1930
    %2892 = vmatprep.subr.mxu0 %v1937
    %2893 = vmatpush1.msra.mxu0 %v1936
    %2894 = vmatprep.subr.mxu0 %v1943
    %2895 = vmatpush1.msra.mxu0 %v1942
    %2896 = vmatprep.subr.mxu0 %v1949
    %2897 = vmatpush1.msra.mxu0 %v1948
    %2898 = vmatprep.subr.mxu0 %v1955
    %2899 = vmatpush1.msra.mxu0 %v1954
    %2900 = vmatprep.subr.mxu0 %v1961
    %2901 = vmatpush1.msra.mxu0 %v1960
    %2902 = vmatprep.subr.mxu0 %v1967
    %2903 = vmatpush1.msra.mxu0 %v1966
    %2904 = vmatprep.subr.mxu0 %v1973
    %2905 = vmatpush1.msra.mxu0 %v1972
    %2906 = vmatprep.subr.mxu0 %v1979
    %2907 = vmatpush1.msra.mxu0 %v1978
    %2908 = vmatprep.subr.mxu0 %v1985
    %2909 = vmatpush1.msra.mxu0 %v1984
    %2910 = vmatprep.subr.mxu0 %v1991
    %2911 = vmatpush1.msra.mxu0 %v1990
    %2912 = vmatprep.subr.mxu0 %v1997
    %2913 = vmatpush1.msra.mxu0 %v1996
    %2914 = vmatprep.subr.mxu0 %v2003
    %2915 = vmatpush1.msra.mxu0 %v2002
    %2916 = vmatprep.subr.mxu0 %v2009
    %2917 = vmatpush1.msra.mxu0 %v2008
    %2918 = vmatprep.subr.mxu0 %v2015
    %2919 = vmatpush1.msra.mxu0 %v2014
    %2920 = vmatprep.subr.mxu0 %v2021
    %2921 = vmatpush1.msra.mxu0 %v2020
    %2922 = vmatprep.subr.mxu0 %v2027
    %2923 = vmatpush1.msra.mxu0 %v2026
    %2924 = vmatprep.subr.mxu0 %v2033
    %2925 = vmatpush1.msra.mxu0 %v2032
    %2926 = vmatprep.subr.mxu0 %v2039
    %2927 = vmatpush1.msra.mxu0 %v2038
    %2928 = vmatprep.subr.mxu0 %v2045
    %2929 = vmatpush1.msra.mxu0 %v2044
    %2930 = vmatprep.subr.mxu0 %v2051
    %2931 = vmatpush1.msra.mxu0 %v2050
    %2932 = vmatprep.subr.mxu0 %v2057
    %2933 = vmatpush1.msra.mxu0 %v2056
    %2934 = vmatprep.mubr.f32.mxu0 %v2797
    %2935 = vmatmul.mubr.f32.gmra.mrb[0].mxu0 %v2796
    %v2936 = vpop.f32.mrb[0].mxu0
    %v2937 = vadd.f32 %v2272, %v2936
    %v2938 = vpop.f32.mrb[0].mxu0
    %v2939 = vadd.f32 %v2276, %v2938
    %2940 = vdwg.mxu0
    %2941 = vmatprep.subr.mxu0 %v1873
    %2942 = vmatpush1.msra.mxu0 %v1872
    %2943 = vmatprep.subr.mxu0 %v1879
    %2944 = vmatpush1.msra.mxu0 %v1878
    %2945 = vmatprep.subr.mxu0 %v1885
    %2946 = vmatpush1.msra.mxu0 %v1884
    %2947 = vmatprep.subr.mxu0 %v1891
    %2948 = vmatpush1.msra.mxu0 %v1890
    %2949 = vmatprep.subr.mxu0 %v1897
    %2950 = vmatpush1.msra.mxu0 %v1896
    %2951 = vmatprep.subr.mxu0 %v1903
    %2952 = vmatpush1.msra.mxu0 %v1902
    %2953 = vmatprep.subr.mxu0 %v1909
    %2954 = vmatpush1.msra.mxu0 %v1908
    %2955 = vmatprep.subr.mxu0 %v1915
    %2956 = vmatpush1.msra.mxu0 %v1914
    %2957 = vmatprep.subr.mxu0 %v1921
    %2958 = vmatpush1.msra.mxu0 %v1920
    %2959 = vmatprep.subr.mxu0 %v1927
    %2960 = vmatpush1.msra.mxu0 %v1926
    %2961 = vmatprep.subr.mxu0 %v1933
    %2962 = vmatpush1.msra.mxu0 %v1932
    %2963 = vmatprep.subr.mxu0 %v1939
    %2964 = vmatpush1.msra.mxu0 %v1938
    %2965 = vmatprep.subr.mxu0 %v1945
    %2966 = vmatpush1.msra.mxu0 %v1944
    %2967 = vmatprep.subr.mxu0 %v1951
    %2968 = vmatpush1.msra.mxu0 %v1950
    %2969 = vmatprep.subr.mxu0 %v1957
    %2970 = vmatpush1.msra.mxu0 %v1956
    %2971 = vmatprep.subr.mxu0 %v1963
    %2972 = vmatpush1.msra.mxu0 %v1962
    %2973 = vmatprep.subr.mxu0 %v1969
    %2974 = vmatpush1.msra.mxu0 %v1968
    %2975 = vmatprep.subr.mxu0 %v1975
    %2976 = vmatpush1.msra.mxu0 %v1974
    %2977 = vmatprep.subr.mxu0 %v1981
    %2978 = vmatpush1.msra.mxu0 %v1980
    %2979 = vmatprep.subr.mxu0 %v1987
    %2980 = vmatpush1.msra.mxu0 %v1986
    %2981 = vmatprep.subr.mxu0 %v1993
    %2982 = vmatpush1.msra.mxu0 %v1992
    %2983 = vmatprep.subr.mxu0 %v1999
    %2984 = vmatpush1.msra.mxu0 %v1998
    %2985 = vmatprep.subr.mxu0 %v2005
    %2986 = vmatpush1.msra.mxu0 %v2004
    %2987 = vmatprep.subr.mxu0 %v2011
    %2988 = vmatpush1.msra.mxu0 %v2010
    %2989 = vmatprep.subr.mxu0 %v2017
    %2990 = vmatpush1.msra.mxu0 %v2016
    %2991 = vmatprep.subr.mxu0 %v2023
    %2992 = vmatpush1.msra.mxu0 %v2022
    %2993 = vmatprep.subr.mxu0 %v2029
    %2994 = vmatpush1.msra.mxu0 %v2028
    %2995 = vmatprep.subr.mxu0 %v2035
    %2996 = vmatpush1.msra.mxu0 %v2034
    %2997 = vmatprep.subr.mxu0 %v2041
    %2998 = vmatpush1.msra.mxu0 %v2040
    %2999 = vmatprep.subr.mxu0 %v2047
    %3000 = vmatpush1.msra.mxu0 %v2046
    %3001 = vmatprep.subr.mxu0 %v2053
    %3002 = vmatpush1.msra.mxu0 %v2052
    %3003 = vmatprep.subr.mxu0 %v2059
    %3004 = vmatpush1.msra.mxu0 %v2058
    %3005 = vmatprep.mubr.f32.mxu0 %v2797
    %3006 = vmatmul.mubr.f32.gmra.mrb[0].mxu0 %v2796
    %v3007 = vpop.f32.mrb[0].mxu0
    %v3008 = vadd.f32 %v2280, %v3007
    %v3009 = vpop.f32.mrb[0].mxu0
    %v3010 = vadd.f32 %v2284, %v3009
    %3011 = vdwg.mxu0
    %3012 = vmatprep.subr.mxu0 %v1875
    %3013 = vmatpush1.msra.mxu0 %v1874
    %3014 = vmatprep.subr.mxu0 %v1881
    %3015 = vmatpush1.msra.mxu0 %v1880
    %3016 = vmatprep.subr.mxu0 %v1887
    %3017 = vmatpush1.msra.mxu0 %v1886
    %3018 = vmatprep.subr.mxu0 %v1893
    %3019 = vmatpush1.msra.mxu0 %v1892
    %3020 = vmatprep.subr.mxu0 %v1899
    %3021 = vmatpush1.msra.mxu0 %v1898
    %3022 = vmatprep.subr.mxu0 %v1905
    %3023 = vmatpush1.msra.mxu0 %v1904
    %3024 = vmatprep.subr.mxu0 %v1911
    %3025 = vmatpush1.msra.mxu0 %v1910
    %3026 = vmatprep.subr.mxu0 %v1917
    %3027 = vmatpush1.msra.mxu0 %v1916
    %3028 = vmatprep.subr.mxu0 %v1923
    %3029 = vmatpush1.msra.mxu0 %v1922
    %3030 = vmatprep.subr.mxu0 %v1929
    %3031 = vmatpush1.msra.mxu0 %v1928
    %3032 = vmatprep.subr.mxu0 %v1935
    %3033 = vmatpush1.msra.mxu0 %v1934
    %3034 = vmatprep.subr.mxu0 %v1941
    %3035 = vmatpush1.msra.mxu0 %v1940
    %3036 = vmatprep.subr.mxu0 %v1947
    %3037 = vmatpush1.msra.mxu0 %v1946
    %3038 = vmatprep.subr.mxu0 %v1953
    %3039 = vmatpush1.msra.mxu0 %v1952
    %3040 = vmatprep.subr.mxu0 %v1959
    %3041 = vmatpush1.msra.mxu0 %v1958
    %3042 = vmatprep.subr.mxu0 %v1965
    %3043 = vmatpush1.msra.mxu0 %v1964
    %3044 = vmatprep.subr.mxu0 %v1971
    %3045 = vmatpush1.msra.mxu0 %v1970
    %3046 = vmatprep.subr.mxu0 %v1977
    %3047 = vmatpush1.msra.mxu0 %v1976
    %3048 = vmatprep.subr.mxu0 %v1983
    %3049 = vmatpush1.msra.mxu0 %v1982
    %3050 = vmatprep.subr.mxu0 %v1989
    %3051 = vmatpush1.msra.mxu0 %v1988
    %3052 = vmatprep.subr.mxu0 %v1995
    %3053 = vmatpush1.msra.mxu0 %v1994
    %3054 = vmatprep.subr.mxu0 %v2001
    %3055 = vmatpush1.msra.mxu0 %v2000
    %3056 = vmatprep.subr.mxu0 %v2007
    %3057 = vmatpush1.msra.mxu0 %v2006
    %3058 = vmatprep.subr.mxu0 %v2013
    %3059 = vmatpush1.msra.mxu0 %v2012
    %3060 = vmatprep.subr.mxu0 %v2019
    %3061 = vmatpush1.msra.mxu0 %v2018
    %3062 = vmatprep.subr.mxu0 %v2025
    %3063 = vmatpush1.msra.mxu0 %v2024
    %3064 = vmatprep.subr.mxu0 %v2031
    %3065 = vmatpush1.msra.mxu0 %v2030
    %3066 = vmatprep.subr.mxu0 %v2037
    %3067 = vmatpush1.msra.mxu0 %v2036
    %3068 = vmatprep.subr.mxu0 %v2043
    %3069 = vmatpush1.msra.mxu0 %v2042
    %3070 = vmatprep.subr.mxu0 %v2049
    %3071 = vmatpush1.msra.mxu0 %v2048
    %3072 = vmatprep.subr.mxu0 %v2055
    %3073 = vmatpush1.msra.mxu0 %v2054
    %3074 = vmatprep.subr.mxu0 %v2061
    %3075 = vmatpush1.msra.mxu0 %v2060
    %3076 = vmatprep.mubr.f32.mxu0 %v2797
    %3077 = vmatmul.mubr.f32.gmra.mrb[0].mxu0 %v2796
    %v3078 = vpop.f32.mrb[0].mxu0
    %v3079 = vadd.f32 %v2288, %v3078
    %v3080 = vpop.f32.mrb[0].mxu0
    %v3081 = vadd.f32 %v2292, %v3080
    %3082 = vdwg.mxu0
    %v3085 = vrot.slane %v2856, 4
    %v3086 = vrot.slane %v2857, 4
    %3089 = vmatprep.subr.mxu0 %v2063
    %3090 = vmatpush1.msra.mxu0 %v2062
    %3091 = vmatprep.subr.mxu0 %v2069
    %3092 = vmatpush1.msra.mxu0 %v2068
    %3093 = vmatprep.subr.mxu0 %v2075
    %3094 = vmatpush1.msra.mxu0 %v2074
    %3095 = vmatprep.subr.mxu0 %v2081
    %3096 = vmatpush1.msra.mxu0 %v2080
    %3097 = vmatprep.subr.mxu0 %v2087
    %3098 = vmatpush1.msra.mxu0 %v2086
    %3099 = vmatprep.subr.mxu0 %v2093
    %3100 = vmatpush1.msra.mxu0 %v2092
    %3101 = vmatprep.subr.mxu0 %v2099
    %3102 = vmatpush1.msra.mxu0 %v2098
    %3103 = vmatprep.subr.mxu0 %v2105
    %3104 = vmatpush1.msra.mxu0 %v2104
    %3105 = vmatprep.subr.mxu0 %v2111
    %3106 = vmatpush1.msra.mxu0 %v2110
    %3107 = vmatprep.subr.mxu0 %v2117
    %3108 = vmatpush1.msra.mxu0 %v2116
    %3109 = vmatprep.subr.mxu0 %v2123
    %3110 = vmatpush1.msra.mxu0 %v2122
    %3111 = vmatprep.subr.mxu0 %v2129
    %3112 = vmatpush1.msra.mxu0 %v2128
    %3113 = vmatprep.subr.mxu0 %v2135
    %3114 = vmatpush1.msra.mxu0 %v2134
    %3115 = vmatprep.subr.mxu0 %v2141
    %3116 = vmatpush1.msra.mxu0 %v2140
    %3117 = vmatprep.subr.mxu0 %v2147
    %3118 = vmatpush1.msra.mxu0 %v2146
    %3119 = vmatprep.subr.mxu0 %v2153
    %3120 = vmatpush1.msra.mxu0 %v2152
    %3121 = vmatprep.subr.mxu0 %v2159
    %3122 = vmatpush1.msra.mxu0 %v2158
    %3123 = vmatprep.subr.mxu0 %v2165
    %3124 = vmatpush1.msra.mxu0 %v2164
    %3125 = vmatprep.subr.mxu0 %v2171
    %3126 = vmatpush1.msra.mxu0 %v2170
    %3127 = vmatprep.subr.mxu0 %v2177
    %3128 = vmatpush1.msra.mxu0 %v2176
    %3129 = vmatprep.subr.mxu0 %v2183
    %3130 = vmatpush1.msra.mxu0 %v2182
    %3131 = vmatprep.subr.mxu0 %v2189
    %3132 = vmatpush1.msra.mxu0 %v2188
    %3133 = vmatprep.subr.mxu0 %v2195
    %3134 = vmatpush1.msra.mxu0 %v2194
    %3135 = vmatprep.subr.mxu0 %v2201
    %3136 = vmatpush1.msra.mxu0 %v2200
    %3137 = vmatprep.subr.mxu0 %v2207
    %3138 = vmatpush1.msra.mxu0 %v2206
    %3139 = vmatprep.subr.mxu0 %v2213
    %3140 = vmatpush1.msra.mxu0 %v2212
    %3141 = vmatprep.subr.mxu0 %v2219
    %3142 = vmatpush1.msra.mxu0 %v2218
    %3143 = vmatprep.subr.mxu0 %v2225
    %3144 = vmatpush1.msra.mxu0 %v2224
    %3145 = vmatprep.subr.mxu0 %v2231
    %3146 = vmatpush1.msra.mxu0 %v2230
    %3147 = vmatprep.subr.mxu0 %v2237
    %3148 = vmatpush1.msra.mxu0 %v2236
    %3149 = vmatprep.subr.mxu0 %v2243
    %3150 = vmatpush1.msra.mxu0 %v2242
    %3151 = vmatprep.subr.mxu0 %v2249
    %3152 = vmatpush1.msra.mxu0 %v2248
    %3153 = vmatprep.mubr.f32.mxu0 %v3086
    %3154 = vmatmul.mubr.f32.gmra.mrb[0].mxu0 %v3085
    %v3155 = vpop.f32.mrb[0].mxu0
    %v3156 = vadd.f32 %v2516, %v3155
    %v3157 = vpop.f32.mrb[0].mxu0
    %v3158 = vadd.f32 %v2520, %v3157
    %3159 = vdwg.mxu0
    %3160 = vmatprep.subr.mxu0 %v2065
    %3161 = vmatpush1.msra.mxu0 %v2064
    %3162 = vmatprep.subr.mxu0 %v2071
    %3163 = vmatpush1.msra.mxu0 %v2070
    %3164 = vmatprep.subr.mxu0 %v2077
    %3165 = vmatpush1.msra.mxu0 %v2076
    %3166 = vmatprep.subr.mxu0 %v2083
    %3167 = vmatpush1.msra.mxu0 %v2082
    %3168 = vmatprep.subr.mxu0 %v2089
    %3169 = vmatpush1.msra.mxu0 %v2088
    %3170 = vmatprep.subr.mxu0 %v2095
    %3171 = vmatpush1.msra.mxu0 %v2094
    %3172 = vmatprep.subr.mxu0 %v2101
    %3173 = vmatpush1.msra.mxu0 %v2100
    %3174 = vmatprep.subr.mxu0 %v2107
    %3175 = vmatpush1.msra.mxu0 %v2106
    %3176 = vmatprep.subr.mxu0 %v2113
    %3177 = vmatpush1.msra.mxu0 %v2112
    %3178 = vmatprep.subr.mxu0 %v2119
    %3179 = vmatpush1.msra.mxu0 %v2118
    %3180 = vmatprep.subr.mxu0 %v2125
    %3181 = vmatpush1.msra.mxu0 %v2124
    %3182 = vmatprep.subr.mxu0 %v2131
    %3183 = vmatpush1.msra.mxu0 %v2130
    %3184 = vmatprep.subr.mxu0 %v2137
    %3185 = vmatpush1.msra.mxu0 %v2136
    %3186 = vmatprep.subr.mxu0 %v2143
    %3187 = vmatpush1.msra.mxu0 %v2142
    %3188 = vmatprep.subr.mxu0 %v2149
    %3189 = vmatpush1.msra.mxu0 %v2148
    %3190 = vmatprep.subr.mxu0 %v2155
    %3191 = vmatpush1.msra.mxu0 %v2154
    %3192 = vmatprep.subr.mxu0 %v2161
    %3193 = vmatpush1.msra.mxu0 %v2160
    %3194 = vmatprep.subr.mxu0 %v2167
    %3195 = vmatpush1.msra.mxu0 %v2166
    %3196 = vmatprep.subr.mxu0 %v2173
    %3197 = vmatpush1.msra.mxu0 %v2172
    %3198 = vmatprep.subr.mxu0 %v2179
    %3199 = vmatpush1.msra.mxu0 %v2178
    %3200 = vmatprep.subr.mxu0 %v2185
    %3201 = vmatpush1.msra.mxu0 %v2184
    %3202 = vmatprep.subr.mxu0 %v2191
    %3203 = vmatpush1.msra.mxu0 %v2190
    %3204 = vmatprep.subr.mxu0 %v2197
    %3205 = vmatpush1.msra.mxu0 %v2196
    %3206 = vmatprep.subr.mxu0 %v2203
    %3207 = vmatpush1.msra.mxu0 %v2202
    %3208 = vmatprep.subr.mxu0 %v2209
    %3209 = vmatpush1.msra.mxu0 %v2208
    %3210 = vmatprep.subr.mxu0 %v2215
    %3211 = vmatpush1.msra.mxu0 %v2214
    %3212 = vmatprep.subr.mxu0 %v2221
    %3213 = vmatpush1.msra.mxu0 %v2220
    %3214 = vmatprep.subr.mxu0 %v2227
    %3215 = vmatpush1.msra.mxu0 %v2226
    %3216 = vmatprep.subr.mxu0 %v2233
    %3217 = vmatpush1.msra.mxu0 %v2232
    %3218 = vmatprep.subr.mxu0 %v2239
    %3219 = vmatpush1.msra.mxu0 %v2238
    %3220 = vmatprep.subr.mxu0 %v2245
    %3221 = vmatpush1.msra.mxu0 %v2244
    %3222 = vmatprep.subr.mxu0 %v2251
    %3223 = vmatpush1.msra.mxu0 %v2250
    %3224 = vmatprep.mubr.f32.mxu0 %v3086
    %3225 = vmatmul.mubr.f32.gmra.mrb[0].mxu0 %v3085
    %v3226 = vpop.f32.mrb[0].mxu0
    %v3227 = vadd.f32 %v2524, %v3226
    %v3228 = vpop.f32.mrb[0].mxu0
    %v3229 = vadd.f32 %v2528, %v3228
    %3230 = vdwg.mxu0
    %3231 = vmatprep.subr.mxu0 %v2067
    %3232 = vmatpush1.msra.mxu0 %v2066
    %3233 = vmatprep.subr.mxu0 %v2073
    %3234 = vmatpush1.msra.mxu0 %v2072
    %3235 = vmatprep.subr.mxu0 %v2079
    %3236 = vmatpush1.msra.mxu0 %v2078
    %3237 = vmatprep.subr.mxu0 %v2085
    %3238 = vmatpush1.msra.mxu0 %v2084
    %3239 = vmatprep.subr.mxu0 %v2091
    %3240 = vmatpush1.msra.mxu0 %v2090
    %3241 = vmatprep.subr.mxu0 %v2097
    %3242 = vmatpush1.msra.mxu0 %v2096
    %3243 = vmatprep.subr.mxu0 %v2103
    %3244 = vmatpush1.msra.mxu0 %v2102
    %3245 = vmatprep.subr.mxu0 %v2109
    %3246 = vmatpush1.msra.mxu0 %v2108
    %3247 = vmatprep.subr.mxu0 %v2115
    %3248 = vmatpush1.msra.mxu0 %v2114
    %3249 = vmatprep.subr.mxu0 %v2121
    %3250 = vmatpush1.msra.mxu0 %v2120
    %3251 = vmatprep.subr.mxu0 %v2127
    %3252 = vmatpush1.msra.mxu0 %v2126
    %3253 = vmatprep.subr.mxu0 %v2133
    %3254 = vmatpush1.msra.mxu0 %v2132
    %3255 = vmatprep.subr.mxu0 %v2139
    %3256 = vmatpush1.msra.mxu0 %v2138
    %3257 = vmatprep.subr.mxu0 %v2145
    %3258 = vmatpush1.msra.mxu0 %v2144
    %3259 = vmatprep.subr.mxu0 %v2151
    %3260 = vmatpush1.msra.mxu0 %v2150
    %3261 = vmatprep.subr.mxu0 %v2157
    %3262 = vmatpush1.msra.mxu0 %v2156
    %3263 = vmatprep.subr.mxu0 %v2163
    %3264 = vmatpush1.msra.mxu0 %v2162
    %3265 = vmatprep.subr.mxu0 %v2169
    %3266 = vmatpush1.msra.mxu0 %v2168
    %3267 = vmatprep.subr.mxu0 %v2175
    %3268 = vmatpush1.msra.mxu0 %v2174
    %3269 = vmatprep.subr.mxu0 %v2181
    %3270 = vmatpush1.msra.mxu0 %v2180
    %3271 = vmatprep.subr.mxu0 %v2187
    %3272 = vmatpush1.msra.mxu0 %v2186
    %3273 = vmatprep.subr.mxu0 %v2193
    %3274 = vmatpush1.msra.mxu0 %v2192
    %3275 = vmatprep.subr.mxu0 %v2199
    %3276 = vmatpush1.msra.mxu0 %v2198
    %3277 = vmatprep.subr.mxu0 %v2205
    %3278 = vmatpush1.msra.mxu0 %v2204
    %3279 = vmatprep.subr.mxu0 %v2211
    %3280 = vmatpush1.msra.mxu0 %v2210
    %3281 = vmatprep.subr.mxu0 %v2217
    %3282 = vmatpush1.msra.mxu0 %v2216
    %3283 = vmatprep.subr.mxu0 %v2223
    %3284 = vmatpush1.msra.mxu0 %v2222
    %3285 = vmatprep.subr.mxu0 %v2229
    %3286 = vmatpush1.msra.mxu0 %v2228
    %3287 = vmatprep.subr.mxu0 %v2235
    %3288 = vmatpush1.msra.mxu0 %v2234
    %3289 = vmatprep.subr.mxu0 %v2241
    %3290 = vmatpush1.msra.mxu0 %v2240
    %3291 = vmatprep.subr.mxu0 %v2247
    %3292 = vmatpush1.msra.mxu0 %v2246
    %3293 = vmatprep.subr.mxu0 %v2253
    %3294 = vmatpush1.msra.mxu0 %v2252
    %3295 = vmatprep.mubr.f32.mxu0 %v3086
    %3296 = vmatmul.mubr.f32.gmra.mrb[0].mxu0 %v3085
    %v3297 = vpop.f32.mrb[0].mxu0
    %v3298 = vadd.f32 %v2532, %v3297
    %v3299 = vpop.f32.mrb[0].mxu0
    %v3300 = vadd.f32 %v2536, %v3299
    %3301 = vdwg.mxu0
    %v3304 = vrot.slane %v2937, 4
    %v3305 = vrot.slane %v2939, 4
    %v3308 = vadd.f32 %v2858, %v3304
    %v3309 = vadd.f32 %v2859, %v3305
    %v3310 = vxor.u32 %v3308, 2147483648
    %v3311 = vxor.u32 %v3309, 2147483648
    %v3312 = vmul.f32 %v3310, 1.442695
    %v3313 = vpow.pop %v3312
    %v3314 = vmul.f32 %v3311, 1.442695
    %v3315 = vpow.pop %v3314
    %v3316 = vadd.f32 %v3313, 1.0
    %v3317 = vadd.f32 %v3315, 1.0
    %v3318 = vrcp.pop %v3316
    %v3319 = vmul.f32 1.0, %v3318
    %v3320 = vrcp.pop %v3317
    %v3321 = vmul.f32 1.0, %v3320
    %v3324 = vrot.slane %v3008, 4
    %v3325 = vrot.slane %v3010, 4
    %v3328 = vadd.f32 %v2860, %v3324
    %v3329 = vadd.f32 %v2861, %v3325
    %v3330 = vxor.u32 %v3328, 2147483648
    %v3331 = vxor.u32 %v3329, 2147483648
    %v3332 = vmul.f32 %v3330, 1.442695
    %v3333 = vpow.pop %v3332
    %v3334 = vmul.f32 %v3331, 1.442695
    %v3335 = vpow.pop %v3334
    %v3336 = vadd.f32 %v3333, 1.0
    %v3337 = vadd.f32 %v3335, 1.0
    %v3338 = vrcp.pop %v3336
    %v3339 = vmul.f32 1.0, %v3338
    %v3340 = vrcp.pop %v3337
    %v3341 = vmul.f32 1.0, %v3340
    %v3344 = vrot.slane %v3079, 4
    %v3345 = vrot.slane %v3081, 4
    %v3348 = vmul.f32 %v3319, %v3344
    %v3349 = vmul.f32 %v3321, %v3345
    %v3350 = vadd.f32 %v2862, %v3348
    %v3351 = vadd.f32 %v2863, %v3349
    %v3352 = vtanh.pop %v3350
    %v3353 = vtanh.pop %v3351
    %v3354 = vsub.f32 1.0, %v3339
    %v3355 = vsub.f32 1.0, %v3341
    %v3356 = vmul.f32 %v3354, %v3352
    %v3357 = vmul.f32 %v3355, %v3353
    %v3360 = vrot.slane %v2796, 4
    %v3361 = vrot.slane %v2797, 4
    %v3364 = vmul.f32 %v3339, %v3360
    %v3365 = vmul.f32 %v3341, %v3361
    %v3366 = vadd.f32 %v3356, %v3364
    %v3367 = vadd.f32 %v3357, %v3365
    %v3368 = vadd.f32 %v2864, %v3156
    %v3369 = vadd.f32 %v2865, %v3158
    %v3370 = vxor.u32 %v3368, 2147483648
    %v3371 = vxor.u32 %v3369, 2147483648
    %v3372 = vmul.f32 %v3370, 1.442695
    %v3373 = vpow.pop %v3372
    %v3374 = vmul.f32 %v3371, 1.442695
    %v3375 = vpow.pop %v3374
    %v3376 = vadd.f32 %v3373, 1.0
    %v3377 = vadd.f32 %v3375, 1.0
    %v3378 = vrcp.pop %v3376
    %v3379 = vmul.f32 1.0, %v3378
    %v3380 = vrcp.pop %v3377
    %v3381 = vmul.f32 1.0, %v3380
    %v3382 = vadd.f32 %v2866, %v3227
    %v3383 = vadd.f32 %v2867, %v3229
    %v3384 = vxor.u32 %v3382, 2147483648
    %v3385 = vxor.u32 %v3383, 2147483648
    %v3386 = vmul.f32 %v3384, 1.442695
    %v3387 = vpow.pop %v3386
    %v3388 = vmul.f32 %v3385, 1.442695
    %v3389 = vpow.pop %v3388
    %v3390 = vadd.f32 %v3387, 1.0
    %v3391 = vadd.f32 %v3389, 1.0
    %v3392 = vrcp.pop %v3390
    %v3393 = vmul.f32 1.0, %v3392
    %v3394 = vrcp.pop %v3391
    %v3395 = vmul.f32 1.0, %v3394
    %v3396 = vmul.f32 %v3379, %v3298
    %v3397 = vmul.f32 %v3381, %v3300
    %v3398 = vadd.f32 %v2868, %v3396
    %v3399 = vadd.f32 %v2869, %v3397
    %v3400 = vtanh.pop %v3398
    %v3401 = vtanh.pop %v3399
    %v3402 = vsub.f32 1.0, %v3393
    %v3403 = vsub.f32 1.0, %v3395
    %v3404 = vmul.f32 %v3402, %v3400
    %v3405 = vmul.f32 %v3403, %v3401
    %v3406 = vmul.f32 %v3393, %v3085
    %v3407 = vmul.f32 %v3395, %v3086
    %v3408 = vadd.f32 %v3404, %v3406
    %v3409 = vadd.f32 %v3405, %v3407
    %v3410 = vld [vmem:[#allocation2 + $0x60] sm:$0xf]
    %v3411 = vld [vmem:[#allocation2 + $0x68] sm:$0xf]
    %v3412 = vld [vmem:[#allocation2 + $0x70] sm:$0xf]
    %v3413 = vld [vmem:[#allocation2 + $0x78] sm:$0xf]
    %v3414 = vld [vmem:[#allocation2 + $0x80] sm:$0xf]
    %v3415 = vld [vmem:[#allocation2 + $0x88] sm:$0xf]
    %v3416 = vld [vmem:[#allocation2 + $0xf0] sm:$0xf0]
    %v3417 = vld [vmem:[#allocation2 + $0xf8] sm:$0xf0]
    %v3418 = vld [vmem:[#allocation2 + $0x100] sm:$0xf0]
    %v3419 = vld [vmem:[#allocation2 + $0x108] sm:$0xf0]
    %v3420 = vld [vmem:[#allocation2 + $0x110] sm:$0xf0]
    %v3421 = vld [vmem:[#allocation2 + $0x118] sm:$0xf0]
    %v3424 = vrot.slane %v3366, 4
    %v3425 = vrot.slane %v3367, 4
    %3428 = vmatprep.subr.mxu0 %v1871
    %3429 = vmatpush1.msra.mxu0 %v1870
    %3430 = vmatprep.subr.mxu0 %v1877
    %3431 = vmatpush1.msra.mxu0 %v1876
    %3432 = vmatprep.subr.mxu0 %v1883
    %3433 = vmatpush1.msra.mxu0 %v1882
    %3434 = vmatprep.subr.mxu0 %v1889
    %3435 = vmatpush1.msra.mxu0 %v1888
    %3436 = vmatprep.subr.mxu0 %v1895
    %3437 = vmatpush1.msra.mxu0 %v1894
    %3438 = vmatprep.subr.mxu0 %v1901
    %3439 = vmatpush1.msra.mxu0 %v1900
    %3440 = vmatprep.subr.mxu0 %v1907
    %3441 = vmatpush1.msra.mxu0 %v1906
    %3442 = vmatprep.subr.mxu0 %v1913
    %3443 = vmatpush1.msra.mxu0 %v1912
    %3444 = vmatprep.subr.mxu0 %v1919
    %3445 = vmatpush1.msra.mxu0 %v1918
    %3446 = vmatprep.subr.mxu0 %v1925
    %3447 = vmatpush1.msra.mxu0 %v1924
    %3448 = vmatprep.subr.mxu0 %v1931
    %3449 = vmatpush1.msra.mxu0 %v1930
    %3450 = vmatprep.subr.mxu0 %v1937
    %3451 = vmatpush1.msra.mxu0 %v1936
    %3452 = vmatprep.subr.mxu0 %v1943
    %3453 = vmatpush1.msra.mxu0 %v1942
    %3454 = vmatprep.subr.mxu0 %v1949
    %3455 = vmatpush1.msra.mxu0 %v1948
    %3456 = vmatprep.subr.mxu0 %v1955
    %3457 = vmatpush1.msra.mxu0 %v1954
    %3458 = vmatprep.subr.mxu0 %v1961
    %3459 = vmatpush1.msra.mxu0 %v1960
    %3460 = vmatprep.subr.mxu0 %v1967
    %3461 = vmatpush1.msra.mxu0 %v1966
    %3462 = vmatprep.subr.mxu0 %v1973
    %3463 = vmatpush1.msra.mxu0 %v1972
    %3464 = vmatprep.subr.mxu0 %v1979
    %3465 = vmatpush1.msra.mxu0 %v1978
    %3466 = vmatprep.subr.mxu0 %v1985
    %3467 = vmatpush1.msra.mxu0 %v1984
    %3468 = vmatprep.subr.mxu0 %v1991
    %3469 = vmatpush1.msra.mxu0 %v1990
    %3470 = vmatprep.subr.mxu0 %v1997
    %3471 = vmatpush1.msra.mxu0 %v1996
    %3472 = vmatprep.subr.mxu0 %v2003
    %3473 = vmatpush1.msra.mxu0 %v2002
    %3474 = vmatprep.subr.mxu0 %v2009
    %3475 = vmatpush1.msra.mxu0 %v2008
    %3476 = vmatprep.subr.mxu0 %v2015
    %3477 = vmatpush1.msra.mxu0 %v2014
    %3478 = vmatprep.subr.mxu0 %v2021
    %3479 = vmatpush1.msra.mxu0 %v2020
    %3480 = vmatprep.subr.mxu0 %v2027
    %3481 = vmatpush1.msra.mxu0 %v2026
    %3482 = vmatprep.subr.mxu0 %v2033
    %3483 = vmatpush1.msra.mxu0 %v2032
    %3484 = vmatprep.subr.mxu0 %v2039
    %3485 = vmatpush1.msra.mxu0 %v2038
    %3486 = vmatprep.subr.mxu0 %v2045
    %3487 = vmatpush1.msra.mxu0 %v2044
    %3488 = vmatprep.subr.mxu0 %v2051
    %3489 = vmatpush1.msra.mxu0 %v2050
    %3490 = vmatprep.subr.mxu0 %v2057
    %3491 = vmatpush1.msra.mxu0 %v2056
    %3492 = vmatprep.mubr.f32.mxu0 %v3425
    %3493 = vmatmul.mubr.f32.gmra.mrb[0].mxu0 %v3424
    %v3494 = vpop.f32.mrb[0].mxu0
    %v3495 = vadd.f32 %v2272, %v3494
    %v3496 = vpop.f32.mrb[0].mxu0
    %v3497 = vadd.f32 %v2276, %v3496
    %3498 = vdwg.mxu0
    %3499 = vmatprep.subr.mxu0 %v1873
    %3500 = vmatpush1.msra.mxu0 %v1872
    %3501 = vmatprep.subr.mxu0 %v1879
    %3502 = vmatpush1.msra.mxu0 %v1878
    %3503 = vmatprep.subr.mxu0 %v1885
    %3504 = vmatpush1.msra.mxu0 %v1884
    %3505 = vmatprep.subr.mxu0 %v1891
    %3506 = vmatpush1.msra.mxu0 %v1890
    %3507 = vmatprep.subr.mxu0 %v1897
    %3508 = vmatpush1.msra.mxu0 %v1896
    %3509 = vmatprep.subr.mxu0 %v1903
    %3510 = vmatpush1.msra.mxu0 %v1902
    %3511 = vmatprep.subr.mxu0 %v1909
    %3512 = vmatpush1.msra.mxu0 %v1908
    %3513 = vmatprep.subr.mxu0 %v1915
    %3514 = vmatpush1.msra.mxu0 %v1914
    %3515 = vmatprep.subr.mxu0 %v1921
    %3516 = vmatpush1.msra.mxu0 %v1920
    %3517 = vmatprep.subr.mxu0 %v1927
    %3518 = vmatpush1.msra.mxu0 %v1926
    %3519 = vmatprep.subr.mxu0 %v1933
    %3520 = vmatpush1.msra.mxu0 %v1932
    %3521 = vmatprep.subr.mxu0 %v1939
    %3522 = vmatpush1.msra.mxu0 %v1938
    %3523 = vmatprep.subr.mxu0 %v1945
    %3524 = vmatpush1.msra.mxu0 %v1944
    %3525 = vmatprep.subr.mxu0 %v1951
    %3526 = vmatpush1.msra.mxu0 %v1950
    %3527 = vmatprep.subr.mxu0 %v1957
    %3528 = vmatpush1.msra.mxu0 %v1956
    %3529 = vmatprep.subr.mxu0 %v1963
    %3530 = vmatpush1.msra.mxu0 %v1962
    %3531 = vmatprep.subr.mxu0 %v1969
    %3532 = vmatpush1.msra.mxu0 %v1968
    %3533 = vmatprep.subr.mxu0 %v1975
    %3534 = vmatpush1.msra.mxu0 %v1974
    %3535 = vmatprep.subr.mxu0 %v1981
    %3536 = vmatpush1.msra.mxu0 %v1980
    %3537 = vmatprep.subr.mxu0 %v1987
    %3538 = vmatpush1.msra.mxu0 %v1986
    %3539 = vmatprep.subr.mxu0 %v1993
    %3540 = vmatpush1.msra.mxu0 %v1992
    %3541 = vmatprep.subr.mxu0 %v1999
    %3542 = vmatpush1.msra.mxu0 %v1998
    %3543 = vmatprep.subr.mxu0 %v2005
    %3544 = vmatpush1.msra.mxu0 %v2004
    %3545 = vmatprep.subr.mxu0 %v2011
    %3546 = vmatpush1.msra.mxu0 %v2010
    %3547 = vmatprep.subr.mxu0 %v2017
    %3548 = vmatpush1.msra.mxu0 %v2016
    %3549 = vmatprep.subr.mxu0 %v2023
    %3550 = vmatpush1.msra.mxu0 %v2022
    %3551 = vmatprep.subr.mxu0 %v2029
    %3552 = vmatpush1.msra.mxu0 %v2028
    %3553 = vmatprep.subr.mxu0 %v2035
    %3554 = vmatpush1.msra.mxu0 %v2034
    %3555 = vmatprep.subr.mxu0 %v2041
    %3556 = vmatpush1.msra.mxu0 %v2040
    %3557 = vmatprep.subr.mxu0 %v2047
    %3558 = vmatpush1.msra.mxu0 %v2046
    %3559 = vmatprep.subr.mxu0 %v2053
    %3560 = vmatpush1.msra.mxu0 %v2052
    %3561 = vmatprep.subr.mxu0 %v2059
    %3562 = vmatpush1.msra.mxu0 %v2058
    %3563 = vmatprep.mubr.f32.mxu0 %v3425
    %3564 = vmatmul.mubr.f32.gmra.mrb[0].mxu0 %v3424
    %v3565 = vpop.f32.mrb[0].mxu0
    %v3566 = vadd.f32 %v2280, %v3565
    %v3567 = vpop.f32.mrb[0].mxu0
    %v3568 = vadd.f32 %v2284, %v3567
    %3569 = vdwg.mxu0
    %3570 = vmatprep.subr.mxu0 %v1875
    %3571 = vmatpush1.msra.mxu0 %v1874
    %3572 = vmatprep.subr.mxu0 %v1881
    %3573 = vmatpush1.msra.mxu0 %v1880
    %3574 = vmatprep.subr.mxu0 %v1887
    %3575 = vmatpush1.msra.mxu0 %v1886
    %3576 = vmatprep.subr.mxu0 %v1893
    %3577 = vmatpush1.msra.mxu0 %v1892
    %3578 = vmatprep.subr.mxu0 %v1899
    %3579 = vmatpush1.msra.mxu0 %v1898
    %3580 = vmatprep.subr.mxu0 %v1905
    %3581 = vmatpush1.msra.mxu0 %v1904
    %3582 = vmatprep.subr.mxu0 %v1911
    %3583 = vmatpush1.msra.mxu0 %v1910
    %3584 = vmatprep.subr.mxu0 %v1917
    %3585 = vmatpush1.msra.mxu0 %v1916
    %3586 = vmatprep.subr.mxu0 %v1923
    %3587 = vmatpush1.msra.mxu0 %v1922
    %3588 = vmatprep.subr.mxu0 %v1929
    %3589 = vmatpush1.msra.mxu0 %v1928
    %3590 = vmatprep.subr.mxu0 %v1935
    %3591 = vmatpush1.msra.mxu0 %v1934
    %3592 = vmatprep.subr.mxu0 %v1941
    %3593 = vmatpush1.msra.mxu0 %v1940
    %3594 = vmatprep.subr.mxu0 %v1947
    %3595 = vmatpush1.msra.mxu0 %v1946
    %3596 = vmatprep.subr.mxu0 %v1953
    %3597 = vmatpush1.msra.mxu0 %v1952
    %3598 = vmatprep.subr.mxu0 %v1959
    %3599 = vmatpush1.msra.mxu0 %v1958
    %3600 = vmatprep.subr.mxu0 %v1965
    %3601 = vmatpush1.msra.mxu0 %v1964
    %3602 = vmatprep.subr.mxu0 %v1971
    %3603 = vmatpush1.msra.mxu0 %v1970
    %3604 = vmatprep.subr.mxu0 %v1977
    %3605 = vmatpush1.msra.mxu0 %v1976
    %3606 = vmatprep.subr.mxu0 %v1983
    %3607 = vmatpush1.msra.mxu0 %v1982
    %3608 = vmatprep.subr.mxu0 %v1989
    %3609 = vmatpush1.msra.mxu0 %v1988
    %3610 = vmatprep.subr.mxu0 %v1995
    %3611 = vmatpush1.msra.mxu0 %v1994
    %3612 = vmatprep.subr.mxu0 %v2001
    %3613 = vmatpush1.msra.mxu0 %v2000
    %3614 = vmatprep.subr.mxu0 %v2007
    %3615 = vmatpush1.msra.mxu0 %v2006
    %3616 = vmatprep.subr.mxu0 %v2013
    %3617 = vmatpush1.msra.mxu0 %v2012
    %3618 = vmatprep.subr.mxu0 %v2019
    %3619 = vmatpush1.msra.mxu0 %v2018
    %3620 = vmatprep.subr.mxu0 %v2025
    %3621 = vmatpush1.msra.mxu0 %v2024
    %3622 = vmatprep.subr.mxu0 %v2031
    %3623 = vmatpush1.msra.mxu0 %v2030
    %3624 = vmatprep.subr.mxu0 %v2037
    %3625 = vmatpush1.msra.mxu0 %v2036
    %3626 = vmatprep.subr.mxu0 %v2043
    %3627 = vmatpush1.msra.mxu0 %v2042
    %3628 = vmatprep.subr.mxu0 %v2049
    %3629 = vmatpush1.msra.mxu0 %v2048
    %3630 = vmatprep.subr.mxu0 %v2055
    %3631 = vmatpush1.msra.mxu0 %v2054
    %3632 = vmatprep.subr.mxu0 %v2061
    %3633 = vmatpush1.msra.mxu0 %v2060
    %3634 = vmatprep.mubr.f32.mxu0 %v3425
    %3635 = vmatmul.mubr.f32.gmra.mrb[0].mxu0 %v3424
    %v3636 = vpop.f32.mrb[0].mxu0
    %v3637 = vadd.f32 %v2288, %v3636
    %v3638 = vpop.f32.mrb[0].mxu0
    %v3639 = vadd.f32 %v2292, %v3638
    %3640 = vdwg.mxu0
    %3641 = vmatprep.subr.mxu0 %v2063
    %3642 = vmatpush1.msra.mxu0 %v2062
    %3643 = vmatprep.subr.mxu0 %v2069
    %3644 = vmatpush1.msra.mxu0 %v2068
    %3645 = vmatprep.subr.mxu0 %v2075
    %3646 = vmatpush1.msra.mxu0 %v2074
    %3647 = vmatprep.subr.mxu0 %v2081
    %3648 = vmatpush1.msra.mxu0 %v2080
    %3649 = vmatprep.subr.mxu0 %v2087
    %3650 = vmatpush1.msra.mxu0 %v2086
    %3651 = vmatprep.subr.mxu0 %v2093
    %3652 = vmatpush1.msra.mxu0 %v2092
    %3653 = vmatprep.subr.mxu0 %v2099
    %3654 = vmatpush1.msra.mxu0 %v2098
    %3655 = vmatprep.subr.mxu0 %v2105
    %3656 = vmatpush1.msra.mxu0 %v2104
    %3657 = vmatprep.subr.mxu0 %v2111
    %3658 = vmatpush1.msra.mxu0 %v2110
    %3659 = vmatprep.subr.mxu0 %v2117
    %3660 = vmatpush1.msra.mxu0 %v2116
    %3661 = vmatprep.subr.mxu0 %v2123
    %3662 = vmatpush1.msra.mxu0 %v2122
    %3663 = vmatprep.subr.mxu0 %v2129
    %3664 = vmatpush1.msra.mxu0 %v2128
    %3665 = vmatprep.subr.mxu0 %v2135
    %3666 = vmatpush1.msra.mxu0 %v2134
    %3667 = vmatprep.subr.mxu0 %v2141
    %3668 = vmatpush1.msra.mxu0 %v2140
    %3669 = vmatprep.subr.mxu0 %v2147
    %3670 = vmatpush1.msra.mxu0 %v2146
    %3671 = vmatprep.subr.mxu0 %v2153
    %3672 = vmatpush1.msra.mxu0 %v2152
    %3673 = vmatprep.subr.mxu0 %v2159
    %3674 = vmatpush1.msra.mxu0 %v2158
    %3675 = vmatprep.subr.mxu0 %v2165
    %3676 = vmatpush1.msra.mxu0 %v2164
    %3677 = vmatprep.subr.mxu0 %v2171
    %3678 = vmatpush1.msra.mxu0 %v2170
    %3679 = vmatprep.subr.mxu0 %v2177
    %3680 = vmatpush1.msra.mxu0 %v2176
    %3681 = vmatprep.subr.mxu0 %v2183
    %3682 = vmatpush1.msra.mxu0 %v2182
    %3683 = vmatprep.subr.mxu0 %v2189
    %3684 = vmatpush1.msra.mxu0 %v2188
    %3685 = vmatprep.subr.mxu0 %v2195
    %3686 = vmatpush1.msra.mxu0 %v2194
    %3687 = vmatprep.subr.mxu0 %v2201
    %3688 = vmatpush1.msra.mxu0 %v2200
    %3689 = vmatprep.subr.mxu0 %v2207
    %3690 = vmatpush1.msra.mxu0 %v2206
    %3691 = vmatprep.subr.mxu0 %v2213
    %3692 = vmatpush1.msra.mxu0 %v2212
    %3693 = vmatprep.subr.mxu0 %v2219
    %3694 = vmatpush1.msra.mxu0 %v2218
    %3695 = vmatprep.subr.mxu0 %v2225
    %3696 = vmatpush1.msra.mxu0 %v2224
    %3697 = vmatprep.subr.mxu0 %v2231
    %3698 = vmatpush1.msra.mxu0 %v2230
    %3699 = vmatprep.subr.mxu0 %v2237
    %3700 = vmatpush1.msra.mxu0 %v2236
    %3701 = vmatprep.subr.mxu0 %v2243
    %3702 = vmatpush1.msra.mxu0 %v2242
    %3703 = vmatprep.subr.mxu0 %v2249
    %3704 = vmatpush1.msra.mxu0 %v2248
    %3705 = vmatprep.mubr.f32.mxu0 %v3409
    %3706 = vmatmul.mubr.f32.gmra.mrb[0].mxu0 %v3408
    %v3707 = vpop.f32.mrb[0].mxu0
    %v3708 = vadd.f32 %v2516, %v3707
    %v3709 = vpop.f32.mrb[0].mxu0
    %v3710 = vadd.f32 %v2520, %v3709
    %3711 = vdwg.mxu0
    %3712 = vmatprep.subr.mxu0 %v2065
    %3713 = vmatpush1.msra.mxu0 %v2064
    %3714 = vmatprep.subr.mxu0 %v2071
    %3715 = vmatpush1.msra.mxu0 %v2070
    %3716 = vmatprep.subr.mxu0 %v2077
    %3717 = vmatpush1.msra.mxu0 %v2076
    %3718 = vmatprep.subr.mxu0 %v2083
    %3719 = vmatpush1.msra.mxu0 %v2082
    %3720 = vmatprep.subr.mxu0 %v2089
    %3721 = vmatpush1.msra.mxu0 %v2088
    %3722 = vmatprep.subr.mxu0 %v2095
    %3723 = vmatpush1.msra.mxu0 %v2094
    %3724 = vmatprep.subr.mxu0 %v2101
    %3725 = vmatpush1.msra.mxu0 %v2100
    %3726 = vmatprep.subr.mxu0 %v2107
    %3727 = vmatpush1.msra.mxu0 %v2106
    %3728 = vmatprep.subr.mxu0 %v2113
    %3729 = vmatpush1.msra.mxu0 %v2112
    %3730 = vmatprep.subr.mxu0 %v2119
    %3731 = vmatpush1.msra.mxu0 %v2118
    %3732 = vmatprep.subr.mxu0 %v2125
    %3733 = vmatpush1.msra.mxu0 %v2124
    %3734 = vmatprep.subr.mxu0 %v2131
    %3735 = vmatpush1.msra.mxu0 %v2130
    %3736 = vmatprep.subr.mxu0 %v2137
    %3737 = vmatpush1.msra.mxu0 %v2136
    %3738 = vmatprep.subr.mxu0 %v2143
    %3739 = vmatpush1.msra.mxu0 %v2142
    %3740 = vmatprep.subr.mxu0 %v2149
    %3741 = vmatpush1.msra.mxu0 %v2148
    %3742 = vmatprep.subr.mxu0 %v2155
    %3743 = vmatpush1.msra.mxu0 %v2154
    %3744 = vmatprep.subr.mxu0 %v2161
    %3745 = vmatpush1.msra.mxu0 %v2160
    %3746 = vmatprep.subr.mxu0 %v2167
    %3747 = vmatpush1.msra.mxu0 %v2166
    %3748 = vmatprep.subr.mxu0 %v2173
    %3749 = vmatpush1.msra.mxu0 %v2172
    %3750 = vmatprep.subr.mxu0 %v2179
    %3751 = vmatpush1.msra.mxu0 %v2178
    %3752 = vmatprep.subr.mxu0 %v2185
    %3753 = vmatpush1.msra.mxu0 %v2184
    %3754 = vmatprep.subr.mxu0 %v2191
    %3755 = vmatpush1.msra.mxu0 %v2190
    %3756 = vmatprep.subr.mxu0 %v2197
    %3757 = vmatpush1.msra.mxu0 %v2196
    %3758 = vmatprep.subr.mxu0 %v2203
    %3759 = vmatpush1.msra.mxu0 %v2202
    %3760 = vmatprep.subr.mxu0 %v2209
    %3761 = vmatpush1.msra.mxu0 %v2208
    %3762 = vmatprep.subr.mxu0 %v2215
    %3763 = vmatpush1.msra.mxu0 %v2214
    %3764 = vmatprep.subr.mxu0 %v2221
    %3765 = vmatpush1.msra.mxu0 %v2220
    %3766 = vmatprep.subr.mxu0 %v2227
    %3767 = vmatpush1.msra.mxu0 %v2226
    %3768 = vmatprep.subr.mxu0 %v2233
    %3769 = vmatpush1.msra.mxu0 %v2232
    %3770 = vmatprep.subr.mxu0 %v2239
    %3771 = vmatpush1.msra.mxu0 %v2238
    %3772 = vmatprep.subr.mxu0 %v2245
    %3773 = vmatpush1.msra.mxu0 %v2244
    %3774 = vmatprep.subr.mxu0 %v2251
    %3775 = vmatpush1.msra.mxu0 %v2250
    %3776 = vmatprep.mubr.f32.mxu0 %v3409
    %3777 = vmatmul.mubr.f32.gmra.mrb[0].mxu0 %v3408
    %v3778 = vpop.f32.mrb[0].mxu0
    %v3779 = vadd.f32 %v2524, %v3778
    %v3780 = vpop.f32.mrb[0].mxu0
    %v3781 = vadd.f32 %v2528, %v3780
    %3782 = vdwg.mxu0
    %3783 = vmatprep.subr.mxu0 %v2067
    %3784 = vmatpush1.msra.mxu0 %v2066
    %3785 = vmatprep.subr.mxu0 %v2073
    %3786 = vmatpush1.msra.mxu0 %v2072
    %3787 = vmatprep.subr.mxu0 %v2079
    %3788 = vmatpush1.msra.mxu0 %v2078
    %3789 = vmatprep.subr.mxu0 %v2085
    %3790 = vmatpush1.msra.mxu0 %v2084
    %3791 = vmatprep.subr.mxu0 %v2091
    %3792 = vmatpush1.msra.mxu0 %v2090
    %3793 = vmatprep.subr.mxu0 %v2097
    %3794 = vmatpush1.msra.mxu0 %v2096
    %3795 = vmatprep.subr.mxu0 %v2103
    %3796 = vmatpush1.msra.mxu0 %v2102
    %3797 = vmatprep.subr.mxu0 %v2109
    %3798 = vmatpush1.msra.mxu0 %v2108
    %3799 = vmatprep.subr.mxu0 %v2115
    %3800 = vmatpush1.msra.mxu0 %v2114
    %3801 = vmatprep.subr.mxu0 %v2121
    %3802 = vmatpush1.msra.mxu0 %v2120
    %3803 = vmatprep.subr.mxu0 %v2127
    %3804 = vmatpush1.msra.mxu0 %v2126
    %3805 = vmatprep.subr.mxu0 %v2133
    %3806 = vmatpush1.msra.mxu0 %v2132
    %3807 = vmatprep.subr.mxu0 %v2139
    %3808 = vmatpush1.msra.mxu0 %v2138
    %3809 = vmatprep.subr.mxu0 %v2145
    %3810 = vmatpush1.msra.mxu0 %v2144
    %3811 = vmatprep.subr.mxu0 %v2151
    %3812 = vmatpush1.msra.mxu0 %v2150
    %3813 = vmatprep.subr.mxu0 %v2157
    %3814 = vmatpush1.msra.mxu0 %v2156
    %3815 = vmatprep.subr.mxu0 %v2163
    %3816 = vmatpush1.msra.mxu0 %v2162
    %3817 = vmatprep.subr.mxu0 %v2169
    %3818 = vmatpush1.msra.mxu0 %v2168
    %3819 = vmatprep.subr.mxu0 %v2175
    %3820 = vmatpush1.msra.mxu0 %v2174
    %3821 = vmatprep.subr.mxu0 %v2181
    %3822 = vmatpush1.msra.mxu0 %v2180
    %3823 = vmatprep.subr.mxu0 %v2187
    %3824 = vmatpush1.msra.mxu0 %v2186
    %3825 = vmatprep.subr.mxu0 %v2193
    %3826 = vmatpush1.msra.mxu0 %v2192
    %3827 = vmatprep.subr.mxu0 %v2199
    %3828 = vmatpush1.msra.mxu0 %v2198
    %3829 = vmatprep.subr.mxu0 %v2205
    %3830 = vmatpush1.msra.mxu0 %v2204
    %3831 = vmatprep.subr.mxu0 %v2211
    %3832 = vmatpush1.msra.mxu0 %v2210
    %3833 = vmatprep.subr.mxu0 %v2217
    %3834 = vmatpush1.msra.mxu0 %v2216
    %3835 = vmatprep.subr.mxu0 %v2223
    %3836 = vmatpush1.msra.mxu0 %v2222
    %3837 = vmatprep.subr.mxu0 %v2229
    %3838 = vmatpush1.msra.mxu0 %v2228
    %3839 = vmatprep.subr.mxu0 %v2235
    %3840 = vmatpush1.msra.mxu0 %v2234
    %3841 = vmatprep.subr.mxu0 %v2241
    %3842 = vmatpush1.msra.mxu0 %v2240
    %3843 = vmatprep.subr.mxu0 %v2247
    %3844 = vmatpush1.msra.mxu0 %v2246
    %3845 = vmatprep.subr.mxu0 %v2253
    %3846 = vmatpush1.msra.mxu0 %v2252
    %3847 = vmatprep.mubr.f32.mxu0 %v3409
    %3848 = vmatmul.mubr.f32.gmra.mrb[0].mxu0 %v3408
    %v3849 = vpop.f32.mrb[0].mxu0
    %v3850 = vadd.f32 %v2532, %v3849
    %v3851 = vpop.f32.mrb[0].mxu0
    %v3852 = vadd.f32 %v2536, %v3851
    %3853 = vdwg.mxu0
    %v3854 = vadd.f32 %v3410, %v3495
    %v3855 = vadd.f32 %v3411, %v3497
    %v3856 = vxor.u32 %v3854, 2147483648
    %v3857 = vxor.u32 %v3855, 2147483648
    %v3858 = vmul.f32 %v3856, 1.442695
    %v3859 = vpow.pop %v3858
    %v3860 = vmul.f32 %v3857, 1.442695
    %v3861 = vpow.pop %v3860
    %v3862 = vadd.f32 %v3859, 1.0
    %v3863 = vadd.f32 %v3861, 1.0
    %v3864 = vrcp.pop %v3862
    %v3865 = vmul.f32 1.0, %v3864
    %v3866 = vrcp.pop %v3863
    %v3867 = vmul.f32 1.0, %v3866
    %v3868 = vadd.f32 %v3412, %v3566
    %v3869 = vadd.f32 %v3413, %v3568
    %v3870 = vxor.u32 %v3868, 2147483648
    %v3871 = vxor.u32 %v3869, 2147483648
    %v3872 = vmul.f32 %v3870, 1.442695
    %v3873 = vpow.pop %v3872
    %v3874 = vmul.f32 %v3871, 1.442695
    %v3875 = vpow.pop %v3874
    %v3876 = vadd.f32 %v3873, 1.0
    %v3877 = vadd.f32 %v3875, 1.0
    %v3878 = vrcp.pop %v3876
    %v3879 = vmul.f32 1.0, %v3878
    %v3880 = vrcp.pop %v3877
    %v3881 = vmul.f32 1.0, %v3880
    %v3882 = vmul.f32 %v3865, %v3637
    %v3883 = vmul.f32 %v3867, %v3639
    %v3884 = vadd.f32 %v3414, %v3882
    %v3885 = vadd.f32 %v3415, %v3883
    %v3886 = vtanh.pop %v3884
    %v3887 = vtanh.pop %v3885
    %v3888 = vsub.f32 1.0, %v3879
    %v3889 = vsub.f32 1.0, %v3881
    %v3890 = vmul.f32 %v3888, %v3886
    %v3891 = vmul.f32 %v3889, %v3887
    %v3892 = vmul.f32 %v3879, %v3424
    %v3893 = vmul.f32 %v3881, %v3425
    %v3894 = vadd.f32 %v3890, %v3892
    %v3895 = vadd.f32 %v3891, %v3893
    %v3898 = vrot.slane %v3708, 4
    %v3899 = vrot.slane %v3710, 4
    %v3902 = vadd.f32 %v3416, %v3898
    %v3903 = vadd.f32 %v3417, %v3899
    %v3904 = vxor.u32 %v3902, 2147483648
    %v3905 = vxor.u32 %v3903, 2147483648
    %v3906 = vmul.f32 %v3904, 1.442695
    %v3907 = vpow.pop %v3906
    %v3908 = vmul.f32 %v3905, 1.442695
    %v3909 = vpow.pop %v3908
    %v3910 = vadd.f32 %v3907, 1.0
    %v3911 = vadd.f32 %v3909, 1.0
    %v3912 = vrcp.pop %v3910
    %v3913 = vmul.f32 1.0, %v3912
    %v3914 = vrcp.pop %v3911
    %v3915 = vmul.f32 1.0, %v3914
    %v3918 = vrot.slane %v3779, 4
    %v3919 = vrot.slane %v3781, 4
    %v3922 = vadd.f32 %v3418, %v3918
    %v3923 = vadd.f32 %v3419, %v3919
    %v3924 = vxor.u32 %v3922, 2147483648
    %v3925 = vxor.u32 %v3923, 2147483648
    %v3926 = vmul.f32 %v3924, 1.442695
    %v3927 = vpow.pop %v3926
    %v3928 = vmul.f32 %v3925, 1.442695
    %v3929 = vpow.pop %v3928
    %v3930 = vadd.f32 %v3927, 1.0
    %v3931 = vadd.f32 %v3929, 1.0
    %v3932 = vrcp.pop %v3930
    %v3933 = vmul.f32 1.0, %v3932
    %v3934 = vrcp.pop %v3931
    %v3935 = vmul.f32 1.0, %v3934
    %v3938 = vrot.slane %v3850, 4
    %v3939 = vrot.slane %v3852, 4
    %v3942 = vmul.f32 %v3913, %v3938
    %v3943 = vmul.f32 %v3915, %v3939
    %v3944 = vadd.f32 %v3420, %v3942
    %v3945 = vadd.f32 %v3421, %v3943
    %v3946 = vtanh.pop %v3944
    %v3947 = vtanh.pop %v3945
    %v3948 = vsub.f32 1.0, %v3933
    %v3949 = vsub.f32 1.0, %v3935
    %v3950 = vmul.f32 %v3948, %v3946
    %v3951 = vmul.f32 %v3949, %v3947
    %v3954 = vrot.slane %v3408, 4
    %v3955 = vrot.slane %v3409, 4
    %v3958 = vmul.f32 %v3933, %v3954
    %v3959 = vmul.f32 %v3935, %v3955
    %v3960 = vadd.f32 %v3950, %v3958
    %v3961 = vadd.f32 %v3951, %v3959
    %v3962 = vld [vmem:[#allocation2 + $0x60] sm:$0xf0]
    %v3963 = vld [vmem:[#allocation2 + $0x68] sm:$0xf0]
    %v3964 = vld [vmem:[#allocation2 + $0x70] sm:$0xf0]
    %v3965 = vld [vmem:[#allocation2 + $0x78] sm:$0xf0]
    %v3966 = vld [vmem:[#allocation2 + $0x80] sm:$0xf0]
    %v3967 = vld [vmem:[#allocation2 + $0x88] sm:$0xf0]
    %v3968 = vld [vmem:[#allocation2 + $0xf0] sm:$0xf]
    %v3969 = vld [vmem:[#allocation2 + $0xf8] sm:$0xf]
    %v3970 = vld [vmem:[#allocation2 + $0x100] sm:$0xf]
    %v3971 = vld [vmem:[#allocation2 + $0x108] sm:$0xf]
    %v3972 = vld [vmem:[#allocation2 + $0x110] sm:$0xf]
    %v3973 = vld [vmem:[#allocation2 + $0x118] sm:$0xf]
    %3974 = vmatprep.subr.mxu0 %v1871
    %3975 = vmatpush1.msra.mxu0 %v1870
    %3976 = vmatprep.subr.mxu0 %v1877
    %3977 = vmatpush1.msra.mxu0 %v1876
    %3978 = vmatprep.subr.mxu0 %v1883
    %3979 = vmatpush1.msra.mxu0 %v1882
    %3980 = vmatprep.subr.mxu0 %v1889
    %3981 = vmatpush1.msra.mxu0 %v1888
    %3982 = vmatprep.subr.mxu0 %v1895
    %3983 = vmatpush1.msra.mxu0 %v1894
    %3984 = vmatprep.subr.mxu0 %v1901
    %3985 = vmatpush1.msra.mxu0 %v1900
    %3986 = vmatprep.subr.mxu0 %v1907
    %3987 = vmatpush1.msra.mxu0 %v1906
    %3988 = vmatprep.subr.mxu0 %v1913
    %3989 = vmatpush1.msra.mxu0 %v1912
    %3990 = vmatprep.subr.mxu0 %v1919
    %3991 = vmatpush1.msra.mxu0 %v1918
    %3992 = vmatprep.subr.mxu0 %v1925
    %3993 = vmatpush1.msra.mxu0 %v1924
    %3994 = vmatprep.subr.mxu0 %v1931
    %3995 = vmatpush1.msra.mxu0 %v1930
    %3996 = vmatprep.subr.mxu0 %v1937
    %3997 = vmatpush1.msra.mxu0 %v1936
    %3998 = vmatprep.subr.mxu0 %v1943
    %3999 = vmatpush1.msra.mxu0 %v1942
    %4000 = vmatprep.subr.mxu0 %v1949
    %4001 = vmatpush1.msra.mxu0 %v1948
    %4002 = vmatprep.subr.mxu0 %v1955
    %4003 = vmatpush1.msra.mxu0 %v1954
    %4004 = vmatprep.subr.mxu0 %v1961
    %4005 = vmatpush1.msra.mxu0 %v1960
    %4006 = vmatprep.subr.mxu0 %v1967
    %4007 = vmatpush1.msra.mxu0 %v1966
    %4008 = vmatprep.subr.mxu0 %v1973
    %4009 = vmatpush1.msra.mxu0 %v1972
    %4010 = vmatprep.subr.mxu0 %v1979
    %4011 = vmatpush1.msra.mxu0 %v1978
    %4012 = vmatprep.subr.mxu0 %v1985
    %4013 = vmatpush1.msra.mxu0 %v1984
    %4014 = vmatprep.subr.mxu0 %v1991
    %4015 = vmatpush1.msra.mxu0 %v1990
    %4016 = vmatprep.subr.mxu0 %v1997
    %4017 = vmatpush1.msra.mxu0 %v1996
    %4018 = vmatprep.subr.mxu0 %v2003
    %4019 = vmatpush1.msra.mxu0 %v2002
    %4020 = vmatprep.subr.mxu0 %v2009
    %4021 = vmatpush1.msra.mxu0 %v2008
    %4022 = vmatprep.subr.mxu0 %v2015
    %4023 = vmatpush1.msra.mxu0 %v2014
    %4024 = vmatprep.subr.mxu0 %v2021
    %4025 = vmatpush1.msra.mxu0 %v2020
    %4026 = vmatprep.subr.mxu0 %v2027
    %4027 = vmatpush1.msra.mxu0 %v2026
    %4028 = vmatprep.subr.mxu0 %v2033
    %4029 = vmatpush1.msra.mxu0 %v2032
    %4030 = vmatprep.subr.mxu0 %v2039
    %4031 = vmatpush1.msra.mxu0 %v2038
    %4032 = vmatprep.subr.mxu0 %v2045
    %4033 = vmatpush1.msra.mxu0 %v2044
    %4034 = vmatprep.subr.mxu0 %v2051
    %4035 = vmatpush1.msra.mxu0 %v2050
    %4036 = vmatprep.subr.mxu0 %v2057
    %4037 = vmatpush1.msra.mxu0 %v2056
    %4038 = vmatprep.mubr.f32.mxu0 %v3895
    %4039 = vmatmul.mubr.f32.gmra.mrb[0].mxu0 %v3894
    %v4040 = vpop.f32.mrb[0].mxu0
    %v4041 = vadd.f32 %v2272, %v4040
    %v4042 = vpop.f32.mrb[0].mxu0
    %v4043 = vadd.f32 %v2276, %v4042
    %4044 = vdwg.mxu0
    %4045 = vmatprep.subr.mxu0 %v1873
    %4046 = vmatpush1.msra.mxu0 %v1872
    %4047 = vmatprep.subr.mxu0 %v1879
    %4048 = vmatpush1.msra.mxu0 %v1878
    %4049 = vmatprep.subr.mxu0 %v1885
    %4050 = vmatpush1.msra.mxu0 %v1884
    %4051 = vmatprep.subr.mxu0 %v1891
    %4052 = vmatpush1.msra.mxu0 %v1890
    %4053 = vmatprep.subr.mxu0 %v1897
    %4054 = vmatpush1.msra.mxu0 %v1896
    %4055 = vmatprep.subr.mxu0 %v1903
    %4056 = vmatpush1.msra.mxu0 %v1902
    %4057 = vmatprep.subr.mxu0 %v1909
    %4058 = vmatpush1.msra.mxu0 %v1908
    %4059 = vmatprep.subr.mxu0 %v1915
    %4060 = vmatpush1.msra.mxu0 %v1914
    %4061 = vmatprep.subr.mxu0 %v1921
    %4062 = vmatpush1.msra.mxu0 %v1920
    %4063 = vmatprep.subr.mxu0 %v1927
    %4064 = vmatpush1.msra.mxu0 %v1926
    %4065 = vmatprep.subr.mxu0 %v1933
    %4066 = vmatpush1.msra.mxu0 %v1932
    %4067 = vmatprep.subr.mxu0 %v1939
    %4068 = vmatpush1.msra.mxu0 %v1938
    %4069 = vmatprep.subr.mxu0 %v1945
    %4070 = vmatpush1.msra.mxu0 %v1944
    %4071 = vmatprep.subr.mxu0 %v1951
    %4072 = vmatpush1.msra.mxu0 %v1950
    %4073 = vmatprep.subr.mxu0 %v1957
    %4074 = vmatpush1.msra.mxu0 %v1956
    %4075 = vmatprep.subr.mxu0 %v1963
    %4076 = vmatpush1.msra.mxu0 %v1962
    %4077 = vmatprep.subr.mxu0 %v1969
    %4078 = vmatpush1.msra.mxu0 %v1968
    %4079 = vmatprep.subr.mxu0 %v1975
    %4080 = vmatpush1.msra.mxu0 %v1974
    %4081 = vmatprep.subr.mxu0 %v1981
    %4082 = vmatpush1.msra.mxu0 %v1980
    %4083 = vmatprep.subr.mxu0 %v1987
    %4084 = vmatpush1.msra.mxu0 %v1986
    %4085 = vmatprep.subr.mxu0 %v1993
    %4086 = vmatpush1.msra.mxu0 %v1992
    %4087 = vmatprep.subr.mxu0 %v1999
    %4088 = vmatpush1.msra.mxu0 %v1998
    %4089 = vmatprep.subr.mxu0 %v2005
    %4090 = vmatpush1.msra.mxu0 %v2004
    %4091 = vmatprep.subr.mxu0 %v2011
    %4092 = vmatpush1.msra.mxu0 %v2010
    %4093 = vmatprep.subr.mxu0 %v2017
    %4094 = vmatpush1.msra.mxu0 %v2016
    %4095 = vmatprep.subr.mxu0 %v2023
    %4096 = vmatpush1.msra.mxu0 %v2022
    %4097 = vmatprep.subr.mxu0 %v2029
    %4098 = vmatpush1.msra.mxu0 %v2028
    %4099 = vmatprep.subr.mxu0 %v2035
    %4100 = vmatpush1.msra.mxu0 %v2034
    %4101 = vmatprep.subr.mxu0 %v2041
    %4102 = vmatpush1.msra.mxu0 %v2040
    %4103 = vmatprep.subr.mxu0 %v2047
    %4104 = vmatpush1.msra.mxu0 %v2046
    %4105 = vmatprep.subr.mxu0 %v2053
    %4106 = vmatpush1.msra.mxu0 %v2052
    %4107 = vmatprep.subr.mxu0 %v2059
    %4108 = vmatpush1.msra.mxu0 %v2058
    %4109 = vmatprep.mubr.f32.mxu0 %v3895
    %4110 = vmatmul.mubr.f32.gmra.mrb[0].mxu0 %v3894
    %v4111 = vpop.f32.mrb[0].mxu0
    %v4112 = vadd.f32 %v2280, %v4111
    %v4113 = vpop.f32.mrb[0].mxu0
    %v4114 = vadd.f32 %v2284, %v4113
    %4115 = vdwg.mxu0
    %4116 = vmatprep.subr.mxu0 %v1875
    %4117 = vmatpush1.msra.mxu0 %v1874
    %4118 = vmatprep.subr.mxu0 %v1881
    %4119 = vmatpush1.msra.mxu0 %v1880
    %4120 = vmatprep.subr.mxu0 %v1887
    %4121 = vmatpush1.msra.mxu0 %v1886
    %4122 = vmatprep.subr.mxu0 %v1893
    %4123 = vmatpush1.msra.mxu0 %v1892
    %4124 = vmatprep.subr.mxu0 %v1899
    %4125 = vmatpush1.msra.mxu0 %v1898
    %4126 = vmatprep.subr.mxu0 %v1905
    %4127 = vmatpush1.msra.mxu0 %v1904
    %4128 = vmatprep.subr.mxu0 %v1911
    %4129 = vmatpush1.msra.mxu0 %v1910
    %4130 = vmatprep.subr.mxu0 %v1917
    %4131 = vmatpush1.msra.mxu0 %v1916
    %4132 = vmatprep.subr.mxu0 %v1923
    %4133 = vmatpush1.msra.mxu0 %v1922
    %4134 = vmatprep.subr.mxu0 %v1929
    %4135 = vmatpush1.msra.mxu0 %v1928
    %4136 = vmatprep.subr.mxu0 %v1935
    %4137 = vmatpush1.msra.mxu0 %v1934
    %4138 = vmatprep.subr.mxu0 %v1941
    %4139 = vmatpush1.msra.mxu0 %v1940
    %4140 = vmatprep.subr.mxu0 %v1947
    %4141 = vmatpush1.msra.mxu0 %v1946
    %4142 = vmatprep.subr.mxu0 %v1953
    %4143 = vmatpush1.msra.mxu0 %v1952
    %4144 = vmatprep.subr.mxu0 %v1959
    %4145 = vmatpush1.msra.mxu0 %v1958
    %4146 = vmatprep.subr.mxu0 %v1965
    %4147 = vmatpush1.msra.mxu0 %v1964
    %4148 = vmatprep.subr.mxu0 %v1971
    %4149 = vmatpush1.msra.mxu0 %v1970
    %4150 = vmatprep.subr.mxu0 %v1977
    %4151 = vmatpush1.msra.mxu0 %v1976
    %4152 = vmatprep.subr.mxu0 %v1983
    %4153 = vmatpush1.msra.mxu0 %v1982
    %4154 = vmatprep.subr.mxu0 %v1989
    %4155 = vmatpush1.msra.mxu0 %v1988
    %4156 = vmatprep.subr.mxu0 %v1995
    %4157 = vmatpush1.msra.mxu0 %v1994
    %4158 = vmatprep.subr.mxu0 %v2001
    %4159 = vmatpush1.msra.mxu0 %v2000
    %4160 = vmatprep.subr.mxu0 %v2007
    %4161 = vmatpush1.msra.mxu0 %v2006
    %4162 = vmatprep.subr.mxu0 %v2013
    %4163 = vmatpush1.msra.mxu0 %v2012
    %4164 = vmatprep.subr.mxu0 %v2019
    %4165 = vmatpush1.msra.mxu0 %v2018
    %4166 = vmatprep.subr.mxu0 %v2025
    %4167 = vmatpush1.msra.mxu0 %v2024
    %4168 = vmatprep.subr.mxu0 %v2031
    %4169 = vmatpush1.msra.mxu0 %v2030
    %4170 = vmatprep.subr.mxu0 %v2037
    %4171 = vmatpush1.msra.mxu0 %v2036
    %4172 = vmatprep.subr.mxu0 %v2043
    %4173 = vmatpush1.msra.mxu0 %v2042
    %4174 = vmatprep.subr.mxu0 %v2049
    %4175 = vmatpush1.msra.mxu0 %v2048
    %4176 = vmatprep.subr.mxu0 %v2055
    %4177 = vmatpush1.msra.mxu0 %v2054
    %4178 = vmatprep.subr.mxu0 %v2061
    %4179 = vmatpush1.msra.mxu0 %v2060
    %4180 = vmatprep.mubr.f32.mxu0 %v3895
    %4181 = vmatmul.mubr.f32.gmra.mrb[0].mxu0 %v3894
    %v4182 = vpop.f32.mrb[0].mxu0
    %v4183 = vadd.f32 %v2288, %v4182
    %v4184 = vpop.f32.mrb[0].mxu0
    %v4185 = vadd.f32 %v2292, %v4184
    %4186 = vdwg.mxu0
    %v4189 = vrot.slane %v3960, 4
    %v4190 = vrot.slane %v3961, 4
    %4193 = vmatprep.subr.mxu0 %v2063
    %4194 = vmatpush1.msra.mxu0 %v2062
    %4195 = vmatprep.subr.mxu0 %v2069
    %4196 = vmatpush1.msra.mxu0 %v2068
    %4197 = vmatprep.subr.mxu0 %v2075
    %4198 = vmatpush1.msra.mxu0 %v2074
    %4199 = vmatprep.subr.mxu0 %v2081
    %4200 = vmatpush1.msra.mxu0 %v2080
    %4201 = vmatprep.subr.mxu0 %v2087
    %4202 = vmatpush1.msra.mxu0 %v2086
    %4203 = vmatprep.subr.mxu0 %v2093
    %4204 = vmatpush1.msra.mxu0 %v2092
    %4205 = vmatprep.subr.mxu0 %v2099
    %4206 = vmatpush1.msra.mxu0 %v2098
    %4207 = vmatprep.subr.mxu0 %v2105
    %4208 = vmatpush1.msra.mxu0 %v2104
    %4209 = vmatprep.subr.mxu0 %v2111
    %4210 = vmatpush1.msra.mxu0 %v2110
    %4211 = vmatprep.subr.mxu0 %v2117
    %4212 = vmatpush1.msra.mxu0 %v2116
    %4213 = vmatprep.subr.mxu0 %v2123
    %4214 = vmatpush1.msra.mxu0 %v2122
    %4215 = vmatprep.subr.mxu0 %v2129
    %4216 = vmatpush1.msra.mxu0 %v2128
    %4217 = vmatprep.subr.mxu0 %v2135
    %4218 = vmatpush1.msra.mxu0 %v2134
    %4219 = vmatprep.subr.mxu0 %v2141
    %4220 = vmatpush1.msra.mxu0 %v2140
    %4221 = vmatprep.subr.mxu0 %v2147
    %4222 = vmatpush1.msra.mxu0 %v2146
    %4223 = vmatprep.subr.mxu0 %v2153
    %4224 = vmatpush1.msra.mxu0 %v2152
    %4225 = vmatprep.subr.mxu0 %v2159
    %4226 = vmatpush1.msra.mxu0 %v2158
    %4227 = vmatprep.subr.mxu0 %v2165
    %4228 = vmatpush1.msra.mxu0 %v2164
    %4229 = vmatprep.subr.mxu0 %v2171
    %4230 = vmatpush1.msra.mxu0 %v2170
    %4231 = vmatprep.subr.mxu0 %v2177
    %4232 = vmatpush1.msra.mxu0 %v2176
    %4233 = vmatprep.subr.mxu0 %v2183
    %4234 = vmatpush1.msra.mxu0 %v2182
    %4235 = vmatprep.subr.mxu0 %v2189
    %4236 = vmatpush1.msra.mxu0 %v2188
    %4237 = vmatprep.subr.mxu0 %v2195
    %4238 = vmatpush1.msra.mxu0 %v2194
    %4239 = vmatprep.subr.mxu0 %v2201
    %4240 = vmatpush1.msra.mxu0 %v2200
    %4241 = vmatprep.subr.mxu0 %v2207
    %4242 = vmatpush1.msra.mxu0 %v2206
    %4243 = vmatprep.subr.mxu0 %v2213
    %4244 = vmatpush1.msra.mxu0 %v2212
    %4245 = vmatprep.subr.mxu0 %v2219
    %4246 = vmatpush1.msra.mxu0 %v2218
    %4247 = vmatprep.subr.mxu0 %v2225
    %4248 = vmatpush1.msra.mxu0 %v2224
    %4249 = vmatprep.subr.mxu0 %v2231
    %4250 = vmatpush1.msra.mxu0 %v2230
    %4251 = vmatprep.subr.mxu0 %v2237
    %4252 = vmatpush1.msra.mxu0 %v2236
    %4253 = vmatprep.subr.mxu0 %v2243
    %4254 = vmatpush1.msra.mxu0 %v2242
    %4255 = vmatprep.subr.mxu0 %v2249
    %4256 = vmatpush1.msra.mxu0 %v2248
    %4257 = vmatprep.mubr.f32.mxu0 %v4190
    %4258 = vmatmul.mubr.f32.gmra.mrb[0].mxu0 %v4189
    %v4259 = vpop.f32.mrb[0].mxu0
    %v4260 = vadd.f32 %v2516, %v4259
    %v4261 = vpop.f32.mrb[0].mxu0
    %v4262 = vadd.f32 %v2520, %v4261
    %4263 = vdwg.mxu0
    %4264 = vmatprep.subr.mxu0 %v2065
    %4265 = vmatpush1.msra.mxu0 %v2064
    %4266 = vmatprep.subr.mxu0 %v2071
    %4267 = vmatpush1.msra.mxu0 %v2070
    %4268 = vmatprep.subr.mxu0 %v2077
    %4269 = vmatpush1.msra.mxu0 %v2076
    %4270 = vmatprep.subr.mxu0 %v2083
    %4271 = vmatpush1.msra.mxu0 %v2082
    %4272 = vmatprep.subr.mxu0 %v2089
    %4273 = vmatpush1.msra.mxu0 %v2088
    %4274 = vmatprep.subr.mxu0 %v2095
    %4275 = vmatpush1.msra.mxu0 %v2094
    %4276 = vmatprep.subr.mxu0 %v2101
    %4277 = vmatpush1.msra.mxu0 %v2100
    %4278 = vmatprep.subr.mxu0 %v2107
    %4279 = vmatpush1.msra.mxu0 %v2106
    %4280 = vmatprep.subr.mxu0 %v2113
    %4281 = vmatpush1.msra.mxu0 %v2112
    %4282 = vmatprep.subr.mxu0 %v2119
    %4283 = vmatpush1.msra.mxu0 %v2118
    %4284 = vmatprep.subr.mxu0 %v2125
    %4285 = vmatpush1.msra.mxu0 %v2124
    %4286 = vmatprep.subr.mxu0 %v2131
    %4287 = vmatpush1.msra.mxu0 %v2130
    %4288 = vmatprep.subr.mxu0 %v2137
    %4289 = vmatpush1.msra.mxu0 %v2136
    %4290 = vmatprep.subr.mxu0 %v2143
    %4291 = vmatpush1.msra.mxu0 %v2142
    %4292 = vmatprep.subr.mxu0 %v2149
    %4293 = vmatpush1.msra.mxu0 %v2148
    %4294 = vmatprep.subr.mxu0 %v2155
    %4295 = vmatpush1.msra.mxu0 %v2154
    %4296 = vmatprep.subr.mxu0 %v2161
    %4297 = vmatpush1.msra.mxu0 %v2160
    %4298 = vmatprep.subr.mxu0 %v2167
    %4299 = vmatpush1.msra.mxu0 %v2166
    %4300 = vmatprep.subr.mxu0 %v2173
    %4301 = vmatpush1.msra.mxu0 %v2172
    %4302 = vmatprep.subr.mxu0 %v2179
    %4303 = vmatpush1.msra.mxu0 %v2178
    %4304 = vmatprep.subr.mxu0 %v2185
    %4305 = vmatpush1.msra.mxu0 %v2184
    %4306 = vmatprep.subr.mxu0 %v2191
    %4307 = vmatpush1.msra.mxu0 %v2190
    %4308 = vmatprep.subr.mxu0 %v2197
    %4309 = vmatpush1.msra.mxu0 %v2196
    %4310 = vmatprep.subr.mxu0 %v2203
    %4311 = vmatpush1.msra.mxu0 %v2202
    %4312 = vmatprep.subr.mxu0 %v2209
    %4313 = vmatpush1.msra.mxu0 %v2208
    %4314 = vmatprep.subr.mxu0 %v2215
    %4315 = vmatpush1.msra.mxu0 %v2214
    %4316 = vmatprep.subr.mxu0 %v2221
    %4317 = vmatpush1.msra.mxu0 %v2220
    %4318 = vmatprep.subr.mxu0 %v2227
    %4319 = vmatpush1.msra.mxu0 %v2226
    %4320 = vmatprep.subr.mxu0 %v2233
    %4321 = vmatpush1.msra.mxu0 %v2232
    %4322 = vmatprep.subr.mxu0 %v2239
    %4323 = vmatpush1.msra.mxu0 %v2238
    %4324 = vmatprep.subr.mxu0 %v2245
    %4325 = vmatpush1.msra.mxu0 %v2244
    %4326 = vmatprep.subr.mxu0 %v2251
    %4327 = vmatpush1.msra.mxu0 %v2250
    %4328 = vmatprep.mubr.f32.mxu0 %v4190
    %4329 = vmatmul.mubr.f32.gmra.mrb[0].mxu0 %v4189
    %v4330 = vpop.f32.mrb[0].mxu0
    %v4331 = vadd.f32 %v2524, %v4330
    %v4332 = vpop.f32.mrb[0].mxu0
    %v4333 = vadd.f32 %v2528, %v4332
    %4334 = vdwg.mxu0
    %4335 = vmatprep.subr.mxu0 %v2067
    %4336 = vmatpush1.msra.mxu0 %v2066
    %4337 = vmatprep.subr.mxu0 %v2073
    %4338 = vmatpush1.msra.mxu0 %v2072
    %4339 = vmatprep.subr.mxu0 %v2079
    %4340 = vmatpush1.msra.mxu0 %v2078
    %4341 = vmatprep.subr.mxu0 %v2085
    %4342 = vmatpush1.msra.mxu0 %v2084
    %4343 = vmatprep.subr.mxu0 %v2091
    %4344 = vmatpush1.msra.mxu0 %v2090
    %4345 = vmatprep.subr.mxu0 %v2097
    %4346 = vmatpush1.msra.mxu0 %v2096
    %4347 = vmatprep.subr.mxu0 %v2103
    %4348 = vmatpush1.msra.mxu0 %v2102
    %4349 = vmatprep.subr.mxu0 %v2109
    %4350 = vmatpush1.msra.mxu0 %v2108
    %4351 = vmatprep.subr.mxu0 %v2115
    %4352 = vmatpush1.msra.mxu0 %v2114
    %4353 = vmatprep.subr.mxu0 %v2121
    %4354 = vmatpush1.msra.mxu0 %v2120
    %4355 = vmatprep.subr.mxu0 %v2127
    %4356 = vmatpush1.msra.mxu0 %v2126
    %4357 = vmatprep.subr.mxu0 %v2133
    %4358 = vmatpush1.msra.mxu0 %v2132
    %4359 = vmatprep.subr.mxu0 %v2139
    %4360 = vmatpush1.msra.mxu0 %v2138
    %4361 = vmatprep.subr.mxu0 %v2145
    %4362 = vmatpush1.msra.mxu0 %v2144
    %4363 = vmatprep.subr.mxu0 %v2151
    %4364 = vmatpush1.msra.mxu0 %v2150
    %4365 = vmatprep.subr.mxu0 %v2157
    %4366 = vmatpush1.msra.mxu0 %v2156
    %4367 = vmatprep.subr.mxu0 %v2163
    %4368 = vmatpush1.msra.mxu0 %v2162
    %4369 = vmatprep.subr.mxu0 %v2169
    %4370 = vmatpush1.msra.mxu0 %v2168
    %4371 = vmatprep.subr.mxu0 %v2175
    %4372 = vmatpush1.msra.mxu0 %v2174
    %4373 = vmatprep.subr.mxu0 %v2181
    %4374 = vmatpush1.msra.mxu0 %v2180
    %4375 = vmatprep.subr.mxu0 %v2187
    %4376 = vmatpush1.msra.mxu0 %v2186
    %4377 = vmatprep.subr.mxu0 %v2193
    %4378 = vmatpush1.msra.mxu0 %v2192
    %4379 = vmatprep.subr.mxu0 %v2199
    %4380 = vmatpush1.msra.mxu0 %v2198
    %4381 = vmatprep.subr.mxu0 %v2205
    %4382 = vmatpush1.msra.mxu0 %v2204
    %4383 = vmatprep.subr.mxu0 %v2211
    %4384 = vmatpush1.msra.mxu0 %v2210
    %4385 = vmatprep.subr.mxu0 %v2217
    %4386 = vmatpush1.msra.mxu0 %v2216
    %4387 = vmatprep.subr.mxu0 %v2223
    %4388 = vmatpush1.msra.mxu0 %v2222
    %4389 = vmatprep.subr.mxu0 %v2229
    %4390 = vmatpush1.msra.mxu0 %v2228
    %4391 = vmatprep.subr.mxu0 %v2235
    %4392 = vmatpush1.msra.mxu0 %v2234
    %4393 = vmatprep.subr.mxu0 %v2241
    %4394 = vmatpush1.msra.mxu0 %v2240
    %4395 = vmatprep.subr.mxu0 %v2247
    %4396 = vmatpush1.msra.mxu0 %v2246
    %4397 = vmatprep.subr.mxu0 %v2253
    %4398 = vmatpush1.msra.mxu0 %v2252
    %4399 = vmatprep.mubr.f32.mxu0 %v4190
    %4400 = vmatmul.mubr.f32.gmra.mrb[0].mxu0 %v4189
    %v4401 = vpop.f32.mrb[0].mxu0
    %v4402 = vadd.f32 %v2532, %v4401
    %v4403 = vpop.f32.mrb[0].mxu0
    %v4404 = vadd.f32 %v2536, %v4403
    %4405 = vdwg.mxu0
    %v4408 = vrot.slane %v4041, 4
    %v4409 = vrot.slane %v4043, 4
    %v4412 = vadd.f32 %v3962, %v4408
    %v4413 = vadd.f32 %v3963, %v4409
    %v4414 = vxor.u32 %v4412, 2147483648
    %v4415 = vxor.u32 %v4413, 2147483648
    %v4416 = vmul.f32 %v4414, 1.442695
    %v4417 = vpow.pop %v4416
    %v4418 = vmul.f32 %v4415, 1.442695
    %v4419 = vpow.pop %v4418
    %v4420 = vadd.f32 %v4417, 1.0
    %v4421 = vadd.f32 %v4419, 1.0
    %v4422 = vrcp.pop %v4420
    %v4423 = vmul.f32 1.0, %v4422
    %v4424 = vrcp.pop %v4421
    %v4425 = vmul.f32 1.0, %v4424
    %v4428 = vrot.slane %v4112, 4
    %v4429 = vrot.slane %v4114, 4
    %v4432 = vadd.f32 %v3964, %v4428
    %v4433 = vadd.f32 %v3965, %v4429
    %v4434 = vxor.u32 %v4432, 2147483648
    %v4435 = vxor.u32 %v4433, 2147483648
    %v4436 = vmul.f32 %v4434, 1.442695
    %v4437 = vpow.pop %v4436
    %v4438 = vmul.f32 %v4435, 1.442695
    %v4439 = vpow.pop %v4438
    %v4440 = vadd.f32 %v4437, 1.0
    %v4441 = vadd.f32 %v4439, 1.0
    %v4442 = vrcp.pop %v4440
    %v4443 = vmul.f32 1.0, %v4442
    %v4444 = vrcp.pop %v4441
    %v4445 = vmul.f32 1.0, %v4444
    %v4448 = vrot.slane %v4183, 4
    %v4449 = vrot.slane %v4185, 4
    %v4452 = vmul.f32 %v4423, %v4448
    %v4453 = vmul.f32 %v4425, %v4449
    %v4454 = vadd.f32 %v3966, %v4452
    %v4455 = vadd.f32 %v3967, %v4453
    %v4456 = vtanh.pop %v4454
    %v4457 = vtanh.pop %v4455
    %v4458 = vsub.f32 1.0, %v4443
    %v4459 = vsub.f32 1.0, %v4445
    %v4460 = vmul.f32 %v4458, %v4456
    %v4461 = vmul.f32 %v4459, %v4457
    %v4464 = vrot.slane %v3894, 4
    %v4465 = vrot.slane %v3895, 4
    %v4468 = vmul.f32 %v4443, %v4464
    %v4469 = vmul.f32 %v4445, %v4465
    %v4470 = vadd.f32 %v4460, %v4468
    %v4471 = vadd.f32 %v4461, %v4469
    %v4472 = vadd.f32 %v3968, %v4260
    %v4473 = vadd.f32 %v3969, %v4262
    %v4474 = vxor.u32 %v4472, 2147483648
    %v4475 = vxor.u32 %v4473, 2147483648
    %v4476 = vmul.f32 %v4474, 1.442695
    %v4477 = vpow.pop %v4476
    %v4478 = vmul.f32 %v4475, 1.442695
    %v4479 = vpow.pop %v4478
    %v4480 = vadd.f32 %v4477, 1.0
    %v4481 = vadd.f32 %v4479, 1.0
    %v4482 = vrcp.pop %v4480
    %v4483 = vmul.f32 1.0, %v4482
    %v4484 = vrcp.pop %v4481
    %v4485 = vmul.f32 1.0, %v4484
    %v4486 = vadd.f32 %v3970, %v4331
    %v4487 = vadd.f32 %v3971, %v4333
    %v4488 = vxor.u32 %v4486, 2147483648
    %v4489 = vxor.u32 %v4487, 2147483648
    %v4490 = vmul.f32 %v4488, 1.442695
    %v4491 = vpow.pop %v4490
    %v4492 = vmul.f32 %v4489, 1.442695
    %v4493 = vpow.pop %v4492
    %v4494 = vadd.f32 %v4491, 1.0
    %v4495 = vadd.f32 %v4493, 1.0
    %v4496 = vrcp.pop %v4494
    %v4497 = vmul.f32 1.0, %v4496
    %v4498 = vrcp.pop %v4495
    %v4499 = vmul.f32 1.0, %v4498
    %v4500 = vmul.f32 %v4483, %v4402
    %v4501 = vmul.f32 %v4485, %v4404
    %v4502 = vadd.f32 %v3972, %v4500
    %v4503 = vadd.f32 %v3973, %v4501
    %v4504 = vtanh.pop %v4502
    %v4505 = vtanh.pop %v4503
    %v4506 = vsub.f32 1.0, %v4497
    %v4507 = vsub.f32 1.0, %v4499
    %v4508 = vmul.f32 %v4506, %v4504
    %v4509 = vmul.f32 %v4507, %v4505
    %v4510 = vmul.f32 %v4497, %v4189
    %v4511 = vmul.f32 %v4499, %v4190
    %v4512 = vadd.f32 %v4508, %v4510
    %v4513 = vadd.f32 %v4509, %v4511
    %v4514 = vld [vmem:[#allocation2 + $0xc0] sm:$0xf]
    %v4515 = vld [vmem:[#allocation2 + $0xc8] sm:$0xf]
    %v4516 = vld [vmem:[#allocation2 + $0xd0] sm:$0xf]
    %v4517 = vld [vmem:[#allocation2 + $0xd8] sm:$0xf]
    %v4518 = vld [vmem:[#allocation2 + $0xe0] sm:$0xf]
    %v4519 = vld [vmem:[#allocation2 + $0xe8] sm:$0xf]
    %v4520 = vld [vmem:[#allocation2 + $0x90] sm:$0xf0]
    %v4521 = vld [vmem:[#allocation2 + $0x98] sm:$0xf0]
    %v4522 = vld [vmem:[#allocation2 + $0xa0] sm:$0xf0]
    %v4523 = vld [vmem:[#allocation2 + $0xa8] sm:$0xf0]
    %v4524 = vld [vmem:[#allocation2 + $0xb0] sm:$0xf0]
    %v4525 = vld [vmem:[#allocation2 + $0xb8] sm:$0xf0]
    %v4528 = vrot.slane %v4470, 4
    %v4529 = vrot.slane %v4471, 4
    %4532 = vmatprep.subr.mxu0 %v1871
    %4533 = vmatpush1.msra.mxu0 %v1870
    %4534 = vmatprep.subr.mxu0 %v1877
    %4535 = vmatpush1.msra.mxu0 %v1876
    %4536 = vmatprep.subr.mxu0 %v1883
    %4537 = vmatpush1.msra.mxu0 %v1882
    %4538 = vmatprep.subr.mxu0 %v1889
    %4539 = vmatpush1.msra.mxu0 %v1888
    %4540 = vmatprep.subr.mxu0 %v1895
    %4541 = vmatpush1.msra.mxu0 %v1894
    %4542 = vmatprep.subr.mxu0 %v1901
    %4543 = vmatpush1.msra.mxu0 %v1900
    %4544 = vmatprep.subr.mxu0 %v1907
    %4545 = vmatpush1.msra.mxu0 %v1906
    %4546 = vmatprep.subr.mxu0 %v1913
    %4547 = vmatpush1.msra.mxu0 %v1912
    %4548 = vmatprep.subr.mxu0 %v1919
    %4549 = vmatpush1.msra.mxu0 %v1918
    %4550 = vmatprep.subr.mxu0 %v1925
    %4551 = vmatpush1.msra.mxu0 %v1924
    %4552 = vmatprep.subr.mxu0 %v1931
    %4553 = vmatpush1.msra.mxu0 %v1930
    %4554 = vmatprep.subr.mxu0 %v1937
    %4555 = vmatpush1.msra.mxu0 %v1936
    %4556 = vmatprep.subr.mxu0 %v1943
    %4557 = vmatpush1.msra.mxu0 %v1942
    %4558 = vmatprep.subr.mxu0 %v1949
    %4559 = vmatpush1.msra.mxu0 %v1948
    %4560 = vmatprep.subr.mxu0 %v1955
    %4561 = vmatpush1.msra.mxu0 %v1954
    %4562 = vmatprep.subr.mxu0 %v1961
    %4563 = vmatpush1.msra.mxu0 %v1960
    %4564 = vmatprep.subr.mxu0 %v1967
    %4565 = vmatpush1.msra.mxu0 %v1966
    %4566 = vmatprep.subr.mxu0 %v1973
    %4567 = vmatpush1.msra.mxu0 %v1972
    %4568 = vmatprep.subr.mxu0 %v1979
    %4569 = vmatpush1.msra.mxu0 %v1978
    %4570 = vmatprep.subr.mxu0 %v1985
    %4571 = vmatpush1.msra.mxu0 %v1984
    %4572 = vmatprep.subr.mxu0 %v1991
    %4573 = vmatpush1.msra.mxu0 %v1990
    %4574 = vmatprep.subr.mxu0 %v1997
    %4575 = vmatpush1.msra.mxu0 %v1996
    %4576 = vmatprep.subr.mxu0 %v2003
    %4577 = vmatpush1.msra.mxu0 %v2002
    %4578 = vmatprep.subr.mxu0 %v2009
    %4579 = vmatpush1.msra.mxu0 %v2008
    %4580 = vmatprep.subr.mxu0 %v2015
    %4581 = vmatpush1.msra.mxu0 %v2014
    %4582 = vmatprep.subr.mxu0 %v2021
    %4583 = vmatpush1.msra.mxu0 %v2020
    %4584 = vmatprep.subr.mxu0 %v2027
    %4585 = vmatpush1.msra.mxu0 %v2026
    %4586 = vmatprep.subr.mxu0 %v2033
    %4587 = vmatpush1.msra.mxu0 %v2032
    %4588 = vmatprep.subr.mxu0 %v2039
    %4589 = vmatpush1.msra.mxu0 %v2038
    %4590 = vmatprep.subr.mxu0 %v2045
    %4591 = vmatpush1.msra.mxu0 %v2044
    %4592 = vmatprep.subr.mxu0 %v2051
    %4593 = vmatpush1.msra.mxu0 %v2050
    %4594 = vmatprep.subr.mxu0 %v2057
    %4595 = vmatpush1.msra.mxu0 %v2056
    %4596 = vmatprep.mubr.f32.mxu0 %v4529
    %4597 = vmatmul.mubr.f32.gmra.mrb[0].mxu0 %v4528
    %v4598 = vpop.f32.mrb[0].mxu0
    %v4599 = vadd.f32 %v2272, %v4598
    %v4600 = vpop.f32.mrb[0].mxu0
    %v4601 = vadd.f32 %v2276, %v4600
    %4602 = vdwg.mxu0
    %4603 = vmatprep.subr.mxu0 %v1873
    %4604 = vmatpush1.msra.mxu0 %v1872
    %4605 = vmatprep.subr.mxu0 %v1879
    %4606 = vmatpush1.msra.mxu0 %v1878
    %4607 = vmatprep.subr.mxu0 %v1885
    %4608 = vmatpush1.msra.mxu0 %v1884
    %4609 = vmatprep.subr.mxu0 %v1891
    %4610 = vmatpush1.msra.mxu0 %v1890
    %4611 = vmatprep.subr.mxu0 %v1897
    %4612 = vmatpush1.msra.mxu0 %v1896
    %4613 = vmatprep.subr.mxu0 %v1903
    %4614 = vmatpush1.msra.mxu0 %v1902
    %4615 = vmatprep.subr.mxu0 %v1909
    %4616 = vmatpush1.msra.mxu0 %v1908
    %4617 = vmatprep.subr.mxu0 %v1915
    %4618 = vmatpush1.msra.mxu0 %v1914
    %4619 = vmatprep.subr.mxu0 %v1921
    %4620 = vmatpush1.msra.mxu0 %v1920
    %4621 = vmatprep.subr.mxu0 %v1927
    %4622 = vmatpush1.msra.mxu0 %v1926
    %4623 = vmatprep.subr.mxu0 %v1933
    %4624 = vmatpush1.msra.mxu0 %v1932
    %4625 = vmatprep.subr.mxu0 %v1939
    %4626 = vmatpush1.msra.mxu0 %v1938
    %4627 = vmatprep.subr.mxu0 %v1945
    %4628 = vmatpush1.msra.mxu0 %v1944
    %4629 = vmatprep.subr.mxu0 %v1951
    %4630 = vmatpush1.msra.mxu0 %v1950
    %4631 = vmatprep.subr.mxu0 %v1957
    %4632 = vmatpush1.msra.mxu0 %v1956
    %4633 = vmatprep.subr.mxu0 %v1963
    %4634 = vmatpush1.msra.mxu0 %v1962
    %4635 = vmatprep.subr.mxu0 %v1969
    %4636 = vmatpush1.msra.mxu0 %v1968
    %4637 = vmatprep.subr.mxu0 %v1975
    %4638 = vmatpush1.msra.mxu0 %v1974
    %4639 = vmatprep.subr.mxu0 %v1981
    %4640 = vmatpush1.msra.mxu0 %v1980
    %4641 = vmatprep.subr.mxu0 %v1987
    %4642 = vmatpush1.msra.mxu0 %v1986
    %4643 = vmatprep.subr.mxu0 %v1993
    %4644 = vmatpush1.msra.mxu0 %v1992
    %4645 = vmatprep.subr.mxu0 %v1999
    %4646 = vmatpush1.msra.mxu0 %v1998
    %4647 = vmatprep.subr.mxu0 %v2005
    %4648 = vmatpush1.msra.mxu0 %v2004
    %4649 = vmatprep.subr.mxu0 %v2011
    %4650 = vmatpush1.msra.mxu0 %v2010
    %4651 = vmatprep.subr.mxu0 %v2017
    %4652 = vmatpush1.msra.mxu0 %v2016
    %4653 = vmatprep.subr.mxu0 %v2023
    %4654 = vmatpush1.msra.mxu0 %v2022
    %4655 = vmatprep.subr.mxu0 %v2029
    %4656 = vmatpush1.msra.mxu0 %v2028
    %4657 = vmatprep.subr.mxu0 %v2035
    %4658 = vmatpush1.msra.mxu0 %v2034
    %4659 = vmatprep.subr.mxu0 %v2041
    %4660 = vmatpush1.msra.mxu0 %v2040
    %4661 = vmatprep.subr.mxu0 %v2047
    %4662 = vmatpush1.msra.mxu0 %v2046
    %4663 = vmatprep.subr.mxu0 %v2053
    %4664 = vmatpush1.msra.mxu0 %v2052
    %4665 = vmatprep.subr.mxu0 %v2059
    %4666 = vmatpush1.msra.mxu0 %v2058
    %4667 = vmatprep.mubr.f32.mxu0 %v4529
    %4668 = vmatmul.mubr.f32.gmra.mrb[0].mxu0 %v4528
    %v4669 = vpop.f32.mrb[0].mxu0
    %v4670 = vadd.f32 %v2280, %v4669
    %v4671 = vpop.f32.mrb[0].mxu0
    %v4672 = vadd.f32 %v2284, %v4671
    %4673 = vdwg.mxu0
    %4674 = vmatprep.subr.mxu0 %v1875
    %4675 = vmatpush1.msra.mxu0 %v1874
    %4676 = vmatprep.subr.mxu0 %v1881
    %4677 = vmatpush1.msra.mxu0 %v1880
    %4678 = vmatprep.subr.mxu0 %v1887
    %4679 = vmatpush1.msra.mxu0 %v1886
    %4680 = vmatprep.subr.mxu0 %v1893
    %4681 = vmatpush1.msra.mxu0 %v1892
    %4682 = vmatprep.subr.mxu0 %v1899
    %4683 = vmatpush1.msra.mxu0 %v1898
    %4684 = vmatprep.subr.mxu0 %v1905
    %4685 = vmatpush1.msra.mxu0 %v1904
    %4686 = vmatprep.subr.mxu0 %v1911
    %4687 = vmatpush1.msra.mxu0 %v1910
    %4688 = vmatprep.subr.mxu0 %v1917
    %4689 = vmatpush1.msra.mxu0 %v1916
    %4690 = vmatprep.subr.mxu0 %v1923
    %4691 = vmatpush1.msra.mxu0 %v1922
    %4692 = vmatprep.subr.mxu0 %v1929
    %4693 = vmatpush1.msra.mxu0 %v1928
    %4694 = vmatprep.subr.mxu0 %v1935
    %4695 = vmatpush1.msra.mxu0 %v1934
    %4696 = vmatprep.subr.mxu0 %v1941
    %4697 = vmatpush1.msra.mxu0 %v1940
    %4698 = vmatprep.subr.mxu0 %v1947
    %4699 = vmatpush1.msra.mxu0 %v1946
    %4700 = vmatprep.subr.mxu0 %v1953
    %4701 = vmatpush1.msra.mxu0 %v1952
    %4702 = vmatprep.subr.mxu0 %v1959
    %4703 = vmatpush1.msra.mxu0 %v1958
    %4704 = vmatprep.subr.mxu0 %v1965
    %4705 = vmatpush1.msra.mxu0 %v1964
    %4706 = vmatprep.subr.mxu0 %v1971
    %4707 = vmatpush1.msra.mxu0 %v1970
    %4708 = vmatprep.subr.mxu0 %v1977
    %4709 = vmatpush1.msra.mxu0 %v1976
    %4710 = vmatprep.subr.mxu0 %v1983
    %4711 = vmatpush1.msra.mxu0 %v1982
    %4712 = vmatprep.subr.mxu0 %v1989
    %4713 = vmatpush1.msra.mxu0 %v1988
    %4714 = vmatprep.subr.mxu0 %v1995
    %4715 = vmatpush1.msra.mxu0 %v1994
    %4716 = vmatprep.subr.mxu0 %v2001
    %4717 = vmatpush1.msra.mxu0 %v2000
    %4718 = vmatprep.subr.mxu0 %v2007
    %4719 = vmatpush1.msra.mxu0 %v2006
    %4720 = vmatprep.subr.mxu0 %v2013
    %4721 = vmatpush1.msra.mxu0 %v2012
    %4722 = vmatprep.subr.mxu0 %v2019
    %4723 = vmatpush1.msra.mxu0 %v2018
    %4724 = vmatprep.subr.mxu0 %v2025
    %4725 = vmatpush1.msra.mxu0 %v2024
    %4726 = vmatprep.subr.mxu0 %v2031
    %4727 = vmatpush1.msra.mxu0 %v2030
    %4728 = vmatprep.subr.mxu0 %v2037
    %4729 = vmatpush1.msra.mxu0 %v2036
    %4730 = vmatprep.subr.mxu0 %v2043
    %4731 = vmatpush1.msra.mxu0 %v2042
    %4732 = vmatprep.subr.mxu0 %v2049
    %4733 = vmatpush1.msra.mxu0 %v2048
    %4734 = vmatprep.subr.mxu0 %v2055
    %4735 = vmatpush1.msra.mxu0 %v2054
    %4736 = vmatprep.subr.mxu0 %v2061
    %4737 = vmatpush1.msra.mxu0 %v2060
    %4738 = vmatprep.mubr.f32.mxu0 %v4529
    %4739 = vmatmul.mubr.f32.gmra.mrb[0].mxu0 %v4528
    %v4740 = vpop.f32.mrb[0].mxu0
    %v4741 = vadd.f32 %v2288, %v4740
    %v4742 = vpop.f32.mrb[0].mxu0
    %v4743 = vadd.f32 %v2292, %v4742
    %4744 = vdwg.mxu0
    %4745 = vmatprep.subr.mxu0 %v2063
    %4746 = vmatpush1.msra.mxu0 %v2062
    %4747 = vmatprep.subr.mxu0 %v2069
    %4748 = vmatpush1.msra.mxu0 %v2068
    %4749 = vmatprep.subr.mxu0 %v2075
    %4750 = vmatpush1.msra.mxu0 %v2074
    %4751 = vmatprep.subr.mxu0 %v2081
    %4752 = vmatpush1.msra.mxu0 %v2080
    %4753 = vmatprep.subr.mxu0 %v2087
    %4754 = vmatpush1.msra.mxu0 %v2086
    %4755 = vmatprep.subr.mxu0 %v2093
    %4756 = vmatpush1.msra.mxu0 %v2092
    %4757 = vmatprep.subr.mxu0 %v2099
    %4758 = vmatpush1.msra.mxu0 %v2098
    %4759 = vmatprep.subr.mxu0 %v2105
    %4760 = vmatpush1.msra.mxu0 %v2104
    %4761 = vmatprep.subr.mxu0 %v2111
    %4762 = vmatpush1.msra.mxu0 %v2110
    %4763 = vmatprep.subr.mxu0 %v2117
    %4764 = vmatpush1.msra.mxu0 %v2116
    %4765 = vmatprep.subr.mxu0 %v2123
    %4766 = vmatpush1.msra.mxu0 %v2122
    %4767 = vmatprep.subr.mxu0 %v2129
    %4768 = vmatpush1.msra.mxu0 %v2128
    %4769 = vmatprep.subr.mxu0 %v2135
    %4770 = vmatpush1.msra.mxu0 %v2134
    %4771 = vmatprep.subr.mxu0 %v2141
    %4772 = vmatpush1.msra.mxu0 %v2140
    %4773 = vmatprep.subr.mxu0 %v2147
    %4774 = vmatpush1.msra.mxu0 %v2146
    %4775 = vmatprep.subr.mxu0 %v2153
    %4776 = vmatpush1.msra.mxu0 %v2152
    %4777 = vmatprep.subr.mxu0 %v2159
    %4778 = vmatpush1.msra.mxu0 %v2158
    %4779 = vmatprep.subr.mxu0 %v2165
    %4780 = vmatpush1.msra.mxu0 %v2164
    %4781 = vmatprep.subr.mxu0 %v2171
    %4782 = vmatpush1.msra.mxu0 %v2170
    %4783 = vmatprep.subr.mxu0 %v2177
    %4784 = vmatpush1.msra.mxu0 %v2176
    %4785 = vmatprep.subr.mxu0 %v2183
    %4786 = vmatpush1.msra.mxu0 %v2182
    %4787 = vmatprep.subr.mxu0 %v2189
    %4788 = vmatpush1.msra.mxu0 %v2188
    %4789 = vmatprep.subr.mxu0 %v2195
    %4790 = vmatpush1.msra.mxu0 %v2194
    %4791 = vmatprep.subr.mxu0 %v2201
    %4792 = vmatpush1.msra.mxu0 %v2200
    %4793 = vmatprep.subr.mxu0 %v2207
    %4794 = vmatpush1.msra.mxu0 %v2206
    %4795 = vmatprep.subr.mxu0 %v2213
    %4796 = vmatpush1.msra.mxu0 %v2212
    %4797 = vmatprep.subr.mxu0 %v2219
    %4798 = vmatpush1.msra.mxu0 %v2218
    %4799 = vmatprep.subr.mxu0 %v2225
    %4800 = vmatpush1.msra.mxu0 %v2224
    %4801 = vmatprep.subr.mxu0 %v2231
    %4802 = vmatpush1.msra.mxu0 %v2230
    %4803 = vmatprep.subr.mxu0 %v2237
    %4804 = vmatpush1.msra.mxu0 %v2236
    %4805 = vmatprep.subr.mxu0 %v2243
    %4806 = vmatpush1.msra.mxu0 %v2242
    %4807 = vmatprep.subr.mxu0 %v2249
    %4808 = vmatpush1.msra.mxu0 %v2248
    %4809 = vmatprep.mubr.f32.mxu0 %v4513
    %4810 = vmatmul.mubr.f32.gmra.mrb[0].mxu0 %v4512
    %v4811 = vpop.f32.mrb[0].mxu0
    %v4812 = vadd.f32 %v2516, %v4811
    %v4813 = vpop.f32.mrb[0].mxu0
    %v4814 = vadd.f32 %v2520, %v4813
    %4815 = vdwg.mxu0
    %4816 = vmatprep.subr.mxu0 %v2065
    %4817 = vmatpush1.msra.mxu0 %v2064
    %4818 = vmatprep.subr.mxu0 %v2071
    %4819 = vmatpush1.msra.mxu0 %v2070
    %4820 = vmatprep.subr.mxu0 %v2077
    %4821 = vmatpush1.msra.mxu0 %v2076
    %4822 = vmatprep.subr.mxu0 %v2083
    %4823 = vmatpush1.msra.mxu0 %v2082
    %4824 = vmatprep.subr.mxu0 %v2089
    %4825 = vmatpush1.msra.mxu0 %v2088
    %4826 = vmatprep.subr.mxu0 %v2095
    %4827 = vmatpush1.msra.mxu0 %v2094
    %4828 = vmatprep.subr.mxu0 %v2101
    %4829 = vmatpush1.msra.mxu0 %v2100
    %4830 = vmatprep.subr.mxu0 %v2107
    %4831 = vmatpush1.msra.mxu0 %v2106
    %4832 = vmatprep.subr.mxu0 %v2113
    %4833 = vmatpush1.msra.mxu0 %v2112
    %4834 = vmatprep.subr.mxu0 %v2119
    %4835 = vmatpush1.msra.mxu0 %v2118
    %4836 = vmatprep.subr.mxu0 %v2125
    %4837 = vmatpush1.msra.mxu0 %v2124
    %4838 = vmatprep.subr.mxu0 %v2131
    %4839 = vmatpush1.msra.mxu0 %v2130
    %4840 = vmatprep.subr.mxu0 %v2137
    %4841 = vmatpush1.msra.mxu0 %v2136
    %4842 = vmatprep.subr.mxu0 %v2143
    %4843 = vmatpush1.msra.mxu0 %v2142
    %4844 = vmatprep.subr.mxu0 %v2149
    %4845 = vmatpush1.msra.mxu0 %v2148
    %4846 = vmatprep.subr.mxu0 %v2155
    %4847 = vmatpush1.msra.mxu0 %v2154
    %4848 = vmatprep.subr.mxu0 %v2161
    %4849 = vmatpush1.msra.mxu0 %v2160
    %4850 = vmatprep.subr.mxu0 %v2167
    %4851 = vmatpush1.msra.mxu0 %v2166
    %4852 = vmatprep.subr.mxu0 %v2173
    %4853 = vmatpush1.msra.mxu0 %v2172
    %4854 = vmatprep.subr.mxu0 %v2179
    %4855 = vmatpush1.msra.mxu0 %v2178
    %4856 = vmatprep.subr.mxu0 %v2185
    %4857 = vmatpush1.msra.mxu0 %v2184
    %4858 = vmatprep.subr.mxu0 %v2191
    %4859 = vmatpush1.msra.mxu0 %v2190
    %4860 = vmatprep.subr.mxu0 %v2197
    %4861 = vmatpush1.msra.mxu0 %v2196
    %4862 = vmatprep.subr.mxu0 %v2203
    %4863 = vmatpush1.msra.mxu0 %v2202
    %4864 = vmatprep.subr.mxu0 %v2209
    %4865 = vmatpush1.msra.mxu0 %v2208
    %4866 = vmatprep.subr.mxu0 %v2215
    %4867 = vmatpush1.msra.mxu0 %v2214
    %4868 = vmatprep.subr.mxu0 %v2221
    %4869 = vmatpush1.msra.mxu0 %v2220
    %4870 = vmatprep.subr.mxu0 %v2227
    %4871 = vmatpush1.msra.mxu0 %v2226
    %4872 = vmatprep.subr.mxu0 %v2233
    %4873 = vmatpush1.msra.mxu0 %v2232
    %4874 = vmatprep.subr.mxu0 %v2239
    %4875 = vmatpush1.msra.mxu0 %v2238
    %4876 = vmatprep.subr.mxu0 %v2245
    %4877 = vmatpush1.msra.mxu0 %v2244
    %4878 = vmatprep.subr.mxu0 %v2251
    %4879 = vmatpush1.msra.mxu0 %v2250
    %4880 = vmatprep.mubr.f32.mxu0 %v4513
    %4881 = vmatmul.mubr.f32.gmra.mrb[0].mxu0 %v4512
    %v4882 = vpop.f32.mrb[0].mxu0
    %v4883 = vadd.f32 %v2524, %v4882
    %v4884 = vpop.f32.mrb[0].mxu0
    %v4885 = vadd.f32 %v2528, %v4884
    %4886 = vdwg.mxu0
    %4887 = vmatprep.subr.mxu0 %v2067
    %4888 = vmatpush1.msra.mxu0 %v2066
    %4889 = vmatprep.subr.mxu0 %v2073
    %4890 = vmatpush1.msra.mxu0 %v2072
    %4891 = vmatprep.subr.mxu0 %v2079
    %4892 = vmatpush1.msra.mxu0 %v2078
    %4893 = vmatprep.subr.mxu0 %v2085
    %4894 = vmatpush1.msra.mxu0 %v2084
    %4895 = vmatprep.subr.mxu0 %v2091
    %4896 = vmatpush1.msra.mxu0 %v2090
    %4897 = vmatprep.subr.mxu0 %v2097
    %4898 = vmatpush1.msra.mxu0 %v2096
    %4899 = vmatprep.subr.mxu0 %v2103
    %4900 = vmatpush1.msra.mxu0 %v2102
    %4901 = vmatprep.subr.mxu0 %v2109
    %4902 = vmatpush1.msra.mxu0 %v2108
    %4903 = vmatprep.subr.mxu0 %v2115
    %4904 = vmatpush1.msra.mxu0 %v2114
    %4905 = vmatprep.subr.mxu0 %v2121
    %4906 = vmatpush1.msra.mxu0 %v2120
    %4907 = vmatprep.subr.mxu0 %v2127
    %4908 = vmatpush1.msra.mxu0 %v2126
    %4909 = vmatprep.subr.mxu0 %v2133
    %4910 = vmatpush1.msra.mxu0 %v2132
    %4911 = vmatprep.subr.mxu0 %v2139
    %4912 = vmatpush1.msra.mxu0 %v2138
    %4913 = vmatprep.subr.mxu0 %v2145
    %4914 = vmatpush1.msra.mxu0 %v2144
    %4915 = vmatprep.subr.mxu0 %v2151
    %4916 = vmatpush1.msra.mxu0 %v2150
    %4917 = vmatprep.subr.mxu0 %v2157
    %4918 = vmatpush1.msra.mxu0 %v2156
    %4919 = vmatprep.subr.mxu0 %v2163
    %4920 = vmatpush1.msra.mxu0 %v2162
    %4921 = vmatprep.subr.mxu0 %v2169
    %4922 = vmatpush1.msra.mxu0 %v2168
    %4923 = vmatprep.subr.mxu0 %v2175
    %4924 = vmatpush1.msra.mxu0 %v2174
    %4925 = vmatprep.subr.mxu0 %v2181
    %4926 = vmatpush1.msra.mxu0 %v2180
    %4927 = vmatprep.subr.mxu0 %v2187
    %4928 = vmatpush1.msra.mxu0 %v2186
    %4929 = vmatprep.subr.mxu0 %v2193
    %4930 = vmatpush1.msra.mxu0 %v2192
    %4931 = vmatprep.subr.mxu0 %v2199
    %4932 = vmatpush1.msra.mxu0 %v2198
    %4933 = vmatprep.subr.mxu0 %v2205
    %4934 = vmatpush1.msra.mxu0 %v2204
    %4935 = vmatprep.subr.mxu0 %v2211
    %4936 = vmatpush1.msra.mxu0 %v2210
    %4937 = vmatprep.subr.mxu0 %v2217
    %4938 = vmatpush1.msra.mxu0 %v2216
    %4939 = vmatprep.subr.mxu0 %v2223
    %4940 = vmatpush1.msra.mxu0 %v2222
    %4941 = vmatprep.subr.mxu0 %v2229
    %4942 = vmatpush1.msra.mxu0 %v2228
    %4943 = vmatprep.subr.mxu0 %v2235
    %4944 = vmatpush1.msra.mxu0 %v2234
    %4945 = vmatprep.subr.mxu0 %v2241
    %4946 = vmatpush1.msra.mxu0 %v2240
    %4947 = vmatprep.subr.mxu0 %v2247
    %4948 = vmatpush1.msra.mxu0 %v2246
    %4949 = vmatprep.subr.mxu0 %v2253
    %4950 = vmatpush1.msra.mxu0 %v2252
    %4951 = vmatprep.mubr.f32.mxu0 %v4513
    %4952 = vmatmul.mubr.f32.gmra.mrb[0].mxu0 %v4512
    %v4953 = vpop.f32.mrb[0].mxu0
    %v4954 = vadd.f32 %v2532, %v4953
    %v4955 = vpop.f32.mrb[0].mxu0
    %v4956 = vadd.f32 %v2536, %v4955
    %4957 = vdwg.mxu0
    %v4958 = vadd.f32 %v4514, %v4599
    %v4959 = vadd.f32 %v4515, %v4601
    %v4960 = vxor.u32 %v4958, 2147483648
    %v4961 = vxor.u32 %v4959, 2147483648
    %v4962 = vmul.f32 %v4960, 1.442695
    %v4963 = vpow.pop %v4962
    %v4964 = vmul.f32 %v4961, 1.442695
    %v4965 = vpow.pop %v4964
    %v4966 = vadd.f32 %v4963, 1.0
    %v4967 = vadd.f32 %v4965, 1.0
    %v4968 = vrcp.pop %v4966
    %v4969 = vmul.f32 1.0, %v4968
    %v4970 = vrcp.pop %v4967
    %v4971 = vmul.f32 1.0, %v4970
    %v4972 = vadd.f32 %v4516, %v4670
    %v4973 = vadd.f32 %v4517, %v4672
    %v4974 = vxor.u32 %v4972, 2147483648
    %v4975 = vxor.u32 %v4973, 2147483648
    %v4976 = vmul.f32 %v4974, 1.442695
    %v4977 = vpow.pop %v4976
    %v4978 = vmul.f32 %v4975, 1.442695
    %v4979 = vpow.pop %v4978
    %v4980 = vadd.f32 %v4977, 1.0
    %v4981 = vadd.f32 %v4979, 1.0
    %v4982 = vrcp.pop %v4980
    %v4983 = vmul.f32 1.0, %v4982
    %v4984 = vrcp.pop %v4981
    %v4985 = vmul.f32 1.0, %v4984
    %v4986 = vmul.f32 %v4969, %v4741
    %v4987 = vmul.f32 %v4971, %v4743
    %v4988 = vadd.f32 %v4518, %v4986
    %v4989 = vadd.f32 %v4519, %v4987
    %v4990 = vtanh.pop %v4988
    %v4991 = vtanh.pop %v4989
    %v4992 = vsub.f32 1.0, %v4983
    %v4993 = vsub.f32 1.0, %v4985
    %v4994 = vmul.f32 %v4992, %v4990
    %v4995 = vmul.f32 %v4993, %v4991
    %v4996 = vmul.f32 %v4983, %v4528
    %v4997 = vmul.f32 %v4985, %v4529
    %v4998 = vadd.f32 %v4994, %v4996
    %v4999 = vadd.f32 %v4995, %v4997
    %v5002 = vrot.slane %v4812, 4
    %v5003 = vrot.slane %v4814, 4
    %v5006 = vadd.f32 %v4520, %v5002
    %v5007 = vadd.f32 %v4521, %v5003
    %v5008 = vxor.u32 %v5006, 2147483648
    %v5009 = vxor.u32 %v5007, 2147483648
    %v5010 = vmul.f32 %v5008, 1.442695
    %v5011 = vpow.pop %v5010
    %v5012 = vmul.f32 %v5009, 1.442695
    %v5013 = vpow.pop %v5012
    %v5014 = vadd.f32 %v5011, 1.0
    %v5015 = vadd.f32 %v5013, 1.0
    %v5016 = vrcp.pop %v5014
    %v5017 = vmul.f32 1.0, %v5016
    %v5018 = vrcp.pop %v5015
    %v5019 = vmul.f32 1.0, %v5018
    %v5022 = vrot.slane %v4883, 4
    %v5023 = vrot.slane %v4885, 4
    %v5026 = vadd.f32 %v4522, %v5022
    %v5027 = vadd.f32 %v4523, %v5023
    %v5028 = vxor.u32 %v5026, 2147483648
    %v5029 = vxor.u32 %v5027, 2147483648
    %v5030 = vmul.f32 %v5028, 1.442695
    %v5031 = vpow.pop %v5030
    %v5032 = vmul.f32 %v5029, 1.442695
    %v5033 = vpow.pop %v5032
    %v5034 = vadd.f32 %v5031, 1.0
    %v5035 = vadd.f32 %v5033, 1.0
    %v5036 = vrcp.pop %v5034
    %v5037 = vmul.f32 1.0, %v5036
    %v5038 = vrcp.pop %v5035
    %v5039 = vmul.f32 1.0, %v5038
    %v5042 = vrot.slane %v4954, 4
    %v5043 = vrot.slane %v4956, 4
    %v5046 = vmul.f32 %v5017, %v5042
    %v5047 = vmul.f32 %v5019, %v5043
    %v5048 = vadd.f32 %v4524, %v5046
    %v5049 = vadd.f32 %v4525, %v5047
    %v5050 = vtanh.pop %v5048
    %v5051 = vtanh.pop %v5049
    %v5052 = vsub.f32 1.0, %v5037
    %v5053 = vsub.f32 1.0, %v5039
    %v5054 = vmul.f32 %v5052, %v5050
    %v5055 = vmul.f32 %v5053, %v5051
    %v5058 = vrot.slane %v4512, 4
    %v5059 = vrot.slane %v4513, 4
    %v5062 = vmul.f32 %v5037, %v5058
    %v5063 = vmul.f32 %v5039, %v5059
    %v5064 = vadd.f32 %v5054, %v5062
    %v5065 = vadd.f32 %v5055, %v5063
    %v5066 = vld [vmem:[#allocation2 + $0xc0] sm:$0xf0]
    %v5067 = vld [vmem:[#allocation2 + $0xc8] sm:$0xf0]
    %v5068 = vld [vmem:[#allocation2 + $0xd0] sm:$0xf0]
    %v5069 = vld [vmem:[#allocation2 + $0xd8] sm:$0xf0]
    %v5070 = vld [vmem:[#allocation2 + $0xe0] sm:$0xf0]
    %v5071 = vld [vmem:[#allocation2 + $0xe8] sm:$0xf0]
    %v5072 = vld [vmem:[#allocation2 + $0x90] sm:$0xf]
    %v5073 = vld [vmem:[#allocation2 + $0x98] sm:$0xf]
    %v5074 = vld [vmem:[#allocation2 + $0xa0] sm:$0xf]
    %v5075 = vld [vmem:[#allocation2 + $0xa8] sm:$0xf]
    %v5076 = vld [vmem:[#allocation2 + $0xb0] sm:$0xf]
    %v5077 = vld [vmem:[#allocation2 + $0xb8] sm:$0xf]
    %5078 = vmatprep.subr.mxu0 %v1871
    %5079 = vmatpush1.msra.mxu0 %v1870
    %5080 = vmatprep.subr.mxu0 %v1877
    %5081 = vmatpush1.msra.mxu0 %v1876
    %5082 = vmatprep.subr.mxu0 %v1883
    %5083 = vmatpush1.msra.mxu0 %v1882
    %5084 = vmatprep.subr.mxu0 %v1889
    %5085 = vmatpush1.msra.mxu0 %v1888
    %5086 = vmatprep.subr.mxu0 %v1895
    %5087 = vmatpush1.msra.mxu0 %v1894
    %5088 = vmatprep.subr.mxu0 %v1901
    %5089 = vmatpush1.msra.mxu0 %v1900
    %5090 = vmatprep.subr.mxu0 %v1907
    %5091 = vmatpush1.msra.mxu0 %v1906
    %5092 = vmatprep.subr.mxu0 %v1913
    %5093 = vmatpush1.msra.mxu0 %v1912
    %5094 = vmatprep.subr.mxu0 %v1919
    %5095 = vmatpush1.msra.mxu0 %v1918
    %5096 = vmatprep.subr.mxu0 %v1925
    %5097 = vmatpush1.msra.mxu0 %v1924
    %5098 = vmatprep.subr.mxu0 %v1931
    %5099 = vmatpush1.msra.mxu0 %v1930
    %5100 = vmatprep.subr.mxu0 %v1937
    %5101 = vmatpush1.msra.mxu0 %v1936
    %5102 = vmatprep.subr.mxu0 %v1943
    %5103 = vmatpush1.msra.mxu0 %v1942
    %5104 = vmatprep.subr.mxu0 %v1949
    %5105 = vmatpush1.msra.mxu0 %v1948
    %5106 = vmatprep.subr.mxu0 %v1955
    %5107 = vmatpush1.msra.mxu0 %v1954
    %5108 = vmatprep.subr.mxu0 %v1961
    %5109 = vmatpush1.msra.mxu0 %v1960
    %5110 = vmatprep.subr.mxu0 %v1967
    %5111 = vmatpush1.msra.mxu0 %v1966
    %5112 = vmatprep.subr.mxu0 %v1973
    %5113 = vmatpush1.msra.mxu0 %v1972
    %5114 = vmatprep.subr.mxu0 %v1979
    %5115 = vmatpush1.msra.mxu0 %v1978
    %5116 = vmatprep.subr.mxu0 %v1985
    %5117 = vmatpush1.msra.mxu0 %v1984
    %5118 = vmatprep.subr.mxu0 %v1991
    %5119 = vmatpush1.msra.mxu0 %v1990
    %5120 = vmatprep.subr.mxu0 %v1997
    %5121 = vmatpush1.msra.mxu0 %v1996
    %5122 = vmatprep.subr.mxu0 %v2003
    %5123 = vmatpush1.msra.mxu0 %v2002
    %5124 = vmatprep.subr.mxu0 %v2009
    %5125 = vmatpush1.msra.mxu0 %v2008
    %5126 = vmatprep.subr.mxu0 %v2015
    %5127 = vmatpush1.msra.mxu0 %v2014
    %5128 = vmatprep.subr.mxu0 %v2021
    %5129 = vmatpush1.msra.mxu0 %v2020
    %5130 = vmatprep.subr.mxu0 %v2027
    %5131 = vmatpush1.msra.mxu0 %v2026
    %5132 = vmatprep.subr.mxu0 %v2033
    %5133 = vmatpush1.msra.mxu0 %v2032
    %5134 = vmatprep.subr.mxu0 %v2039
    %5135 = vmatpush1.msra.mxu0 %v2038
    %5136 = vmatprep.subr.mxu0 %v2045
    %5137 = vmatpush1.msra.mxu0 %v2044
    %5138 = vmatprep.subr.mxu0 %v2051
    %5139 = vmatpush1.msra.mxu0 %v2050
    %5140 = vmatprep.subr.mxu0 %v2057
    %5141 = vmatpush1.msra.mxu0 %v2056
    %5142 = vmatprep.mubr.f32.mxu0 %v4999
    %5143 = vmatmul.mubr.f32.gmra.mrb[0].mxu0 %v4998
    %v5144 = vpop.f32.mrb[0].mxu0
    %v5145 = vadd.f32 %v2272, %v5144
    %v5146 = vpop.f32.mrb[0].mxu0
    %v5147 = vadd.f32 %v2276, %v5146
    %5148 = vdwg.mxu0
    %5149 = vmatprep.subr.mxu0 %v1873
    %5150 = vmatpush1.msra.mxu0 %v1872
    %5151 = vmatprep.subr.mxu0 %v1879
    %5152 = vmatpush1.msra.mxu0 %v1878
    %5153 = vmatprep.subr.mxu0 %v1885
    %5154 = vmatpush1.msra.mxu0 %v1884
    %5155 = vmatprep.subr.mxu0 %v1891
    %5156 = vmatpush1.msra.mxu0 %v1890
    %5157 = vmatprep.subr.mxu0 %v1897
    %5158 = vmatpush1.msra.mxu0 %v1896
    %5159 = vmatprep.subr.mxu0 %v1903
    %5160 = vmatpush1.msra.mxu0 %v1902
    %5161 = vmatprep.subr.mxu0 %v1909
    %5162 = vmatpush1.msra.mxu0 %v1908
    %5163 = vmatprep.subr.mxu0 %v1915
    %5164 = vmatpush1.msra.mxu0 %v1914
    %5165 = vmatprep.subr.mxu0 %v1921
    %5166 = vmatpush1.msra.mxu0 %v1920
    %5167 = vmatprep.subr.mxu0 %v1927
    %5168 = vmatpush1.msra.mxu0 %v1926
    %5169 = vmatprep.subr.mxu0 %v1933
    %5170 = vmatpush1.msra.mxu0 %v1932
    %5171 = vmatprep.subr.mxu0 %v1939
    %5172 = vmatpush1.msra.mxu0 %v1938
    %5173 = vmatprep.subr.mxu0 %v1945
    %5174 = vmatpush1.msra.mxu0 %v1944
    %5175 = vmatprep.subr.mxu0 %v1951
    %5176 = vmatpush1.msra.mxu0 %v1950
    %5177 = vmatprep.subr.mxu0 %v1957
    %5178 = vmatpush1.msra.mxu0 %v1956
    %5179 = vmatprep.subr.mxu0 %v1963
    %5180 = vmatpush1.msra.mxu0 %v1962
    %5181 = vmatprep.subr.mxu0 %v1969
    %5182 = vmatpush1.msra.mxu0 %v1968
    %5183 = vmatprep.subr.mxu0 %v1975
    %5184 = vmatpush1.msra.mxu0 %v1974
    %5185 = vmatprep.subr.mxu0 %v1981
    %5186 = vmatpush1.msra.mxu0 %v1980
    %5187 = vmatprep.subr.mxu0 %v1987
    %5188 = vmatpush1.msra.mxu0 %v1986
    %5189 = vmatprep.subr.mxu0 %v1993
    %5190 = vmatpush1.msra.mxu0 %v1992
    %5191 = vmatprep.subr.mxu0 %v1999
    %5192 = vmatpush1.msra.mxu0 %v1998
    %5193 = vmatprep.subr.mxu0 %v2005
    %5194 = vmatpush1.msra.mxu0 %v2004
    %5195 = vmatprep.subr.mxu0 %v2011
    %5196 = vmatpush1.msra.mxu0 %v2010
    %5197 = vmatprep.subr.mxu0 %v2017
    %5198 = vmatpush1.msra.mxu0 %v2016
    %5199 = vmatprep.subr.mxu0 %v2023
    %5200 = vmatpush1.msra.mxu0 %v2022
    %5201 = vmatprep.subr.mxu0 %v2029
    %5202 = vmatpush1.msra.mxu0 %v2028
    %5203 = vmatprep.subr.mxu0 %v2035
    %5204 = vmatpush1.msra.mxu0 %v2034
    %5205 = vmatprep.subr.mxu0 %v2041
    %5206 = vmatpush1.msra.mxu0 %v2040
    %5207 = vmatprep.subr.mxu0 %v2047
    %5208 = vmatpush1.msra.mxu0 %v2046
    %5209 = vmatprep.subr.mxu0 %v2053
    %5210 = vmatpush1.msra.mxu0 %v2052
    %5211 = vmatprep.subr.mxu0 %v2059
    %5212 = vmatpush1.msra.mxu0 %v2058
    %5213 = vmatprep.mubr.f32.mxu0 %v4999
    %5214 = vmatmul.mubr.f32.gmra.mrb[0].mxu0 %v4998
    %v5215 = vpop.f32.mrb[0].mxu0
    %v5216 = vadd.f32 %v2280, %v5215
    %v5217 = vpop.f32.mrb[0].mxu0
    %v5218 = vadd.f32 %v2284, %v5217
    %5219 = vdwg.mxu0
    %5220 = vmatprep.subr.mxu0 %v1875
    %5221 = vmatpush1.msra.mxu0 %v1874
    %5222 = vmatprep.subr.mxu0 %v1881
    %5223 = vmatpush1.msra.mxu0 %v1880
    %5224 = vmatprep.subr.mxu0 %v1887
    %5225 = vmatpush1.msra.mxu0 %v1886
    %5226 = vmatprep.subr.mxu0 %v1893
    %5227 = vmatpush1.msra.mxu0 %v1892
    %5228 = vmatprep.subr.mxu0 %v1899
    %5229 = vmatpush1.msra.mxu0 %v1898
    %5230 = vmatprep.subr.mxu0 %v1905
    %5231 = vmatpush1.msra.mxu0 %v1904
    %5232 = vmatprep.subr.mxu0 %v1911
    %5233 = vmatpush1.msra.mxu0 %v1910
    %5234 = vmatprep.subr.mxu0 %v1917
    %5235 = vmatpush1.msra.mxu0 %v1916
    %5236 = vmatprep.subr.mxu0 %v1923
    %5237 = vmatpush1.msra.mxu0 %v1922
    %5238 = vmatprep.subr.mxu0 %v1929
    %5239 = vmatpush1.msra.mxu0 %v1928
    %5240 = vmatprep.subr.mxu0 %v1935
    %5241 = vmatpush1.msra.mxu0 %v1934
    %5242 = vmatprep.subr.mxu0 %v1941
    %5243 = vmatpush1.msra.mxu0 %v1940
    %5244 = vmatprep.subr.mxu0 %v1947
    %5245 = vmatpush1.msra.mxu0 %v1946
    %5246 = vmatprep.subr.mxu0 %v1953
    %5247 = vmatpush1.msra.mxu0 %v1952
    %5248 = vmatprep.subr.mxu0 %v1959
    %5249 = vmatpush1.msra.mxu0 %v1958
    %5250 = vmatprep.subr.mxu0 %v1965
    %5251 = vmatpush1.msra.mxu0 %v1964
    %5252 = vmatprep.subr.mxu0 %v1971
    %5253 = vmatpush1.msra.mxu0 %v1970
    %5254 = vmatprep.subr.mxu0 %v1977
    %5255 = vmatpush1.msra.mxu0 %v1976
    %5256 = vmatprep.subr.mxu0 %v1983
    %5257 = vmatpush1.msra.mxu0 %v1982
    %5258 = vmatprep.subr.mxu0 %v1989
    %5259 = vmatpush1.msra.mxu0 %v1988
    %5260 = vmatprep.subr.mxu0 %v1995
    %5261 = vmatpush1.msra.mxu0 %v1994
    %5262 = vmatprep.subr.mxu0 %v2001
    %5263 = vmatpush1.msra.mxu0 %v2000
    %5264 = vmatprep.subr.mxu0 %v2007
    %5265 = vmatpush1.msra.mxu0 %v2006
    %5266 = vmatprep.subr.mxu0 %v2013
    %5267 = vmatpush1.msra.mxu0 %v2012
    %5268 = vmatprep.subr.mxu0 %v2019
    %5269 = vmatpush1.msra.mxu0 %v2018
    %5270 = vmatprep.subr.mxu0 %v2025
    %5271 = vmatpush1.msra.mxu0 %v2024
    %5272 = vmatprep.subr.mxu0 %v2031
    %5273 = vmatpush1.msra.mxu0 %v2030
    %5274 = vmatprep.subr.mxu0 %v2037
    %5275 = vmatpush1.msra.mxu0 %v2036
    %5276 = vmatprep.subr.mxu0 %v2043
    %5277 = vmatpush1.msra.mxu0 %v2042
    %5278 = vmatprep.subr.mxu0 %v2049
    %5279 = vmatpush1.msra.mxu0 %v2048
    %5280 = vmatprep.subr.mxu0 %v2055
    %5281 = vmatpush1.msra.mxu0 %v2054
    %5282 = vmatprep.subr.mxu0 %v2061
    %5283 = vmatpush1.msra.mxu0 %v2060
    %5284 = vmatprep.mubr.f32.mxu0 %v4999
    %5285 = vmatmul.mubr.f32.gmra.mrb[0].mxu0 %v4998
    %v5286 = vpop.f32.mrb[0].mxu0
    %v5287 = vadd.f32 %v2288, %v5286
    %v5288 = vpop.f32.mrb[0].mxu0
    %v5289 = vadd.f32 %v2292, %v5288
    %5290 = vdwg.mxu0
    %v5293 = vrot.slane %v5064, 4
    %v5294 = vrot.slane %v5065, 4
    %5297 = vmatprep.subr.mxu0 %v2063
    %5298 = vmatpush1.msra.mxu0 %v2062
    %5299 = vmatprep.subr.mxu0 %v2069
    %5300 = vmatpush1.msra.mxu0 %v2068
    %5301 = vmatprep.subr.mxu0 %v2075
    %5302 = vmatpush1.msra.mxu0 %v2074
    %5303 = vmatprep.subr.mxu0 %v2081
    %5304 = vmatpush1.msra.mxu0 %v2080
    %5305 = vmatprep.subr.mxu0 %v2087
    %5306 = vmatpush1.msra.mxu0 %v2086
    %5307 = vmatprep.subr.mxu0 %v2093
    %5308 = vmatpush1.msra.mxu0 %v2092
    %5309 = vmatprep.subr.mxu0 %v2099
    %5310 = vmatpush1.msra.mxu0 %v2098
    %5311 = vmatprep.subr.mxu0 %v2105
    %5312 = vmatpush1.msra.mxu0 %v2104
    %5313 = vmatprep.subr.mxu0 %v2111
    %5314 = vmatpush1.msra.mxu0 %v2110
    %5315 = vmatprep.subr.mxu0 %v2117
    %5316 = vmatpush1.msra.mxu0 %v2116
    %5317 = vmatprep.subr.mxu0 %v2123
    %5318 = vmatpush1.msra.mxu0 %v2122
    %5319 = vmatprep.subr.mxu0 %v2129
    %5320 = vmatpush1.msra.mxu0 %v2128
    %5321 = vmatprep.subr.mxu0 %v2135
    %5322 = vmatpush1.msra.mxu0 %v2134
    %5323 = vmatprep.subr.mxu0 %v2141
    %5324 = vmatpush1.msra.mxu0 %v2140
    %5325 = vmatprep.subr.mxu0 %v2147
    %5326 = vmatpush1.msra.mxu0 %v2146
    %5327 = vmatprep.subr.mxu0 %v2153
    %5328 = vmatpush1.msra.mxu0 %v2152
    %5329 = vmatprep.subr.mxu0 %v2159
    %5330 = vmatpush1.msra.mxu0 %v2158
    %5331 = vmatprep.subr.mxu0 %v2165
    %5332 = vmatpush1.msra.mxu0 %v2164
    %5333 = vmatprep.subr.mxu0 %v2171
    %5334 = vmatpush1.msra.mxu0 %v2170
    %5335 = vmatprep.subr.mxu0 %v2177
    %5336 = vmatpush1.msra.mxu0 %v2176
    %5337 = vmatprep.subr.mxu0 %v2183
    %5338 = vmatpush1.msra.mxu0 %v2182
    %5339 = vmatprep.subr.mxu0 %v2189
    %5340 = vmatpush1.msra.mxu0 %v2188
    %5341 = vmatprep.subr.mxu0 %v2195
    %5342 = vmatpush1.msra.mxu0 %v2194
    %5343 = vmatprep.subr.mxu0 %v2201
    %5344 = vmatpush1.msra.mxu0 %v2200
    %5345 = vmatprep.subr.mxu0 %v2207
    %5346 = vmatpush1.msra.mxu0 %v2206
    %5347 = vmatprep.subr.mxu0 %v2213
    %5348 = vmatpush1.msra.mxu0 %v2212
    %5349 = vmatprep.subr.mxu0 %v2219
    %5350 = vmatpush1.msra.mxu0 %v2218
    %5351 = vmatprep.subr.mxu0 %v2225
    %5352 = vmatpush1.msra.mxu0 %v2224
    %5353 = vmatprep.subr.mxu0 %v2231
    %5354 = vmatpush1.msra.mxu0 %v2230
    %5355 = vmatprep.subr.mxu0 %v2237
    %5356 = vmatpush1.msra.mxu0 %v2236
    %5357 = vmatprep.subr.mxu0 %v2243
    %5358 = vmatpush1.msra.mxu0 %v2242
    %5359 = vmatprep.subr.mxu0 %v2249
    %5360 = vmatpush1.msra.mxu0 %v2248
    %5361 = vmatprep.mubr.f32.mxu0 %v5294
    %5362 = vmatmul.mubr.f32.gmra.mrb[0].mxu0 %v5293
    %v5363 = vpop.f32.mrb[0].mxu0
    %v5364 = vadd.f32 %v2516, %v5363
    %v5365 = vpop.f32.mrb[0].mxu0
    %v5366 = vadd.f32 %v2520, %v5365
    %5367 = vdwg.mxu0
    %5368 = vmatprep.subr.mxu0 %v2065
    %5369 = vmatpush1.msra.mxu0 %v2064
    %5370 = vmatprep.subr.mxu0 %v2071
    %5371 = vmatpush1.msra.mxu0 %v2070
    %5372 = vmatprep.subr.mxu0 %v2077
    %5373 = vmatpush1.msra.mxu0 %v2076
    %5374 = vmatprep.subr.mxu0 %v2083
    %5375 = vmatpush1.msra.mxu0 %v2082
    %5376 = vmatprep.subr.mxu0 %v2089
    %5377 = vmatpush1.msra.mxu0 %v2088
    %5378 = vmatprep.subr.mxu0 %v2095
    %5379 = vmatpush1.msra.mxu0 %v2094
    %5380 = vmatprep.subr.mxu0 %v2101
    %5381 = vmatpush1.msra.mxu0 %v2100
    %5382 = vmatprep.subr.mxu0 %v2107
    %5383 = vmatpush1.msra.mxu0 %v2106
    %5384 = vmatprep.subr.mxu0 %v2113
    %5385 = vmatpush1.msra.mxu0 %v2112
    %5386 = vmatprep.subr.mxu0 %v2119
    %5387 = vmatpush1.msra.mxu0 %v2118
    %5388 = vmatprep.subr.mxu0 %v2125
    %5389 = vmatpush1.msra.mxu0 %v2124
    %5390 = vmatprep.subr.mxu0 %v2131
    %5391 = vmatpush1.msra.mxu0 %v2130
    %5392 = vmatprep.subr.mxu0 %v2137
    %5393 = vmatpush1.msra.mxu0 %v2136
    %5394 = vmatprep.subr.mxu0 %v2143
    %5395 = vmatpush1.msra.mxu0 %v2142
    %5396 = vmatprep.subr.mxu0 %v2149
    %5397 = vmatpush1.msra.mxu0 %v2148
    %5398 = vmatprep.subr.mxu0 %v2155
    %5399 = vmatpush1.msra.mxu0 %v2154
    %5400 = vmatprep.subr.mxu0 %v2161
    %5401 = vmatpush1.msra.mxu0 %v2160
    %5402 = vmatprep.subr.mxu0 %v2167
    %5403 = vmatpush1.msra.mxu0 %v2166
    %5404 = vmatprep.subr.mxu0 %v2173
    %5405 = vmatpush1.msra.mxu0 %v2172
    %5406 = vmatprep.subr.mxu0 %v2179
    %5407 = vmatpush1.msra.mxu0 %v2178
    %5408 = vmatprep.subr.mxu0 %v2185
    %5409 = vmatpush1.msra.mxu0 %v2184
    %5410 = vmatprep.subr.mxu0 %v2191
    %5411 = vmatpush1.msra.mxu0 %v2190
    %5412 = vmatprep.subr.mxu0 %v2197
    %5413 = vmatpush1.msra.mxu0 %v2196
    %5414 = vmatprep.subr.mxu0 %v2203
    %5415 = vmatpush1.msra.mxu0 %v2202
    %5416 = vmatprep.subr.mxu0 %v2209
    %5417 = vmatpush1.msra.mxu0 %v2208
    %5418 = vmatprep.subr.mxu0 %v2215
    %5419 = vmatpush1.msra.mxu0 %v2214
    %5420 = vmatprep.subr.mxu0 %v2221
    %5421 = vmatpush1.msra.mxu0 %v2220
    %5422 = vmatprep.subr.mxu0 %v2227
    %5423 = vmatpush1.msra.mxu0 %v2226
    %5424 = vmatprep.subr.mxu0 %v2233
    %5425 = vmatpush1.msra.mxu0 %v2232
    %5426 = vmatprep.subr.mxu0 %v2239
    %5427 = vmatpush1.msra.mxu0 %v2238
    %5428 = vmatprep.subr.mxu0 %v2245
    %5429 = vmatpush1.msra.mxu0 %v2244
    %5430 = vmatprep.subr.mxu0 %v2251
    %5431 = vmatpush1.msra.mxu0 %v2250
    %5432 = vmatprep.mubr.f32.mxu0 %v5294
    %5433 = vmatmul.mubr.f32.gmra.mrb[0].mxu0 %v5293
    %v5434 = vpop.f32.mrb[0].mxu0
    %v5435 = vadd.f32 %v2524, %v5434
    %v5436 = vpop.f32.mrb[0].mxu0
    %v5437 = vadd.f32 %v2528, %v5436
    %5438 = vdwg.mxu0
    %5439 = vmatprep.subr.mxu0 %v2067
    %5440 = vmatpush1.msra.mxu0 %v2066
    %5441 = vmatprep.subr.mxu0 %v2073
    %5442 = vmatpush1.msra.mxu0 %v2072
    %5443 = vmatprep.subr.mxu0 %v2079
    %5444 = vmatpush1.msra.mxu0 %v2078
    %5445 = vmatprep.subr.mxu0 %v2085
    %5446 = vmatpush1.msra.mxu0 %v2084
    %5447 = vmatprep.subr.mxu0 %v2091
    %5448 = vmatpush1.msra.mxu0 %v2090
    %5449 = vmatprep.subr.mxu0 %v2097
    %5450 = vmatpush1.msra.mxu0 %v2096
    %5451 = vmatprep.subr.mxu0 %v2103
    %5452 = vmatpush1.msra.mxu0 %v2102
    %5453 = vmatprep.subr.mxu0 %v2109
    %5454 = vmatpush1.msra.mxu0 %v2108
    %5455 = vmatprep.subr.mxu0 %v2115
    %5456 = vmatpush1.msra.mxu0 %v2114
    %5457 = vmatprep.subr.mxu0 %v2121
    %5458 = vmatpush1.msra.mxu0 %v2120
    %5459 = vmatprep.subr.mxu0 %v2127
    %5460 = vmatpush1.msra.mxu0 %v2126
    %5461 = vmatprep.subr.mxu0 %v2133
    %5462 = vmatpush1.msra.mxu0 %v2132
    %5463 = vmatprep.subr.mxu0 %v2139
    %5464 = vmatpush1.msra.mxu0 %v2138
    %5465 = vmatprep.subr.mxu0 %v2145
    %5466 = vmatpush1.msra.mxu0 %v2144
    %5467 = vmatprep.subr.mxu0 %v2151
    %5468 = vmatpush1.msra.mxu0 %v2150
    %5469 = vmatprep.subr.mxu0 %v2157
    %5470 = vmatpush1.msra.mxu0 %v2156
    %5471 = vmatprep.subr.mxu0 %v2163
    %5472 = vmatpush1.msra.mxu0 %v2162
    %5473 = vmatprep.subr.mxu0 %v2169
    %5474 = vmatpush1.msra.mxu0 %v2168
    %5475 = vmatprep.subr.mxu0 %v2175
    %5476 = vmatpush1.msra.mxu0 %v2174
    %5477 = vmatprep.subr.mxu0 %v2181
    %5478 = vmatpush1.msra.mxu0 %v2180
    %5479 = vmatprep.subr.mxu0 %v2187
    %5480 = vmatpush1.msra.mxu0 %v2186
    %5481 = vmatprep.subr.mxu0 %v2193
    %5482 = vmatpush1.msra.mxu0 %v2192
    %5483 = vmatprep.subr.mxu0 %v2199
    %5484 = vmatpush1.msra.mxu0 %v2198
    %5485 = vmatprep.subr.mxu0 %v2205
    %5486 = vmatpush1.msra.mxu0 %v2204
    %5487 = vmatprep.subr.mxu0 %v2211
    %5488 = vmatpush1.msra.mxu0 %v2210
    %5489 = vmatprep.subr.mxu0 %v2217
    %5490 = vmatpush1.msra.mxu0 %v2216
    %5491 = vmatprep.subr.mxu0 %v2223
    %5492 = vmatpush1.msra.mxu0 %v2222
    %5493 = vmatprep.subr.mxu0 %v2229
    %5494 = vmatpush1.msra.mxu0 %v2228
    %5495 = vmatprep.subr.mxu0 %v2235
    %5496 = vmatpush1.msra.mxu0 %v2234
    %5497 = vmatprep.subr.mxu0 %v2241
    %5498 = vmatpush1.msra.mxu0 %v2240
    %5499 = vmatprep.subr.mxu0 %v2247
    %5500 = vmatpush1.msra.mxu0 %v2246
    %5501 = vmatprep.subr.mxu0 %v2253
    %5502 = vmatpush1.msra.mxu0 %v2252
    %5503 = vmatprep.mubr.f32.mxu0 %v5294
    %5504 = vmatmul.mubr.f32.gmra.mrb[0].mxu0 %v5293
    %v5505 = vpop.f32.mrb[0].mxu0
    %v5506 = vadd.f32 %v2532, %v5505
    %v5507 = vpop.f32.mrb[0].mxu0
    %v5508 = vadd.f32 %v2536, %v5507
    %5509 = vdwg.mxu0
    %v5512 = vrot.slane %v5145, 4
    %v5513 = vrot.slane %v5147, 4
    %v5516 = vadd.f32 %v5066, %v5512
    %v5517 = vadd.f32 %v5067, %v5513
    %v5518 = vxor.u32 %v5516, 2147483648
    %v5519 = vxor.u32 %v5517, 2147483648
    %v5520 = vmul.f32 %v5518, 1.442695
    %v5521 = vpow.pop %v5520
    %v5522 = vmul.f32 %v5519, 1.442695
    %v5523 = vpow.pop %v5522
    %v5524 = vadd.f32 %v5521, 1.0
    %v5525 = vadd.f32 %v5523, 1.0
    %v5526 = vrcp.pop %v5524
    %v5527 = vmul.f32 1.0, %v5526
    %v5528 = vrcp.pop %v5525
    %v5529 = vmul.f32 1.0, %v5528
    %v5532 = vrot.slane %v5216, 4
    %v5533 = vrot.slane %v5218, 4
    %v5536 = vadd.f32 %v5068, %v5532
    %v5537 = vadd.f32 %v5069, %v5533
    %v5538 = vxor.u32 %v5536, 2147483648
    %v5539 = vxor.u32 %v5537, 2147483648
    %v5540 = vmul.f32 %v5538, 1.442695
    %v5541 = vpow.pop %v5540
    %v5542 = vmul.f32 %v5539, 1.442695
    %v5543 = vpow.pop %v5542
    %v5544 = vadd.f32 %v5541, 1.0
    %v5545 = vadd.f32 %v5543, 1.0
    %v5546 = vrcp.pop %v5544
    %v5547 = vmul.f32 1.0, %v5546
    %v5548 = vrcp.pop %v5545
    %v5549 = vmul.f32 1.0, %v5548
    %v5552 = vrot.slane %v5287, 4
    %v5553 = vrot.slane %v5289, 4
    %v5556 = vmul.f32 %v5527, %v5552
    %v5557 = vmul.f32 %v5529, %v5553
    %v5558 = vadd.f32 %v5070, %v5556
    %v5559 = vadd.f32 %v5071, %v5557
    %v5560 = vtanh.pop %v5558
    %v5561 = vtanh.pop %v5559
    %v5562 = vsub.f32 1.0, %v5547
    %v5563 = vsub.f32 1.0, %v5549
    %v5564 = vmul.f32 %v5562, %v5560
    %v5565 = vmul.f32 %v5563, %v5561
    %v5568 = vrot.slane %v4998, 4
    %v5569 = vrot.slane %v4999, 4
    %v5572 = vmul.f32 %v5547, %v5568
    %v5573 = vmul.f32 %v5549, %v5569
    %v5574 = vadd.f32 %v5564, %v5572
    %v5575 = vadd.f32 %v5565, %v5573
    %v5576 = vadd.f32 %v5072, %v5364
    %v5577 = vadd.f32 %v5073, %v5366
    %v5578 = vxor.u32 %v5576, 2147483648
    %v5579 = vxor.u32 %v5577, 2147483648
    %v5580 = vmul.f32 %v5578, 1.442695
    %v5581 = vpow.pop %v5580
    %v5582 = vmul.f32 %v5579, 1.442695
    %v5583 = vpow.pop %v5582
    %v5584 = vadd.f32 %v5581, 1.0
    %v5585 = vadd.f32 %v5583, 1.0
    %v5586 = vrcp.pop %v5584
    %v5587 = vmul.f32 1.0, %v5586
    %v5588 = vrcp.pop %v5585
    %v5589 = vmul.f32 1.0, %v5588
    %v5590 = vadd.f32 %v5074, %v5435
    %v5591 = vadd.f32 %v5075, %v5437
    %v5592 = vxor.u32 %v5590, 2147483648
    %v5593 = vxor.u32 %v5591, 2147483648
    %v5594 = vmul.f32 %v5592, 1.442695
    %v5595 = vpow.pop %v5594
    %v5596 = vmul.f32 %v5593, 1.442695
    %v5597 = vpow.pop %v5596
    %v5598 = vadd.f32 %v5595, 1.0
    %v5599 = vadd.f32 %v5597, 1.0
    %v5600 = vrcp.pop %v5598
    %v5601 = vmul.f32 1.0, %v5600
    %v5602 = vrcp.pop %v5599
    %v5603 = vmul.f32 1.0, %v5602
    %v5604 = vmul.f32 %v5587, %v5506
    %v5605 = vmul.f32 %v5589, %v5508
    %v5606 = vadd.f32 %v5076, %v5604
    %v5607 = vadd.f32 %v5077, %v5605
    %v5608 = vtanh.pop %v5606
    %v5609 = vtanh.pop %v5607
    %v5610 = vsub.f32 1.0, %v5601
    %v5611 = vsub.f32 1.0, %v5603
    %v5612 = vmul.f32 %v5610, %v5608
    %v5613 = vmul.f32 %v5611, %v5609
    %v5614 = vmul.f32 %v5601, %v5293
    %v5615 = vmul.f32 %v5603, %v5294
    %v5616 = vadd.f32 %v5612, %v5614
    %v5617 = vadd.f32 %v5613, %v5615
    %v5618 = vld [vmem:[#allocation2 + $0x120] sm:$0xf]
    %v5619 = vld [vmem:[#allocation2 + $0x128] sm:$0xf]
    %v5620 = vld [vmem:[#allocation2 + $0x130] sm:$0xf]
    %v5621 = vld [vmem:[#allocation2 + $0x138] sm:$0xf]
    %v5622 = vld [vmem:[#allocation2 + $0x140] sm:$0xf]
    %v5623 = vld [vmem:[#allocation2 + $0x148] sm:$0xf]
    %v5624 = vld [vmem:[#allocation2 + $0x30] sm:$0xf0]
    %v5625 = vld [vmem:[#allocation2 + $0x38] sm:$0xf0]
    %v5626 = vld [vmem:[#allocation2 + $0x40] sm:$0xf0]
    %v5627 = vld [vmem:[#allocation2 + $0x48] sm:$0xf0]
    %v5628 = vld [vmem:[#allocation2 + $0x50] sm:$0xf0]
    %v5629 = vld [vmem:[#allocation2 + $0x58] sm:$0xf0]
    %v5632 = vrot.slane %v5574, 4
    %v5633 = vrot.slane %v5575, 4
    %5636 = vmatprep.subr.mxu0 %v1871
    %5637 = vmatpush1.msra.mxu0 %v1870
    %5638 = vmatprep.subr.mxu0 %v1877
    %5639 = vmatpush1.msra.mxu0 %v1876
    %5640 = vmatprep.subr.mxu0 %v1883
    %5641 = vmatpush1.msra.mxu0 %v1882
    %5642 = vmatprep.subr.mxu0 %v1889
    %5643 = vmatpush1.msra.mxu0 %v1888
    %5644 = vmatprep.subr.mxu0 %v1895
    %5645 = vmatpush1.msra.mxu0 %v1894
    %5646 = vmatprep.subr.mxu0 %v1901
    %5647 = vmatpush1.msra.mxu0 %v1900
    %5648 = vmatprep.subr.mxu0 %v1907
    %5649 = vmatpush1.msra.mxu0 %v1906
    %5650 = vmatprep.subr.mxu0 %v1913
    %5651 = vmatpush1.msra.mxu0 %v1912
    %5652 = vmatprep.subr.mxu0 %v1919
    %5653 = vmatpush1.msra.mxu0 %v1918
    %5654 = vmatprep.subr.mxu0 %v1925
    %5655 = vmatpush1.msra.mxu0 %v1924
    %5656 = vmatprep.subr.mxu0 %v1931
    %5657 = vmatpush1.msra.mxu0 %v1930
    %5658 = vmatprep.subr.mxu0 %v1937
    %5659 = vmatpush1.msra.mxu0 %v1936
    %5660 = vmatprep.subr.mxu0 %v1943
    %5661 = vmatpush1.msra.mxu0 %v1942
    %5662 = vmatprep.subr.mxu0 %v1949
    %5663 = vmatpush1.msra.mxu0 %v1948
    %5664 = vmatprep.subr.mxu0 %v1955
    %5665 = vmatpush1.msra.mxu0 %v1954
    %5666 = vmatprep.subr.mxu0 %v1961
    %5667 = vmatpush1.msra.mxu0 %v1960
    %5668 = vmatprep.subr.mxu0 %v1967
    %5669 = vmatpush1.msra.mxu0 %v1966
    %5670 = vmatprep.subr.mxu0 %v1973
    %5671 = vmatpush1.msra.mxu0 %v1972
    %5672 = vmatprep.subr.mxu0 %v1979
    %5673 = vmatpush1.msra.mxu0 %v1978
    %5674 = vmatprep.subr.mxu0 %v1985
    %5675 = vmatpush1.msra.mxu0 %v1984
    %5676 = vmatprep.subr.mxu0 %v1991
    %5677 = vmatpush1.msra.mxu0 %v1990
    %5678 = vmatprep.subr.mxu0 %v1997
    %5679 = vmatpush1.msra.mxu0 %v1996
    %5680 = vmatprep.subr.mxu0 %v2003
    %5681 = vmatpush1.msra.mxu0 %v2002
    %5682 = vmatprep.subr.mxu0 %v2009
    %5683 = vmatpush1.msra.mxu0 %v2008
    %5684 = vmatprep.subr.mxu0 %v2015
    %5685 = vmatpush1.msra.mxu0 %v2014
    %5686 = vmatprep.subr.mxu0 %v2021
    %5687 = vmatpush1.msra.mxu0 %v2020
    %5688 = vmatprep.subr.mxu0 %v2027
    %5689 = vmatpush1.msra.mxu0 %v2026
    %5690 = vmatprep.subr.mxu0 %v2033
    %5691 = vmatpush1.msra.mxu0 %v2032
    %5692 = vmatprep.subr.mxu0 %v2039
    %5693 = vmatpush1.msra.mxu0 %v2038
    %5694 = vmatprep.subr.mxu0 %v2045
    %5695 = vmatpush1.msra.mxu0 %v2044
    %5696 = vmatprep.subr.mxu0 %v2051
    %5697 = vmatpush1.msra.mxu0 %v2050
    %5698 = vmatprep.subr.mxu0 %v2057
    %5699 = vmatpush1.msra.mxu0 %v2056
    %5700 = vmatprep.mubr.f32.mxu0 %v5633
    %5701 = vmatmul.mubr.f32.gmra.mrb[0].mxu0 %v5632
    %v5702 = vpop.f32.mrb[0].mxu0
    %v5703 = vadd.f32 %v2272, %v5702
    %v5704 = vpop.f32.mrb[0].mxu0
    %v5705 = vadd.f32 %v2276, %v5704
    %5706 = vdwg.mxu0
    %5707 = vmatprep.subr.mxu0 %v1873
    %5708 = vmatpush1.msra.mxu0 %v1872
    %5709 = vmatprep.subr.mxu0 %v1879
    %5710 = vmatpush1.msra.mxu0 %v1878
    %5711 = vmatprep.subr.mxu0 %v1885
    %5712 = vmatpush1.msra.mxu0 %v1884
    %5713 = vmatprep.subr.mxu0 %v1891
    %5714 = vmatpush1.msra.mxu0 %v1890
    %5715 = vmatprep.subr.mxu0 %v1897
    %5716 = vmatpush1.msra.mxu0 %v1896
    %5717 = vmatprep.subr.mxu0 %v1903
    %5718 = vmatpush1.msra.mxu0 %v1902
    %5719 = vmatprep.subr.mxu0 %v1909
    %5720 = vmatpush1.msra.mxu0 %v1908
    %5721 = vmatprep.subr.mxu0 %v1915
    %5722 = vmatpush1.msra.mxu0 %v1914
    %5723 = vmatprep.subr.mxu0 %v1921
    %5724 = vmatpush1.msra.mxu0 %v1920
    %5725 = vmatprep.subr.mxu0 %v1927
    %5726 = vmatpush1.msra.mxu0 %v1926
    %5727 = vmatprep.subr.mxu0 %v1933
    %5728 = vmatpush1.msra.mxu0 %v1932
    %5729 = vmatprep.subr.mxu0 %v1939
    %5730 = vmatpush1.msra.mxu0 %v1938
    %5731 = vmatprep.subr.mxu0 %v1945
    %5732 = vmatpush1.msra.mxu0 %v1944
    %5733 = vmatprep.subr.mxu0 %v1951
    %5734 = vmatpush1.msra.mxu0 %v1950
    %5735 = vmatprep.subr.mxu0 %v1957
    %5736 = vmatpush1.msra.mxu0 %v1956
    %5737 = vmatprep.subr.mxu0 %v1963
    %5738 = vmatpush1.msra.mxu0 %v1962
    %5739 = vmatprep.subr.mxu0 %v1969
    %5740 = vmatpush1.msra.mxu0 %v1968
    %5741 = vmatprep.subr.mxu0 %v1975
    %5742 = vmatpush1.msra.mxu0 %v1974
    %5743 = vmatprep.subr.mxu0 %v1981
    %5744 = vmatpush1.msra.mxu0 %v1980
    %5745 = vmatprep.subr.mxu0 %v1987
    %5746 = vmatpush1.msra.mxu0 %v1986
    %5747 = vmatprep.subr.mxu0 %v1993
    %5748 = vmatpush1.msra.mxu0 %v1992
    %5749 = vmatprep.subr.mxu0 %v1999
    %5750 = vmatpush1.msra.mxu0 %v1998
    %5751 = vmatprep.subr.mxu0 %v2005
    %5752 = vmatpush1.msra.mxu0 %v2004
    %5753 = vmatprep.subr.mxu0 %v2011
    %5754 = vmatpush1.msra.mxu0 %v2010
    %5755 = vmatprep.subr.mxu0 %v2017
    %5756 = vmatpush1.msra.mxu0 %v2016
    %5757 = vmatprep.subr.mxu0 %v2023
    %5758 = vmatpush1.msra.mxu0 %v2022
    %5759 = vmatprep.subr.mxu0 %v2029
    %5760 = vmatpush1.msra.mxu0 %v2028
    %5761 = vmatprep.subr.mxu0 %v2035
    %5762 = vmatpush1.msra.mxu0 %v2034
    %5763 = vmatprep.subr.mxu0 %v2041
    %5764 = vmatpush1.msra.mxu0 %v2040
    %5765 = vmatprep.subr.mxu0 %v2047
    %5766 = vmatpush1.msra.mxu0 %v2046
    %5767 = vmatprep.subr.mxu0 %v2053
    %5768 = vmatpush1.msra.mxu0 %v2052
    %5769 = vmatprep.subr.mxu0 %v2059
    %5770 = vmatpush1.msra.mxu0 %v2058
    %5771 = vmatprep.mubr.f32.mxu0 %v5633
    %5772 = vmatmul.mubr.f32.gmra.mrb[0].mxu0 %v5632
    %v5773 = vpop.f32.mrb[0].mxu0
    %v5774 = vadd.f32 %v2280, %v5773
    %v5775 = vpop.f32.mrb[0].mxu0
    %v5776 = vadd.f32 %v2284, %v5775
    %5777 = vdwg.mxu0
    %5778 = vmatprep.subr.mxu0 %v1875
    %5779 = vmatpush1.msra.mxu0 %v1874
    %5780 = vmatprep.subr.mxu0 %v1881
    %5781 = vmatpush1.msra.mxu0 %v1880
    %5782 = vmatprep.subr.mxu0 %v1887
    %5783 = vmatpush1.msra.mxu0 %v1886
    %5784 = vmatprep.subr.mxu0 %v1893
    %5785 = vmatpush1.msra.mxu0 %v1892
    %5786 = vmatprep.subr.mxu0 %v1899
    %5787 = vmatpush1.msra.mxu0 %v1898
    %5788 = vmatprep.subr.mxu0 %v1905
    %5789 = vmatpush1.msra.mxu0 %v1904
    %5790 = vmatprep.subr.mxu0 %v1911
    %5791 = vmatpush1.msra.mxu0 %v1910
    %5792 = vmatprep.subr.mxu0 %v1917
    %5793 = vmatpush1.msra.mxu0 %v1916
    %5794 = vmatprep.subr.mxu0 %v1923
    %5795 = vmatpush1.msra.mxu0 %v1922
    %5796 = vmatprep.subr.mxu0 %v1929
    %5797 = vmatpush1.msra.mxu0 %v1928
    %5798 = vmatprep.subr.mxu0 %v1935
    %5799 = vmatpush1.msra.mxu0 %v1934
    %5800 = vmatprep.subr.mxu0 %v1941
    %5801 = vmatpush1.msra.mxu0 %v1940
    %5802 = vmatprep.subr.mxu0 %v1947
    %5803 = vmatpush1.msra.mxu0 %v1946
    %5804 = vmatprep.subr.mxu0 %v1953
    %5805 = vmatpush1.msra.mxu0 %v1952
    %5806 = vmatprep.subr.mxu0 %v1959
    %5807 = vmatpush1.msra.mxu0 %v1958
    %5808 = vmatprep.subr.mxu0 %v1965
    %5809 = vmatpush1.msra.mxu0 %v1964
    %5810 = vmatprep.subr.mxu0 %v1971
    %5811 = vmatpush1.msra.mxu0 %v1970
    %5812 = vmatprep.subr.mxu0 %v1977
    %5813 = vmatpush1.msra.mxu0 %v1976
    %5814 = vmatprep.subr.mxu0 %v1983
    %5815 = vmatpush1.msra.mxu0 %v1982
    %5816 = vmatprep.subr.mxu0 %v1989
    %5817 = vmatpush1.msra.mxu0 %v1988
    %5818 = vmatprep.subr.mxu0 %v1995
    %5819 = vmatpush1.msra.mxu0 %v1994
    %5820 = vmatprep.subr.mxu0 %v2001
    %5821 = vmatpush1.msra.mxu0 %v2000
    %5822 = vmatprep.subr.mxu0 %v2007
    %5823 = vmatpush1.msra.mxu0 %v2006
    %5824 = vmatprep.subr.mxu0 %v2013
    %5825 = vmatpush1.msra.mxu0 %v2012
    %5826 = vmatprep.subr.mxu0 %v2019
    %5827 = vmatpush1.msra.mxu0 %v2018
    %5828 = vmatprep.subr.mxu0 %v2025
    %5829 = vmatpush1.msra.mxu0 %v2024
    %5830 = vmatprep.subr.mxu0 %v2031
    %5831 = vmatpush1.msra.mxu0 %v2030
    %5832 = vmatprep.subr.mxu0 %v2037
    %5833 = vmatpush1.msra.mxu0 %v2036
    %5834 = vmatprep.subr.mxu0 %v2043
    %5835 = vmatpush1.msra.mxu0 %v2042
    %5836 = vmatprep.subr.mxu0 %v2049
    %5837 = vmatpush1.msra.mxu0 %v2048
    %5838 = vmatprep.subr.mxu0 %v2055
    %5839 = vmatpush1.msra.mxu0 %v2054
    %5840 = vmatprep.subr.mxu0 %v2061
    %5841 = vmatpush1.msra.mxu0 %v2060
    %5842 = vmatprep.mubr.f32.mxu0 %v5633
    %5843 = vmatmul.mubr.f32.gmra.mrb[0].mxu0 %v5632
    %v5844 = vpop.f32.mrb[0].mxu0
    %v5845 = vadd.f32 %v2288, %v5844
    %v5846 = vpop.f32.mrb[0].mxu0
    %v5847 = vadd.f32 %v2292, %v5846
    %5848 = vdwg.mxu0
    %5849 = vmatprep.subr.mxu0 %v2063
    %5850 = vmatpush1.msra.mxu0 %v2062
    %5851 = vmatprep.subr.mxu0 %v2069
    %5852 = vmatpush1.msra.mxu0 %v2068
    %5853 = vmatprep.subr.mxu0 %v2075
    %5854 = vmatpush1.msra.mxu0 %v2074
    %5855 = vmatprep.subr.mxu0 %v2081
    %5856 = vmatpush1.msra.mxu0 %v2080
    %5857 = vmatprep.subr.mxu0 %v2087
    %5858 = vmatpush1.msra.mxu0 %v2086
    %5859 = vmatprep.subr.mxu0 %v2093
    %5860 = vmatpush1.msra.mxu0 %v2092
    %5861 = vmatprep.subr.mxu0 %v2099
    %5862 = vmatpush1.msra.mxu0 %v2098
    %5863 = vmatprep.subr.mxu0 %v2105
    %5864 = vmatpush1.msra.mxu0 %v2104
    %5865 = vmatprep.subr.mxu0 %v2111
    %5866 = vmatpush1.msra.mxu0 %v2110
    %5867 = vmatprep.subr.mxu0 %v2117
    %5868 = vmatpush1.msra.mxu0 %v2116
    %5869 = vmatprep.subr.mxu0 %v2123
    %5870 = vmatpush1.msra.mxu0 %v2122
    %5871 = vmatprep.subr.mxu0 %v2129
    %5872 = vmatpush1.msra.mxu0 %v2128
    %5873 = vmatprep.subr.mxu0 %v2135
    %5874 = vmatpush1.msra.mxu0 %v2134
    %5875 = vmatprep.subr.mxu0 %v2141
    %5876 = vmatpush1.msra.mxu0 %v2140
    %5877 = vmatprep.subr.mxu0 %v2147
    %5878 = vmatpush1.msra.mxu0 %v2146
    %5879 = vmatprep.subr.mxu0 %v2153
    %5880 = vmatpush1.msra.mxu0 %v2152
    %5881 = vmatprep.subr.mxu0 %v2159
    %5882 = vmatpush1.msra.mxu0 %v2158
    %5883 = vmatprep.subr.mxu0 %v2165
    %5884 = vmatpush1.msra.mxu0 %v2164
    %5885 = vmatprep.subr.mxu0 %v2171
    %5886 = vmatpush1.msra.mxu0 %v2170
    %5887 = vmatprep.subr.mxu0 %v2177
    %5888 = vmatpush1.msra.mxu0 %v2176
    %5889 = vmatprep.subr.mxu0 %v2183
    %5890 = vmatpush1.msra.mxu0 %v2182
    %5891 = vmatprep.subr.mxu0 %v2189
    %5892 = vmatpush1.msra.mxu0 %v2188
    %5893 = vmatprep.subr.mxu0 %v2195
    %5894 = vmatpush1.msra.mxu0 %v2194
    %5895 = vmatprep.subr.mxu0 %v2201
    %5896 = vmatpush1.msra.mxu0 %v2200
    %5897 = vmatprep.subr.mxu0 %v2207
    %5898 = vmatpush1.msra.mxu0 %v2206
    %5899 = vmatprep.subr.mxu0 %v2213
    %5900 = vmatpush1.msra.mxu0 %v2212
    %5901 = vmatprep.subr.mxu0 %v2219
    %5902 = vmatpush1.msra.mxu0 %v2218
    %5903 = vmatprep.subr.mxu0 %v2225
    %5904 = vmatpush1.msra.mxu0 %v2224
    %5905 = vmatprep.subr.mxu0 %v2231
    %5906 = vmatpush1.msra.mxu0 %v2230
    %5907 = vmatprep.subr.mxu0 %v2237
    %5908 = vmatpush1.msra.mxu0 %v2236
    %5909 = vmatprep.subr.mxu0 %v2243
    %5910 = vmatpush1.msra.mxu0 %v2242
    %5911 = vmatprep.subr.mxu0 %v2249
    %5912 = vmatpush1.msra.mxu0 %v2248
    %5913 = vmatprep.mubr.f32.mxu0 %v5617
    %5914 = vmatmul.mubr.f32.gmra.mrb[0].mxu0 %v5616
    %v5915 = vpop.f32.mrb[0].mxu0
    %v5916 = vadd.f32 %v2516, %v5915
    %v5917 = vpop.f32.mrb[0].mxu0
    %v5918 = vadd.f32 %v2520, %v5917
    %5919 = vdwg.mxu0
    %5920 = vmatprep.subr.mxu0 %v2065
    %5921 = vmatpush1.msra.mxu0 %v2064
    %5922 = vmatprep.subr.mxu0 %v2071
    %5923 = vmatpush1.msra.mxu0 %v2070
    %5924 = vmatprep.subr.mxu0 %v2077
    %5925 = vmatpush1.msra.mxu0 %v2076
    %5926 = vmatprep.subr.mxu0 %v2083
    %5927 = vmatpush1.msra.mxu0 %v2082
    %5928 = vmatprep.subr.mxu0 %v2089
    %5929 = vmatpush1.msra.mxu0 %v2088
    %5930 = vmatprep.subr.mxu0 %v2095
    %5931 = vmatpush1.msra.mxu0 %v2094
    %5932 = vmatprep.subr.mxu0 %v2101
    %5933 = vmatpush1.msra.mxu0 %v2100
    %5934 = vmatprep.subr.mxu0 %v2107
    %5935 = vmatpush1.msra.mxu0 %v2106
    %5936 = vmatprep.subr.mxu0 %v2113
    %5937 = vmatpush1.msra.mxu0 %v2112
    %5938 = vmatprep.subr.mxu0 %v2119
    %5939 = vmatpush1.msra.mxu0 %v2118
    %5940 = vmatprep.subr.mxu0 %v2125
    %5941 = vmatpush1.msra.mxu0 %v2124
    %5942 = vmatprep.subr.mxu0 %v2131
    %5943 = vmatpush1.msra.mxu0 %v2130
    %5944 = vmatprep.subr.mxu0 %v2137
    %5945 = vmatpush1.msra.mxu0 %v2136
    %5946 = vmatprep.subr.mxu0 %v2143
    %5947 = vmatpush1.msra.mxu0 %v2142
    %5948 = vmatprep.subr.mxu0 %v2149
    %5949 = vmatpush1.msra.mxu0 %v2148
    %5950 = vmatprep.subr.mxu0 %v2155
    %5951 = vmatpush1.msra.mxu0 %v2154
    %5952 = vmatprep.subr.mxu0 %v2161
    %5953 = vmatpush1.msra.mxu0 %v2160
    %5954 = vmatprep.subr.mxu0 %v2167
    %5955 = vmatpush1.msra.mxu0 %v2166
    %5956 = vmatprep.subr.mxu0 %v2173
    %5957 = vmatpush1.msra.mxu0 %v2172
    %5958 = vmatprep.subr.mxu0 %v2179
    %5959 = vmatpush1.msra.mxu0 %v2178
    %5960 = vmatprep.subr.mxu0 %v2185
    %5961 = vmatpush1.msra.mxu0 %v2184
    %5962 = vmatprep.subr.mxu0 %v2191
    %5963 = vmatpush1.msra.mxu0 %v2190
    %5964 = vmatprep.subr.mxu0 %v2197
    %5965 = vmatpush1.msra.mxu0 %v2196
    %5966 = vmatprep.subr.mxu0 %v2203
    %5967 = vmatpush1.msra.mxu0 %v2202
    %5968 = vmatprep.subr.mxu0 %v2209
    %5969 = vmatpush1.msra.mxu0 %v2208
    %5970 = vmatprep.subr.mxu0 %v2215
    %5971 = vmatpush1.msra.mxu0 %v2214
    %5972 = vmatprep.subr.mxu0 %v2221
    %5973 = vmatpush1.msra.mxu0 %v2220
    %5974 = vmatprep.subr.mxu0 %v2227
    %5975 = vmatpush1.msra.mxu0 %v2226
    %5976 = vmatprep.subr.mxu0 %v2233
    %5977 = vmatpush1.msra.mxu0 %v2232
    %5978 = vmatprep.subr.mxu0 %v2239
    %5979 = vmatpush1.msra.mxu0 %v2238
    %5980 = vmatprep.subr.mxu0 %v2245
    %5981 = vmatpush1.msra.mxu0 %v2244
    %5982 = vmatprep.subr.mxu0 %v2251
    %5983 = vmatpush1.msra.mxu0 %v2250
    %5984 = vmatprep.mubr.f32.mxu0 %v5617
    %5985 = vmatmul.mubr.f32.gmra.mrb[0].mxu0 %v5616
    %v5986 = vpop.f32.mrb[0].mxu0
    %v5987 = vadd.f32 %v2524, %v5986
    %v5988 = vpop.f32.mrb[0].mxu0
    %v5989 = vadd.f32 %v2528, %v5988
    %5990 = vdwg.mxu0
    %5991 = vmatprep.subr.mxu0 %v2067
    %5992 = vmatpush1.msra.mxu0 %v2066
    %5993 = vmatprep.subr.mxu0 %v2073
    %5994 = vmatpush1.msra.mxu0 %v2072
    %5995 = vmatprep.subr.mxu0 %v2079
    %5996 = vmatpush1.msra.mxu0 %v2078
    %5997 = vmatprep.subr.mxu0 %v2085
    %5998 = vmatpush1.msra.mxu0 %v2084
    %5999 = vmatprep.subr.mxu0 %v2091
    %6000 = vmatpush1.msra.mxu0 %v2090
    %6001 = vmatprep.subr.mxu0 %v2097
    %6002 = vmatpush1.msra.mxu0 %v2096
    %6003 = vmatprep.subr.mxu0 %v2103
    %6004 = vmatpush1.msra.mxu0 %v2102
    %6005 = vmatprep.subr.mxu0 %v2109
    %6006 = vmatpush1.msra.mxu0 %v2108
    %6007 = vmatprep.subr.mxu0 %v2115
    %6008 = vmatpush1.msra.mxu0 %v2114
    %6009 = vmatprep.subr.mxu0 %v2121
    %6010 = vmatpush1.msra.mxu0 %v2120
    %6011 = vmatprep.subr.mxu0 %v2127
    %6012 = vmatpush1.msra.mxu0 %v2126
    %6013 = vmatprep.subr.mxu0 %v2133
    %6014 = vmatpush1.msra.mxu0 %v2132
    %6015 = vmatprep.subr.mxu0 %v2139
    %6016 = vmatpush1.msra.mxu0 %v2138
    %6017 = vmatprep.subr.mxu0 %v2145
    %6018 = vmatpush1.msra.mxu0 %v2144
    %6019 = vmatprep.subr.mxu0 %v2151
    %6020 = vmatpush1.msra.mxu0 %v2150
    %6021 = vmatprep.subr.mxu0 %v2157
    %6022 = vmatpush1.msra.mxu0 %v2156
    %6023 = vmatprep.subr.mxu0 %v2163
    %6024 = vmatpush1.msra.mxu0 %v2162
    %6025 = vmatprep.subr.mxu0 %v2169
    %6026 = vmatpush1.msra.mxu0 %v2168
    %6027 = vmatprep.subr.mxu0 %v2175
    %6028 = vmatpush1.msra.mxu0 %v2174
    %6029 = vmatprep.subr.mxu0 %v2181
    %6030 = vmatpush1.msra.mxu0 %v2180
    %6031 = vmatprep.subr.mxu0 %v2187
    %6032 = vmatpush1.msra.mxu0 %v2186
    %6033 = vmatprep.subr.mxu0 %v2193
    %6034 = vmatpush1.msra.mxu0 %v2192
    %6035 = vmatprep.subr.mxu0 %v2199
    %6036 = vmatpush1.msra.mxu0 %v2198
    %6037 = vmatprep.subr.mxu0 %v2205
    %6038 = vmatpush1.msra.mxu0 %v2204
    %6039 = vmatprep.subr.mxu0 %v2211
    %6040 = vmatpush1.msra.mxu0 %v2210
    %6041 = vmatprep.subr.mxu0 %v2217
    %6042 = vmatpush1.msra.mxu0 %v2216
    %6043 = vmatprep.subr.mxu0 %v2223
    %6044 = vmatpush1.msra.mxu0 %v2222
    %6045 = vmatprep.subr.mxu0 %v2229
    %6046 = vmatpush1.msra.mxu0 %v2228
    %6047 = vmatprep.subr.mxu0 %v2235
    %6048 = vmatpush1.msra.mxu0 %v2234
    %6049 = vmatprep.subr.mxu0 %v2241
    %6050 = vmatpush1.msra.mxu0 %v2240
    %6051 = vmatprep.subr.mxu0 %v2247
    %6052 = vmatpush1.msra.mxu0 %v2246
    %6053 = vmatprep.subr.mxu0 %v2253
    %6054 = vmatpush1.msra.mxu0 %v2252
    %6055 = vmatprep.mubr.f32.mxu0 %v5617
    %6056 = vmatmul.mubr.f32.gmra.mrb[0].mxu0 %v5616
    %v6057 = vpop.f32.mrb[0].mxu0
    %v6058 = vadd.f32 %v2532, %v6057
    %v6059 = vpop.f32.mrb[0].mxu0
    %v6060 = vadd.f32 %v2536, %v6059
    %6061 = vdwg.mxu0
    %v6062 = vadd.f32 %v5618, %v5703
    %v6063 = vadd.f32 %v5619, %v5705
    %v6064 = vxor.u32 %v6062, 2147483648
    %v6065 = vxor.u32 %v6063, 2147483648
    %v6066 = vmul.f32 %v6064, 1.442695
    %v6067 = vpow.pop %v6066
    %v6068 = vmul.f32 %v6065, 1.442695
    %v6069 = vpow.pop %v6068
    %v6070 = vadd.f32 %v6067, 1.0
    %v6071 = vadd.f32 %v6069, 1.0
    %v6072 = vrcp.pop %v6070
    %v6073 = vmul.f32 1.0, %v6072
    %v6074 = vrcp.pop %v6071
    %v6075 = vmul.f32 1.0, %v6074
    %v6076 = vadd.f32 %v5620, %v5774
    %v6077 = vadd.f32 %v5621, %v5776
    %v6078 = vxor.u32 %v6076, 2147483648
    %v6079 = vxor.u32 %v6077, 2147483648
    %v6080 = vmul.f32 %v6078, 1.442695
    %v6081 = vpow.pop %v6080
    %v6082 = vmul.f32 %v6079, 1.442695
    %v6083 = vpow.pop %v6082
    %v6084 = vadd.f32 %v6081, 1.0
    %v6085 = vadd.f32 %v6083, 1.0
    %v6086 = vrcp.pop %v6084
    %v6087 = vmul.f32 1.0, %v6086
    %v6088 = vrcp.pop %v6085
    %v6089 = vmul.f32 1.0, %v6088
    %v6090 = vmul.f32 %v6073, %v5845
    %v6091 = vmul.f32 %v6075, %v5847
    %v6092 = vadd.f32 %v5622, %v6090
    %v6093 = vadd.f32 %v5623, %v6091
    %v6094 = vtanh.pop %v6092
    %v6095 = vtanh.pop %v6093
    %v6096 = vsub.f32 1.0, %v6087
    %v6097 = vsub.f32 1.0, %v6089
    %v6098 = vmul.f32 %v6096, %v6094
    %v6099 = vmul.f32 %v6097, %v6095
    %v6100 = vmul.f32 %v6087, %v5632
    %v6101 = vmul.f32 %v6089, %v5633
    %v6102 = vadd.f32 %v6098, %v6100
    %v6103 = vadd.f32 %v6099, %v6101
    %v6106 = vrot.slane %v5916, 4
    %v6107 = vrot.slane %v5918, 4
    %v6110 = vadd.f32 %v5624, %v6106
    %v6111 = vadd.f32 %v5625, %v6107
    %v6112 = vxor.u32 %v6110, 2147483648
    %v6113 = vxor.u32 %v6111, 2147483648
    %v6114 = vmul.f32 %v6112, 1.442695
    %v6115 = vpow.pop %v6114
    %v6116 = vmul.f32 %v6113, 1.442695
    %v6117 = vpow.pop %v6116
    %v6118 = vadd.f32 %v6115, 1.0
    %v6119 = vadd.f32 %v6117, 1.0
    %v6120 = vrcp.pop %v6118
    %v6121 = vmul.f32 1.0, %v6120
    %v6122 = vrcp.pop %v6119
    %v6123 = vmul.f32 1.0, %v6122
    %v6126 = vrot.slane %v5987, 4
    %v6127 = vrot.slane %v5989, 4
    %v6130 = vadd.f32 %v5626, %v6126
    %v6131 = vadd.f32 %v5627, %v6127
    %v6132 = vxor.u32 %v6130, 2147483648
    %v6133 = vxor.u32 %v6131, 2147483648
    %v6134 = vmul.f32 %v6132, 1.442695
    %v6135 = vpow.pop %v6134
    %v6136 = vmul.f32 %v6133, 1.442695
    %v6137 = vpow.pop %v6136
    %v6138 = vadd.f32 %v6135, 1.0
    %v6139 = vadd.f32 %v6137, 1.0
    %v6140 = vrcp.pop %v6138
    %v6141 = vmul.f32 1.0, %v6140
    %v6142 = vrcp.pop %v6139
    %v6143 = vmul.f32 1.0, %v6142
    %v6146 = vrot.slane %v6058, 4
    %v6147 = vrot.slane %v6060, 4
    %v6150 = vmul.f32 %v6121, %v6146
    %v6151 = vmul.f32 %v6123, %v6147
    %v6152 = vadd.f32 %v5628, %v6150
    %v6153 = vadd.f32 %v5629, %v6151
    %v6154 = vtanh.pop %v6152
    %v6155 = vtanh.pop %v6153
    %v6156 = vsub.f32 1.0, %v6141
    %v6157 = vsub.f32 1.0, %v6143
    %v6158 = vmul.f32 %v6156, %v6154
    %v6159 = vmul.f32 %v6157, %v6155
    %v6162 = vrot.slane %v5616, 4
    %v6163 = vrot.slane %v5617, 4
    %v6166 = vmul.f32 %v6141, %v6162
    %v6167 = vmul.f32 %v6143, %v6163
    %v6168 = vadd.f32 %v6158, %v6166
    %v6169 = vadd.f32 %v6159, %v6167
    %v6170 = vld [vmem:[#allocation2 + $0x120] sm:$0xf0]
    %v6171 = vld [vmem:[#allocation2 + $0x128] sm:$0xf0]
    %v6172 = vld [vmem:[#allocation2 + $0x130] sm:$0xf0]
    %v6173 = vld [vmem:[#allocation2 + $0x138] sm:$0xf0]
    %v6174 = vld [vmem:[#allocation2 + $0x140] sm:$0xf0]
    %v6175 = vld [vmem:[#allocation2 + $0x148] sm:$0xf0]
    %v6176 = vld [vmem:[#allocation2 + $0x30] sm:$0xf]
    %v6177 = vld [vmem:[#allocation2 + $0x38] sm:$0xf]
    %v6178 = vld [vmem:[#allocation2 + $0x40] sm:$0xf]
    %v6179 = vld [vmem:[#allocation2 + $0x48] sm:$0xf]
    %v6180 = vld [vmem:[#allocation2 + $0x50] sm:$0xf]
    %v6181 = vld [vmem:[#allocation2 + $0x58] sm:$0xf]
    %6182 = vmatprep.subr.mxu0 %v1871
    %6183 = vmatpush1.msra.mxu0 %v1870
    %6184 = vmatprep.subr.mxu0 %v1877
    %6185 = vmatpush1.msra.mxu0 %v1876
    %6186 = vmatprep.subr.mxu0 %v1883
    %6187 = vmatpush1.msra.mxu0 %v1882
    %6188 = vmatprep.subr.mxu0 %v1889
    %6189 = vmatpush1.msra.mxu0 %v1888
    %6190 = vmatprep.subr.mxu0 %v1895
    %6191 = vmatpush1.msra.mxu0 %v1894
    %6192 = vmatprep.subr.mxu0 %v1901
    %6193 = vmatpush1.msra.mxu0 %v1900
    %6194 = vmatprep.subr.mxu0 %v1907
    %6195 = vmatpush1.msra.mxu0 %v1906
    %6196 = vmatprep.subr.mxu0 %v1913
    %6197 = vmatpush1.msra.mxu0 %v1912
    %6198 = vmatprep.subr.mxu0 %v1919
    %6199 = vmatpush1.msra.mxu0 %v1918
    %6200 = vmatprep.subr.mxu0 %v1925
    %6201 = vmatpush1.msra.mxu0 %v1924
    %6202 = vmatprep.subr.mxu0 %v1931
    %6203 = vmatpush1.msra.mxu0 %v1930
    %6204 = vmatprep.subr.mxu0 %v1937
    %6205 = vmatpush1.msra.mxu0 %v1936
    %6206 = vmatprep.subr.mxu0 %v1943
    %6207 = vmatpush1.msra.mxu0 %v1942
    %6208 = vmatprep.subr.mxu0 %v1949
    %6209 = vmatpush1.msra.mxu0 %v1948
    %6210 = vmatprep.subr.mxu0 %v1955
    %6211 = vmatpush1.msra.mxu0 %v1954
    %6212 = vmatprep.subr.mxu0 %v1961
    %6213 = vmatpush1.msra.mxu0 %v1960
    %6214 = vmatprep.subr.mxu0 %v1967
    %6215 = vmatpush1.msra.mxu0 %v1966
    %6216 = vmatprep.subr.mxu0 %v1973
    %6217 = vmatpush1.msra.mxu0 %v1972
    %6218 = vmatprep.subr.mxu0 %v1979
    %6219 = vmatpush1.msra.mxu0 %v1978
    %6220 = vmatprep.subr.mxu0 %v1985
    %6221 = vmatpush1.msra.mxu0 %v1984
    %6222 = vmatprep.subr.mxu0 %v1991
    %6223 = vmatpush1.msra.mxu0 %v1990
    %6224 = vmatprep.subr.mxu0 %v1997
    %6225 = vmatpush1.msra.mxu0 %v1996
    %6226 = vmatprep.subr.mxu0 %v2003
    %6227 = vmatpush1.msra.mxu0 %v2002
    %6228 = vmatprep.subr.mxu0 %v2009
    %6229 = vmatpush1.msra.mxu0 %v2008
    %6230 = vmatprep.subr.mxu0 %v2015
    %6231 = vmatpush1.msra.mxu0 %v2014
    %6232 = vmatprep.subr.mxu0 %v2021
    %6233 = vmatpush1.msra.mxu0 %v2020
    %6234 = vmatprep.subr.mxu0 %v2027
    %6235 = vmatpush1.msra.mxu0 %v2026
    %6236 = vmatprep.subr.mxu0 %v2033
    %6237 = vmatpush1.msra.mxu0 %v2032
    %6238 = vmatprep.subr.mxu0 %v2039
    %6239 = vmatpush1.msra.mxu0 %v2038
    %6240 = vmatprep.subr.mxu0 %v2045
    %6241 = vmatpush1.msra.mxu0 %v2044
    %6242 = vmatprep.subr.mxu0 %v2051
    %6243 = vmatpush1.msra.mxu0 %v2050
    %6244 = vmatprep.subr.mxu0 %v2057
    %6245 = vmatpush1.msra.mxu0 %v2056
    %6246 = vmatprep.mubr.f32.mxu0 %v6103
    %6247 = vmatmul.mubr.f32.gmra.mrb[0].mxu0 %v6102
    %v6248 = vpop.f32.mrb[0].mxu0
    %v6249 = vadd.f32 %v2272, %v6248
    %v6250 = vpop.f32.mrb[0].mxu0
    %v6251 = vadd.f32 %v2276, %v6250
    %6252 = vdwg.mxu0
    %6253 = vmatprep.subr.mxu0 %v1873
    %6254 = vmatpush1.msra.mxu0 %v1872
    %6255 = vmatprep.subr.mxu0 %v1879
    %6256 = vmatpush1.msra.mxu0 %v1878
    %6257 = vmatprep.subr.mxu0 %v1885
    %6258 = vmatpush1.msra.mxu0 %v1884
    %6259 = vmatprep.subr.mxu0 %v1891
    %6260 = vmatpush1.msra.mxu0 %v1890
    %6261 = vmatprep.subr.mxu0 %v1897
    %6262 = vmatpush1.msra.mxu0 %v1896
    %6263 = vmatprep.subr.mxu0 %v1903
    %6264 = vmatpush1.msra.mxu0 %v1902
    %6265 = vmatprep.subr.mxu0 %v1909
    %6266 = vmatpush1.msra.mxu0 %v1908
    %6267 = vmatprep.subr.mxu0 %v1915
    %6268 = vmatpush1.msra.mxu0 %v1914
    %6269 = vmatprep.subr.mxu0 %v1921
    %6270 = vmatpush1.msra.mxu0 %v1920
    %6271 = vmatprep.subr.mxu0 %v1927
    %6272 = vmatpush1.msra.mxu0 %v1926
    %6273 = vmatprep.subr.mxu0 %v1933
    %6274 = vmatpush1.msra.mxu0 %v1932
    %6275 = vmatprep.subr.mxu0 %v1939
    %6276 = vmatpush1.msra.mxu0 %v1938
    %6277 = vmatprep.subr.mxu0 %v1945
    %6278 = vmatpush1.msra.mxu0 %v1944
    %6279 = vmatprep.subr.mxu0 %v1951
    %6280 = vmatpush1.msra.mxu0 %v1950
    %6281 = vmatprep.subr.mxu0 %v1957
    %6282 = vmatpush1.msra.mxu0 %v1956
    %6283 = vmatprep.subr.mxu0 %v1963
    %6284 = vmatpush1.msra.mxu0 %v1962
    %6285 = vmatprep.subr.mxu0 %v1969
    %6286 = vmatpush1.msra.mxu0 %v1968
    %6287 = vmatprep.subr.mxu0 %v1975
    %6288 = vmatpush1.msra.mxu0 %v1974
    %6289 = vmatprep.subr.mxu0 %v1981
    %6290 = vmatpush1.msra.mxu0 %v1980
    %6291 = vmatprep.subr.mxu0 %v1987
    %6292 = vmatpush1.msra.mxu0 %v1986
    %6293 = vmatprep.subr.mxu0 %v1993
    %6294 = vmatpush1.msra.mxu0 %v1992
    %6295 = vmatprep.subr.mxu0 %v1999
    %6296 = vmatpush1.msra.mxu0 %v1998
    %6297 = vmatprep.subr.mxu0 %v2005
    %6298 = vmatpush1.msra.mxu0 %v2004
    %6299 = vmatprep.subr.mxu0 %v2011
    %6300 = vmatpush1.msra.mxu0 %v2010
    %6301 = vmatprep.subr.mxu0 %v2017
    %6302 = vmatpush1.msra.mxu0 %v2016
    %6303 = vmatprep.subr.mxu0 %v2023
    %6304 = vmatpush1.msra.mxu0 %v2022
    %6305 = vmatprep.subr.mxu0 %v2029
    %6306 = vmatpush1.msra.mxu0 %v2028
    %6307 = vmatprep.subr.mxu0 %v2035
    %6308 = vmatpush1.msra.mxu0 %v2034
    %6309 = vmatprep.subr.mxu0 %v2041
    %6310 = vmatpush1.msra.mxu0 %v2040
    %6311 = vmatprep.subr.mxu0 %v2047
    %6312 = vmatpush1.msra.mxu0 %v2046
    %6313 = vmatprep.subr.mxu0 %v2053
    %6314 = vmatpush1.msra.mxu0 %v2052
    %6315 = vmatprep.subr.mxu0 %v2059
    %6316 = vmatpush1.msra.mxu0 %v2058
    %6317 = vmatprep.mubr.f32.mxu0 %v6103
    %6318 = vmatmul.mubr.f32.gmra.mrb[0].mxu0 %v6102
    %v6319 = vpop.f32.mrb[0].mxu0
    %v6320 = vadd.f32 %v2280, %v6319
    %v6321 = vpop.f32.mrb[0].mxu0
    %v6322 = vadd.f32 %v2284, %v6321
    %6323 = vdwg.mxu0
    %6324 = vmatprep.subr.mxu0 %v1875
    %6325 = vmatpush1.msra.mxu0 %v1874
    %6326 = vmatprep.subr.mxu0 %v1881
    %6327 = vmatpush1.msra.mxu0 %v1880
    %6328 = vmatprep.subr.mxu0 %v1887
    %6329 = vmatpush1.msra.mxu0 %v1886
    %6330 = vmatprep.subr.mxu0 %v1893
    %6331 = vmatpush1.msra.mxu0 %v1892
    %6332 = vmatprep.subr.mxu0 %v1899
    %6333 = vmatpush1.msra.mxu0 %v1898
    %6334 = vmatprep.subr.mxu0 %v1905
    %6335 = vmatpush1.msra.mxu0 %v1904
    %6336 = vmatprep.subr.mxu0 %v1911
    %6337 = vmatpush1.msra.mxu0 %v1910
    %6338 = vmatprep.subr.mxu0 %v1917
    %6339 = vmatpush1.msra.mxu0 %v1916
    %6340 = vmatprep.subr.mxu0 %v1923
    %6341 = vmatpush1.msra.mxu0 %v1922
    %6342 = vmatprep.subr.mxu0 %v1929
    %6343 = vmatpush1.msra.mxu0 %v1928
    %6344 = vmatprep.subr.mxu0 %v1935
    %6345 = vmatpush1.msra.mxu0 %v1934
    %6346 = vmatprep.subr.mxu0 %v1941
    %6347 = vmatpush1.msra.mxu0 %v1940
    %6348 = vmatprep.subr.mxu0 %v1947
    %6349 = vmatpush1.msra.mxu0 %v1946
    %6350 = vmatprep.subr.mxu0 %v1953
    %6351 = vmatpush1.msra.mxu0 %v1952
    %6352 = vmatprep.subr.mxu0 %v1959
    %6353 = vmatpush1.msra.mxu0 %v1958
    %6354 = vmatprep.subr.mxu0 %v1965
    %6355 = vmatpush1.msra.mxu0 %v1964
    %6356 = vmatprep.subr.mxu0 %v1971
    %6357 = vmatpush1.msra.mxu0 %v1970
    %6358 = vmatprep.subr.mxu0 %v1977
    %6359 = vmatpush1.msra.mxu0 %v1976
    %6360 = vmatprep.subr.mxu0 %v1983
    %6361 = vmatpush1.msra.mxu0 %v1982
    %6362 = vmatprep.subr.mxu0 %v1989
    %6363 = vmatpush1.msra.mxu0 %v1988
    %6364 = vmatprep.subr.mxu0 %v1995
    %6365 = vmatpush1.msra.mxu0 %v1994
    %6366 = vmatprep.subr.mxu0 %v2001
    %6367 = vmatpush1.msra.mxu0 %v2000
    %6368 = vmatprep.subr.mxu0 %v2007
    %6369 = vmatpush1.msra.mxu0 %v2006
    %6370 = vmatprep.subr.mxu0 %v2013
    %6371 = vmatpush1.msra.mxu0 %v2012
    %6372 = vmatprep.subr.mxu0 %v2019
    %6373 = vmatpush1.msra.mxu0 %v2018
    %6374 = vmatprep.subr.mxu0 %v2025
    %6375 = vmatpush1.msra.mxu0 %v2024
    %6376 = vmatprep.subr.mxu0 %v2031
    %6377 = vmatpush1.msra.mxu0 %v2030
    %6378 = vmatprep.subr.mxu0 %v2037
    %6379 = vmatpush1.msra.mxu0 %v2036
    %6380 = vmatprep.subr.mxu0 %v2043
    %6381 = vmatpush1.msra.mxu0 %v2042
    %6382 = vmatprep.subr.mxu0 %v2049
    %6383 = vmatpush1.msra.mxu0 %v2048
    %6384 = vmatprep.subr.mxu0 %v2055
    %6385 = vmatpush1.msra.mxu0 %v2054
    %6386 = vmatprep.subr.mxu0 %v2061
    %6387 = vmatpush1.msra.mxu0 %v2060
    %6388 = vmatprep.mubr.f32.mxu0 %v6103
    %6389 = vmatmul.mubr.f32.gmra.mrb[0].mxu0 %v6102
    %v6390 = vpop.f32.mrb[0].mxu0
    %v6391 = vadd.f32 %v2288, %v6390
    %v6392 = vpop.f32.mrb[0].mxu0
    %v6393 = vadd.f32 %v2292, %v6392
    %6394 = vdwg.mxu0
    %v6397 = vrot.slane %v6168, 4
    %v6398 = vrot.slane %v6169, 4
    %6401 = vmatprep.subr.mxu0 %v2063
    %6402 = vmatpush1.msra.mxu0 %v2062
    %6403 = vmatprep.subr.mxu0 %v2069
    %6404 = vmatpush1.msra.mxu0 %v2068
    %6405 = vmatprep.subr.mxu0 %v2075
    %6406 = vmatpush1.msra.mxu0 %v2074
    %6407 = vmatprep.subr.mxu0 %v2081
    %6408 = vmatpush1.msra.mxu0 %v2080
    %6409 = vmatprep.subr.mxu0 %v2087
    %6410 = vmatpush1.msra.mxu0 %v2086
    %6411 = vmatprep.subr.mxu0 %v2093
    %6412 = vmatpush1.msra.mxu0 %v2092
    %6413 = vmatprep.subr.mxu0 %v2099
    %6414 = vmatpush1.msra.mxu0 %v2098
    %6415 = vmatprep.subr.mxu0 %v2105
    %6416 = vmatpush1.msra.mxu0 %v2104
    %6417 = vmatprep.subr.mxu0 %v2111
    %6418 = vmatpush1.msra.mxu0 %v2110
    %6419 = vmatprep.subr.mxu0 %v2117
    %6420 = vmatpush1.msra.mxu0 %v2116
    %6421 = vmatprep.subr.mxu0 %v2123
    %6422 = vmatpush1.msra.mxu0 %v2122
    %6423 = vmatprep.subr.mxu0 %v2129
    %6424 = vmatpush1.msra.mxu0 %v2128
    %6425 = vmatprep.subr.mxu0 %v2135
    %6426 = vmatpush1.msra.mxu0 %v2134
    %6427 = vmatprep.subr.mxu0 %v2141
    %6428 = vmatpush1.msra.mxu0 %v2140
    %6429 = vmatprep.subr.mxu0 %v2147
    %6430 = vmatpush1.msra.mxu0 %v2146
    %6431 = vmatprep.subr.mxu0 %v2153
    %6432 = vmatpush1.msra.mxu0 %v2152
    %6433 = vmatprep.subr.mxu0 %v2159
    %6434 = vmatpush1.msra.mxu0 %v2158
    %6435 = vmatprep.subr.mxu0 %v2165
    %6436 = vmatpush1.msra.mxu0 %v2164
    %6437 = vmatprep.subr.mxu0 %v2171
    %6438 = vmatpush1.msra.mxu0 %v2170
    %6439 = vmatprep.subr.mxu0 %v2177
    %6440 = vmatpush1.msra.mxu0 %v2176
    %6441 = vmatprep.subr.mxu0 %v2183
    %6442 = vmatpush1.msra.mxu0 %v2182
    %6443 = vmatprep.subr.mxu0 %v2189
    %6444 = vmatpush1.msra.mxu0 %v2188
    %6445 = vmatprep.subr.mxu0 %v2195
    %6446 = vmatpush1.msra.mxu0 %v2194
    %6447 = vmatprep.subr.mxu0 %v2201
    %6448 = vmatpush1.msra.mxu0 %v2200
    %6449 = vmatprep.subr.mxu0 %v2207
    %6450 = vmatpush1.msra.mxu0 %v2206
    %6451 = vmatprep.subr.mxu0 %v2213
    %6452 = vmatpush1.msra.mxu0 %v2212
    %6453 = vmatprep.subr.mxu0 %v2219
    %6454 = vmatpush1.msra.mxu0 %v2218
    %6455 = vmatprep.subr.mxu0 %v2225
    %6456 = vmatpush1.msra.mxu0 %v2224
    %6457 = vmatprep.subr.mxu0 %v2231
    %6458 = vmatpush1.msra.mxu0 %v2230
    %6459 = vmatprep.subr.mxu0 %v2237
    %6460 = vmatpush1.msra.mxu0 %v2236
    %6461 = vmatprep.subr.mxu0 %v2243
    %6462 = vmatpush1.msra.mxu0 %v2242
    %6463 = vmatprep.subr.mxu0 %v2249
    %6464 = vmatpush1.msra.mxu0 %v2248
    %6465 = vmatprep.mubr.f32.mxu0 %v6398
    %6466 = vmatmul.mubr.f32.gmra.mrb[0].mxu0 %v6397
    %v6467 = vpop.f32.mrb[0].mxu0
    %v6468 = vadd.f32 %v2516, %v6467
    %v6469 = vpop.f32.mrb[0].mxu0
    %v6470 = vadd.f32 %v2520, %v6469
    %6471 = vdwg.mxu0
    %6472 = vmatprep.subr.mxu0 %v2065
    %6473 = vmatpush1.msra.mxu0 %v2064
    %6474 = vmatprep.subr.mxu0 %v2071
    %6475 = vmatpush1.msra.mxu0 %v2070
    %6476 = vmatprep.subr.mxu0 %v2077
    %6477 = vmatpush1.msra.mxu0 %v2076
    %6478 = vmatprep.subr.mxu0 %v2083
    %6479 = vmatpush1.msra.mxu0 %v2082
    %6480 = vmatprep.subr.mxu0 %v2089
    %6481 = vmatpush1.msra.mxu0 %v2088
    %6482 = vmatprep.subr.mxu0 %v2095
    %6483 = vmatpush1.msra.mxu0 %v2094
    %6484 = vmatprep.subr.mxu0 %v2101
    %6485 = vmatpush1.msra.mxu0 %v2100
    %6486 = vmatprep.subr.mxu0 %v2107
    %6487 = vmatpush1.msra.mxu0 %v2106
    %6488 = vmatprep.subr.mxu0 %v2113
    %6489 = vmatpush1.msra.mxu0 %v2112
    %6490 = vmatprep.subr.mxu0 %v2119
    %6491 = vmatpush1.msra.mxu0 %v2118
    %6492 = vmatprep.subr.mxu0 %v2125
    %6493 = vmatpush1.msra.mxu0 %v2124
    %6494 = vmatprep.subr.mxu0 %v2131
    %6495 = vmatpush1.msra.mxu0 %v2130
    %6496 = vmatprep.subr.mxu0 %v2137
    %6497 = vmatpush1.msra.mxu0 %v2136
    %6498 = vmatprep.subr.mxu0 %v2143
    %6499 = vmatpush1.msra.mxu0 %v2142
    %6500 = vmatprep.subr.mxu0 %v2149
    %6501 = vmatpush1.msra.mxu0 %v2148
    %6502 = vmatprep.subr.mxu0 %v2155
    %6503 = vmatpush1.msra.mxu0 %v2154
    %6504 = vmatprep.subr.mxu0 %v2161
    %6505 = vmatpush1.msra.mxu0 %v2160
    %6506 = vmatprep.subr.mxu0 %v2167
    %6507 = vmatpush1.msra.mxu0 %v2166
    %6508 = vmatprep.subr.mxu0 %v2173
    %6509 = vmatpush1.msra.mxu0 %v2172
    %6510 = vmatprep.subr.mxu0 %v2179
    %6511 = vmatpush1.msra.mxu0 %v2178
    %6512 = vmatprep.subr.mxu0 %v2185
    %6513 = vmatpush1.msra.mxu0 %v2184
    %6514 = vmatprep.subr.mxu0 %v2191
    %6515 = vmatpush1.msra.mxu0 %v2190
    %6516 = vmatprep.subr.mxu0 %v2197
    %6517 = vmatpush1.msra.mxu0 %v2196
    %6518 = vmatprep.subr.mxu0 %v2203
    %6519 = vmatpush1.msra.mxu0 %v2202
    %6520 = vmatprep.subr.mxu0 %v2209
    %6521 = vmatpush1.msra.mxu0 %v2208
    %6522 = vmatprep.subr.mxu0 %v2215
    %6523 = vmatpush1.msra.mxu0 %v2214
    %6524 = vmatprep.subr.mxu0 %v2221
    %6525 = vmatpush1.msra.mxu0 %v2220
    %6526 = vmatprep.subr.mxu0 %v2227
    %6527 = vmatpush1.msra.mxu0 %v2226
    %6528 = vmatprep.subr.mxu0 %v2233
    %6529 = vmatpush1.msra.mxu0 %v2232
    %6530 = vmatprep.subr.mxu0 %v2239
    %6531 = vmatpush1.msra.mxu0 %v2238
    %6532 = vmatprep.subr.mxu0 %v2245
    %6533 = vmatpush1.msra.mxu0 %v2244
    %6534 = vmatprep.subr.mxu0 %v2251
    %6535 = vmatpush1.msra.mxu0 %v2250
    %6536 = vmatprep.mubr.f32.mxu0 %v6398
    %6537 = vmatmul.mubr.f32.gmra.mrb[0].mxu0 %v6397
    %v6538 = vpop.f32.mrb[0].mxu0
    %v6539 = vadd.f32 %v2524, %v6538
    %v6540 = vpop.f32.mrb[0].mxu0
    %v6541 = vadd.f32 %v2528, %v6540
    %6542 = vdwg.mxu0
    %6543 = vmatprep.subr.mxu0 %v2067
    %6544 = vmatpush1.msra.mxu0 %v2066
    %6545 = vmatprep.subr.mxu0 %v2073
    %6546 = vmatpush1.msra.mxu0 %v2072
    %6547 = vmatprep.subr.mxu0 %v2079
    %6548 = vmatpush1.msra.mxu0 %v2078
    %6549 = vmatprep.subr.mxu0 %v2085
    %6550 = vmatpush1.msra.mxu0 %v2084
    %6551 = vmatprep.subr.mxu0 %v2091
    %6552 = vmatpush1.msra.mxu0 %v2090
    %6553 = vmatprep.subr.mxu0 %v2097
    %6554 = vmatpush1.msra.mxu0 %v2096
    %6555 = vmatprep.subr.mxu0 %v2103
    %6556 = vmatpush1.msra.mxu0 %v2102
    %6557 = vmatprep.subr.mxu0 %v2109
    %6558 = vmatpush1.msra.mxu0 %v2108
    %6559 = vmatprep.subr.mxu0 %v2115
    %6560 = vmatpush1.msra.mxu0 %v2114
    %6561 = vmatprep.subr.mxu0 %v2121
    %6562 = vmatpush1.msra.mxu0 %v2120
    %6563 = vmatprep.subr.mxu0 %v2127
    %6564 = vmatpush1.msra.mxu0 %v2126
    %6565 = vmatprep.subr.mxu0 %v2133
    %6566 = vmatpush1.msra.mxu0 %v2132
    %6567 = vmatprep.subr.mxu0 %v2139
    %6568 = vmatpush1.msra.mxu0 %v2138
    %6569 = vmatprep.subr.mxu0 %v2145
    %6570 = vmatpush1.msra.mxu0 %v2144
    %6571 = vmatprep.subr.mxu0 %v2151
    %6572 = vmatpush1.msra.mxu0 %v2150
    %6573 = vmatprep.subr.mxu0 %v2157
    %6574 = vmatpush1.msra.mxu0 %v2156
    %6575 = vmatprep.subr.mxu0 %v2163
    %6576 = vmatpush1.msra.mxu0 %v2162
    %6577 = vmatprep.subr.mxu0 %v2169
    %6578 = vmatpush1.msra.mxu0 %v2168
    %6579 = vmatprep.subr.mxu0 %v2175
    %6580 = vmatpush1.msra.mxu0 %v2174
    %6581 = vmatprep.subr.mxu0 %v2181
    %6582 = vmatpush1.msra.mxu0 %v2180
    %6583 = vmatprep.subr.mxu0 %v2187
    %6584 = vmatpush1.msra.mxu0 %v2186
    %6585 = vmatprep.subr.mxu0 %v2193
    %6586 = vmatpush1.msra.mxu0 %v2192
    %6587 = vmatprep.subr.mxu0 %v2199
    %6588 = vmatpush1.msra.mxu0 %v2198
    %6589 = vmatprep.subr.mxu0 %v2205
    %6590 = vmatpush1.msra.mxu0 %v2204
    %6591 = vmatprep.subr.mxu0 %v2211
    %6592 = vmatpush1.msra.mxu0 %v2210
    %6593 = vmatprep.subr.mxu0 %v2217
    %6594 = vmatpush1.msra.mxu0 %v2216
    %6595 = vmatprep.subr.mxu0 %v2223
    %6596 = vmatpush1.msra.mxu0 %v2222
    %6597 = vmatprep.subr.mxu0 %v2229
    %6598 = vmatpush1.msra.mxu0 %v2228
    %6599 = vmatprep.subr.mxu0 %v2235
    %6600 = vmatpush1.msra.mxu0 %v2234
    %6601 = vmatprep.subr.mxu0 %v2241
    %6602 = vmatpush1.msra.mxu0 %v2240
    %6603 = vmatprep.subr.mxu0 %v2247
    %6604 = vmatpush1.msra.mxu0 %v2246
    %6605 = vmatprep.subr.mxu0 %v2253
    %6606 = vmatpush1.msra.mxu0 %v2252
    %6607 = vmatprep.mubr.f32.mxu0 %v6398
    %6608 = vmatmul.mubr.f32.gmra.mrb[0].mxu0 %v6397
    %v6609 = vpop.f32.mrb[0].mxu0
    %v6610 = vadd.f32 %v2532, %v6609
    %v6611 = vpop.f32.mrb[0].mxu0
    %v6612 = vadd.f32 %v2536, %v6611
    %6613 = vdwg.mxu0
    %v6616 = vrot.slane %v6249, 4
    %v6617 = vrot.slane %v6251, 4
    %v6620 = vadd.f32 %v6170, %v6616
    %v6621 = vadd.f32 %v6171, %v6617
    %v6622 = vxor.u32 %v6620, 2147483648
    %v6623 = vxor.u32 %v6621, 2147483648
    %v6624 = vmul.f32 %v6622, 1.442695
    %v6625 = vpow.pop %v6624
    %v6626 = vmul.f32 %v6623, 1.442695
    %v6627 = vpow.pop %v6626
    %v6628 = vadd.f32 %v6625, 1.0
    %v6629 = vadd.f32 %v6627, 1.0
    %v6630 = vrcp.pop %v6628
    %v6631 = vmul.f32 1.0, %v6630
    %v6632 = vrcp.pop %v6629
    %v6633 = vmul.f32 1.0, %v6632
    %v6636 = vrot.slane %v6320, 4
    %v6637 = vrot.slane %v6322, 4
    %v6640 = vadd.f32 %v6172, %v6636
    %v6641 = vadd.f32 %v6173, %v6637
    %v6642 = vxor.u32 %v6640, 2147483648
    %v6643 = vxor.u32 %v6641, 2147483648
    %v6644 = vmul.f32 %v6642, 1.442695
    %v6645 = vpow.pop %v6644
    %v6646 = vmul.f32 %v6643, 1.442695
    %v6647 = vpow.pop %v6646
    %v6648 = vadd.f32 %v6645, 1.0
    %v6649 = vadd.f32 %v6647, 1.0
    %v6650 = vrcp.pop %v6648
    %v6651 = vmul.f32 1.0, %v6650
    %v6652 = vrcp.pop %v6649
    %v6653 = vmul.f32 1.0, %v6652
    %v6656 = vrot.slane %v6391, 4
    %v6657 = vrot.slane %v6393, 4
    %v6660 = vmul.f32 %v6631, %v6656
    %v6661 = vmul.f32 %v6633, %v6657
    %v6662 = vadd.f32 %v6174, %v6660
    %v6663 = vadd.f32 %v6175, %v6661
    %v6664 = vtanh.pop %v6662
    %v6665 = vtanh.pop %v6663
    %v6666 = vsub.f32 1.0, %v6651
    %v6667 = vsub.f32 1.0, %v6653
    %v6668 = vmul.f32 %v6666, %v6664
    %v6669 = vmul.f32 %v6667, %v6665
    %v6672 = vrot.slane %v6102, 4
    %v6673 = vrot.slane %v6103, 4
    %v6676 = vmul.f32 %v6651, %v6672
    %v6677 = vmul.f32 %v6653, %v6673
    %v6678 = vadd.f32 %v6668, %v6676
    %v6679 = vadd.f32 %v6669, %v6677
    %v6680 = vadd.f32 %v6176, %v6468
    %v6681 = vadd.f32 %v6177, %v6470
    %v6682 = vxor.u32 %v6680, 2147483648
    %v6683 = vxor.u32 %v6681, 2147483648
    %v6684 = vmul.f32 %v6682, 1.442695
    %v6685 = vpow.pop %v6684
    %v6686 = vmul.f32 %v6683, 1.442695
    %v6687 = vpow.pop %v6686
    %v6688 = vadd.f32 %v6685, 1.0
    %v6689 = vadd.f32 %v6687, 1.0
    %v6690 = vrcp.pop %v6688
    %v6691 = vmul.f32 1.0, %v6690
    %v6692 = vrcp.pop %v6689
    %v6693 = vmul.f32 1.0, %v6692
    %v6694 = vadd.f32 %v6178, %v6539
    %v6695 = vadd.f32 %v6179, %v6541
    %v6696 = vxor.u32 %v6694, 2147483648
    %v6697 = vxor.u32 %v6695, 2147483648
    %v6698 = vmul.f32 %v6696, 1.442695
    %v6699 = vpow.pop %v6698
    %v6700 = vmul.f32 %v6697, 1.442695
    %v6701 = vpow.pop %v6700
    %v6702 = vadd.f32 %v6699, 1.0
    %v6703 = vadd.f32 %v6701, 1.0
    %v6704 = vrcp.pop %v6702
    %v6705 = vmul.f32 1.0, %v6704
    %v6706 = vrcp.pop %v6703
    %v6707 = vmul.f32 1.0, %v6706
    %v6708 = vmul.f32 %v6691, %v6610
    %v6709 = vmul.f32 %v6693, %v6612
    %v6710 = vadd.f32 %v6180, %v6708
    %v6711 = vadd.f32 %v6181, %v6709
    %v6712 = vtanh.pop %v6710
    %v6713 = vtanh.pop %v6711
    %v6714 = vsub.f32 1.0, %v6705
    %v6715 = vsub.f32 1.0, %v6707
    %v6716 = vmul.f32 %v6714, %v6712
    %v6717 = vmul.f32 %v6715, %v6713
    %v6718 = vmul.f32 %v6705, %v6397
    %v6719 = vmul.f32 %v6707, %v6398
    %v6720 = vadd.f32 %v6716, %v6718
    %v6721 = vadd.f32 %v6717, %v6719
    %v6724 = vcombine.high %v6678, %v6679
    %6726 = vst [vmem:[%s7] sm:$0xff] %v6724
    %v6729 = vcombine.low %v6720, %v6721
    %6731 = vst [vmem:[%s7 + $0x8] sm:$0xff] %v6729
    // Predicated region
    $region54: #{ctrl_forward.3} parent=1 // pred_check
      _
    $region55: #{ctrl_forward.3} parent=1 // pred_check_branch
      %6733 = sbr.rel (0) target = $region57
    $region56: #{ctrl_forward.3} parent=1 // pred_region
      _
    $region57: #{ctrl_forward.3} parent=1 // pred_fallthru
      _
    // Predicated region
    $region58: #{ctrl_forward.3} parent=1 // pred_check
      _
    $region59: #{ctrl_forward.3} parent=1 // pred_check_branch
      %6735 = sbr.rel (0) target = $region61
    $region60: #{ctrl_forward.3} parent=1 // pred_region
      _
    $region61: #{ctrl_forward.3} parent=1 // pred_fallthru
      _
    %6736 = vsyncpa [#allocation4], 1
    %6737 = vsyncpa [#allocation6], 1
    %6738 = vsyncpa [#allocation9], 1
    %6739 = vsyncpa [#allocation12], 1

</llo_original>
